<compile_context>
chip_gen: v7x
topology: tpu7x:2x2x1
jax: 0.10.0
libtpu: 0.0.40
codegen_flags: <defaults>
</compile_context>

<pallas_src>
import numpy as np
import jax
import jax.numpy as jnp
from jax import lax
from jax.experimental import pallas as pl
from jax.experimental.pallas import tpu as pltpu

NUM_JOINTS = 23                 # smpl.NUM_JOINTS
N_J = NUM_JOINTS + 1            # 24 joints incl. root
N_BETAS = 10
N_VERTS = 128                   # synthetic vertex count (kernel never sees V)

POSE_ROWS = 6 * N_J             # 144
JNT_ROWS = 3 * N_J              # 72
SUB, LANE = 8, 128
GROUP = SUB * LANE              # 1024 samples per sublane group

# standard SMPL kinematic tree (parents[i] < i, so a forward unroll is valid)
PARENTS = (-1, 0, 0, 0, 1, 2, 3, 4, 5, 6, 7, 8, 9, 9, 9,
           12, 13, 14, 16, 17, 18, 19, 20, 21)
_HAS_CHILD = tuple(any(PARENTS[c] == j for c in range(1, N_J)) for j in range(N_J))
_NONLEAF = tuple(j for j in range(N_J) if _HAS_CHILD[j])
_RG_SLOT = {j: s for s, j in enumerate(_NONLEAF)}
N_NONLEAF = len(_NONLEAF)       # 19

_HI = jax.lax.Precision.HIGHEST


def fastfk_kernel(pose_ref, jrel_ref, out_ref, rg_ref):
    """One grid step = `groups` sublane groups of 1024 samples each.

    pose_ref : (groups*144, 8, 128)   row = g*144 + 6*j + c   (6d pose, SoA)
    jrel_ref : (groups*72,  8, 128)   row = g*72 + 3*j + k    (rest root + rest offsets)
    out_ref  : (groups*72,  8, 128)   global joint positions
    rg_ref   : VMEM scratch (9*19, 8, 128) — global rotations of non-leaf joints
    """
    groups = pose_ref.shape[0] // POSE_ROWS

    def run_group(g):
        p_base = g * POSE_ROWS
        j_base = g * JNT_ROWS

        def prow(j, c):                       # pose 6d component c of joint j, (8,128)
            return pose_ref[p_base + 6 * j + c]

        def jrow(j, k):                       # rest-pose offset component, (8,128)
            return jrel_ref[j_base + 3 * j + k]

        def store_out(j, t):
            for k in range(3):
                out_ref[j_base + 3 * j + k] = t[k]

        def store_rg(j, R):                   # stash global rotation (non-leaf only)
            s = 9 * _RG_SLOT[j]
            for k in range(9):
                rg_ref[s + k] = R[k]

        def load_rg(j):
            s = 9 * _RG_SLOT[j]
            return tuple(rg_ref[s + k] for k in range(9))

        def rot6d(j):
            """rotation_6d_to_matrix for joint j, SoA over the (8,128) sample tile."""
            a1 = [prow(j, c) for c in range(3)]
            a2 = [prow(j, c) for c in range(3, 6)]
            s1 = a1[0] * a1[0] + a1[1] * a1[1] + a1[2] * a1[2]
            inv1 = lax.rsqrt(jnp.maximum(s1, 1e-24))   # keep clamp: padded lanes are 0
            b1 = [x * inv1 for x in a1]
            d = b1[0] * a2[0] + b1[1] * a2[1] + b1[2] * a2[2]
            u2 = [a2[k] - d * b1[k] for k in range(3)]
            s2 = u2[0] * u2[0] + u2[1] * u2[1] + u2[2] * u2[2]
            inv2 = lax.rsqrt(jnp.maximum(s2, 1e-24))
            b2 = [x * inv2 for x in u2]
            b3 = [b1[1] * b2[2] - b1[2] * b2[1],
                  b1[2] * b2[0] - b1[0] * b2[2],
                  b1[0] * b2[1] - b1[1] * b2[0]]
            return (b1[0], b1[1], b1[2], b2[0], b2[1], b2[2], b3[0], b3[1], b3[2])

        def mat3(P, Q):                       # P @ Q, elementwise over samples (VPU)
            return tuple(P[3 * r + 0] * Q[c] + P[3 * r + 1] * Q[3 + c] + P[3 * r + 2] * Q[6 + c]
                         for r in range(3) for c in range(3))

        def rotvec(P, v):                     # P @ v, elementwise over samples (VPU)
            return tuple(P[3 * r + 0] * v[0] + P[3 * r + 1] * v[1] + P[3 * r + 2] * v[2]
                         for r in range(3))

        # ---- batch_rigid_transform: static unroll over the kinematic tree ----
        tg = [None] * N_J
        tg[0] = (jrow(0, 0), jrow(0, 1), jrow(0, 2))
        store_out(0, tg[0])
        store_rg(0, rot6d(0))

        last_parent, Rp = None, None
        for i in range(1, N_J):
            p = PARENTS[i]
            if p != last_parent:              # hoist Rg[parent] across consecutive siblings
                Rp = load_rg(p)
                last_parent = p
            t = rotvec(Rp, (jrow(i, 0), jrow(i, 1), jrow(i, 2)))
            tg[i] = (t[0] + tg[p][0], t[1] + tg[p][1], t[2] + tg[p][2])
            store_out(i, tg[i])
            if _HAS_CHILD[i]:                 # leaves never need their global rotation
                store_rg(i, mat3(Rp, rot6d(i)))

    if groups == 1:
        run_group(0)                          # fully static indices for the 1-group case
    else:
        pl.loop(0, groups)(run_group)         # scf.for over sublane groups


def make_fast_fk(v_template, shapedirs, J_regressor, *, max_groups_per_block=4):
    """Build the FastFK forward:  fk(pose6d, betas=None, transl=None) -> (B, 24, 3).

    Model constants are folded once here (not per call):
        J0 = J_regressor @ v_template, A = J_regressor @ shapedirs, then converted
        to root-position + parent-relative offset form.
    NOTE: like the PyTorch module, `transl` is accepted but never applied to the
    returned joints.
    """
    f32 = jnp.float32
    J0 = jnp.einsum('jv,vk->jk', J_regressor.astype(f32), v_template.astype(f32),
                    precision=_HI)                                    # (24, 3)
    A = jnp.einsum('jv,vkl->jkl', J_regressor.astype(f32), shapedirs.astype(f32),
                   precision=_HI)                                     # (24, 3, 10)
    pidx = jnp.array((0,) + PARENTS[1:], dtype=jnp.int32)
    child = jnp.array([0.0] + [1.0] * (N_J - 1), f32)
    J0rel = (J0 - child[:, None] * J0[pidx]).reshape(JNT_ROWS)        # (72,)
    Arel = (A - child[:, None, None] * A[pidx]).reshape(JNT_ROWS, N_BETAS)  # (72, 10)

    max_g = int(max(1, min(max_groups_per_block, 16)))

    @jax.jit
    def fk(pose6d, betas=None, transl=None):
        del transl
        B = pose6d.shape[0]
        pose = pose6d.reshape(B, -1).astype(f32)
        n_in = pose.shape[1] // 6
        if n_in < N_J:                        # identity-pad missing joints (6d id rows)
            ident = jnp.tile(jnp.asarray([1., 0., 0., 0., 1., 0.], f32), (B, N_J - n_in))
            pose = jnp.concatenate([pose, ident], axis=1)

        if betas is None:
            jrel = jnp.broadcast_to(J0rel, (B, JNT_ROWS))
        else:
            bet = jnp.broadcast_to(betas.astype(f32).reshape(-1, N_BETAS), (B, N_BETAS))
            jrel = jnp.einsum('bl,rl->br', bet, Arel, precision=_HI) + J0rel

        # ---- block sizing: G groups per grid step, >=2 blocks when possible (v7x) ----
        n_groups = -(-B // GROUP)
        g = max(1, min(max_g, n_groups))
        if n_groups >= 2:
            g = min(g, -(-n_groups // 2))
        n_blocks = -(-n_groups // g)
        n_groups_pad = n_blocks * g
        b_pad = n_groups_pad * GROUP

        def pack(x, rows):                    # (B, rows) -> (n_groups_pad*rows, 8, 128)
            xt = jnp.pad(x.T, ((0, 0), (0, b_pad - B)))
            xt = xt.reshape(rows, n_groups_pad, SUB, LANE).transpose(1, 0, 2, 3)
            return xt.reshape(n_groups_pad * rows, SUB, LANE)

        pose_k = pack(pose, POSE_ROWS)
        jrel_k = pack(jrel, JNT_ROWS)

        block_bytes = g * (POSE_ROWS + 2 * JNT_ROWS) * SUB * LANE * 4
        vmem_limit = int(min(max(2 * block_bytes + (4 << 20), 32 << 20), 56 << 20))

        out = pl.pallas_call(
            fastfk_kernel,
            out_shape=jax.ShapeDtypeStruct((n_groups_pad * JNT_ROWS, SUB, LANE), f32),
            grid_spec=pltpu.PrefetchScalarGridSpec(
                num_scalar_prefetch=0,
                grid=(n_blocks,),
                in_specs=[
                    pl.BlockSpec((g * POSE_ROWS, SUB, LANE), lambda b: (b, 0, 0)),
                    pl.BlockSpec((g * JNT_ROWS, SUB, LANE), lambda b: (b, 0, 0)),
                ],
                out_specs=pl.BlockSpec((g * JNT_ROWS, SUB, LANE), lambda b: (b, 0, 0)),
                scratch_shapes=[pltpu.VMEM((9 * N_NONLEAF, SUB, LANE), f32)],
            ),
            compiler_params=pltpu.CompilerParams(
                dimension_semantics=("parallel",),
                vmem_limit_bytes=vmem_limit),
        )(pose_k, jrel_k)

        # (n_groups_pad*72, 8, 128) -> (B, 24, 3)
        out = out.reshape(n_groups_pad, JNT_ROWS, SUB, LANE).transpose(1, 0, 2, 3)
        out = out.reshape(JNT_ROWS, b_pad)[:, :B]
        return out.reshape(N_J, 3, B).transpose(2, 0, 1)

    return fk


# ---------------- pure-JAX reference (mirrors the PyTorch forward) -----------
def fastfk_reference(pose6d, betas, v_template, shapedirs, J_regressor, parents):
    B = pose6d.shape[0]
    p6 = pose6d.reshape(B, -1, 6).astype(jnp.float32)
    a1, a2 = p6[..., :3], p6[..., 3:]
    b1 = a1 / jnp.maximum(jnp.linalg.norm(a1, axis=-1, keepdims=True), 1e-12)
    u2 = a2 - jnp.sum(b1 * a2, axis=-1, keepdims=True) * b1
    b2 = u2 / jnp.maximum(jnp.linalg.norm(u2, axis=-1, keepdims=True), 1e-12)
    b3 = jnp.cross(b1, b2)
    rot = jnp.stack([b1, b2, b3], axis=-2)                           # (B, J, 3, 3)

    v_shaped = v_template[None] + jnp.einsum('bl,mkl->bmk', betas, shapedirs,
                                             precision=_HI)
    J = jnp.einsum('bik,ji->bjk', v_shaped, J_regressor, precision=_HI)

    Rg = [None] * N_J
    tg = [None] * N_J
    Rg[0] = rot[:, 0]
    tg[0] = J[:, 0]
    for i in range(1, N_J):
        p = parents[i]
        rel = J[:, i] - J[:, p]
        Rg[i] = jnp.einsum('bij,bjk->bik', Rg[p], rot[:, i], precision=_HI)
        tg[i] = jnp.einsum('bij,bj->bi', Rg[p], rel, precision=_HI) + tg[p]
    return jnp.stack(tg, axis=1)                                     # (B, J, 3)


if __name__ == "__main__":
    key = jax.random.PRNGKey(0)
    k1, k2, k3, k4, k5, k6, k7 = jax.random.split(key, 7)

    # deterministic synthetic SMPL parameters (canonical layouts)
    v_template = 0.5 * jax.random.normal(k1, (N_VERTS, 3), dtype=jnp.float32)
    shapedirs = 0.01 * jax.random.normal(k2, (N_VERTS, 3, N_BETAS), dtype=jnp.float32)
    J_regressor = jax.nn.softmax(
        jax.random.normal(k3, (N_J, N_VERTS), dtype=jnp.float32), axis=-1)

    fk = make_fast_fk(v_template, shapedirs, J_regressor)

    # small-shape check consistent with the module: batch=2, pose6d = (B, 24*6)
    B = 2
    pose6d = jax.random.normal(k4, (B, N_J * 6), dtype=jnp.float32)
    betas = 0.5 * jax.random.normal(k5, (B, N_BETAS), dtype=jnp.float32)
    joints = jax.block_until_ready(fk(pose6d, betas))
    ref = fastfk_reference(pose6d, betas, v_template, shapedirs, J_regressor, PARENTS)
    np.testing.assert_allclose(np.asarray(joints), np.asarray(ref), rtol=2e-3, atol=2e-3)

    # exercise the multi-group / multi-block path (group loop, padding, 2 grid blocks)
    B2 = 2500
    pose2 = jax.random.normal(k6, (B2, N_J * 6), dtype=jnp.float32)
    betas2 = 0.5 * jax.random.normal(k7, (B2, N_BETAS), dtype=jnp.float32)
    joints2 = jax.block_until_ready(fk(pose2, betas2))
    ref2 = fastfk_reference(pose2, betas2, v_template, shapedirs, J_regressor, PARENTS)
    np.testing.assert_allclose(np.asarray(joints2), np.asarray(ref2), rtol=2e-3, atol=2e-3)

    print("KERNEL_OK")
</pallas_src>

<mosaic_0001>
module attributes {stable_mosaic.version = 11 : i64} {
  func.func @fastfk_kernel(%arg0: i32, %arg1: memref<144x8x128xf32, #tpu.memory_space<vmem>>, %arg2: memref<72x8x128xf32, #tpu.memory_space<vmem>>, %arg3: memref<72x8x128xf32, #tpu.memory_space<vmem>>, %arg4: memref<171x8x128xf32, #tpu.memory_space<vmem>>) attributes {dimension_semantics = [#tpu.dimension_semantics<parallel>], iteration_bounds = array<i64: 1>, scalar_prefetch = 0 : i64, scratch_operands = 1 : i64, tpu.core_type = #tpu.core_type<tc>, window_params = [{transform_indices = @transform_0, window_bounds = array<i64: 144, 8, 128>}, {transform_indices = @transform_1, window_bounds = array<i64: 72, 8, 128>}, {transform_indices = @transform_2, window_bounds = array<i64: 72, 8, 128>}]} {
    %c0 = arith.constant 0 : index
    %c0_0 = arith.constant 0 : index
    %c0_1 = arith.constant 0 : index
    %0 = vector.load %arg2[%c0, %c0_0, %c0_1] : memref<72x8x128xf32, #tpu.memory_space<vmem>>, vector<1x8x128xf32>
    %1 = vector.shape_cast %0 : vector<1x8x128xf32> to vector<8x128xf32>
    %c1 = arith.constant 1 : index
    %c0_2 = arith.constant 0 : index
    %c0_3 = arith.constant 0 : index
    %2 = vector.load %arg2[%c1, %c0_2, %c0_3] : memref<72x8x128xf32, #tpu.memory_space<vmem>>, vector<1x8x128xf32>
    %3 = vector.shape_cast %2 : vector<1x8x128xf32> to vector<8x128xf32>
    %c2 = arith.constant 2 : index
    %c0_4 = arith.constant 0 : index
    %c0_5 = arith.constant 0 : index
    %4 = vector.load %arg2[%c2, %c0_4, %c0_5] : memref<72x8x128xf32, #tpu.memory_space<vmem>>, vector<1x8x128xf32>
    %5 = vector.shape_cast %4 : vector<1x8x128xf32> to vector<8x128xf32>
    %c0_6 = arith.constant 0 : index
    %c0_7 = arith.constant 0 : index
    %c0_8 = arith.constant 0 : index
    %6 = vector.load %arg3[%c0_6, %c0_7, %c0_8] : memref<72x8x128xf32, #tpu.memory_space<vmem>>, vector<1x8x128xf32>
    %7 = vector.shape_cast %6 : vector<1x8x128xf32> to vector<8x128xf32>
    %8 = vector.shape_cast %1 : vector<8x128xf32> to vector<1x8x128xf32>
    tpu.vector_store %arg3[%c0_6, %c0_7, %c0_8], %8 {strides = array<i32>} : memref<72x8x128xf32, #tpu.memory_space<vmem>>, vector<1x8x128xf32>,
    %c1_9 = arith.constant 1 : index
    %c0_10 = arith.constant 0 : index
    %c0_11 = arith.constant 0 : index
    %9 = vector.load %arg3[%c1_9, %c0_10, %c0_11] : memref<72x8x128xf32, #tpu.memory_space<vmem>>, vector<1x8x128xf32>
    %10 = vector.shape_cast %9 : vector<1x8x128xf32> to vector<8x128xf32>
    %11 = vector.shape_cast %3 : vector<8x128xf32> to vector<1x8x128xf32>
    tpu.vector_store %arg3[%c1_9, %c0_10, %c0_11], %11 {strides = array<i32>} : memref<72x8x128xf32, #tpu.memory_space<vmem>>, vector<1x8x128xf32>,
    %c2_12 = arith.constant 2 : index
    %c0_13 = arith.constant 0 : index
    %c0_14 = arith.constant 0 : index
    %12 = vector.load %arg3[%c2_12, %c0_13, %c0_14] : memref<72x8x128xf32, #tpu.memory_space<vmem>>, vector<1x8x128xf32>
    %13 = vector.shape_cast %12 : vector<1x8x128xf32> to vector<8x128xf32>
    %14 = vector.shape_cast %5 : vector<8x128xf32> to vector<1x8x128xf32>
    tpu.vector_store %arg3[%c2_12, %c0_13, %c0_14], %14 {strides = array<i32>} : memref<72x8x128xf32, #tpu.memory_space<vmem>>, vector<1x8x128xf32>,
    %c0_15 = arith.constant 0 : index
    %c0_16 = arith.constant 0 : index
    %c0_17 = arith.constant 0 : index
    %15 = vector.load %arg1[%c0_15, %c0_16, %c0_17] : memref<144x8x128xf32, #tpu.memory_space<vmem>>, vector<1x8x128xf32>
    %16 = vector.shape_cast %15 : vector<1x8x128xf32> to vector<8x128xf32>
    %c1_18 = arith.constant 1 : index
    %c0_19 = arith.constant 0 : index
    %c0_20 = arith.constant 0 : index
    %17 = vector.load %arg1[%c1_18, %c0_19, %c0_20] : memref<144x8x128xf32, #tpu.memory_space<vmem>>, vector<1x8x128xf32>
    %18 = vector.shape_cast %17 : vector<1x8x128xf32> to vector<8x128xf32>
    %c2_21 = arith.constant 2 : index
    %c0_22 = arith.constant 0 : index
    %c0_23 = arith.constant 0 : index
    %19 = vector.load %arg1[%c2_21, %c0_22, %c0_23] : memref<144x8x128xf32, #tpu.memory_space<vmem>>, vector<1x8x128xf32>
    %20 = vector.shape_cast %19 : vector<1x8x128xf32> to vector<8x128xf32>
    %c3 = arith.constant 3 : index
    %c0_24 = arith.constant 0 : index
    %c0_25 = arith.constant 0 : index
    %21 = vector.load %arg1[%c3, %c0_24, %c0_25] : memref<144x8x128xf32, #tpu.memory_space<vmem>>, vector<1x8x128xf32>
    %22 = vector.shape_cast %21 : vector<1x8x128xf32> to vector<8x128xf32>
    %c4 = arith.constant 4 : index
    %c0_26 = arith.constant 0 : index
    %c0_27 = arith.constant 0 : index
    %23 = vector.load %arg1[%c4, %c0_26, %c0_27] : memref<144x8x128xf32, #tpu.memory_space<vmem>>, vector<1x8x128xf32>
    %24 = vector.shape_cast %23 : vector<1x8x128xf32> to vector<8x128xf32>
    %c5 = arith.constant 5 : index
    %c0_28 = arith.constant 0 : index
    %c0_29 = arith.constant 0 : index
    %25 = vector.load %arg1[%c5, %c0_28, %c0_29] : memref<144x8x128xf32, #tpu.memory_space<vmem>>, vector<1x8x128xf32>
    %26 = vector.shape_cast %25 : vector<1x8x128xf32> to vector<8x128xf32>
    %27 = arith.mulf %16, %16 : vector<8x128xf32>
    %28 = arith.mulf %18, %18 : vector<8x128xf32>
    %29 = arith.addf %27, %28 : vector<8x128xf32>
    %30 = arith.mulf %20, %20 : vector<8x128xf32>
    %31 = arith.addf %29, %30 : vector<8x128xf32>
    %cst = arith.constant 1.000000e-24 : f32
    %32 = vector.broadcast %cst : f32 to vector<8x128xf32>
    %33 = arith.maximumf %31, %32 : vector<8x128xf32>
    %34 = math.rsqrt %33 : vector<8x128xf32>
    %35 = arith.mulf %16, %34 : vector<8x128xf32>
    %36 = arith.mulf %18, %34 : vector<8x128xf32>
    %37 = arith.mulf %20, %34 : vector<8x128xf32>
    %38 = arith.mulf %35, %22 : vector<8x128xf32>
    %39 = arith.mulf %36, %24 : vector<8x128xf32>
    %40 = arith.addf %38, %39 : vector<8x128xf32>
    %41 = arith.mulf %37, %26 : vector<8x128xf32>
    %42 = arith.addf %40, %41 : vector<8x128xf32>
    %43 = arith.mulf %42, %35 : vector<8x128xf32>
    %44 = arith.subf %22, %43 : vector<8x128xf32>
    %45 = arith.mulf %42, %36 : vector<8x128xf32>
    %46 = arith.subf %24, %45 : vector<8x128xf32>
    %47 = arith.mulf %42, %37 : vector<8x128xf32>
    %48 = arith.subf %26, %47 : vector<8x128xf32>
    %49 = arith.mulf %44, %44 : vector<8x128xf32>
    %50 = arith.mulf %46, %46 : vector<8x128xf32>
    %51 = arith.addf %49, %50 : vector<8x128xf32>
    %52 = arith.mulf %48, %48 : vector<8x128xf32>
    %53 = arith.addf %51, %52 : vector<8x128xf32>
    %cst_30 = arith.constant 1.000000e-24 : f32
    %54 = vector.broadcast %cst_30 : f32 to vector<8x128xf32>
    %55 = arith.maximumf %53, %54 : vector<8x128xf32>
    %56 = math.rsqrt %55 : vector<8x128xf32>
    %57 = arith.mulf %44, %56 : vector<8x128xf32>
    %58 = arith.mulf %46, %56 : vector<8x128xf32>
    %59 = arith.mulf %48, %56 : vector<8x128xf32>
    %60 = arith.mulf %36, %59 : vector<8x128xf32>
    %61 = arith.mulf %37, %58 : vector<8x128xf32>
    %62 = arith.subf %60, %61 : vector<8x128xf32>
    %63 = arith.mulf %37, %57 : vector<8x128xf32>
    %64 = arith.mulf %35, %59 : vector<8x128xf32>
    %65 = arith.subf %63, %64 : vector<8x128xf32>
    %66 = arith.mulf %35, %58 : vector<8x128xf32>
    %67 = arith.mulf %36, %57 : vector<8x128xf32>
    %68 = arith.subf %66, %67 : vector<8x128xf32>
    %c0_31 = arith.constant 0 : index
    %c0_32 = arith.constant 0 : index
    %c0_33 = arith.constant 0 : index
    %69 = vector.load %arg4[%c0_31, %c0_32, %c0_33] : memref<171x8x128xf32, #tpu.memory_space<vmem>>, vector<1x8x128xf32>
    %70 = vector.shape_cast %69 : vector<1x8x128xf32> to vector<8x128xf32>
    %71 = vector.shape_cast %35 : vector<8x128xf32> to vector<1x8x128xf32>
    tpu.vector_store %arg4[%c0_31, %c0_32, %c0_33], %71 {strides = array<i32>} : memref<171x8x128xf32, #tpu.memory_space<vmem>>, vector<1x8x128xf32>,
    %c1_34 = arith.constant 1 : index
    %c0_35 = arith.constant 0 : index
    %c0_36 = arith.constant 0 : index
    %72 = vector.load %arg4[%c1_34, %c0_35, %c0_36] : memref<171x8x128xf32, #tpu.memory_space<vmem>>, vector<1x8x128xf32>
    %73 = vector.shape_cast %72 : vector<1x8x128xf32> to vector<8x128xf32>
    %74 = vector.shape_cast %36 : vector<8x128xf32> to vector<1x8x128xf32>
    tpu.vector_store %arg4[%c1_34, %c0_35, %c0_36], %74 {strides = array<i32>} : memref<171x8x128xf32, #tpu.memory_space<vmem>>, vector<1x8x128xf32>,
    %c2_37 = arith.constant 2 : index
    %c0_38 = arith.constant 0 : index
    %c0_39 = arith.constant 0 : index
    %75 = vector.load %arg4[%c2_37, %c0_38, %c0_39] : memref<171x8x128xf32, #tpu.memory_space<vmem>>, vector<1x8x128xf32>
    %76 = vector.shape_cast %75 : vector<1x8x128xf32> to vector<8x128xf32>
    %77 = vector.shape_cast %37 : vector<8x128xf32> to vector<1x8x128xf32>
    tpu.vector_store %arg4[%c2_37, %c0_38, %c0_39], %77 {strides = array<i32>} : memref<171x8x128xf32, #tpu.memory_space<vmem>>, vector<1x8x128xf32>,
    %c3_40 = arith.constant 3 : index
    %c0_41 = arith.constant 0 : index
    %c0_42 = arith.constant 0 : index
    %78 = vector.load %arg4[%c3_40, %c0_41, %c0_42] : memref<171x8x128xf32, #tpu.memory_space<vmem>>, vector<1x8x128xf32>
    %79 = vector.shape_cast %78 : vector<1x8x128xf32> to vector<8x128xf32>
    %80 = vector.shape_cast %57 : vector<8x128xf32> to vector<1x8x128xf32>
    tpu.vector_store %arg4[%c3_40, %c0_41, %c0_42], %80 {strides = array<i32>} : memref<171x8x128xf32, #tpu.memory_space<vmem>>, vector<1x8x128xf32>,
    %c4_43 = arith.constant 4 : index
    %c0_44 = arith.constant 0 : index
    %c0_45 = arith.constant 0 : index
    %81 = vector.load %arg4[%c4_43, %c0_44, %c0_45] : memref<171x8x128xf32, #tpu.memory_space<vmem>>, vector<1x8x128xf32>
    %82 = vector.shape_cast %81 : vector<1x8x128xf32> to vector<8x128xf32>
    %83 = vector.shape_cast %58 : vector<8x128xf32> to vector<1x8x128xf32>
    tpu.vector_store %arg4[%c4_43, %c0_44, %c0_45], %83 {strides = array<i32>} : memref<171x8x128xf32, #tpu.memory_space<vmem>>, vector<1x8x128xf32>,
    %c5_46 = arith.constant 5 : index
    %c0_47 = arith.constant 0 : index
    %c0_48 = arith.constant 0 : index
    %84 = vector.load %arg4[%c5_46, %c0_47, %c0_48] : memref<171x8x128xf32, #tpu.memory_space<vmem>>, vector<1x8x128xf32>
    %85 = vector.shape_cast %84 : vector<1x8x128xf32> to vector<8x128xf32>
    %86 = vector.shape_cast %59 : vector<8x128xf32> to vector<1x8x128xf32>
    tpu.vector_store %arg4[%c5_46, %c0_47, %c0_48], %86 {strides = array<i32>} : memref<171x8x128xf32, #tpu.memory_space<vmem>>, vector<1x8x128xf32>,
    %c6 = arith.constant 6 : index
    %c0_49 = arith.constant 0 : index
    %c0_50 = arith.constant 0 : index
    %87 = vector.load %arg4[%c6, %c0_49, %c0_50] : memref<171x8x128xf32, #tpu.memory_space<vmem>>, vector<1x8x128xf32>
    %88 = vector.shape_cast %87 : vector<1x8x128xf32> to vector<8x128xf32>
    %89 = vector.shape_cast %62 : vector<8x128xf32> to vector<1x8x128xf32>
    tpu.vector_store %arg4[%c6, %c0_49, %c0_50], %89 {strides = array<i32>} : memref<171x8x128xf32, #tpu.memory_space<vmem>>, vector<1x8x128xf32>,
    %c7 = arith.constant 7 : index
    %c0_51 = arith.constant 0 : index
    %c0_52 = arith.constant 0 : index
    %90 = vector.load %arg4[%c7, %c0_51, %c0_52] : memref<171x8x128xf32, #tpu.memory_space<vmem>>, vector<1x8x128xf32>
    %91 = vector.shape_cast %90 : vector<1x8x128xf32> to vector<8x128xf32>
    %92 = vector.shape_cast %65 : vector<8x128xf32> to vector<1x8x128xf32>
    tpu.vector_store %arg4[%c7, %c0_51, %c0_52], %92 {strides = array<i32>} : memref<171x8x128xf32, #tpu.memory_space<vmem>>, vector<1x8x128xf32>,
    %c8 = arith.constant 8 : index
    %c0_53 = arith.constant 0 : index
    %c0_54 = arith.constant 0 : index
    %93 = vector.load %arg4[%c8, %c0_53, %c0_54] : memref<171x8x128xf32, #tpu.memory_space<vmem>>, vector<1x8x128xf32>
    %94 = vector.shape_cast %93 : vector<1x8x128xf32> to vector<8x128xf32>
    %95 = vector.shape_cast %68 : vector<8x128xf32> to vector<1x8x128xf32>
    tpu.vector_store %arg4[%c8, %c0_53, %c0_54], %95 {strides = array<i32>} : memref<171x8x128xf32, #tpu.memory_space<vmem>>, vector<1x8x128xf32>,
    %c0_55 = arith.constant 0 : index
    %c0_56 = arith.constant 0 : index
    %c0_57 = arith.constant 0 : index
    %96 = vector.load %arg4[%c0_55, %c0_56, %c0_57] : memref<171x8x128xf32, #tpu.memory_space<vmem>>, vector<1x8x128xf32>
    %97 = vector.shape_cast %96 : vector<1x8x128xf32> to vector<8x128xf32>
    %c1_58 = arith.constant 1 : index
    %c0_59 = arith.constant 0 : index
    %c0_60 = arith.constant 0 : index
    %98 = vector.load %arg4[%c1_58, %c0_59, %c0_60] : memref<171x8x128xf32, #tpu.memory_space<vmem>>, vector<1x8x128xf32>
    %99 = vector.shape_cast %98 : vector<1x8x128xf32> to vector<8x128xf32>
    %c2_61 = arith.constant 2 : index
    %c0_62 = arith.constant 0 : index
    %c0_63 = arith.constant 0 : index
    %100 = vector.load %arg4[%c2_61, %c0_62, %c0_63] : memref<171x8x128xf32, #tpu.memory_space<vmem>>, vector<1x8x128xf32>
    %101 = vector.shape_cast %100 : vector<1x8x128xf32> to vector<8x128xf32>
    %c3_64 = arith.constant 3 : index
    %c0_65 = arith.constant 0 : index
    %c0_66 = arith.constant 0 : index
    %102 = vector.load %arg4[%c3_64, %c0_65, %c0_66] : memref<171x8x128xf32, #tpu.memory_space<vmem>>, vector<1x8x128xf32>
    %103 = vector.shape_cast %102 : vector<1x8x128xf32> to vector<8x128xf32>
    %c4_67 = arith.constant 4 : index
    %c0_68 = arith.constant 0 : index
    %c0_69 = arith.constant 0 : index
    %104 = vector.load %arg4[%c4_67, %c0_68, %c0_69] : memref<171x8x128xf32, #tpu.memory_space<vmem>>, vector<1x8x128xf32>
    %105 = vector.shape_cast %104 : vector<1x8x128xf32> to vector<8x128xf32>
    %c5_70 = arith.constant 5 : index
    %c0_71 = arith.constant 0 : index
    %c0_72 = arith.constant 0 : index
    %106 = vector.load %arg4[%c5_70, %c0_71, %c0_72] : memref<171x8x128xf32, #tpu.memory_space<vmem>>, vector<1x8x128xf32>
    %107 = vector.shape_cast %106 : vector<1x8x128xf32> to vector<8x128xf32>
    %c6_73 = arith.constant 6 : index
    %c0_74 = arith.constant 0 : index
    %c0_75 = arith.constant 0 : index
    %108 = vector.load %arg4[%c6_73, %c0_74, %c0_75] : memref<171x8x128xf32, #tpu.memory_space<vmem>>, vector<1x8x128xf32>
    %109 = vector.shape_cast %108 : vector<1x8x128xf32> to vector<8x128xf32>
    %c7_76 = arith.constant 7 : index
    %c0_77 = arith.constant 0 : index
    %c0_78 = arith.constant 0 : index
    %110 = vector.load %arg4[%c7_76, %c0_77, %c0_78] : memref<171x8x128xf32, #tpu.memory_space<vmem>>, vector<1x8x128xf32>
    %111 = vector.shape_cast %110 : vector<1x8x128xf32> to vector<8x128xf32>
    %c8_79 = arith.constant 8 : index
    %c0_80 = arith.constant 0 : index
    %c0_81 = arith.constant 0 : index
    %112 = vector.load %arg4[%c8_79, %c0_80, %c0_81] : memref<171x8x128xf32, #tpu.memory_space<vmem>>, vector<1x8x128xf32>
    %113 = vector.shape_cast %112 : vector<1x8x128xf32> to vector<8x128xf32>
    %c3_82 = arith.constant 3 : index
    %c0_83 = arith.constant 0 : index
    %c0_84 = arith.constant 0 : index
    %114 = vector.load %arg2[%c3_82, %c0_83, %c0_84] : memref<72x8x128xf32, #tpu.memory_space<vmem>>, vector<1x8x128xf32>
    %115 = vector.shape_cast %114 : vector<1x8x128xf32> to vector<8x128xf32>
    %c4_85 = arith.constant 4 : index
    %c0_86 = arith.constant 0 : index
    %c0_87 = arith.constant 0 : index
    %116 = vector.load %arg2[%c4_85, %c0_86, %c0_87] : memref<72x8x128xf32, #tpu.memory_space<vmem>>, vector<1x8x128xf32>
    %117 = vector.shape_cast %116 : vector<1x8x128xf32> to vector<8x128xf32>
    %c5_88 = arith.constant 5 : index
    %c0_89 = arith.constant 0 : index
    %c0_90 = arith.constant 0 : index
    %118 = vector.load %arg2[%c5_88, %c0_89, %c0_90] : memref<72x8x128xf32, #tpu.memory_space<vmem>>, vector<1x8x128xf32>
    %119 = vector.shape_cast %118 : vector<1x8x128xf32> to vector<8x128xf32>
    %120 = arith.mulf %97, %115 : vector<8x128xf32>
    %121 = arith.mulf %99, %117 : vector<8x128xf32>
    %122 = arith.addf %120, %121 : vector<8x128xf32>
    %123 = arith.mulf %101, %119 : vector<8x128xf32>
    %124 = arith.addf %122, %123 : vector<8x128xf32>
    %125 = arith.mulf %103, %115 : vector<8x128xf32>
    %126 = arith.mulf %105, %117 : vector<8x128xf32>
    %127 = arith.addf %125, %126 : vector<8x128xf32>
    %128 = arith.mulf %107, %119 : vector<8x128xf32>
    %129 = arith.addf %127, %128 : vector<8x128xf32>
    %130 = arith.mulf %109, %115 : vector<8x128xf32>
    %131 = arith.mulf %111, %117 : vector<8x128xf32>
    %132 = arith.addf %130, %131 : vector<8x128xf32>
    %133 = arith.mulf %113, %119 : vector<8x128xf32>
    %134 = arith.addf %132, %133 : vector<8x128xf32>
    %135 = arith.addf %124, %1 : vector<8x128xf32>
    %136 = arith.addf %129, %3 : vector<8x128xf32>
    %137 = arith.addf %134, %5 : vector<8x128xf32>
    %c3_91 = arith.constant 3 : index
    %c0_92 = arith.constant 0 : index
    %c0_93 = arith.constant 0 : index
    %138 = vector.load %arg3[%c3_91, %c0_92, %c0_93] : memref<72x8x128xf32, #tpu.memory_space<vmem>>, vector<1x8x128xf32>
    %139 = vector.shape_cast %138 : vector<1x8x128xf32> to vector<8x128xf32>
    %140 = vector.shape_cast %135 : vector<8x128xf32> to vector<1x8x128xf32>
    tpu.vector_store %arg3[%c3_91, %c0_92, %c0_93], %140 {strides = array<i32>} : memref<72x8x128xf32, #tpu.memory_space<vmem>>, vector<1x8x128xf32>,
    %c4_94 = arith.constant 4 : index
    %c0_95 = arith.constant 0 : index
    %c0_96 = arith.constant 0 : index
    %141 = vector.load %arg3[%c4_94, %c0_95, %c0_96] : memref<72x8x128xf32, #tpu.memory_space<vmem>>, vector<1x8x128xf32>
    %142 = vector.shape_cast %141 : vector<1x8x128xf32> to vector<8x128xf32>
    %143 = vector.shape_cast %136 : vector<8x128xf32> to vector<1x8x128xf32>
    tpu.vector_store %arg3[%c4_94, %c0_95, %c0_96], %143 {strides = array<i32>} : memref<72x8x128xf32, #tpu.memory_space<vmem>>, vector<1x8x128xf32>,
    %c5_97 = arith.constant 5 : index
    %c0_98 = arith.constant 0 : index
    %c0_99 = arith.constant 0 : index
    %144 = vector.load %arg3[%c5_97, %c0_98, %c0_99] : memref<72x8x128xf32, #tpu.memory_space<vmem>>, vector<1x8x128xf32>
    %145 = vector.shape_cast %144 : vector<1x8x128xf32> to vector<8x128xf32>
    %146 = vector.shape_cast %137 : vector<8x128xf32> to vector<1x8x128xf32>
    tpu.vector_store %arg3[%c5_97, %c0_98, %c0_99], %146 {strides = array<i32>} : memref<72x8x128xf32, #tpu.memory_space<vmem>>, vector<1x8x128xf32>,
    %c6_100 = arith.constant 6 : index
    %c0_101 = arith.constant 0 : index
    %c0_102 = arith.constant 0 : index
    %147 = vector.load %arg1[%c6_100, %c0_101, %c0_102] : memref<144x8x128xf32, #tpu.memory_space<vmem>>, vector<1x8x128xf32>
    %148 = vector.shape_cast %147 : vector<1x8x128xf32> to vector<8x128xf32>
    %c7_103 = arith.constant 7 : index
    %c0_104 = arith.constant 0 : index
    %c0_105 = arith.constant 0 : index
    %149 = vector.load %arg1[%c7_103, %c0_104, %c0_105] : memref<144x8x128xf32, #tpu.memory_space<vmem>>, vector<1x8x128xf32>
    %150 = vector.shape_cast %149 : vector<1x8x128xf32> to vector<8x128xf32>
    %c8_106 = arith.constant 8 : index
    %c0_107 = arith.constant 0 : index
    %c0_108 = arith.constant 0 : index
    %151 = vector.load %arg1[%c8_106, %c0_107, %c0_108] : memref<144x8x128xf32, #tpu.memory_space<vmem>>, vector<1x8x128xf32>
    %152 = vector.shape_cast %151 : vector<1x8x128xf32> to vector<8x128xf32>
    %c9 = arith.constant 9 : index
    %c0_109 = arith.constant 0 : index
    %c0_110 = arith.constant 0 : index
    %153 = vector.load %arg1[%c9, %c0_109, %c0_110] : memref<144x8x128xf32, #tpu.memory_space<vmem>>, vector<1x8x128xf32>
    %154 = vector.shape_cast %153 : vector<1x8x128xf32> to vector<8x128xf32>
    %c10 = arith.constant 10 : index
    %c0_111 = arith.constant 0 : index
    %c0_112 = arith.constant 0 : index
    %155 = vector.load %arg1[%c10, %c0_111, %c0_112] : memref<144x8x128xf32, #tpu.memory_space<vmem>>, vector<1x8x128xf32>
    %156 = vector.shape_cast %155 : vector<1x8x128xf32> to vector<8x128xf32>
    %c11 = arith.constant 11 : index
    %c0_113 = arith.constant 0 : index
    %c0_114 = arith.constant 0 : index
    %157 = vector.load %arg1[%c11, %c0_113, %c0_114] : memref<144x8x128xf32, #tpu.memory_space<vmem>>, vector<1x8x128xf32>
    %158 = vector.shape_cast %157 : vector<1x8x128xf32> to vector<8x128xf32>
    %159 = arith.mulf %148, %148 : vector<8x128xf32>
    %160 = arith.mulf %150, %150 : vector<8x128xf32>
    %161 = arith.addf %159, %160 : vector<8x128xf32>
    %162 = arith.mulf %152, %152 : vector<8x128xf32>
    %163 = arith.addf %161, %162 : vector<8x128xf32>
    %cst_115 = arith.constant 1.000000e-24 : f32
    %164 = vector.broadcast %cst_115 : f32 to vector<8x128xf32>
    %165 = arith.maximumf %163, %164 : vector<8x128xf32>
    %166 = math.rsqrt %165 : vector<8x128xf32>
    %167 = arith.mulf %148, %166 : vector<8x128xf32>
    %168 = arith.mulf %150, %166 : vector<8x128xf32>
    %169 = arith.mulf %152, %166 : vector<8x128xf32>
    %170 = arith.mulf %167, %154 : vector<8x128xf32>
    %171 = arith.mulf %168, %156 : vector<8x128xf32>
    %172 = arith.addf %170, %171 : vector<8x128xf32>
    %173 = arith.mulf %169, %158 : vector<8x128xf32>
    %174 = arith.addf %172, %173 : vector<8x128xf32>
    %175 = arith.mulf %174, %167 : vector<8x128xf32>
    %176 = arith.subf %154, %175 : vector<8x128xf32>
    %177 = arith.mulf %174, %168 : vector<8x128xf32>
    %178 = arith.subf %156, %177 : vector<8x128xf32>
    %179 = arith.mulf %174, %169 : vector<8x128xf32>
    %180 = arith.subf %158, %179 : vector<8x128xf32>
    %181 = arith.mulf %176, %176 : vector<8x128xf32>
    %182 = arith.mulf %178, %178 : vector<8x128xf32>
    %183 = arith.addf %181, %182 : vector<8x128xf32>
    %184 = arith.mulf %180, %180 : vector<8x128xf32>
    %185 = arith.addf %183, %184 : vector<8x128xf32>
    %cst_116 = arith.constant 1.000000e-24 : f32
    %186 = vector.broadcast %cst_116 : f32 to vector<8x128xf32>
    %187 = arith.maximumf %185, %186 : vector<8x128xf32>
    %188 = math.rsqrt %187 : vector<8x128xf32>
    %189 = arith.mulf %176, %188 : vector<8x128xf32>
    %190 = arith.mulf %178, %188 : vector<8x128xf32>
    %191 = arith.mulf %180, %188 : vector<8x128xf32>
    %192 = arith.mulf %168, %191 : vector<8x128xf32>
    %193 = arith.mulf %169, %190 : vector<8x128xf32>
    %194 = arith.subf %192, %193 : vector<8x128xf32>
    %195 = arith.mulf %169, %189 : vector<8x128xf32>
    %196 = arith.mulf %167, %191 : vector<8x128xf32>
    %197 = arith.subf %195, %196 : vector<8x128xf32>
    %198 = arith.mulf %167, %190 : vector<8x128xf32>
    %199 = arith.mulf %168, %189 : vector<8x128xf32>
    %200 = arith.subf %198, %199 : vector<8x128xf32>
    %201 = arith.mulf %97, %167 : vector<8x128xf32>
    %202 = arith.mulf %99, %189 : vector<8x128xf32>
    %203 = arith.addf %201, %202 : vector<8x128xf32>
    %204 = arith.mulf %101, %194 : vector<8x128xf32>
    %205 = arith.addf %203, %204 : vector<8x128xf32>
    %206 = arith.mulf %97, %168 : vector<8x128xf32>
    %207 = arith.mulf %99, %190 : vector<8x128xf32>
    %208 = arith.addf %206, %207 : vector<8x128xf32>
    %209 = arith.mulf %101, %197 : vector<8x128xf32>
    %210 = arith.addf %208, %209 : vector<8x128xf32>
    %211 = arith.mulf %97, %169 : vector<8x128xf32>
    %212 = arith.mulf %99, %191 : vector<8x128xf32>
    %213 = arith.addf %211, %212 : vector<8x128xf32>
    %214 = arith.mulf %101, %200 : vector<8x128xf32>
    %215 = arith.addf %213, %214 : vector<8x128xf32>
    %216 = arith.mulf %103, %167 : vector<8x128xf32>
    %217 = arith.mulf %105, %189 : vector<8x128xf32>
    %218 = arith.addf %216, %217 : vector<8x128xf32>
    %219 = arith.mulf %107, %194 : vector<8x128xf32>
    %220 = arith.addf %218, %219 : vector<8x128xf32>
    %221 = arith.mulf %103, %168 : vector<8x128xf32>
    %222 = arith.mulf %105, %190 : vector<8x128xf32>
    %223 = arith.addf %221, %222 : vector<8x128xf32>
    %224 = arith.mulf %107, %197 : vector<8x128xf32>
    %225 = arith.addf %223, %224 : vector<8x128xf32>
    %226 = arith.mulf %103, %169 : vector<8x128xf32>
    %227 = arith.mulf %105, %191 : vector<8x128xf32>
    %228 = arith.addf %226, %227 : vector<8x128xf32>
    %229 = arith.mulf %107, %200 : vector<8x128xf32>
    %230 = arith.addf %228, %229 : vector<8x128xf32>
    %231 = arith.mulf %109, %167 : vector<8x128xf32>
    %232 = arith.mulf %111, %189 : vector<8x128xf32>
    %233 = arith.addf %231, %232 : vector<8x128xf32>
    %234 = arith.mulf %113, %194 : vector<8x128xf32>
    %235 = arith.addf %233, %234 : vector<8x128xf32>
    %236 = arith.mulf %109, %168 : vector<8x128xf32>
    %237 = arith.mulf %111, %190 : vector<8x128xf32>
    %238 = arith.addf %236, %237 : vector<8x128xf32>
    %239 = arith.mulf %113, %197 : vector<8x128xf32>
    %240 = arith.addf %238, %239 : vector<8x128xf32>
    %241 = arith.mulf %109, %169 : vector<8x128xf32>
    %242 = arith.mulf %111, %191 : vector<8x128xf32>
    %243 = arith.addf %241, %242 : vector<8x128xf32>
    %244 = arith.mulf %113, %200 : vector<8x128xf32>
    %245 = arith.addf %243, %244 : vector<8x128xf32>
    %c9_117 = arith.constant 9 : index
    %c0_118 = arith.constant 0 : index
    %c0_119 = arith.constant 0 : index
    %246 = vector.load %arg4[%c9_117, %c0_118, %c0_119] : memref<171x8x128xf32, #tpu.memory_space<vmem>>, vector<1x8x128xf32>
    %247 = vector.shape_cast %246 : vector<1x8x128xf32> to vector<8x128xf32>
    %248 = vector.shape_cast %205 : vector<8x128xf32> to vector<1x8x128xf32>
    tpu.vector_store %arg4[%c9_117, %c0_118, %c0_119], %248 {strides = array<i32>} : memref<171x8x128xf32, #tpu.memory_space<vmem>>, vector<1x8x128xf32>,
    %c10_120 = arith.constant 10 : index
    %c0_121 = arith.constant 0 : index
    %c0_122 = arith.constant 0 : index
    %249 = vector.load %arg4[%c10_120, %c0_121, %c0_122] : memref<171x8x128xf32, #tpu.memory_space<vmem>>, vector<1x8x128xf32>
    %250 = vector.shape_cast %249 : vector<1x8x128xf32> to vector<8x128xf32>
    %251 = vector.shape_cast %210 : vector<8x128xf32> to vector<1x8x128xf32>
    tpu.vector_store %arg4[%c10_120, %c0_121, %c0_122], %251 {strides = array<i32>} : memref<171x8x128xf32, #tpu.memory_space<vmem>>, vector<1x8x128xf32>,
    %c11_123 = arith.constant 11 : index
    %c0_124 = arith.constant 0 : index
    %c0_125 = arith.constant 0 : index
    %252 = vector.load %arg4[%c11_123, %c0_124, %c0_125] : memref<171x8x128xf32, #tpu.memory_space<vmem>>, vector<1x8x128xf32>
    %253 = vector.shape_cast %252 : vector<1x8x128xf32> to vector<8x128xf32>
    %254 = vector.shape_cast %215 : vector<8x128xf32> to vector<1x8x128xf32>
    tpu.vector_store %arg4[%c11_123, %c0_124, %c0_125], %254 {strides = array<i32>} : memref<171x8x128xf32, #tpu.memory_space<vmem>>, vector<1x8x128xf32>,
    %c12 = arith.constant 12 : index
    %c0_126 = arith.constant 0 : index
    %c0_127 = arith.constant 0 : index
    %255 = vector.load %arg4[%c12, %c0_126, %c0_127] : memref<171x8x128xf32, #tpu.memory_space<vmem>>, vector<1x8x128xf32>
    %256 = vector.shape_cast %255 : vector<1x8x128xf32> to vector<8x128xf32>
    %257 = vector.shape_cast %220 : vector<8x128xf32> to vector<1x8x128xf32>
    tpu.vector_store %arg4[%c12, %c0_126, %c0_127], %257 {strides = array<i32>} : memref<171x8x128xf32, #tpu.memory_space<vmem>>, vector<1x8x128xf32>,
    %c13 = arith.constant 13 : index
    %c0_128 = arith.constant 0 : index
    %c0_129 = arith.constant 0 : index
    %258 = vector.load %arg4[%c13, %c0_128, %c0_129] : memref<171x8x128xf32, #tpu.memory_space<vmem>>, vector<1x8x128xf32>
    %259 = vector.shape_cast %258 : vector<1x8x128xf32> to vector<8x128xf32>
    %260 = vector.shape_cast %225 : vector<8x128xf32> to vector<1x8x128xf32>
    tpu.vector_store %arg4[%c13, %c0_128, %c0_129], %260 {strides = array<i32>} : memref<171x8x128xf32, #tpu.memory_space<vmem>>, vector<1x8x128xf32>,
    %c14 = arith.constant 14 : index
    %c0_130 = arith.constant 0 : index
    %c0_131 = arith.constant 0 : index
    %261 = vector.load %arg4[%c14, %c0_130, %c0_131] : memref<171x8x128xf32, #tpu.memory_space<vmem>>, vector<1x8x128xf32>
    %262 = vector.shape_cast %261 : vector<1x8x128xf32> to vector<8x128xf32>
    %263 = vector.shape_cast %230 : vector<8x128xf32> to vector<1x8x128xf32>
    tpu.vector_store %arg4[%c14, %c0_130, %c0_131], %263 {strides = array<i32>} : memref<171x8x128xf32, #tpu.memory_space<vmem>>, vector<1x8x128xf32>,
    %c15 = arith.constant 15 : index
    %c0_132 = arith.constant 0 : index
    %c0_133 = arith.constant 0 : index
    %264 = vector.load %arg4[%c15, %c0_132, %c0_133] : memref<171x8x128xf32, #tpu.memory_space<vmem>>, vector<1x8x128xf32>
    %265 = vector.shape_cast %264 : vector<1x8x128xf32> to vector<8x128xf32>
    %266 = vector.shape_cast %235 : vector<8x128xf32> to vector<1x8x128xf32>
    tpu.vector_store %arg4[%c15, %c0_132, %c0_133], %266 {strides = array<i32>} : memref<171x8x128xf32, #tpu.memory_space<vmem>>, vector<1x8x128xf32>,
    %c16 = arith.constant 16 : index
    %c0_134 = arith.constant 0 : index
    %c0_135 = arith.constant 0 : index
    %267 = vector.load %arg4[%c16, %c0_134, %c0_135] : memref<171x8x128xf32, #tpu.memory_space<vmem>>, vector<1x8x128xf32>
    %268 = vector.shape_cast %267 : vector<1x8x128xf32> to vector<8x128xf32>
    %269 = vector.shape_cast %240 : vector<8x128xf32> to vector<1x8x128xf32>
    tpu.vector_store %arg4[%c16, %c0_134, %c0_135], %269 {strides = array<i32>} : memref<171x8x128xf32, #tpu.memory_space<vmem>>, vector<1x8x128xf32>,
    %c17 = arith.constant 17 : index
    %c0_136 = arith.constant 0 : index
    %c0_137 = arith.constant 0 : index
    %270 = vector.load %arg4[%c17, %c0_136, %c0_137] : memref<171x8x128xf32, #tpu.memory_space<vmem>>, vector<1x8x128xf32>
    %271 = vector.shape_cast %270 : vector<1x8x128xf32> to vector<8x128xf32>
    %272 = vector.shape_cast %245 : vector<8x128xf32> to vector<1x8x128xf32>
    tpu.vector_store %arg4[%c17, %c0_136, %c0_137], %272 {strides = array<i32>} : memref<171x8x128xf32, #tpu.memory_space<vmem>>, vector<1x8x128xf32>,
    %c6_138 = arith.constant 6 : index
    %c0_139 = arith.constant 0 : index
    %c0_140 = arith.constant 0 : index
    %273 = vector.load %arg2[%c6_138, %c0_139, %c0_140] : memref<72x8x128xf32, #tpu.memory_space<vmem>>, vector<1x8x128xf32>
    %274 = vector.shape_cast %273 : vector<1x8x128xf32> to vector<8x128xf32>
    %c7_141 = arith.constant 7 : index
    %c0_142 = arith.constant 0 : index
    %c0_143 = arith.constant 0 : index
    %275 = vector.load %arg2[%c7_141, %c0_142, %c0_143] : memref<72x8x128xf32, #tpu.memory_space<vmem>>, vector<1x8x128xf32>
    %276 = vector.shape_cast %275 : vector<1x8x128xf32> to vector<8x128xf32>
    %c8_144 = arith.constant 8 : index
    %c0_145 = arith.constant 0 : index
    %c0_146 = arith.constant 0 : index
    %277 = vector.load %arg2[%c8_144, %c0_145, %c0_146] : memref<72x8x128xf32, #tpu.memory_space<vmem>>, vector<1x8x128xf32>
    %278 = vector.shape_cast %277 : vector<1x8x128xf32> to vector<8x128xf32>
    %279 = arith.mulf %97, %274 : vector<8x128xf32>
    %280 = arith.mulf %99, %276 : vector<8x128xf32>
    %281 = arith.addf %279, %280 : vector<8x128xf32>
    %282 = arith.mulf %101, %278 : vector<8x128xf32>
    %283 = arith.addf %281, %282 : vector<8x128xf32>
    %284 = arith.mulf %103, %274 : vector<8x128xf32>
    %285 = arith.mulf %105, %276 : vector<8x128xf32>
    %286 = arith.addf %284, %285 : vector<8x128xf32>
    %287 = arith.mulf %107, %278 : vector<8x128xf32>
    %288 = arith.addf %286, %287 : vector<8x128xf32>
    %289 = arith.mulf %109, %274 : vector<8x128xf32>
    %290 = arith.mulf %111, %276 : vector<8x128xf32>
    %291 = arith.addf %289, %290 : vector<8x128xf32>
    %292 = arith.mulf %113, %278 : vector<8x128xf32>
    %293 = arith.addf %291, %292 : vector<8x128xf32>
    %294 = arith.addf %283, %1 : vector<8x128xf32>
    %295 = arith.addf %288, %3 : vector<8x128xf32>
    %296 = arith.addf %293, %5 : vector<8x128xf32>
    %c6_147 = arith.constant 6 : index
    %c0_148 = arith.constant 0 : index
    %c0_149 = arith.constant 0 : index
    %297 = vector.load %arg3[%c6_147, %c0_148, %c0_149] : memref<72x8x128xf32, #tpu.memory_space<vmem>>, vector<1x8x128xf32>
    %298 = vector.shape_cast %297 : vector<1x8x128xf32> to vector<8x128xf32>
    %299 = vector.shape_cast %294 : vector<8x128xf32> to vector<1x8x128xf32>
    tpu.vector_store %arg3[%c6_147, %c0_148, %c0_149], %299 {strides = array<i32>} : memref<72x8x128xf32, #tpu.memory_space<vmem>>, vector<1x8x128xf32>,
    %c7_150 = arith.constant 7 : index
    %c0_151 = arith.constant 0 : index
    %c0_152 = arith.constant 0 : index
    %300 = vector.load %arg3[%c7_150, %c0_151, %c0_152] : memref<72x8x128xf32, #tpu.memory_space<vmem>>, vector<1x8x128xf32>
    %301 = vector.shape_cast %300 : vector<1x8x128xf32> to vector<8x128xf32>
    %302 = vector.shape_cast %295 : vector<8x128xf32> to vector<1x8x128xf32>
    tpu.vector_store %arg3[%c7_150, %c0_151, %c0_152], %302 {strides = array<i32>} : memref<72x8x128xf32, #tpu.memory_space<vmem>>, vector<1x8x128xf32>,
    %c8_153 = arith.constant 8 : index
    %c0_154 = arith.constant 0 : index
    %c0_155 = arith.constant 0 : index
    %303 = vector.load %arg3[%c8_153, %c0_154, %c0_155] : memref<72x8x128xf32, #tpu.memory_space<vmem>>, vector<1x8x128xf32>
    %304 = vector.shape_cast %303 : vector<1x8x128xf32> to vector<8x128xf32>
    %305 = vector.shape_cast %296 : vector<8x128xf32> to vector<1x8x128xf32>
    tpu.vector_store %arg3[%c8_153, %c0_154, %c0_155], %305 {strides = array<i32>} : memref<72x8x128xf32, #tpu.memory_space<vmem>>, vector<1x8x128xf32>,
    %c12_156 = arith.constant 12 : index
    %c0_157 = arith.constant 0 : index
    %c0_158 = arith.constant 0 : index
    %306 = vector.load %arg1[%c12_156, %c0_157, %c0_158] : memref<144x8x128xf32, #tpu.memory_space<vmem>>, vector<1x8x128xf32>
    %307 = vector.shape_cast %306 : vector<1x8x128xf32> to vector<8x128xf32>
    %c13_159 = arith.constant 13 : index
    %c0_160 = arith.constant 0 : index
    %c0_161 = arith.constant 0 : index
    %308 = vector.load %arg1[%c13_159, %c0_160, %c0_161] : memref<144x8x128xf32, #tpu.memory_space<vmem>>, vector<1x8x128xf32>
    %309 = vector.shape_cast %308 : vector<1x8x128xf32> to vector<8x128xf32>
    %c14_162 = arith.constant 14 : index
    %c0_163 = arith.constant 0 : index
    %c0_164 = arith.constant 0 : index
    %310 = vector.load %arg1[%c14_162, %c0_163, %c0_164] : memref<144x8x128xf32, #tpu.memory_space<vmem>>, vector<1x8x128xf32>
    %311 = vector.shape_cast %310 : vector<1x8x128xf32> to vector<8x128xf32>
    %c15_165 = arith.constant 15 : index
    %c0_166 = arith.constant 0 : index
    %c0_167 = arith.constant 0 : index
    %312 = vector.load %arg1[%c15_165, %c0_166, %c0_167] : memref<144x8x128xf32, #tpu.memory_space<vmem>>, vector<1x8x128xf32>
    %313 = vector.shape_cast %312 : vector<1x8x128xf32> to vector<8x128xf32>
    %c16_168 = arith.constant 16 : index
    %c0_169 = arith.constant 0 : index
    %c0_170 = arith.constant 0 : index
    %314 = vector.load %arg1[%c16_168, %c0_169, %c0_170] : memref<144x8x128xf32, #tpu.memory_space<vmem>>, vector<1x8x128xf32>
    %315 = vector.shape_cast %314 : vector<1x8x128xf32> to vector<8x128xf32>
    %c17_171 = arith.constant 17 : index
    %c0_172 = arith.constant 0 : index
    %c0_173 = arith.constant 0 : index
    %316 = vector.load %arg1[%c17_171, %c0_172, %c0_173] : memref<144x8x128xf32, #tpu.memory_space<vmem>>, vector<1x8x128xf32>
    %317 = vector.shape_cast %316 : vector<1x8x128xf32> to vector<8x128xf32>
    %318 = arith.mulf %307, %307 : vector<8x128xf32>
    %319 = arith.mulf %309, %309 : vector<8x128xf32>
    %320 = arith.addf %318, %319 : vector<8x128xf32>
    %321 = arith.mulf %311, %311 : vector<8x128xf32>
    %322 = arith.addf %320, %321 : vector<8x128xf32>
    %cst_174 = arith.constant 1.000000e-24 : f32
    %323 = vector.broadcast %cst_174 : f32 to vector<8x128xf32>
    %324 = arith.maximumf %322, %323 : vector<8x128xf32>
    %325 = math.rsqrt %324 : vector<8x128xf32>
    %326 = arith.mulf %307, %325 : vector<8x128xf32>
    %327 = arith.mulf %309, %325 : vector<8x128xf32>
    %328 = arith.mulf %311, %325 : vector<8x128xf32>
    %329 = arith.mulf %326, %313 : vector<8x128xf32>
    %330 = arith.mulf %327, %315 : vector<8x128xf32>
    %331 = arith.addf %329, %330 : vector<8x128xf32>
    %332 = arith.mulf %328, %317 : vector<8x128xf32>
    %333 = arith.addf %331, %332 : vector<8x128xf32>
    %334 = arith.mulf %333, %326 : vector<8x128xf32>
    %335 = arith.subf %313, %334 : vector<8x128xf32>
    %336 = arith.mulf %333, %327 : vector<8x128xf32>
    %337 = arith.subf %315, %336 : vector<8x128xf32>
    %338 = arith.mulf %333, %328 : vector<8x128xf32>
    %339 = arith.subf %317, %338 : vector<8x128xf32>
    %340 = arith.mulf %335, %335 : vector<8x128xf32>
    %341 = arith.mulf %337, %337 : vector<8x128xf32>
    %342 = arith.addf %340, %341 : vector<8x128xf32>
    %343 = arith.mulf %339, %339 : vector<8x128xf32>
    %344 = arith.addf %342, %343 : vector<8x128xf32>
    %cst_175 = arith.constant 1.000000e-24 : f32
    %345 = vector.broadcast %cst_175 : f32 to vector<8x128xf32>
    %346 = arith.maximumf %344, %345 : vector<8x128xf32>
    %347 = math.rsqrt %346 : vector<8x128xf32>
    %348 = arith.mulf %335, %347 : vector<8x128xf32>
    %349 = arith.mulf %337, %347 : vector<8x128xf32>
    %350 = arith.mulf %339, %347 : vector<8x128xf32>
    %351 = arith.mulf %327, %350 : vector<8x128xf32>
    %352 = arith.mulf %328, %349 : vector<8x128xf32>
    %353 = arith.subf %351, %352 : vector<8x128xf32>
    %354 = arith.mulf %328, %348 : vector<8x128xf32>
    %355 = arith.mulf %326, %350 : vector<8x128xf32>
    %356 = arith.subf %354, %355 : vector<8x128xf32>
    %357 = arith.mulf %326, %349 : vector<8x128xf32>
    %358 = arith.mulf %327, %348 : vector<8x128xf32>
    %359 = arith.subf %357, %358 : vector<8x128xf32>
    %360 = arith.mulf %97, %326 : vector<8x128xf32>
    %361 = arith.mulf %99, %348 : vector<8x128xf32>
    %362 = arith.addf %360, %361 : vector<8x128xf32>
    %363 = arith.mulf %101, %353 : vector<8x128xf32>
    %364 = arith.addf %362, %363 : vector<8x128xf32>
    %365 = arith.mulf %97, %327 : vector<8x128xf32>
    %366 = arith.mulf %99, %349 : vector<8x128xf32>
    %367 = arith.addf %365, %366 : vector<8x128xf32>
    %368 = arith.mulf %101, %356 : vector<8x128xf32>
    %369 = arith.addf %367, %368 : vector<8x128xf32>
    %370 = arith.mulf %97, %328 : vector<8x128xf32>
    %371 = arith.mulf %99, %350 : vector<8x128xf32>
    %372 = arith.addf %370, %371 : vector<8x128xf32>
    %373 = arith.mulf %101, %359 : vector<8x128xf32>
    %374 = arith.addf %372, %373 : vector<8x128xf32>
    %375 = arith.mulf %103, %326 : vector<8x128xf32>
    %376 = arith.mulf %105, %348 : vector<8x128xf32>
    %377 = arith.addf %375, %376 : vector<8x128xf32>
    %378 = arith.mulf %107, %353 : vector<8x128xf32>
    %379 = arith.addf %377, %378 : vector<8x128xf32>
    %380 = arith.mulf %103, %327 : vector<8x128xf32>
    %381 = arith.mulf %105, %349 : vector<8x128xf32>
    %382 = arith.addf %380, %381 : vector<8x128xf32>
    %383 = arith.mulf %107, %356 : vector<8x128xf32>
    %384 = arith.addf %382, %383 : vector<8x128xf32>
    %385 = arith.mulf %103, %328 : vector<8x128xf32>
    %386 = arith.mulf %105, %350 : vector<8x128xf32>
    %387 = arith.addf %385, %386 : vector<8x128xf32>
    %388 = arith.mulf %107, %359 : vector<8x128xf32>
    %389 = arith.addf %387, %388 : vector<8x128xf32>
    %390 = arith.mulf %109, %326 : vector<8x128xf32>
    %391 = arith.mulf %111, %348 : vector<8x128xf32>
    %392 = arith.addf %390, %391 : vector<8x128xf32>
    %393 = arith.mulf %113, %353 : vector<8x128xf32>
    %394 = arith.addf %392, %393 : vector<8x128xf32>
    %395 = arith.mulf %109, %327 : vector<8x128xf32>
    %396 = arith.mulf %111, %349 : vector<8x128xf32>
    %397 = arith.addf %395, %396 : vector<8x128xf32>
    %398 = arith.mulf %113, %356 : vector<8x128xf32>
    %399 = arith.addf %397, %398 : vector<8x128xf32>
    %400 = arith.mulf %109, %328 : vector<8x128xf32>
    %401 = arith.mulf %111, %350 : vector<8x128xf32>
    %402 = arith.addf %400, %401 : vector<8x128xf32>
    %403 = arith.mulf %113, %359 : vector<8x128xf32>
    %404 = arith.addf %402, %403 : vector<8x128xf32>
    %c18 = arith.constant 18 : index
    %c0_176 = arith.constant 0 : index
    %c0_177 = arith.constant 0 : index
    %405 = vector.load %arg4[%c18, %c0_176, %c0_177] : memref<171x8x128xf32, #tpu.memory_space<vmem>>, vector<1x8x128xf32>
    %406 = vector.shape_cast %405 : vector<1x8x128xf32> to vector<8x128xf32>
    %407 = vector.shape_cast %364 : vector<8x128xf32> to vector<1x8x128xf32>
    tpu.vector_store %arg4[%c18, %c0_176, %c0_177], %407 {strides = array<i32>} : memref<171x8x128xf32, #tpu.memory_space<vmem>>, vector<1x8x128xf32>,
    %c19 = arith.constant 19 : index
    %c0_178 = arith.constant 0 : index
    %c0_179 = arith.constant 0 : index
    %408 = vector.load %arg4[%c19, %c0_178, %c0_179] : memref<171x8x128xf32, #tpu.memory_space<vmem>>, vector<1x8x128xf32>
    %409 = vector.shape_cast %408 : vector<1x8x128xf32> to vector<8x128xf32>
    %410 = vector.shape_cast %369 : vector<8x128xf32> to vector<1x8x128xf32>
    tpu.vector_store %arg4[%c19, %c0_178, %c0_179], %410 {strides = array<i32>} : memref<171x8x128xf32, #tpu.memory_space<vmem>>, vector<1x8x128xf32>,
    %c20 = arith.constant 20 : index
    %c0_180 = arith.constant 0 : index
    %c0_181 = arith.constant 0 : index
    %411 = vector.load %arg4[%c20, %c0_180, %c0_181] : memref<171x8x128xf32, #tpu.memory_space<vmem>>, vector<1x8x128xf32>
    %412 = vector.shape_cast %411 : vector<1x8x128xf32> to vector<8x128xf32>
    %413 = vector.shape_cast %374 : vector<8x128xf32> to vector<1x8x128xf32>
    tpu.vector_store %arg4[%c20, %c0_180, %c0_181], %413 {strides = array<i32>} : memref<171x8x128xf32, #tpu.memory_space<vmem>>, vector<1x8x128xf32>,
    %c21 = arith.constant 21 : index
    %c0_182 = arith.constant 0 : index
    %c0_183 = arith.constant 0 : index
    %414 = vector.load %arg4[%c21, %c0_182, %c0_183] : memref<171x8x128xf32, #tpu.memory_space<vmem>>, vector<1x8x128xf32>
    %415 = vector.shape_cast %414 : vector<1x8x128xf32> to vector<8x128xf32>
    %416 = vector.shape_cast %379 : vector<8x128xf32> to vector<1x8x128xf32>
    tpu.vector_store %arg4[%c21, %c0_182, %c0_183], %416 {strides = array<i32>} : memref<171x8x128xf32, #tpu.memory_space<vmem>>, vector<1x8x128xf32>,
    %c22 = arith.constant 22 : index
    %c0_184 = arith.constant 0 : index
    %c0_185 = arith.constant 0 : index
    %417 = vector.load %arg4[%c22, %c0_184, %c0_185] : memref<171x8x128xf32, #tpu.memory_space<vmem>>, vector<1x8x128xf32>
    %418 = vector.shape_cast %417 : vector<1x8x128xf32> to vector<8x128xf32>
    %419 = vector.shape_cast %384 : vector<8x128xf32> to vector<1x8x128xf32>
    tpu.vector_store %arg4[%c22, %c0_184, %c0_185], %419 {strides = array<i32>} : memref<171x8x128xf32, #tpu.memory_space<vmem>>, vector<1x8x128xf32>,
    %c23 = arith.constant 23 : index
    %c0_186 = arith.constant 0 : index
    %c0_187 = arith.constant 0 : index
    %420 = vector.load %arg4[%c23, %c0_186, %c0_187] : memref<171x8x128xf32, #tpu.memory_space<vmem>>, vector<1x8x128xf32>
    %421 = vector.shape_cast %420 : vector<1x8x128xf32> to vector<8x128xf32>
    %422 = vector.shape_cast %389 : vector<8x128xf32> to vector<1x8x128xf32>
    tpu.vector_store %arg4[%c23, %c0_186, %c0_187], %422 {strides = array<i32>} : memref<171x8x128xf32, #tpu.memory_space<vmem>>, vector<1x8x128xf32>,
    %c24 = arith.constant 24 : index
    %c0_188 = arith.constant 0 : index
    %c0_189 = arith.constant 0 : index
    %423 = vector.load %arg4[%c24, %c0_188, %c0_189] : memref<171x8x128xf32, #tpu.memory_space<vmem>>, vector<1x8x128xf32>
    %424 = vector.shape_cast %423 : vector<1x8x128xf32> to vector<8x128xf32>
    %425 = vector.shape_cast %394 : vector<8x128xf32> to vector<1x8x128xf32>
    tpu.vector_store %arg4[%c24, %c0_188, %c0_189], %425 {strides = array<i32>} : memref<171x8x128xf32, #tpu.memory_space<vmem>>, vector<1x8x128xf32>,
    %c25 = arith.constant 25 : index
    %c0_190 = arith.constant 0 : index
    %c0_191 = arith.constant 0 : index
    %426 = vector.load %arg4[%c25, %c0_190, %c0_191] : memref<171x8x128xf32, #tpu.memory_space<vmem>>, vector<1x8x128xf32>
    %427 = vector.shape_cast %426 : vector<1x8x128xf32> to vector<8x128xf32>
    %428 = vector.shape_cast %399 : vector<8x128xf32> to vector<1x8x128xf32>
    tpu.vector_store %arg4[%c25, %c0_190, %c0_191], %428 {strides = array<i32>} : memref<171x8x128xf32, #tpu.memory_space<vmem>>, vector<1x8x128xf32>,
    %c26 = arith.constant 26 : index
    %c0_192 = arith.constant 0 : index
    %c0_193 = arith.constant 0 : index
    %429 = vector.load %arg4[%c26, %c0_192, %c0_193] : memref<171x8x128xf32, #tpu.memory_space<vmem>>, vector<1x8x128xf32>
    %430 = vector.shape_cast %429 : vector<1x8x128xf32> to vector<8x128xf32>
    %431 = vector.shape_cast %404 : vector<8x128xf32> to vector<1x8x128xf32>
    tpu.vector_store %arg4[%c26, %c0_192, %c0_193], %431 {strides = array<i32>} : memref<171x8x128xf32, #tpu.memory_space<vmem>>, vector<1x8x128xf32>,
    %c9_194 = arith.constant 9 : index
    %c0_195 = arith.constant 0 : index
    %c0_196 = arith.constant 0 : index
    %432 = vector.load %arg2[%c9_194, %c0_195, %c0_196] : memref<72x8x128xf32, #tpu.memory_space<vmem>>, vector<1x8x128xf32>
    %433 = vector.shape_cast %432 : vector<1x8x128xf32> to vector<8x128xf32>
    %c10_197 = arith.constant 10 : index
    %c0_198 = arith.constant 0 : index
    %c0_199 = arith.constant 0 : index
    %434 = vector.load %arg2[%c10_197, %c0_198, %c0_199] : memref<72x8x128xf32, #tpu.memory_space<vmem>>, vector<1x8x128xf32>
    %435 = vector.shape_cast %434 : vector<1x8x128xf32> to vector<8x128xf32>
    %c11_200 = arith.constant 11 : index
    %c0_201 = arith.constant 0 : index
    %c0_202 = arith.constant 0 : index
    %436 = vector.load %arg2[%c11_200, %c0_201, %c0_202] : memref<72x8x128xf32, #tpu.memory_space<vmem>>, vector<1x8x128xf32>
    %437 = vector.shape_cast %436 : vector<1x8x128xf32> to vector<8x128xf32>
    %438 = arith.mulf %97, %433 : vector<8x128xf32>
    %439 = arith.mulf %99, %435 : vector<8x128xf32>
    %440 = arith.addf %438, %439 : vector<8x128xf32>
    %441 = arith.mulf %101, %437 : vector<8x128xf32>
    %442 = arith.addf %440, %441 : vector<8x128xf32>
    %443 = arith.mulf %103, %433 : vector<8x128xf32>
    %444 = arith.mulf %105, %435 : vector<8x128xf32>
    %445 = arith.addf %443, %444 : vector<8x128xf32>
    %446 = arith.mulf %107, %437 : vector<8x128xf32>
    %447 = arith.addf %445, %446 : vector<8x128xf32>
    %448 = arith.mulf %109, %433 : vector<8x128xf32>
    %449 = arith.mulf %111, %435 : vector<8x128xf32>
    %450 = arith.addf %448, %449 : vector<8x128xf32>
    %451 = arith.mulf %113, %437 : vector<8x128xf32>
    %452 = arith.addf %450, %451 : vector<8x128xf32>
    %453 = arith.addf %442, %1 : vector<8x128xf32>
    %454 = arith.addf %447, %3 : vector<8x128xf32>
    %455 = arith.addf %452, %5 : vector<8x128xf32>
    %c9_203 = arith.constant 9 : index
    %c0_204 = arith.constant 0 : index
    %c0_205 = arith.constant 0 : index
    %456 = vector.load %arg3[%c9_203, %c0_204, %c0_205] : memref<72x8x128xf32, #tpu.memory_space<vmem>>, vector<1x8x128xf32>
    %457 = vector.shape_cast %456 : vector<1x8x128xf32> to vector<8x128xf32>
    %458 = vector.shape_cast %453 : vector<8x128xf32> to vector<1x8x128xf32>
    tpu.vector_store %arg3[%c9_203, %c0_204, %c0_205], %458 {strides = array<i32>} : memref<72x8x128xf32, #tpu.memory_space<vmem>>, vector<1x8x128xf32>,
    %c10_206 = arith.constant 10 : index
    %c0_207 = arith.constant 0 : index
    %c0_208 = arith.constant 0 : index
    %459 = vector.load %arg3[%c10_206, %c0_207, %c0_208] : memref<72x8x128xf32, #tpu.memory_space<vmem>>, vector<1x8x128xf32>
    %460 = vector.shape_cast %459 : vector<1x8x128xf32> to vector<8x128xf32>
    %461 = vector.shape_cast %454 : vector<8x128xf32> to vector<1x8x128xf32>
    tpu.vector_store %arg3[%c10_206, %c0_207, %c0_208], %461 {strides = array<i32>} : memref<72x8x128xf32, #tpu.memory_space<vmem>>, vector<1x8x128xf32>,
    %c11_209 = arith.constant 11 : index
    %c0_210 = arith.constant 0 : index
    %c0_211 = arith.constant 0 : index
    %462 = vector.load %arg3[%c11_209, %c0_210, %c0_211] : memref<72x8x128xf32, #tpu.memory_space<vmem>>, vector<1x8x128xf32>
    %463 = vector.shape_cast %462 : vector<1x8x128xf32> to vector<8x128xf32>
    %464 = vector.shape_cast %455 : vector<8x128xf32> to vector<1x8x128xf32>
    tpu.vector_store %arg3[%c11_209, %c0_210, %c0_211], %464 {strides = array<i32>} : memref<72x8x128xf32, #tpu.memory_space<vmem>>, vector<1x8x128xf32>,
    %c18_212 = arith.constant 18 : index
    %c0_213 = arith.constant 0 : index
    %c0_214 = arith.constant 0 : index
    %465 = vector.load %arg1[%c18_212, %c0_213, %c0_214] : memref<144x8x128xf32, #tpu.memory_space<vmem>>, vector<1x8x128xf32>
    %466 = vector.shape_cast %465 : vector<1x8x128xf32> to vector<8x128xf32>
    %c19_215 = arith.constant 19 : index
    %c0_216 = arith.constant 0 : index
    %c0_217 = arith.constant 0 : index
    %467 = vector.load %arg1[%c19_215, %c0_216, %c0_217] : memref<144x8x128xf32, #tpu.memory_space<vmem>>, vector<1x8x128xf32>
    %468 = vector.shape_cast %467 : vector<1x8x128xf32> to vector<8x128xf32>
    %c20_218 = arith.constant 20 : index
    %c0_219 = arith.constant 0 : index
    %c0_220 = arith.constant 0 : index
    %469 = vector.load %arg1[%c20_218, %c0_219, %c0_220] : memref<144x8x128xf32, #tpu.memory_space<vmem>>, vector<1x8x128xf32>
    %470 = vector.shape_cast %469 : vector<1x8x128xf32> to vector<8x128xf32>
    %c21_221 = arith.constant 21 : index
    %c0_222 = arith.constant 0 : index
    %c0_223 = arith.constant 0 : index
    %471 = vector.load %arg1[%c21_221, %c0_222, %c0_223] : memref<144x8x128xf32, #tpu.memory_space<vmem>>, vector<1x8x128xf32>
    %472 = vector.shape_cast %471 : vector<1x8x128xf32> to vector<8x128xf32>
    %c22_224 = arith.constant 22 : index
    %c0_225 = arith.constant 0 : index
    %c0_226 = arith.constant 0 : index
    %473 = vector.load %arg1[%c22_224, %c0_225, %c0_226] : memref<144x8x128xf32, #tpu.memory_space<vmem>>, vector<1x8x128xf32>
    %474 = vector.shape_cast %473 : vector<1x8x128xf32> to vector<8x128xf32>
    %c23_227 = arith.constant 23 : index
    %c0_228 = arith.constant 0 : index
    %c0_229 = arith.constant 0 : index
    %475 = vector.load %arg1[%c23_227, %c0_228, %c0_229] : memref<144x8x128xf32, #tpu.memory_space<vmem>>, vector<1x8x128xf32>
    %476 = vector.shape_cast %475 : vector<1x8x128xf32> to vector<8x128xf32>
    %477 = arith.mulf %466, %466 : vector<8x128xf32>
    %478 = arith.mulf %468, %468 : vector<8x128xf32>
    %479 = arith.addf %477, %478 : vector<8x128xf32>
    %480 = arith.mulf %470, %470 : vector<8x128xf32>
    %481 = arith.addf %479, %480 : vector<8x128xf32>
    %cst_230 = arith.constant 1.000000e-24 : f32
    %482 = vector.broadcast %cst_230 : f32 to vector<8x128xf32>
    %483 = arith.maximumf %481, %482 : vector<8x128xf32>
    %484 = math.rsqrt %483 : vector<8x128xf32>
    %485 = arith.mulf %466, %484 : vector<8x128xf32>
    %486 = arith.mulf %468, %484 : vector<8x128xf32>
    %487 = arith.mulf %470, %484 : vector<8x128xf32>
    %488 = arith.mulf %485, %472 : vector<8x128xf32>
    %489 = arith.mulf %486, %474 : vector<8x128xf32>
    %490 = arith.addf %488, %489 : vector<8x128xf32>
    %491 = arith.mulf %487, %476 : vector<8x128xf32>
    %492 = arith.addf %490, %491 : vector<8x128xf32>
    %493 = arith.mulf %492, %485 : vector<8x128xf32>
    %494 = arith.subf %472, %493 : vector<8x128xf32>
    %495 = arith.mulf %492, %486 : vector<8x128xf32>
    %496 = arith.subf %474, %495 : vector<8x128xf32>
    %497 = arith.mulf %492, %487 : vector<8x128xf32>
    %498 = arith.subf %476, %497 : vector<8x128xf32>
    %499 = arith.mulf %494, %494 : vector<8x128xf32>
    %500 = arith.mulf %496, %496 : vector<8x128xf32>
    %501 = arith.addf %499, %500 : vector<8x128xf32>
    %502 = arith.mulf %498, %498 : vector<8x128xf32>
    %503 = arith.addf %501, %502 : vector<8x128xf32>
    %cst_231 = arith.constant 1.000000e-24 : f32
    %504 = vector.broadcast %cst_231 : f32 to vector<8x128xf32>
    %505 = arith.maximumf %503, %504 : vector<8x128xf32>
    %506 = math.rsqrt %505 : vector<8x128xf32>
    %507 = arith.mulf %494, %506 : vector<8x128xf32>
    %508 = arith.mulf %496, %506 : vector<8x128xf32>
    %509 = arith.mulf %498, %506 : vector<8x128xf32>
    %510 = arith.mulf %486, %509 : vector<8x128xf32>
    %511 = arith.mulf %487, %508 : vector<8x128xf32>
    %512 = arith.subf %510, %511 : vector<8x128xf32>
    %513 = arith.mulf %487, %507 : vector<8x128xf32>
    %514 = arith.mulf %485, %509 : vector<8x128xf32>
    %515 = arith.subf %513, %514 : vector<8x128xf32>
    %516 = arith.mulf %485, %508 : vector<8x128xf32>
    %517 = arith.mulf %486, %507 : vector<8x128xf32>
    %518 = arith.subf %516, %517 : vector<8x128xf32>
    %519 = arith.mulf %97, %485 : vector<8x128xf32>
    %520 = arith.mulf %99, %507 : vector<8x128xf32>
    %521 = arith.addf %519, %520 : vector<8x128xf32>
    %522 = arith.mulf %101, %512 : vector<8x128xf32>
    %523 = arith.addf %521, %522 : vector<8x128xf32>
    %524 = arith.mulf %97, %486 : vector<8x128xf32>
    %525 = arith.mulf %99, %508 : vector<8x128xf32>
    %526 = arith.addf %524, %525 : vector<8x128xf32>
    %527 = arith.mulf %101, %515 : vector<8x128xf32>
    %528 = arith.addf %526, %527 : vector<8x128xf32>
    %529 = arith.mulf %97, %487 : vector<8x128xf32>
    %530 = arith.mulf %99, %509 : vector<8x128xf32>
    %531 = arith.addf %529, %530 : vector<8x128xf32>
    %532 = arith.mulf %101, %518 : vector<8x128xf32>
    %533 = arith.addf %531, %532 : vector<8x128xf32>
    %534 = arith.mulf %103, %485 : vector<8x128xf32>
    %535 = arith.mulf %105, %507 : vector<8x128xf32>
    %536 = arith.addf %534, %535 : vector<8x128xf32>
    %537 = arith.mulf %107, %512 : vector<8x128xf32>
    %538 = arith.addf %536, %537 : vector<8x128xf32>
    %539 = arith.mulf %103, %486 : vector<8x128xf32>
    %540 = arith.mulf %105, %508 : vector<8x128xf32>
    %541 = arith.addf %539, %540 : vector<8x128xf32>
    %542 = arith.mulf %107, %515 : vector<8x128xf32>
    %543 = arith.addf %541, %542 : vector<8x128xf32>
    %544 = arith.mulf %103, %487 : vector<8x128xf32>
    %545 = arith.mulf %105, %509 : vector<8x128xf32>
    %546 = arith.addf %544, %545 : vector<8x128xf32>
    %547 = arith.mulf %107, %518 : vector<8x128xf32>
    %548 = arith.addf %546, %547 : vector<8x128xf32>
    %549 = arith.mulf %109, %485 : vector<8x128xf32>
    %550 = arith.mulf %111, %507 : vector<8x128xf32>
    %551 = arith.addf %549, %550 : vector<8x128xf32>
    %552 = arith.mulf %113, %512 : vector<8x128xf32>
    %553 = arith.addf %551, %552 : vector<8x128xf32>
    %554 = arith.mulf %109, %486 : vector<8x128xf32>
    %555 = arith.mulf %111, %508 : vector<8x128xf32>
    %556 = arith.addf %554, %555 : vector<8x128xf32>
    %557 = arith.mulf %113, %515 : vector<8x128xf32>
    %558 = arith.addf %556, %557 : vector<8x128xf32>
    %559 = arith.mulf %109, %487 : vector<8x128xf32>
    %560 = arith.mulf %111, %509 : vector<8x128xf32>
    %561 = arith.addf %559, %560 : vector<8x128xf32>
    %562 = arith.mulf %113, %518 : vector<8x128xf32>
    %563 = arith.addf %561, %562 : vector<8x128xf32>
    %c27 = arith.constant 27 : index
    %c0_232 = arith.constant 0 : index
    %c0_233 = arith.constant 0 : index
    %564 = vector.load %arg4[%c27, %c0_232, %c0_233] : memref<171x8x128xf32, #tpu.memory_space<vmem>>, vector<1x8x128xf32>
    %565 = vector.shape_cast %564 : vector<1x8x128xf32> to vector<8x128xf32>
    %566 = vector.shape_cast %523 : vector<8x128xf32> to vector<1x8x128xf32>
    tpu.vector_store %arg4[%c27, %c0_232, %c0_233], %566 {strides = array<i32>} : memref<171x8x128xf32, #tpu.memory_space<vmem>>, vector<1x8x128xf32>,
    %c28 = arith.constant 28 : index
    %c0_234 = arith.constant 0 : index
    %c0_235 = arith.constant 0 : index
    %567 = vector.load %arg4[%c28, %c0_234, %c0_235] : memref<171x8x128xf32, #tpu.memory_space<vmem>>, vector<1x8x128xf32>
    %568 = vector.shape_cast %567 : vector<1x8x128xf32> to vector<8x128xf32>
    %569 = vector.shape_cast %528 : vector<8x128xf32> to vector<1x8x128xf32>
    tpu.vector_store %arg4[%c28, %c0_234, %c0_235], %569 {strides = array<i32>} : memref<171x8x128xf32, #tpu.memory_space<vmem>>, vector<1x8x128xf32>,
    %c29 = arith.constant 29 : index
    %c0_236 = arith.constant 0 : index
    %c0_237 = arith.constant 0 : index
    %570 = vector.load %arg4[%c29, %c0_236, %c0_237] : memref<171x8x128xf32, #tpu.memory_space<vmem>>, vector<1x8x128xf32>
    %571 = vector.shape_cast %570 : vector<1x8x128xf32> to vector<8x128xf32>
    %572 = vector.shape_cast %533 : vector<8x128xf32> to vector<1x8x128xf32>
    tpu.vector_store %arg4[%c29, %c0_236, %c0_237], %572 {strides = array<i32>} : memref<171x8x128xf32, #tpu.memory_space<vmem>>, vector<1x8x128xf32>,
    %c30 = arith.constant 30 : index
    %c0_238 = arith.constant 0 : index
    %c0_239 = arith.constant 0 : index
    %573 = vector.load %arg4[%c30, %c0_238, %c0_239] : memref<171x8x128xf32, #tpu.memory_space<vmem>>, vector<1x8x128xf32>
    %574 = vector.shape_cast %573 : vector<1x8x128xf32> to vector<8x128xf32>
    %575 = vector.shape_cast %538 : vector<8x128xf32> to vector<1x8x128xf32>
    tpu.vector_store %arg4[%c30, %c0_238, %c0_239], %575 {strides = array<i32>} : memref<171x8x128xf32, #tpu.memory_space<vmem>>, vector<1x8x128xf32>,
    %c31 = arith.constant 31 : index
    %c0_240 = arith.constant 0 : index
    %c0_241 = arith.constant 0 : index
    %576 = vector.load %arg4[%c31, %c0_240, %c0_241] : memref<171x8x128xf32, #tpu.memory_space<vmem>>, vector<1x8x128xf32>
    %577 = vector.shape_cast %576 : vector<1x8x128xf32> to vector<8x128xf32>
    %578 = vector.shape_cast %543 : vector<8x128xf32> to vector<1x8x128xf32>
    tpu.vector_store %arg4[%c31, %c0_240, %c0_241], %578 {strides = array<i32>} : memref<171x8x128xf32, #tpu.memory_space<vmem>>, vector<1x8x128xf32>,
    %c32 = arith.constant 32 : index
    %c0_242 = arith.constant 0 : index
    %c0_243 = arith.constant 0 : index
    %579 = vector.load %arg4[%c32, %c0_242, %c0_243] : memref<171x8x128xf32, #tpu.memory_space<vmem>>, vector<1x8x128xf32>
    %580 = vector.shape_cast %579 : vector<1x8x128xf32> to vector<8x128xf32>
    %581 = vector.shape_cast %548 : vector<8x128xf32> to vector<1x8x128xf32>
    tpu.vector_store %arg4[%c32, %c0_242, %c0_243], %581 {strides = array<i32>} : memref<171x8x128xf32, #tpu.memory_space<vmem>>, vector<1x8x128xf32>,
    %c33 = arith.constant 33 : index
    %c0_244 = arith.constant 0 : index
    %c0_245 = arith.constant 0 : index
    %582 = vector.load %arg4[%c33, %c0_244, %c0_245] : memref<171x8x128xf32, #tpu.memory_space<vmem>>, vector<1x8x128xf32>
    %583 = vector.shape_cast %582 : vector<1x8x128xf32> to vector<8x128xf32>
    %584 = vector.shape_cast %553 : vector<8x128xf32> to vector<1x8x128xf32>
    tpu.vector_store %arg4[%c33, %c0_244, %c0_245], %584 {strides = array<i32>} : memref<171x8x128xf32, #tpu.memory_space<vmem>>, vector<1x8x128xf32>,
    %c34 = arith.constant 34 : index
    %c0_246 = arith.constant 0 : index
    %c0_247 = arith.constant 0 : index
    %585 = vector.load %arg4[%c34, %c0_246, %c0_247] : memref<171x8x128xf32, #tpu.memory_space<vmem>>, vector<1x8x128xf32>
    %586 = vector.shape_cast %585 : vector<1x8x128xf32> to vector<8x128xf32>
    %587 = vector.shape_cast %558 : vector<8x128xf32> to vector<1x8x128xf32>
    tpu.vector_store %arg4[%c34, %c0_246, %c0_247], %587 {strides = array<i32>} : memref<171x8x128xf32, #tpu.memory_space<vmem>>, vector<1x8x128xf32>,
    %c35 = arith.constant 35 : index
    %c0_248 = arith.constant 0 : index
    %c0_249 = arith.constant 0 : index
    %588 = vector.load %arg4[%c35, %c0_248, %c0_249] : memref<171x8x128xf32, #tpu.memory_space<vmem>>, vector<1x8x128xf32>
    %589 = vector.shape_cast %588 : vector<1x8x128xf32> to vector<8x128xf32>
    %590 = vector.shape_cast %563 : vector<8x128xf32> to vector<1x8x128xf32>
    tpu.vector_store %arg4[%c35, %c0_248, %c0_249], %590 {strides = array<i32>} : memref<171x8x128xf32, #tpu.memory_space<vmem>>, vector<1x8x128xf32>,
    %c9_250 = arith.constant 9 : index
    %c0_251 = arith.constant 0 : index
    %c0_252 = arith.constant 0 : index
    %591 = vector.load %arg4[%c9_250, %c0_251, %c0_252] : memref<171x8x128xf32, #tpu.memory_space<vmem>>, vector<1x8x128xf32>
    %592 = vector.shape_cast %591 : vector<1x8x128xf32> to vector<8x128xf32>
    %c10_253 = arith.constant 10 : index
    %c0_254 = arith.constant 0 : index
    %c0_255 = arith.constant 0 : index
    %593 = vector.load %arg4[%c10_253, %c0_254, %c0_255] : memref<171x8x128xf32, #tpu.memory_space<vmem>>, vector<1x8x128xf32>
    %594 = vector.shape_cast %593 : vector<1x8x128xf32> to vector<8x128xf32>
    %c11_256 = arith.constant 11 : index
    %c0_257 = arith.constant 0 : index
    %c0_258 = arith.constant 0 : index
    %595 = vector.load %arg4[%c11_256, %c0_257, %c0_258] : memref<171x8x128xf32, #tpu.memory_space<vmem>>, vector<1x8x128xf32>
    %596 = vector.shape_cast %595 : vector<1x8x128xf32> to vector<8x128xf32>
    %c12_259 = arith.constant 12 : index
    %c0_260 = arith.constant 0 : index
    %c0_261 = arith.constant 0 : index
    %597 = vector.load %arg4[%c12_259, %c0_260, %c0_261] : memref<171x8x128xf32, #tpu.memory_space<vmem>>, vector<1x8x128xf32>
    %598 = vector.shape_cast %597 : vector<1x8x128xf32> to vector<8x128xf32>
    %c13_262 = arith.constant 13 : index
    %c0_263 = arith.constant 0 : index
    %c0_264 = arith.constant 0 : index
    %599 = vector.load %arg4[%c13_262, %c0_263, %c0_264] : memref<171x8x128xf32, #tpu.memory_space<vmem>>, vector<1x8x128xf32>
    %600 = vector.shape_cast %599 : vector<1x8x128xf32> to vector<8x128xf32>
    %c14_265 = arith.constant 14 : index
    %c0_266 = arith.constant 0 : index
    %c0_267 = arith.constant 0 : index
    %601 = vector.load %arg4[%c14_265, %c0_266, %c0_267] : memref<171x8x128xf32, #tpu.memory_space<vmem>>, vector<1x8x128xf32>
    %602 = vector.shape_cast %601 : vector<1x8x128xf32> to vector<8x128xf32>
    %c15_268 = arith.constant 15 : index
    %c0_269 = arith.constant 0 : index
    %c0_270 = arith.constant 0 : index
    %603 = vector.load %arg4[%c15_268, %c0_269, %c0_270] : memref<171x8x128xf32, #tpu.memory_space<vmem>>, vector<1x8x128xf32>
    %604 = vector.shape_cast %603 : vector<1x8x128xf32> to vector<8x128xf32>
    %c16_271 = arith.constant 16 : index
    %c0_272 = arith.constant 0 : index
    %c0_273 = arith.constant 0 : index
    %605 = vector.load %arg4[%c16_271, %c0_272, %c0_273] : memref<171x8x128xf32, #tpu.memory_space<vmem>>, vector<1x8x128xf32>
    %606 = vector.shape_cast %605 : vector<1x8x128xf32> to vector<8x128xf32>
    %c17_274 = arith.constant 17 : index
    %c0_275 = arith.constant 0 : index
    %c0_276 = arith.constant 0 : index
    %607 = vector.load %arg4[%c17_274, %c0_275, %c0_276] : memref<171x8x128xf32, #tpu.memory_space<vmem>>, vector<1x8x128xf32>
    %608 = vector.shape_cast %607 : vector<1x8x128xf32> to vector<8x128xf32>
    %c12_277 = arith.constant 12 : index
    %c0_278 = arith.constant 0 : index
    %c0_279 = arith.constant 0 : index
    %609 = vector.load %arg2[%c12_277, %c0_278, %c0_279] : memref<72x8x128xf32, #tpu.memory_space<vmem>>, vector<1x8x128xf32>
    %610 = vector.shape_cast %609 : vector<1x8x128xf32> to vector<8x128xf32>
    %c13_280 = arith.constant 13 : index
    %c0_281 = arith.constant 0 : index
    %c0_282 = arith.constant 0 : index
    %611 = vector.load %arg2[%c13_280, %c0_281, %c0_282] : memref<72x8x128xf32, #tpu.memory_space<vmem>>, vector<1x8x128xf32>
    %612 = vector.shape_cast %611 : vector<1x8x128xf32> to vector<8x128xf32>
    %c14_283 = arith.constant 14 : index
    %c0_284 = arith.constant 0 : index
    %c0_285 = arith.constant 0 : index
    %613 = vector.load %arg2[%c14_283, %c0_284, %c0_285] : memref<72x8x128xf32, #tpu.memory_space<vmem>>, vector<1x8x128xf32>
    %614 = vector.shape_cast %613 : vector<1x8x128xf32> to vector<8x128xf32>
    %615 = arith.mulf %592, %610 : vector<8x128xf32>
    %616 = arith.mulf %594, %612 : vector<8x128xf32>
    %617 = arith.addf %615, %616 : vector<8x128xf32>
    %618 = arith.mulf %596, %614 : vector<8x128xf32>
    %619 = arith.addf %617, %618 : vector<8x128xf32>
    %620 = arith.mulf %598, %610 : vector<8x128xf32>
    %621 = arith.mulf %600, %612 : vector<8x128xf32>
    %622 = arith.addf %620, %621 : vector<8x128xf32>
    %623 = arith.mulf %602, %614 : vector<8x128xf32>
    %624 = arith.addf %622, %623 : vector<8x128xf32>
    %625 = arith.mulf %604, %610 : vector<8x128xf32>
    %626 = arith.mulf %606, %612 : vector<8x128xf32>
    %627 = arith.addf %625, %626 : vector<8x128xf32>
    %628 = arith.mulf %608, %614 : vector<8x128xf32>
    %629 = arith.addf %627, %628 : vector<8x128xf32>
    %630 = arith.addf %619, %135 : vector<8x128xf32>
    %631 = arith.addf %624, %136 : vector<8x128xf32>
    %632 = arith.addf %629, %137 : vector<8x128xf32>
    %c12_286 = arith.constant 12 : index
    %c0_287 = arith.constant 0 : index
    %c0_288 = arith.constant 0 : index
    %633 = vector.load %arg3[%c12_286, %c0_287, %c0_288] : memref<72x8x128xf32, #tpu.memory_space<vmem>>, vector<1x8x128xf32>
    %634 = vector.shape_cast %633 : vector<1x8x128xf32> to vector<8x128xf32>
    %635 = vector.shape_cast %630 : vector<8x128xf32> to vector<1x8x128xf32>
    tpu.vector_store %arg3[%c12_286, %c0_287, %c0_288], %635 {strides = array<i32>} : memref<72x8x128xf32, #tpu.memory_space<vmem>>, vector<1x8x128xf32>,
    %c13_289 = arith.constant 13 : index
    %c0_290 = arith.constant 0 : index
    %c0_291 = arith.constant 0 : index
    %636 = vector.load %arg3[%c13_289, %c0_290, %c0_291] : memref<72x8x128xf32, #tpu.memory_space<vmem>>, vector<1x8x128xf32>
    %637 = vector.shape_cast %636 : vector<1x8x128xf32> to vector<8x128xf32>
    %638 = vector.shape_cast %631 : vector<8x128xf32> to vector<1x8x128xf32>
    tpu.vector_store %arg3[%c13_289, %c0_290, %c0_291], %638 {strides = array<i32>} : memref<72x8x128xf32, #tpu.memory_space<vmem>>, vector<1x8x128xf32>,
    %c14_292 = arith.constant 14 : index
    %c0_293 = arith.constant 0 : index
    %c0_294 = arith.constant 0 : index
    %639 = vector.load %arg3[%c14_292, %c0_293, %c0_294] : memref<72x8x128xf32, #tpu.memory_space<vmem>>, vector<1x8x128xf32>
    %640 = vector.shape_cast %639 : vector<1x8x128xf32> to vector<8x128xf32>
    %641 = vector.shape_cast %632 : vector<8x128xf32> to vector<1x8x128xf32>
    tpu.vector_store %arg3[%c14_292, %c0_293, %c0_294], %641 {strides = array<i32>} : memref<72x8x128xf32, #tpu.memory_space<vmem>>, vector<1x8x128xf32>,
    %c24_295 = arith.constant 24 : index
    %c0_296 = arith.constant 0 : index
    %c0_297 = arith.constant 0 : index
    %642 = vector.load %arg1[%c24_295, %c0_296, %c0_297] : memref<144x8x128xf32, #tpu.memory_space<vmem>>, vector<1x8x128xf32>
    %643 = vector.shape_cast %642 : vector<1x8x128xf32> to vector<8x128xf32>
    %c25_298 = arith.constant 25 : index
    %c0_299 = arith.constant 0 : index
    %c0_300 = arith.constant 0 : index
    %644 = vector.load %arg1[%c25_298, %c0_299, %c0_300] : memref<144x8x128xf32, #tpu.memory_space<vmem>>, vector<1x8x128xf32>
    %645 = vector.shape_cast %644 : vector<1x8x128xf32> to vector<8x128xf32>
    %c26_301 = arith.constant 26 : index
    %c0_302 = arith.constant 0 : index
    %c0_303 = arith.constant 0 : index
    %646 = vector.load %arg1[%c26_301, %c0_302, %c0_303] : memref<144x8x128xf32, #tpu.memory_space<vmem>>, vector<1x8x128xf32>
    %647 = vector.shape_cast %646 : vector<1x8x128xf32> to vector<8x128xf32>
    %c27_304 = arith.constant 27 : index
    %c0_305 = arith.constant 0 : index
    %c0_306 = arith.constant 0 : index
    %648 = vector.load %arg1[%c27_304, %c0_305, %c0_306] : memref<144x8x128xf32, #tpu.memory_space<vmem>>, vector<1x8x128xf32>
    %649 = vector.shape_cast %648 : vector<1x8x128xf32> to vector<8x128xf32>
    %c28_307 = arith.constant 28 : index
    %c0_308 = arith.constant 0 : index
    %c0_309 = arith.constant 0 : index
    %650 = vector.load %arg1[%c28_307, %c0_308, %c0_309] : memref<144x8x128xf32, #tpu.memory_space<vmem>>, vector<1x8x128xf32>
    %651 = vector.shape_cast %650 : vector<1x8x128xf32> to vector<8x128xf32>
    %c29_310 = arith.constant 29 : index
    %c0_311 = arith.constant 0 : index
    %c0_312 = arith.constant 0 : index
    %652 = vector.load %arg1[%c29_310, %c0_311, %c0_312] : memref<144x8x128xf32, #tpu.memory_space<vmem>>, vector<1x8x128xf32>
    %653 = vector.shape_cast %652 : vector<1x8x128xf32> to vector<8x128xf32>
    %654 = arith.mulf %643, %643 : vector<8x128xf32>
    %655 = arith.mulf %645, %645 : vector<8x128xf32>
    %656 = arith.addf %654, %655 : vector<8x128xf32>
    %657 = arith.mulf %647, %647 : vector<8x128xf32>
    %658 = arith.addf %656, %657 : vector<8x128xf32>
    %cst_313 = arith.constant 1.000000e-24 : f32
    %659 = vector.broadcast %cst_313 : f32 to vector<8x128xf32>
    %660 = arith.maximumf %658, %659 : vector<8x128xf32>
    %661 = math.rsqrt %660 : vector<8x128xf32>
    %662 = arith.mulf %643, %661 : vector<8x128xf32>
    %663 = arith.mulf %645, %661 : vector<8x128xf32>
    %664 = arith.mulf %647, %661 : vector<8x128xf32>
    %665 = arith.mulf %662, %649 : vector<8x128xf32>
    %666 = arith.mulf %663, %651 : vector<8x128xf32>
    %667 = arith.addf %665, %666 : vector<8x128xf32>
    %668 = arith.mulf %664, %653 : vector<8x128xf32>
    %669 = arith.addf %667, %668 : vector<8x128xf32>
    %670 = arith.mulf %669, %662 : vector<8x128xf32>
    %671 = arith.subf %649, %670 : vector<8x128xf32>
    %672 = arith.mulf %669, %663 : vector<8x128xf32>
    %673 = arith.subf %651, %672 : vector<8x128xf32>
    %674 = arith.mulf %669, %664 : vector<8x128xf32>
    %675 = arith.subf %653, %674 : vector<8x128xf32>
    %676 = arith.mulf %671, %671 : vector<8x128xf32>
    %677 = arith.mulf %673, %673 : vector<8x128xf32>
    %678 = arith.addf %676, %677 : vector<8x128xf32>
    %679 = arith.mulf %675, %675 : vector<8x128xf32>
    %680 = arith.addf %678, %679 : vector<8x128xf32>
    %cst_314 = arith.constant 1.000000e-24 : f32
    %681 = vector.broadcast %cst_314 : f32 to vector<8x128xf32>
    %682 = arith.maximumf %680, %681 : vector<8x128xf32>
    %683 = math.rsqrt %682 : vector<8x128xf32>
    %684 = arith.mulf %671, %683 : vector<8x128xf32>
    %685 = arith.mulf %673, %683 : vector<8x128xf32>
    %686 = arith.mulf %675, %683 : vector<8x128xf32>
    %687 = arith.mulf %663, %686 : vector<8x128xf32>
    %688 = arith.mulf %664, %685 : vector<8x128xf32>
    %689 = arith.subf %687, %688 : vector<8x128xf32>
    %690 = arith.mulf %664, %684 : vector<8x128xf32>
    %691 = arith.mulf %662, %686 : vector<8x128xf32>
    %692 = arith.subf %690, %691 : vector<8x128xf32>
    %693 = arith.mulf %662, %685 : vector<8x128xf32>
    %694 = arith.mulf %663, %684 : vector<8x128xf32>
    %695 = arith.subf %693, %694 : vector<8x128xf32>
    %696 = arith.mulf %592, %662 : vector<8x128xf32>
    %697 = arith.mulf %594, %684 : vector<8x128xf32>
    %698 = arith.addf %696, %697 : vector<8x128xf32>
    %699 = arith.mulf %596, %689 : vector<8x128xf32>
    %700 = arith.addf %698, %699 : vector<8x128xf32>
    %701 = arith.mulf %592, %663 : vector<8x128xf32>
    %702 = arith.mulf %594, %685 : vector<8x128xf32>
    %703 = arith.addf %701, %702 : vector<8x128xf32>
    %704 = arith.mulf %596, %692 : vector<8x128xf32>
    %705 = arith.addf %703, %704 : vector<8x128xf32>
    %706 = arith.mulf %592, %664 : vector<8x128xf32>
    %707 = arith.mulf %594, %686 : vector<8x128xf32>
    %708 = arith.addf %706, %707 : vector<8x128xf32>
    %709 = arith.mulf %596, %695 : vector<8x128xf32>
    %710 = arith.addf %708, %709 : vector<8x128xf32>
    %711 = arith.mulf %598, %662 : vector<8x128xf32>
    %712 = arith.mulf %600, %684 : vector<8x128xf32>
    %713 = arith.addf %711, %712 : vector<8x128xf32>
    %714 = arith.mulf %602, %689 : vector<8x128xf32>
    %715 = arith.addf %713, %714 : vector<8x128xf32>
    %716 = arith.mulf %598, %663 : vector<8x128xf32>
    %717 = arith.mulf %600, %685 : vector<8x128xf32>
    %718 = arith.addf %716, %717 : vector<8x128xf32>
    %719 = arith.mulf %602, %692 : vector<8x128xf32>
    %720 = arith.addf %718, %719 : vector<8x128xf32>
    %721 = arith.mulf %598, %664 : vector<8x128xf32>
    %722 = arith.mulf %600, %686 : vector<8x128xf32>
    %723 = arith.addf %721, %722 : vector<8x128xf32>
    %724 = arith.mulf %602, %695 : vector<8x128xf32>
    %725 = arith.addf %723, %724 : vector<8x128xf32>
    %726 = arith.mulf %604, %662 : vector<8x128xf32>
    %727 = arith.mulf %606, %684 : vector<8x128xf32>
    %728 = arith.addf %726, %727 : vector<8x128xf32>
    %729 = arith.mulf %608, %689 : vector<8x128xf32>
    %730 = arith.addf %728, %729 : vector<8x128xf32>
    %731 = arith.mulf %604, %663 : vector<8x128xf32>
    %732 = arith.mulf %606, %685 : vector<8x128xf32>
    %733 = arith.addf %731, %732 : vector<8x128xf32>
    %734 = arith.mulf %608, %692 : vector<8x128xf32>
    %735 = arith.addf %733, %734 : vector<8x128xf32>
    %736 = arith.mulf %604, %664 : vector<8x128xf32>
    %737 = arith.mulf %606, %686 : vector<8x128xf32>
    %738 = arith.addf %736, %737 : vector<8x128xf32>
    %739 = arith.mulf %608, %695 : vector<8x128xf32>
    %740 = arith.addf %738, %739 : vector<8x128xf32>
    %c36 = arith.constant 36 : index
    %c0_315 = arith.constant 0 : index
    %c0_316 = arith.constant 0 : index
    %741 = vector.load %arg4[%c36, %c0_315, %c0_316] : memref<171x8x128xf32, #tpu.memory_space<vmem>>, vector<1x8x128xf32>
    %742 = vector.shape_cast %741 : vector<1x8x128xf32> to vector<8x128xf32>
    %743 = vector.shape_cast %700 : vector<8x128xf32> to vector<1x8x128xf32>
    tpu.vector_store %arg4[%c36, %c0_315, %c0_316], %743 {strides = array<i32>} : memref<171x8x128xf32, #tpu.memory_space<vmem>>, vector<1x8x128xf32>,
    %c37 = arith.constant 37 : index
    %c0_317 = arith.constant 0 : index
    %c0_318 = arith.constant 0 : index
    %744 = vector.load %arg4[%c37, %c0_317, %c0_318] : memref<171x8x128xf32, #tpu.memory_space<vmem>>, vector<1x8x128xf32>
    %745 = vector.shape_cast %744 : vector<1x8x128xf32> to vector<8x128xf32>
    %746 = vector.shape_cast %705 : vector<8x128xf32> to vector<1x8x128xf32>
    tpu.vector_store %arg4[%c37, %c0_317, %c0_318], %746 {strides = array<i32>} : memref<171x8x128xf32, #tpu.memory_space<vmem>>, vector<1x8x128xf32>,
    %c38 = arith.constant 38 : index
    %c0_319 = arith.constant 0 : index
    %c0_320 = arith.constant 0 : index
    %747 = vector.load %arg4[%c38, %c0_319, %c0_320] : memref<171x8x128xf32, #tpu.memory_space<vmem>>, vector<1x8x128xf32>
    %748 = vector.shape_cast %747 : vector<1x8x128xf32> to vector<8x128xf32>
    %749 = vector.shape_cast %710 : vector<8x128xf32> to vector<1x8x128xf32>
    tpu.vector_store %arg4[%c38, %c0_319, %c0_320], %749 {strides = array<i32>} : memref<171x8x128xf32, #tpu.memory_space<vmem>>, vector<1x8x128xf32>,
    %c39 = arith.constant 39 : index
    %c0_321 = arith.constant 0 : index
    %c0_322 = arith.constant 0 : index
    %750 = vector.load %arg4[%c39, %c0_321, %c0_322] : memref<171x8x128xf32, #tpu.memory_space<vmem>>, vector<1x8x128xf32>
    %751 = vector.shape_cast %750 : vector<1x8x128xf32> to vector<8x128xf32>
    %752 = vector.shape_cast %715 : vector<8x128xf32> to vector<1x8x128xf32>
    tpu.vector_store %arg4[%c39, %c0_321, %c0_322], %752 {strides = array<i32>} : memref<171x8x128xf32, #tpu.memory_space<vmem>>, vector<1x8x128xf32>,
    %c40 = arith.constant 40 : index
    %c0_323 = arith.constant 0 : index
    %c0_324 = arith.constant 0 : index
    %753 = vector.load %arg4[%c40, %c0_323, %c0_324] : memref<171x8x128xf32, #tpu.memory_space<vmem>>, vector<1x8x128xf32>
    %754 = vector.shape_cast %753 : vector<1x8x128xf32> to vector<8x128xf32>
    %755 = vector.shape_cast %720 : vector<8x128xf32> to vector<1x8x128xf32>
    tpu.vector_store %arg4[%c40, %c0_323, %c0_324], %755 {strides = array<i32>} : memref<171x8x128xf32, #tpu.memory_space<vmem>>, vector<1x8x128xf32>,
    %c41 = arith.constant 41 : index
    %c0_325 = arith.constant 0 : index
    %c0_326 = arith.constant 0 : index
    %756 = vector.load %arg4[%c41, %c0_325, %c0_326] : memref<171x8x128xf32, #tpu.memory_space<vmem>>, vector<1x8x128xf32>
    %757 = vector.shape_cast %756 : vector<1x8x128xf32> to vector<8x128xf32>
    %758 = vector.shape_cast %725 : vector<8x128xf32> to vector<1x8x128xf32>
    tpu.vector_store %arg4[%c41, %c0_325, %c0_326], %758 {strides = array<i32>} : memref<171x8x128xf32, #tpu.memory_space<vmem>>, vector<1x8x128xf32>,
    %c42 = arith.constant 42 : index
    %c0_327 = arith.constant 0 : index
    %c0_328 = arith.constant 0 : index
    %759 = vector.load %arg4[%c42, %c0_327, %c0_328] : memref<171x8x128xf32, #tpu.memory_space<vmem>>, vector<1x8x128xf32>
    %760 = vector.shape_cast %759 : vector<1x8x128xf32> to vector<8x128xf32>
    %761 = vector.shape_cast %730 : vector<8x128xf32> to vector<1x8x128xf32>
    tpu.vector_store %arg4[%c42, %c0_327, %c0_328], %761 {strides = array<i32>} : memref<171x8x128xf32, #tpu.memory_space<vmem>>, vector<1x8x128xf32>,
    %c43 = arith.constant 43 : index
    %c0_329 = arith.constant 0 : index
    %c0_330 = arith.constant 0 : index
    %762 = vector.load %arg4[%c43, %c0_329, %c0_330] : memref<171x8x128xf32, #tpu.memory_space<vmem>>, vector<1x8x128xf32>
    %763 = vector.shape_cast %762 : vector<1x8x128xf32> to vector<8x128xf32>
    %764 = vector.shape_cast %735 : vector<8x128xf32> to vector<1x8x128xf32>
    tpu.vector_store %arg4[%c43, %c0_329, %c0_330], %764 {strides = array<i32>} : memref<171x8x128xf32, #tpu.memory_space<vmem>>, vector<1x8x128xf32>,
    %c44 = arith.constant 44 : index
    %c0_331 = arith.constant 0 : index
    %c0_332 = arith.constant 0 : index
    %765 = vector.load %arg4[%c44, %c0_331, %c0_332] : memref<171x8x128xf32, #tpu.memory_space<vmem>>, vector<1x8x128xf32>
    %766 = vector.shape_cast %765 : vector<1x8x128xf32> to vector<8x128xf32>
    %767 = vector.shape_cast %740 : vector<8x128xf32> to vector<1x8x128xf32>
    tpu.vector_store %arg4[%c44, %c0_331, %c0_332], %767 {strides = array<i32>} : memref<171x8x128xf32, #tpu.memory_space<vmem>>, vector<1x8x128xf32>,
    %c18_333 = arith.constant 18 : index
    %c0_334 = arith.constant 0 : index
    %c0_335 = arith.constant 0 : index
    %768 = vector.load %arg4[%c18_333, %c0_334, %c0_335] : memref<171x8x128xf32, #tpu.memory_space<vmem>>, vector<1x8x128xf32>
    %769 = vector.shape_cast %768 : vector<1x8x128xf32> to vector<8x128xf32>
    %c19_336 = arith.constant 19 : index
    %c0_337 = arith.constant 0 : index
    %c0_338 = arith.constant 0 : index
    %770 = vector.load %arg4[%c19_336, %c0_337, %c0_338] : memref<171x8x128xf32, #tpu.memory_space<vmem>>, vector<1x8x128xf32>
    %771 = vector.shape_cast %770 : vector<1x8x128xf32> to vector<8x128xf32>
    %c20_339 = arith.constant 20 : index
    %c0_340 = arith.constant 0 : index
    %c0_341 = arith.constant 0 : index
    %772 = vector.load %arg4[%c20_339, %c0_340, %c0_341] : memref<171x8x128xf32, #tpu.memory_space<vmem>>, vector<1x8x128xf32>
    %773 = vector.shape_cast %772 : vector<1x8x128xf32> to vector<8x128xf32>
    %c21_342 = arith.constant 21 : index
    %c0_343 = arith.constant 0 : index
    %c0_344 = arith.constant 0 : index
    %774 = vector.load %arg4[%c21_342, %c0_343, %c0_344] : memref<171x8x128xf32, #tpu.memory_space<vmem>>, vector<1x8x128xf32>
    %775 = vector.shape_cast %774 : vector<1x8x128xf32> to vector<8x128xf32>
    %c22_345 = arith.constant 22 : index
    %c0_346 = arith.constant 0 : index
    %c0_347 = arith.constant 0 : index
    %776 = vector.load %arg4[%c22_345, %c0_346, %c0_347] : memref<171x8x128xf32, #tpu.memory_space<vmem>>, vector<1x8x128xf32>
    %777 = vector.shape_cast %776 : vector<1x8x128xf32> to vector<8x128xf32>
    %c23_348 = arith.constant 23 : index
    %c0_349 = arith.constant 0 : index
    %c0_350 = arith.constant 0 : index
    %778 = vector.load %arg4[%c23_348, %c0_349, %c0_350] : memref<171x8x128xf32, #tpu.memory_space<vmem>>, vector<1x8x128xf32>
    %779 = vector.shape_cast %778 : vector<1x8x128xf32> to vector<8x128xf32>
    %c24_351 = arith.constant 24 : index
    %c0_352 = arith.constant 0 : index
    %c0_353 = arith.constant 0 : index
    %780 = vector.load %arg4[%c24_351, %c0_352, %c0_353] : memref<171x8x128xf32, #tpu.memory_space<vmem>>, vector<1x8x128xf32>
    %781 = vector.shape_cast %780 : vector<1x8x128xf32> to vector<8x128xf32>
    %c25_354 = arith.constant 25 : index
    %c0_355 = arith.constant 0 : index
    %c0_356 = arith.constant 0 : index
    %782 = vector.load %arg4[%c25_354, %c0_355, %c0_356] : memref<171x8x128xf32, #tpu.memory_space<vmem>>, vector<1x8x128xf32>
    %783 = vector.shape_cast %782 : vector<1x8x128xf32> to vector<8x128xf32>
    %c26_357 = arith.constant 26 : index
    %c0_358 = arith.constant 0 : index
    %c0_359 = arith.constant 0 : index
    %784 = vector.load %arg4[%c26_357, %c0_358, %c0_359] : memref<171x8x128xf32, #tpu.memory_space<vmem>>, vector<1x8x128xf32>
    %785 = vector.shape_cast %784 : vector<1x8x128xf32> to vector<8x128xf32>
    %c15_360 = arith.constant 15 : index
    %c0_361 = arith.constant 0 : index
    %c0_362 = arith.constant 0 : index
    %786 = vector.load %arg2[%c15_360, %c0_361, %c0_362] : memref<72x8x128xf32, #tpu.memory_space<vmem>>, vector<1x8x128xf32>
    %787 = vector.shape_cast %786 : vector<1x8x128xf32> to vector<8x128xf32>
    %c16_363 = arith.constant 16 : index
    %c0_364 = arith.constant 0 : index
    %c0_365 = arith.constant 0 : index
    %788 = vector.load %arg2[%c16_363, %c0_364, %c0_365] : memref<72x8x128xf32, #tpu.memory_space<vmem>>, vector<1x8x128xf32>
    %789 = vector.shape_cast %788 : vector<1x8x128xf32> to vector<8x128xf32>
    %c17_366 = arith.constant 17 : index
    %c0_367 = arith.constant 0 : index
    %c0_368 = arith.constant 0 : index
    %790 = vector.load %arg2[%c17_366, %c0_367, %c0_368] : memref<72x8x128xf32, #tpu.memory_space<vmem>>, vector<1x8x128xf32>
    %791 = vector.shape_cast %790 : vector<1x8x128xf32> to vector<8x128xf32>
    %792 = arith.mulf %769, %787 : vector<8x128xf32>
    %793 = arith.mulf %771, %789 : vector<8x128xf32>
    %794 = arith.addf %792, %793 : vector<8x128xf32>
    %795 = arith.mulf %773, %791 : vector<8x128xf32>
    %796 = arith.addf %794, %795 : vector<8x128xf32>
    %797 = arith.mulf %775, %787 : vector<8x128xf32>
    %798 = arith.mulf %777, %789 : vector<8x128xf32>
    %799 = arith.addf %797, %798 : vector<8x128xf32>
    %800 = arith.mulf %779, %791 : vector<8x128xf32>
    %801 = arith.addf %799, %800 : vector<8x128xf32>
    %802 = arith.mulf %781, %787 : vector<8x128xf32>
    %803 = arith.mulf %783, %789 : vector<8x128xf32>
    %804 = arith.addf %802, %803 : vector<8x128xf32>
    %805 = arith.mulf %785, %791 : vector<8x128xf32>
    %806 = arith.addf %804, %805 : vector<8x128xf32>
    %807 = arith.addf %796, %294 : vector<8x128xf32>
    %808 = arith.addf %801, %295 : vector<8x128xf32>
    %809 = arith.addf %806, %296 : vector<8x128xf32>
    %c15_369 = arith.constant 15 : index
    %c0_370 = arith.constant 0 : index
    %c0_371 = arith.constant 0 : index
    %810 = vector.load %arg3[%c15_369, %c0_370, %c0_371] : memref<72x8x128xf32, #tpu.memory_space<vmem>>, vector<1x8x128xf32>
    %811 = vector.shape_cast %810 : vector<1x8x128xf32> to vector<8x128xf32>
    %812 = vector.shape_cast %807 : vector<8x128xf32> to vector<1x8x128xf32>
    tpu.vector_store %arg3[%c15_369, %c0_370, %c0_371], %812 {strides = array<i32>} : memref<72x8x128xf32, #tpu.memory_space<vmem>>, vector<1x8x128xf32>,
    %c16_372 = arith.constant 16 : index
    %c0_373 = arith.constant 0 : index
    %c0_374 = arith.constant 0 : index
    %813 = vector.load %arg3[%c16_372, %c0_373, %c0_374] : memref<72x8x128xf32, #tpu.memory_space<vmem>>, vector<1x8x128xf32>
    %814 = vector.shape_cast %813 : vector<1x8x128xf32> to vector<8x128xf32>
    %815 = vector.shape_cast %808 : vector<8x128xf32> to vector<1x8x128xf32>
    tpu.vector_store %arg3[%c16_372, %c0_373, %c0_374], %815 {strides = array<i32>} : memref<72x8x128xf32, #tpu.memory_space<vmem>>, vector<1x8x128xf32>,
    %c17_375 = arith.constant 17 : index
    %c0_376 = arith.constant 0 : index
    %c0_377 = arith.constant 0 : index
    %816 = vector.load %arg3[%c17_375, %c0_376, %c0_377] : memref<72x8x128xf32, #tpu.memory_space<vmem>>, vector<1x8x128xf32>
    %817 = vector.shape_cast %816 : vector<1x8x128xf32> to vector<8x128xf32>
    %818 = vector.shape_cast %809 : vector<8x128xf32> to vector<1x8x128xf32>
    tpu.vector_store %arg3[%c17_375, %c0_376, %c0_377], %818 {strides = array<i32>} : memref<72x8x128xf32, #tpu.memory_space<vmem>>, vector<1x8x128xf32>,
    %c30_378 = arith.constant 30 : index
    %c0_379 = arith.constant 0 : index
    %c0_380 = arith.constant 0 : index
    %819 = vector.load %arg1[%c30_378, %c0_379, %c0_380] : memref<144x8x128xf32, #tpu.memory_space<vmem>>, vector<1x8x128xf32>
    %820 = vector.shape_cast %819 : vector<1x8x128xf32> to vector<8x128xf32>
    %c31_381 = arith.constant 31 : index
    %c0_382 = arith.constant 0 : index
    %c0_383 = arith.constant 0 : index
    %821 = vector.load %arg1[%c31_381, %c0_382, %c0_383] : memref<144x8x128xf32, #tpu.memory_space<vmem>>, vector<1x8x128xf32>
    %822 = vector.shape_cast %821 : vector<1x8x128xf32> to vector<8x128xf32>
    %c32_384 = arith.constant 32 : index
    %c0_385 = arith.constant 0 : index
    %c0_386 = arith.constant 0 : index
    %823 = vector.load %arg1[%c32_384, %c0_385, %c0_386] : memref<144x8x128xf32, #tpu.memory_space<vmem>>, vector<1x8x128xf32>
    %824 = vector.shape_cast %823 : vector<1x8x128xf32> to vector<8x128xf32>
    %c33_387 = arith.constant 33 : index
    %c0_388 = arith.constant 0 : index
    %c0_389 = arith.constant 0 : index
    %825 = vector.load %arg1[%c33_387, %c0_388, %c0_389] : memref<144x8x128xf32, #tpu.memory_space<vmem>>, vector<1x8x128xf32>
    %826 = vector.shape_cast %825 : vector<1x8x128xf32> to vector<8x128xf32>
    %c34_390 = arith.constant 34 : index
    %c0_391 = arith.constant 0 : index
    %c0_392 = arith.constant 0 : index
    %827 = vector.load %arg1[%c34_390, %c0_391, %c0_392] : memref<144x8x128xf32, #tpu.memory_space<vmem>>, vector<1x8x128xf32>
    %828 = vector.shape_cast %827 : vector<1x8x128xf32> to vector<8x128xf32>
    %c35_393 = arith.constant 35 : index
    %c0_394 = arith.constant 0 : index
    %c0_395 = arith.constant 0 : index
    %829 = vector.load %arg1[%c35_393, %c0_394, %c0_395] : memref<144x8x128xf32, #tpu.memory_space<vmem>>, vector<1x8x128xf32>
    %830 = vector.shape_cast %829 : vector<1x8x128xf32> to vector<8x128xf32>
    %831 = arith.mulf %820, %820 : vector<8x128xf32>
    %832 = arith.mulf %822, %822 : vector<8x128xf32>
    %833 = arith.addf %831, %832 : vector<8x128xf32>
    %834 = arith.mulf %824, %824 : vector<8x128xf32>
    %835 = arith.addf %833, %834 : vector<8x128xf32>
    %cst_396 = arith.constant 1.000000e-24 : f32
    %836 = vector.broadcast %cst_396 : f32 to vector<8x128xf32>
    %837 = arith.maximumf %835, %836 : vector<8x128xf32>
    %838 = math.rsqrt %837 : vector<8x128xf32>
    %839 = arith.mulf %820, %838 : vector<8x128xf32>
    %840 = arith.mulf %822, %838 : vector<8x128xf32>
    %841 = arith.mulf %824, %838 : vector<8x128xf32>
    %842 = arith.mulf %839, %826 : vector<8x128xf32>
    %843 = arith.mulf %840, %828 : vector<8x128xf32>
    %844 = arith.addf %842, %843 : vector<8x128xf32>
    %845 = arith.mulf %841, %830 : vector<8x128xf32>
    %846 = arith.addf %844, %845 : vector<8x128xf32>
    %847 = arith.mulf %846, %839 : vector<8x128xf32>
    %848 = arith.subf %826, %847 : vector<8x128xf32>
    %849 = arith.mulf %846, %840 : vector<8x128xf32>
    %850 = arith.subf %828, %849 : vector<8x128xf32>
    %851 = arith.mulf %846, %841 : vector<8x128xf32>
    %852 = arith.subf %830, %851 : vector<8x128xf32>
    %853 = arith.mulf %848, %848 : vector<8x128xf32>
    %854 = arith.mulf %850, %850 : vector<8x128xf32>
    %855 = arith.addf %853, %854 : vector<8x128xf32>
    %856 = arith.mulf %852, %852 : vector<8x128xf32>
    %857 = arith.addf %855, %856 : vector<8x128xf32>
    %cst_397 = arith.constant 1.000000e-24 : f32
    %858 = vector.broadcast %cst_397 : f32 to vector<8x128xf32>
    %859 = arith.maximumf %857, %858 : vector<8x128xf32>
    %860 = math.rsqrt %859 : vector<8x128xf32>
    %861 = arith.mulf %848, %860 : vector<8x128xf32>
    %862 = arith.mulf %850, %860 : vector<8x128xf32>
    %863 = arith.mulf %852, %860 : vector<8x128xf32>
    %864 = arith.mulf %840, %863 : vector<8x128xf32>
    %865 = arith.mulf %841, %862 : vector<8x128xf32>
    %866 = arith.subf %864, %865 : vector<8x128xf32>
    %867 = arith.mulf %841, %861 : vector<8x128xf32>
    %868 = arith.mulf %839, %863 : vector<8x128xf32>
    %869 = arith.subf %867, %868 : vector<8x128xf32>
    %870 = arith.mulf %839, %862 : vector<8x128xf32>
    %871 = arith.mulf %840, %861 : vector<8x128xf32>
    %872 = arith.subf %870, %871 : vector<8x128xf32>
    %873 = arith.mulf %769, %839 : vector<8x128xf32>
    %874 = arith.mulf %771, %861 : vector<8x128xf32>
    %875 = arith.addf %873, %874 : vector<8x128xf32>
    %876 = arith.mulf %773, %866 : vector<8x128xf32>
    %877 = arith.addf %875, %876 : vector<8x128xf32>
    %878 = arith.mulf %769, %840 : vector<8x128xf32>
    %879 = arith.mulf %771, %862 : vector<8x128xf32>
    %880 = arith.addf %878, %879 : vector<8x128xf32>
    %881 = arith.mulf %773, %869 : vector<8x128xf32>
    %882 = arith.addf %880, %881 : vector<8x128xf32>
    %883 = arith.mulf %769, %841 : vector<8x128xf32>
    %884 = arith.mulf %771, %863 : vector<8x128xf32>
    %885 = arith.addf %883, %884 : vector<8x128xf32>
    %886 = arith.mulf %773, %872 : vector<8x128xf32>
    %887 = arith.addf %885, %886 : vector<8x128xf32>
    %888 = arith.mulf %775, %839 : vector<8x128xf32>
    %889 = arith.mulf %777, %861 : vector<8x128xf32>
    %890 = arith.addf %888, %889 : vector<8x128xf32>
    %891 = arith.mulf %779, %866 : vector<8x128xf32>
    %892 = arith.addf %890, %891 : vector<8x128xf32>
    %893 = arith.mulf %775, %840 : vector<8x128xf32>
    %894 = arith.mulf %777, %862 : vector<8x128xf32>
    %895 = arith.addf %893, %894 : vector<8x128xf32>
    %896 = arith.mulf %779, %869 : vector<8x128xf32>
    %897 = arith.addf %895, %896 : vector<8x128xf32>
    %898 = arith.mulf %775, %841 : vector<8x128xf32>
    %899 = arith.mulf %777, %863 : vector<8x128xf32>
    %900 = arith.addf %898, %899 : vector<8x128xf32>
    %901 = arith.mulf %779, %872 : vector<8x128xf32>
    %902 = arith.addf %900, %901 : vector<8x128xf32>
    %903 = arith.mulf %781, %839 : vector<8x128xf32>
    %904 = arith.mulf %783, %861 : vector<8x128xf32>
    %905 = arith.addf %903, %904 : vector<8x128xf32>
    %906 = arith.mulf %785, %866 : vector<8x128xf32>
    %907 = arith.addf %905, %906 : vector<8x128xf32>
    %908 = arith.mulf %781, %840 : vector<8x128xf32>
    %909 = arith.mulf %783, %862 : vector<8x128xf32>
    %910 = arith.addf %908, %909 : vector<8x128xf32>
    %911 = arith.mulf %785, %869 : vector<8x128xf32>
    %912 = arith.addf %910, %911 : vector<8x128xf32>
    %913 = arith.mulf %781, %841 : vector<8x128xf32>
    %914 = arith.mulf %783, %863 : vector<8x128xf32>
    %915 = arith.addf %913, %914 : vector<8x128xf32>
    %916 = arith.mulf %785, %872 : vector<8x128xf32>
    %917 = arith.addf %915, %916 : vector<8x128xf32>
    %c45 = arith.constant 45 : index
    %c0_398 = arith.constant 0 : index
    %c0_399 = arith.constant 0 : index
    %918 = vector.load %arg4[%c45, %c0_398, %c0_399] : memref<171x8x128xf32, #tpu.memory_space<vmem>>, vector<1x8x128xf32>
    %919 = vector.shape_cast %918 : vector<1x8x128xf32> to vector<8x128xf32>
    %920 = vector.shape_cast %877 : vector<8x128xf32> to vector<1x8x128xf32>
    tpu.vector_store %arg4[%c45, %c0_398, %c0_399], %920 {strides = array<i32>} : memref<171x8x128xf32, #tpu.memory_space<vmem>>, vector<1x8x128xf32>,
    %c46 = arith.constant 46 : index
    %c0_400 = arith.constant 0 : index
    %c0_401 = arith.constant 0 : index
    %921 = vector.load %arg4[%c46, %c0_400, %c0_401] : memref<171x8x128xf32, #tpu.memory_space<vmem>>, vector<1x8x128xf32>
    %922 = vector.shape_cast %921 : vector<1x8x128xf32> to vector<8x128xf32>
    %923 = vector.shape_cast %882 : vector<8x128xf32> to vector<1x8x128xf32>
    tpu.vector_store %arg4[%c46, %c0_400, %c0_401], %923 {strides = array<i32>} : memref<171x8x128xf32, #tpu.memory_space<vmem>>, vector<1x8x128xf32>,
    %c47 = arith.constant 47 : index
    %c0_402 = arith.constant 0 : index
    %c0_403 = arith.constant 0 : index
    %924 = vector.load %arg4[%c47, %c0_402, %c0_403] : memref<171x8x128xf32, #tpu.memory_space<vmem>>, vector<1x8x128xf32>
    %925 = vector.shape_cast %924 : vector<1x8x128xf32> to vector<8x128xf32>
    %926 = vector.shape_cast %887 : vector<8x128xf32> to vector<1x8x128xf32>
    tpu.vector_store %arg4[%c47, %c0_402, %c0_403], %926 {strides = array<i32>} : memref<171x8x128xf32, #tpu.memory_space<vmem>>, vector<1x8x128xf32>,
    %c48 = arith.constant 48 : index
    %c0_404 = arith.constant 0 : index
    %c0_405 = arith.constant 0 : index
    %927 = vector.load %arg4[%c48, %c0_404, %c0_405] : memref<171x8x128xf32, #tpu.memory_space<vmem>>, vector<1x8x128xf32>
    %928 = vector.shape_cast %927 : vector<1x8x128xf32> to vector<8x128xf32>
    %929 = vector.shape_cast %892 : vector<8x128xf32> to vector<1x8x128xf32>
    tpu.vector_store %arg4[%c48, %c0_404, %c0_405], %929 {strides = array<i32>} : memref<171x8x128xf32, #tpu.memory_space<vmem>>, vector<1x8x128xf32>,
    %c49 = arith.constant 49 : index
    %c0_406 = arith.constant 0 : index
    %c0_407 = arith.constant 0 : index
    %930 = vector.load %arg4[%c49, %c0_406, %c0_407] : memref<171x8x128xf32, #tpu.memory_space<vmem>>, vector<1x8x128xf32>
    %931 = vector.shape_cast %930 : vector<1x8x128xf32> to vector<8x128xf32>
    %932 = vector.shape_cast %897 : vector<8x128xf32> to vector<1x8x128xf32>
    tpu.vector_store %arg4[%c49, %c0_406, %c0_407], %932 {strides = array<i32>} : memref<171x8x128xf32, #tpu.memory_space<vmem>>, vector<1x8x128xf32>,
    %c50 = arith.constant 50 : index
    %c0_408 = arith.constant 0 : index
    %c0_409 = arith.constant 0 : index
    %933 = vector.load %arg4[%c50, %c0_408, %c0_409] : memref<171x8x128xf32, #tpu.memory_space<vmem>>, vector<1x8x128xf32>
    %934 = vector.shape_cast %933 : vector<1x8x128xf32> to vector<8x128xf32>
    %935 = vector.shape_cast %902 : vector<8x128xf32> to vector<1x8x128xf32>
    tpu.vector_store %arg4[%c50, %c0_408, %c0_409], %935 {strides = array<i32>} : memref<171x8x128xf32, #tpu.memory_space<vmem>>, vector<1x8x128xf32>,
    %c51 = arith.constant 51 : index
    %c0_410 = arith.constant 0 : index
    %c0_411 = arith.constant 0 : index
    %936 = vector.load %arg4[%c51, %c0_410, %c0_411] : memref<171x8x128xf32, #tpu.memory_space<vmem>>, vector<1x8x128xf32>
    %937 = vector.shape_cast %936 : vector<1x8x128xf32> to vector<8x128xf32>
    %938 = vector.shape_cast %907 : vector<8x128xf32> to vector<1x8x128xf32>
    tpu.vector_store %arg4[%c51, %c0_410, %c0_411], %938 {strides = array<i32>} : memref<171x8x128xf32, #tpu.memory_space<vmem>>, vector<1x8x128xf32>,
    %c52 = arith.constant 52 : index
    %c0_412 = arith.constant 0 : index
    %c0_413 = arith.constant 0 : index
    %939 = vector.load %arg4[%c52, %c0_412, %c0_413] : memref<171x8x128xf32, #tpu.memory_space<vmem>>, vector<1x8x128xf32>
    %940 = vector.shape_cast %939 : vector<1x8x128xf32> to vector<8x128xf32>
    %941 = vector.shape_cast %912 : vector<8x128xf32> to vector<1x8x128xf32>
    tpu.vector_store %arg4[%c52, %c0_412, %c0_413], %941 {strides = array<i32>} : memref<171x8x128xf32, #tpu.memory_space<vmem>>, vector<1x8x128xf32>,
    %c53 = arith.constant 53 : index
    %c0_414 = arith.constant 0 : index
    %c0_415 = arith.constant 0 : index
    %942 = vector.load %arg4[%c53, %c0_414, %c0_415] : memref<171x8x128xf32, #tpu.memory_space<vmem>>, vector<1x8x128xf32>
    %943 = vector.shape_cast %942 : vector<1x8x128xf32> to vector<8x128xf32>
    %944 = vector.shape_cast %917 : vector<8x128xf32> to vector<1x8x128xf32>
    tpu.vector_store %arg4[%c53, %c0_414, %c0_415], %944 {strides = array<i32>} : memref<171x8x128xf32, #tpu.memory_space<vmem>>, vector<1x8x128xf32>,
    %c27_416 = arith.constant 27 : index
    %c0_417 = arith.constant 0 : index
    %c0_418 = arith.constant 0 : index
    %945 = vector.load %arg4[%c27_416, %c0_417, %c0_418] : memref<171x8x128xf32, #tpu.memory_space<vmem>>, vector<1x8x128xf32>
    %946 = vector.shape_cast %945 : vector<1x8x128xf32> to vector<8x128xf32>
    %c28_419 = arith.constant 28 : index
    %c0_420 = arith.constant 0 : index
    %c0_421 = arith.constant 0 : index
    %947 = vector.load %arg4[%c28_419, %c0_420, %c0_421] : memref<171x8x128xf32, #tpu.memory_space<vmem>>, vector<1x8x128xf32>
    %948 = vector.shape_cast %947 : vector<1x8x128xf32> to vector<8x128xf32>
    %c29_422 = arith.constant 29 : index
    %c0_423 = arith.constant 0 : index
    %c0_424 = arith.constant 0 : index
    %949 = vector.load %arg4[%c29_422, %c0_423, %c0_424] : memref<171x8x128xf32, #tpu.memory_space<vmem>>, vector<1x8x128xf32>
    %950 = vector.shape_cast %949 : vector<1x8x128xf32> to vector<8x128xf32>
    %c30_425 = arith.constant 30 : index
    %c0_426 = arith.constant 0 : index
    %c0_427 = arith.constant 0 : index
    %951 = vector.load %arg4[%c30_425, %c0_426, %c0_427] : memref<171x8x128xf32, #tpu.memory_space<vmem>>, vector<1x8x128xf32>
    %952 = vector.shape_cast %951 : vector<1x8x128xf32> to vector<8x128xf32>
    %c31_428 = arith.constant 31 : index
    %c0_429 = arith.constant 0 : index
    %c0_430 = arith.constant 0 : index
    %953 = vector.load %arg4[%c31_428, %c0_429, %c0_430] : memref<171x8x128xf32, #tpu.memory_space<vmem>>, vector<1x8x128xf32>
    %954 = vector.shape_cast %953 : vector<1x8x128xf32> to vector<8x128xf32>
    %c32_431 = arith.constant 32 : index
    %c0_432 = arith.constant 0 : index
    %c0_433 = arith.constant 0 : index
    %955 = vector.load %arg4[%c32_431, %c0_432, %c0_433] : memref<171x8x128xf32, #tpu.memory_space<vmem>>, vector<1x8x128xf32>
    %956 = vector.shape_cast %955 : vector<1x8x128xf32> to vector<8x128xf32>
    %c33_434 = arith.constant 33 : index
    %c0_435 = arith.constant 0 : index
    %c0_436 = arith.constant 0 : index
    %957 = vector.load %arg4[%c33_434, %c0_435, %c0_436] : memref<171x8x128xf32, #tpu.memory_space<vmem>>, vector<1x8x128xf32>
    %958 = vector.shape_cast %957 : vector<1x8x128xf32> to vector<8x128xf32>
    %c34_437 = arith.constant 34 : index
    %c0_438 = arith.constant 0 : index
    %c0_439 = arith.constant 0 : index
    %959 = vector.load %arg4[%c34_437, %c0_438, %c0_439] : memref<171x8x128xf32, #tpu.memory_space<vmem>>, vector<1x8x128xf32>
    %960 = vector.shape_cast %959 : vector<1x8x128xf32> to vector<8x128xf32>
    %c35_440 = arith.constant 35 : index
    %c0_441 = arith.constant 0 : index
    %c0_442 = arith.constant 0 : index
    %961 = vector.load %arg4[%c35_440, %c0_441, %c0_442] : memref<171x8x128xf32, #tpu.memory_space<vmem>>, vector<1x8x128xf32>
    %962 = vector.shape_cast %961 : vector<1x8x128xf32> to vector<8x128xf32>
    %c18_443 = arith.constant 18 : index
    %c0_444 = arith.constant 0 : index
    %c0_445 = arith.constant 0 : index
    %963 = vector.load %arg2[%c18_443, %c0_444, %c0_445] : memref<72x8x128xf32, #tpu.memory_space<vmem>>, vector<1x8x128xf32>
    %964 = vector.shape_cast %963 : vector<1x8x128xf32> to vector<8x128xf32>
    %c19_446 = arith.constant 19 : index
    %c0_447 = arith.constant 0 : index
    %c0_448 = arith.constant 0 : index
    %965 = vector.load %arg2[%c19_446, %c0_447, %c0_448] : memref<72x8x128xf32, #tpu.memory_space<vmem>>, vector<1x8x128xf32>
    %966 = vector.shape_cast %965 : vector<1x8x128xf32> to vector<8x128xf32>
    %c20_449 = arith.constant 20 : index
    %c0_450 = arith.constant 0 : index
    %c0_451 = arith.constant 0 : index
    %967 = vector.load %arg2[%c20_449, %c0_450, %c0_451] : memref<72x8x128xf32, #tpu.memory_space<vmem>>, vector<1x8x128xf32>
    %968 = vector.shape_cast %967 : vector<1x8x128xf32> to vector<8x128xf32>
    %969 = arith.mulf %946, %964 : vector<8x128xf32>
    %970 = arith.mulf %948, %966 : vector<8x128xf32>
    %971 = arith.addf %969, %970 : vector<8x128xf32>
    %972 = arith.mulf %950, %968 : vector<8x128xf32>
    %973 = arith.addf %971, %972 : vector<8x128xf32>
    %974 = arith.mulf %952, %964 : vector<8x128xf32>
    %975 = arith.mulf %954, %966 : vector<8x128xf32>
    %976 = arith.addf %974, %975 : vector<8x128xf32>
    %977 = arith.mulf %956, %968 : vector<8x128xf32>
    %978 = arith.addf %976, %977 : vector<8x128xf32>
    %979 = arith.mulf %958, %964 : vector<8x128xf32>
    %980 = arith.mulf %960, %966 : vector<8x128xf32>
    %981 = arith.addf %979, %980 : vector<8x128xf32>
    %982 = arith.mulf %962, %968 : vector<8x128xf32>
    %983 = arith.addf %981, %982 : vector<8x128xf32>
    %984 = arith.addf %973, %453 : vector<8x128xf32>
    %985 = arith.addf %978, %454 : vector<8x128xf32>
    %986 = arith.addf %983, %455 : vector<8x128xf32>
    %c18_452 = arith.constant 18 : index
    %c0_453 = arith.constant 0 : index
    %c0_454 = arith.constant 0 : index
    %987 = vector.load %arg3[%c18_452, %c0_453, %c0_454] : memref<72x8x128xf32, #tpu.memory_space<vmem>>, vector<1x8x128xf32>
    %988 = vector.shape_cast %987 : vector<1x8x128xf32> to vector<8x128xf32>
    %989 = vector.shape_cast %984 : vector<8x128xf32> to vector<1x8x128xf32>
    tpu.vector_store %arg3[%c18_452, %c0_453, %c0_454], %989 {strides = array<i32>} : memref<72x8x128xf32, #tpu.memory_space<vmem>>, vector<1x8x128xf32>,
    %c19_455 = arith.constant 19 : index
    %c0_456 = arith.constant 0 : index
    %c0_457 = arith.constant 0 : index
    %990 = vector.load %arg3[%c19_455, %c0_456, %c0_457] : memref<72x8x128xf32, #tpu.memory_space<vmem>>, vector<1x8x128xf32>
    %991 = vector.shape_cast %990 : vector<1x8x128xf32> to vector<8x128xf32>
    %992 = vector.shape_cast %985 : vector<8x128xf32> to vector<1x8x128xf32>
    tpu.vector_store %arg3[%c19_455, %c0_456, %c0_457], %992 {strides = array<i32>} : memref<72x8x128xf32, #tpu.memory_space<vmem>>, vector<1x8x128xf32>,
    %c20_458 = arith.constant 20 : index
    %c0_459 = arith.constant 0 : index
    %c0_460 = arith.constant 0 : index
    %993 = vector.load %arg3[%c20_458, %c0_459, %c0_460] : memref<72x8x128xf32, #tpu.memory_space<vmem>>, vector<1x8x128xf32>
    %994 = vector.shape_cast %993 : vector<1x8x128xf32> to vector<8x128xf32>
    %995 = vector.shape_cast %986 : vector<8x128xf32> to vector<1x8x128xf32>
    tpu.vector_store %arg3[%c20_458, %c0_459, %c0_460], %995 {strides = array<i32>} : memref<72x8x128xf32, #tpu.memory_space<vmem>>, vector<1x8x128xf32>,
    %c36_461 = arith.constant 36 : index
    %c0_462 = arith.constant 0 : index
    %c0_463 = arith.constant 0 : index
    %996 = vector.load %arg1[%c36_461, %c0_462, %c0_463] : memref<144x8x128xf32, #tpu.memory_space<vmem>>, vector<1x8x128xf32>
    %997 = vector.shape_cast %996 : vector<1x8x128xf32> to vector<8x128xf32>
    %c37_464 = arith.constant 37 : index
    %c0_465 = arith.constant 0 : index
    %c0_466 = arith.constant 0 : index
    %998 = vector.load %arg1[%c37_464, %c0_465, %c0_466] : memref<144x8x128xf32, #tpu.memory_space<vmem>>, vector<1x8x128xf32>
    %999 = vector.shape_cast %998 : vector<1x8x128xf32> to vector<8x128xf32>
    %c38_467 = arith.constant 38 : index
    %c0_468 = arith.constant 0 : index
    %c0_469 = arith.constant 0 : index
    %1000 = vector.load %arg1[%c38_467, %c0_468, %c0_469] : memref<144x8x128xf32, #tpu.memory_space<vmem>>, vector<1x8x128xf32>
    %1001 = vector.shape_cast %1000 : vector<1x8x128xf32> to vector<8x128xf32>
    %c39_470 = arith.constant 39 : index
    %c0_471 = arith.constant 0 : index
    %c0_472 = arith.constant 0 : index
    %1002 = vector.load %arg1[%c39_470, %c0_471, %c0_472] : memref<144x8x128xf32, #tpu.memory_space<vmem>>, vector<1x8x128xf32>
    %1003 = vector.shape_cast %1002 : vector<1x8x128xf32> to vector<8x128xf32>
    %c40_473 = arith.constant 40 : index
    %c0_474 = arith.constant 0 : index
    %c0_475 = arith.constant 0 : index
    %1004 = vector.load %arg1[%c40_473, %c0_474, %c0_475] : memref<144x8x128xf32, #tpu.memory_space<vmem>>, vector<1x8x128xf32>
    %1005 = vector.shape_cast %1004 : vector<1x8x128xf32> to vector<8x128xf32>
    %c41_476 = arith.constant 41 : index
    %c0_477 = arith.constant 0 : index
    %c0_478 = arith.constant 0 : index
    %1006 = vector.load %arg1[%c41_476, %c0_477, %c0_478] : memref<144x8x128xf32, #tpu.memory_space<vmem>>, vector<1x8x128xf32>
    %1007 = vector.shape_cast %1006 : vector<1x8x128xf32> to vector<8x128xf32>
    %1008 = arith.mulf %997, %997 : vector<8x128xf32>
    %1009 = arith.mulf %999, %999 : vector<8x128xf32>
    %1010 = arith.addf %1008, %1009 : vector<8x128xf32>
    %1011 = arith.mulf %1001, %1001 : vector<8x128xf32>
    %1012 = arith.addf %1010, %1011 : vector<8x128xf32>
    %cst_479 = arith.constant 1.000000e-24 : f32
    %1013 = vector.broadcast %cst_479 : f32 to vector<8x128xf32>
    %1014 = arith.maximumf %1012, %1013 : vector<8x128xf32>
    %1015 = math.rsqrt %1014 : vector<8x128xf32>
    %1016 = arith.mulf %997, %1015 : vector<8x128xf32>
    %1017 = arith.mulf %999, %1015 : vector<8x128xf32>
    %1018 = arith.mulf %1001, %1015 : vector<8x128xf32>
    %1019 = arith.mulf %1016, %1003 : vector<8x128xf32>
    %1020 = arith.mulf %1017, %1005 : vector<8x128xf32>
    %1021 = arith.addf %1019, %1020 : vector<8x128xf32>
    %1022 = arith.mulf %1018, %1007 : vector<8x128xf32>
    %1023 = arith.addf %1021, %1022 : vector<8x128xf32>
    %1024 = arith.mulf %1023, %1016 : vector<8x128xf32>
    %1025 = arith.subf %1003, %1024 : vector<8x128xf32>
    %1026 = arith.mulf %1023, %1017 : vector<8x128xf32>
    %1027 = arith.subf %1005, %1026 : vector<8x128xf32>
    %1028 = arith.mulf %1023, %1018 : vector<8x128xf32>
    %1029 = arith.subf %1007, %1028 : vector<8x128xf32>
    %1030 = arith.mulf %1025, %1025 : vector<8x128xf32>
    %1031 = arith.mulf %1027, %1027 : vector<8x128xf32>
    %1032 = arith.addf %1030, %1031 : vector<8x128xf32>
    %1033 = arith.mulf %1029, %1029 : vector<8x128xf32>
    %1034 = arith.addf %1032, %1033 : vector<8x128xf32>
    %cst_480 = arith.constant 1.000000e-24 : f32
    %1035 = vector.broadcast %cst_480 : f32 to vector<8x128xf32>
    %1036 = arith.maximumf %1034, %1035 : vector<8x128xf32>
    %1037 = math.rsqrt %1036 : vector<8x128xf32>
    %1038 = arith.mulf %1025, %1037 : vector<8x128xf32>
    %1039 = arith.mulf %1027, %1037 : vector<8x128xf32>
    %1040 = arith.mulf %1029, %1037 : vector<8x128xf32>
    %1041 = arith.mulf %1017, %1040 : vector<8x128xf32>
    %1042 = arith.mulf %1018, %1039 : vector<8x128xf32>
    %1043 = arith.subf %1041, %1042 : vector<8x128xf32>
    %1044 = arith.mulf %1018, %1038 : vector<8x128xf32>
    %1045 = arith.mulf %1016, %1040 : vector<8x128xf32>
    %1046 = arith.subf %1044, %1045 : vector<8x128xf32>
    %1047 = arith.mulf %1016, %1039 : vector<8x128xf32>
    %1048 = arith.mulf %1017, %1038 : vector<8x128xf32>
    %1049 = arith.subf %1047, %1048 : vector<8x128xf32>
    %1050 = arith.mulf %946, %1016 : vector<8x128xf32>
    %1051 = arith.mulf %948, %1038 : vector<8x128xf32>
    %1052 = arith.addf %1050, %1051 : vector<8x128xf32>
    %1053 = arith.mulf %950, %1043 : vector<8x128xf32>
    %1054 = arith.addf %1052, %1053 : vector<8x128xf32>
    %1055 = arith.mulf %946, %1017 : vector<8x128xf32>
    %1056 = arith.mulf %948, %1039 : vector<8x128xf32>
    %1057 = arith.addf %1055, %1056 : vector<8x128xf32>
    %1058 = arith.mulf %950, %1046 : vector<8x128xf32>
    %1059 = arith.addf %1057, %1058 : vector<8x128xf32>
    %1060 = arith.mulf %946, %1018 : vector<8x128xf32>
    %1061 = arith.mulf %948, %1040 : vector<8x128xf32>
    %1062 = arith.addf %1060, %1061 : vector<8x128xf32>
    %1063 = arith.mulf %950, %1049 : vector<8x128xf32>
    %1064 = arith.addf %1062, %1063 : vector<8x128xf32>
    %1065 = arith.mulf %952, %1016 : vector<8x128xf32>
    %1066 = arith.mulf %954, %1038 : vector<8x128xf32>
    %1067 = arith.addf %1065, %1066 : vector<8x128xf32>
    %1068 = arith.mulf %956, %1043 : vector<8x128xf32>
    %1069 = arith.addf %1067, %1068 : vector<8x128xf32>
    %1070 = arith.mulf %952, %1017 : vector<8x128xf32>
    %1071 = arith.mulf %954, %1039 : vector<8x128xf32>
    %1072 = arith.addf %1070, %1071 : vector<8x128xf32>
    %1073 = arith.mulf %956, %1046 : vector<8x128xf32>
    %1074 = arith.addf %1072, %1073 : vector<8x128xf32>
    %1075 = arith.mulf %952, %1018 : vector<8x128xf32>
    %1076 = arith.mulf %954, %1040 : vector<8x128xf32>
    %1077 = arith.addf %1075, %1076 : vector<8x128xf32>
    %1078 = arith.mulf %956, %1049 : vector<8x128xf32>
    %1079 = arith.addf %1077, %1078 : vector<8x128xf32>
    %1080 = arith.mulf %958, %1016 : vector<8x128xf32>
    %1081 = arith.mulf %960, %1038 : vector<8x128xf32>
    %1082 = arith.addf %1080, %1081 : vector<8x128xf32>
    %1083 = arith.mulf %962, %1043 : vector<8x128xf32>
    %1084 = arith.addf %1082, %1083 : vector<8x128xf32>
    %1085 = arith.mulf %958, %1017 : vector<8x128xf32>
    %1086 = arith.mulf %960, %1039 : vector<8x128xf32>
    %1087 = arith.addf %1085, %1086 : vector<8x128xf32>
    %1088 = arith.mulf %962, %1046 : vector<8x128xf32>
    %1089 = arith.addf %1087, %1088 : vector<8x128xf32>
    %1090 = arith.mulf %958, %1018 : vector<8x128xf32>
    %1091 = arith.mulf %960, %1040 : vector<8x128xf32>
    %1092 = arith.addf %1090, %1091 : vector<8x128xf32>
    %1093 = arith.mulf %962, %1049 : vector<8x128xf32>
    %1094 = arith.addf %1092, %1093 : vector<8x128xf32>
    %c54 = arith.constant 54 : index
    %c0_481 = arith.constant 0 : index
    %c0_482 = arith.constant 0 : index
    %1095 = vector.load %arg4[%c54, %c0_481, %c0_482] : memref<171x8x128xf32, #tpu.memory_space<vmem>>, vector<1x8x128xf32>
    %1096 = vector.shape_cast %1095 : vector<1x8x128xf32> to vector<8x128xf32>
    %1097 = vector.shape_cast %1054 : vector<8x128xf32> to vector<1x8x128xf32>
    tpu.vector_store %arg4[%c54, %c0_481, %c0_482], %1097 {strides = array<i32>} : memref<171x8x128xf32, #tpu.memory_space<vmem>>, vector<1x8x128xf32>,
    %c55 = arith.constant 55 : index
    %c0_483 = arith.constant 0 : index
    %c0_484 = arith.constant 0 : index
    %1098 = vector.load %arg4[%c55, %c0_483, %c0_484] : memref<171x8x128xf32, #tpu.memory_space<vmem>>, vector<1x8x128xf32>
    %1099 = vector.shape_cast %1098 : vector<1x8x128xf32> to vector<8x128xf32>
    %1100 = vector.shape_cast %1059 : vector<8x128xf32> to vector<1x8x128xf32>
    tpu.vector_store %arg4[%c55, %c0_483, %c0_484], %1100 {strides = array<i32>} : memref<171x8x128xf32, #tpu.memory_space<vmem>>, vector<1x8x128xf32>,
    %c56 = arith.constant 56 : index
    %c0_485 = arith.constant 0 : index
    %c0_486 = arith.constant 0 : index
    %1101 = vector.load %arg4[%c56, %c0_485, %c0_486] : memref<171x8x128xf32, #tpu.memory_space<vmem>>, vector<1x8x128xf32>
    %1102 = vector.shape_cast %1101 : vector<1x8x128xf32> to vector<8x128xf32>
    %1103 = vector.shape_cast %1064 : vector<8x128xf32> to vector<1x8x128xf32>
    tpu.vector_store %arg4[%c56, %c0_485, %c0_486], %1103 {strides = array<i32>} : memref<171x8x128xf32, #tpu.memory_space<vmem>>, vector<1x8x128xf32>,
    %c57 = arith.constant 57 : index
    %c0_487 = arith.constant 0 : index
    %c0_488 = arith.constant 0 : index
    %1104 = vector.load %arg4[%c57, %c0_487, %c0_488] : memref<171x8x128xf32, #tpu.memory_space<vmem>>, vector<1x8x128xf32>
    %1105 = vector.shape_cast %1104 : vector<1x8x128xf32> to vector<8x128xf32>
    %1106 = vector.shape_cast %1069 : vector<8x128xf32> to vector<1x8x128xf32>
    tpu.vector_store %arg4[%c57, %c0_487, %c0_488], %1106 {strides = array<i32>} : memref<171x8x128xf32, #tpu.memory_space<vmem>>, vector<1x8x128xf32>,
    %c58 = arith.constant 58 : index
    %c0_489 = arith.constant 0 : index
    %c0_490 = arith.constant 0 : index
    %1107 = vector.load %arg4[%c58, %c0_489, %c0_490] : memref<171x8x128xf32, #tpu.memory_space<vmem>>, vector<1x8x128xf32>
    %1108 = vector.shape_cast %1107 : vector<1x8x128xf32> to vector<8x128xf32>
    %1109 = vector.shape_cast %1074 : vector<8x128xf32> to vector<1x8x128xf32>
    tpu.vector_store %arg4[%c58, %c0_489, %c0_490], %1109 {strides = array<i32>} : memref<171x8x128xf32, #tpu.memory_space<vmem>>, vector<1x8x128xf32>,
    %c59 = arith.constant 59 : index
    %c0_491 = arith.constant 0 : index
    %c0_492 = arith.constant 0 : index
    %1110 = vector.load %arg4[%c59, %c0_491, %c0_492] : memref<171x8x128xf32, #tpu.memory_space<vmem>>, vector<1x8x128xf32>
    %1111 = vector.shape_cast %1110 : vector<1x8x128xf32> to vector<8x128xf32>
    %1112 = vector.shape_cast %1079 : vector<8x128xf32> to vector<1x8x128xf32>
    tpu.vector_store %arg4[%c59, %c0_491, %c0_492], %1112 {strides = array<i32>} : memref<171x8x128xf32, #tpu.memory_space<vmem>>, vector<1x8x128xf32>,
    %c60 = arith.constant 60 : index
    %c0_493 = arith.constant 0 : index
    %c0_494 = arith.constant 0 : index
    %1113 = vector.load %arg4[%c60, %c0_493, %c0_494] : memref<171x8x128xf32, #tpu.memory_space<vmem>>, vector<1x8x128xf32>
    %1114 = vector.shape_cast %1113 : vector<1x8x128xf32> to vector<8x128xf32>
    %1115 = vector.shape_cast %1084 : vector<8x128xf32> to vector<1x8x128xf32>
    tpu.vector_store %arg4[%c60, %c0_493, %c0_494], %1115 {strides = array<i32>} : memref<171x8x128xf32, #tpu.memory_space<vmem>>, vector<1x8x128xf32>,
    %c61 = arith.constant 61 : index
    %c0_495 = arith.constant 0 : index
    %c0_496 = arith.constant 0 : index
    %1116 = vector.load %arg4[%c61, %c0_495, %c0_496] : memref<171x8x128xf32, #tpu.memory_space<vmem>>, vector<1x8x128xf32>
    %1117 = vector.shape_cast %1116 : vector<1x8x128xf32> to vector<8x128xf32>
    %1118 = vector.shape_cast %1089 : vector<8x128xf32> to vector<1x8x128xf32>
    tpu.vector_store %arg4[%c61, %c0_495, %c0_496], %1118 {strides = array<i32>} : memref<171x8x128xf32, #tpu.memory_space<vmem>>, vector<1x8x128xf32>,
    %c62 = arith.constant 62 : index
    %c0_497 = arith.constant 0 : index
    %c0_498 = arith.constant 0 : index
    %1119 = vector.load %arg4[%c62, %c0_497, %c0_498] : memref<171x8x128xf32, #tpu.memory_space<vmem>>, vector<1x8x128xf32>
    %1120 = vector.shape_cast %1119 : vector<1x8x128xf32> to vector<8x128xf32>
    %1121 = vector.shape_cast %1094 : vector<8x128xf32> to vector<1x8x128xf32>
    tpu.vector_store %arg4[%c62, %c0_497, %c0_498], %1121 {strides = array<i32>} : memref<171x8x128xf32, #tpu.memory_space<vmem>>, vector<1x8x128xf32>,
    %c36_499 = arith.constant 36 : index
    %c0_500 = arith.constant 0 : index
    %c0_501 = arith.constant 0 : index
    %1122 = vector.load %arg4[%c36_499, %c0_500, %c0_501] : memref<171x8x128xf32, #tpu.memory_space<vmem>>, vector<1x8x128xf32>
    %1123 = vector.shape_cast %1122 : vector<1x8x128xf32> to vector<8x128xf32>
    %c37_502 = arith.constant 37 : index
    %c0_503 = arith.constant 0 : index
    %c0_504 = arith.constant 0 : index
    %1124 = vector.load %arg4[%c37_502, %c0_503, %c0_504] : memref<171x8x128xf32, #tpu.memory_space<vmem>>, vector<1x8x128xf32>
    %1125 = vector.shape_cast %1124 : vector<1x8x128xf32> to vector<8x128xf32>
    %c38_505 = arith.constant 38 : index
    %c0_506 = arith.constant 0 : index
    %c0_507 = arith.constant 0 : index
    %1126 = vector.load %arg4[%c38_505, %c0_506, %c0_507] : memref<171x8x128xf32, #tpu.memory_space<vmem>>, vector<1x8x128xf32>
    %1127 = vector.shape_cast %1126 : vector<1x8x128xf32> to vector<8x128xf32>
    %c39_508 = arith.constant 39 : index
    %c0_509 = arith.constant 0 : index
    %c0_510 = arith.constant 0 : index
    %1128 = vector.load %arg4[%c39_508, %c0_509, %c0_510] : memref<171x8x128xf32, #tpu.memory_space<vmem>>, vector<1x8x128xf32>
    %1129 = vector.shape_cast %1128 : vector<1x8x128xf32> to vector<8x128xf32>
    %c40_511 = arith.constant 40 : index
    %c0_512 = arith.constant 0 : index
    %c0_513 = arith.constant 0 : index
    %1130 = vector.load %arg4[%c40_511, %c0_512, %c0_513] : memref<171x8x128xf32, #tpu.memory_space<vmem>>, vector<1x8x128xf32>
    %1131 = vector.shape_cast %1130 : vector<1x8x128xf32> to vector<8x128xf32>
    %c41_514 = arith.constant 41 : index
    %c0_515 = arith.constant 0 : index
    %c0_516 = arith.constant 0 : index
    %1132 = vector.load %arg4[%c41_514, %c0_515, %c0_516] : memref<171x8x128xf32, #tpu.memory_space<vmem>>, vector<1x8x128xf32>
    %1133 = vector.shape_cast %1132 : vector<1x8x128xf32> to vector<8x128xf32>
    %c42_517 = arith.constant 42 : index
    %c0_518 = arith.constant 0 : index
    %c0_519 = arith.constant 0 : index
    %1134 = vector.load %arg4[%c42_517, %c0_518, %c0_519] : memref<171x8x128xf32, #tpu.memory_space<vmem>>, vector<1x8x128xf32>
    %1135 = vector.shape_cast %1134 : vector<1x8x128xf32> to vector<8x128xf32>
    %c43_520 = arith.constant 43 : index
    %c0_521 = arith.constant 0 : index
    %c0_522 = arith.constant 0 : index
    %1136 = vector.load %arg4[%c43_520, %c0_521, %c0_522] : memref<171x8x128xf32, #tpu.memory_space<vmem>>, vector<1x8x128xf32>
    %1137 = vector.shape_cast %1136 : vector<1x8x128xf32> to vector<8x128xf32>
    %c44_523 = arith.constant 44 : index
    %c0_524 = arith.constant 0 : index
    %c0_525 = arith.constant 0 : index
    %1138 = vector.load %arg4[%c44_523, %c0_524, %c0_525] : memref<171x8x128xf32, #tpu.memory_space<vmem>>, vector<1x8x128xf32>
    %1139 = vector.shape_cast %1138 : vector<1x8x128xf32> to vector<8x128xf32>
    %c21_526 = arith.constant 21 : index
    %c0_527 = arith.constant 0 : index
    %c0_528 = arith.constant 0 : index
    %1140 = vector.load %arg2[%c21_526, %c0_527, %c0_528] : memref<72x8x128xf32, #tpu.memory_space<vmem>>, vector<1x8x128xf32>
    %1141 = vector.shape_cast %1140 : vector<1x8x128xf32> to vector<8x128xf32>
    %c22_529 = arith.constant 22 : index
    %c0_530 = arith.constant 0 : index
    %c0_531 = arith.constant 0 : index
    %1142 = vector.load %arg2[%c22_529, %c0_530, %c0_531] : memref<72x8x128xf32, #tpu.memory_space<vmem>>, vector<1x8x128xf32>
    %1143 = vector.shape_cast %1142 : vector<1x8x128xf32> to vector<8x128xf32>
    %c23_532 = arith.constant 23 : index
    %c0_533 = arith.constant 0 : index
    %c0_534 = arith.constant 0 : index
    %1144 = vector.load %arg2[%c23_532, %c0_533, %c0_534] : memref<72x8x128xf32, #tpu.memory_space<vmem>>, vector<1x8x128xf32>
    %1145 = vector.shape_cast %1144 : vector<1x8x128xf32> to vector<8x128xf32>
    %1146 = arith.mulf %1123, %1141 : vector<8x128xf32>
    %1147 = arith.mulf %1125, %1143 : vector<8x128xf32>
    %1148 = arith.addf %1146, %1147 : vector<8x128xf32>
    %1149 = arith.mulf %1127, %1145 : vector<8x128xf32>
    %1150 = arith.addf %1148, %1149 : vector<8x128xf32>
    %1151 = arith.mulf %1129, %1141 : vector<8x128xf32>
    %1152 = arith.mulf %1131, %1143 : vector<8x128xf32>
    %1153 = arith.addf %1151, %1152 : vector<8x128xf32>
    %1154 = arith.mulf %1133, %1145 : vector<8x128xf32>
    %1155 = arith.addf %1153, %1154 : vector<8x128xf32>
    %1156 = arith.mulf %1135, %1141 : vector<8x128xf32>
    %1157 = arith.mulf %1137, %1143 : vector<8x128xf32>
    %1158 = arith.addf %1156, %1157 : vector<8x128xf32>
    %1159 = arith.mulf %1139, %1145 : vector<8x128xf32>
    %1160 = arith.addf %1158, %1159 : vector<8x128xf32>
    %1161 = arith.addf %1150, %630 : vector<8x128xf32>
    %1162 = arith.addf %1155, %631 : vector<8x128xf32>
    %1163 = arith.addf %1160, %632 : vector<8x128xf32>
    %c21_535 = arith.constant 21 : index
    %c0_536 = arith.constant 0 : index
    %c0_537 = arith.constant 0 : index
    %1164 = vector.load %arg3[%c21_535, %c0_536, %c0_537] : memref<72x8x128xf32, #tpu.memory_space<vmem>>, vector<1x8x128xf32>
    %1165 = vector.shape_cast %1164 : vector<1x8x128xf32> to vector<8x128xf32>
    %1166 = vector.shape_cast %1161 : vector<8x128xf32> to vector<1x8x128xf32>
    tpu.vector_store %arg3[%c21_535, %c0_536, %c0_537], %1166 {strides = array<i32>} : memref<72x8x128xf32, #tpu.memory_space<vmem>>, vector<1x8x128xf32>,
    %c22_538 = arith.constant 22 : index
    %c0_539 = arith.constant 0 : index
    %c0_540 = arith.constant 0 : index
    %1167 = vector.load %arg3[%c22_538, %c0_539, %c0_540] : memref<72x8x128xf32, #tpu.memory_space<vmem>>, vector<1x8x128xf32>
    %1168 = vector.shape_cast %1167 : vector<1x8x128xf32> to vector<8x128xf32>
    %1169 = vector.shape_cast %1162 : vector<8x128xf32> to vector<1x8x128xf32>
    tpu.vector_store %arg3[%c22_538, %c0_539, %c0_540], %1169 {strides = array<i32>} : memref<72x8x128xf32, #tpu.memory_space<vmem>>, vector<1x8x128xf32>,
    %c23_541 = arith.constant 23 : index
    %c0_542 = arith.constant 0 : index
    %c0_543 = arith.constant 0 : index
    %1170 = vector.load %arg3[%c23_541, %c0_542, %c0_543] : memref<72x8x128xf32, #tpu.memory_space<vmem>>, vector<1x8x128xf32>
    %1171 = vector.shape_cast %1170 : vector<1x8x128xf32> to vector<8x128xf32>
    %1172 = vector.shape_cast %1163 : vector<8x128xf32> to vector<1x8x128xf32>
    tpu.vector_store %arg3[%c23_541, %c0_542, %c0_543], %1172 {strides = array<i32>} : memref<72x8x128xf32, #tpu.memory_space<vmem>>, vector<1x8x128xf32>,
    %c42_544 = arith.constant 42 : index
    %c0_545 = arith.constant 0 : index
    %c0_546 = arith.constant 0 : index
    %1173 = vector.load %arg1[%c42_544, %c0_545, %c0_546] : memref<144x8x128xf32, #tpu.memory_space<vmem>>, vector<1x8x128xf32>
    %1174 = vector.shape_cast %1173 : vector<1x8x128xf32> to vector<8x128xf32>
    %c43_547 = arith.constant 43 : index
    %c0_548 = arith.constant 0 : index
    %c0_549 = arith.constant 0 : index
    %1175 = vector.load %arg1[%c43_547, %c0_548, %c0_549] : memref<144x8x128xf32, #tpu.memory_space<vmem>>, vector<1x8x128xf32>
    %1176 = vector.shape_cast %1175 : vector<1x8x128xf32> to vector<8x128xf32>
    %c44_550 = arith.constant 44 : index
    %c0_551 = arith.constant 0 : index
    %c0_552 = arith.constant 0 : index
    %1177 = vector.load %arg1[%c44_550, %c0_551, %c0_552] : memref<144x8x128xf32, #tpu.memory_space<vmem>>, vector<1x8x128xf32>
    %1178 = vector.shape_cast %1177 : vector<1x8x128xf32> to vector<8x128xf32>
    %c45_553 = arith.constant 45 : index
    %c0_554 = arith.constant 0 : index
    %c0_555 = arith.constant 0 : index
    %1179 = vector.load %arg1[%c45_553, %c0_554, %c0_555] : memref<144x8x128xf32, #tpu.memory_space<vmem>>, vector<1x8x128xf32>
    %1180 = vector.shape_cast %1179 : vector<1x8x128xf32> to vector<8x128xf32>
    %c46_556 = arith.constant 46 : index
    %c0_557 = arith.constant 0 : index
    %c0_558 = arith.constant 0 : index
    %1181 = vector.load %arg1[%c46_556, %c0_557, %c0_558] : memref<144x8x128xf32, #tpu.memory_space<vmem>>, vector<1x8x128xf32>
    %1182 = vector.shape_cast %1181 : vector<1x8x128xf32> to vector<8x128xf32>
    %c47_559 = arith.constant 47 : index
    %c0_560 = arith.constant 0 : index
    %c0_561 = arith.constant 0 : index
    %1183 = vector.load %arg1[%c47_559, %c0_560, %c0_561] : memref<144x8x128xf32, #tpu.memory_space<vmem>>, vector<1x8x128xf32>
    %1184 = vector.shape_cast %1183 : vector<1x8x128xf32> to vector<8x128xf32>
    %1185 = arith.mulf %1174, %1174 : vector<8x128xf32>
    %1186 = arith.mulf %1176, %1176 : vector<8x128xf32>
    %1187 = arith.addf %1185, %1186 : vector<8x128xf32>
    %1188 = arith.mulf %1178, %1178 : vector<8x128xf32>
    %1189 = arith.addf %1187, %1188 : vector<8x128xf32>
    %cst_562 = arith.constant 1.000000e-24 : f32
    %1190 = vector.broadcast %cst_562 : f32 to vector<8x128xf32>
    %1191 = arith.maximumf %1189, %1190 : vector<8x128xf32>
    %1192 = math.rsqrt %1191 : vector<8x128xf32>
    %1193 = arith.mulf %1174, %1192 : vector<8x128xf32>
    %1194 = arith.mulf %1176, %1192 : vector<8x128xf32>
    %1195 = arith.mulf %1178, %1192 : vector<8x128xf32>
    %1196 = arith.mulf %1193, %1180 : vector<8x128xf32>
    %1197 = arith.mulf %1194, %1182 : vector<8x128xf32>
    %1198 = arith.addf %1196, %1197 : vector<8x128xf32>
    %1199 = arith.mulf %1195, %1184 : vector<8x128xf32>
    %1200 = arith.addf %1198, %1199 : vector<8x128xf32>
    %1201 = arith.mulf %1200, %1193 : vector<8x128xf32>
    %1202 = arith.subf %1180, %1201 : vector<8x128xf32>
    %1203 = arith.mulf %1200, %1194 : vector<8x128xf32>
    %1204 = arith.subf %1182, %1203 : vector<8x128xf32>
    %1205 = arith.mulf %1200, %1195 : vector<8x128xf32>
    %1206 = arith.subf %1184, %1205 : vector<8x128xf32>
    %1207 = arith.mulf %1202, %1202 : vector<8x128xf32>
    %1208 = arith.mulf %1204, %1204 : vector<8x128xf32>
    %1209 = arith.addf %1207, %1208 : vector<8x128xf32>
    %1210 = arith.mulf %1206, %1206 : vector<8x128xf32>
    %1211 = arith.addf %1209, %1210 : vector<8x128xf32>
    %cst_563 = arith.constant 1.000000e-24 : f32
    %1212 = vector.broadcast %cst_563 : f32 to vector<8x128xf32>
    %1213 = arith.maximumf %1211, %1212 : vector<8x128xf32>
    %1214 = math.rsqrt %1213 : vector<8x128xf32>
    %1215 = arith.mulf %1202, %1214 : vector<8x128xf32>
    %1216 = arith.mulf %1204, %1214 : vector<8x128xf32>
    %1217 = arith.mulf %1206, %1214 : vector<8x128xf32>
    %1218 = arith.mulf %1194, %1217 : vector<8x128xf32>
    %1219 = arith.mulf %1195, %1216 : vector<8x128xf32>
    %1220 = arith.subf %1218, %1219 : vector<8x128xf32>
    %1221 = arith.mulf %1195, %1215 : vector<8x128xf32>
    %1222 = arith.mulf %1193, %1217 : vector<8x128xf32>
    %1223 = arith.subf %1221, %1222 : vector<8x128xf32>
    %1224 = arith.mulf %1193, %1216 : vector<8x128xf32>
    %1225 = arith.mulf %1194, %1215 : vector<8x128xf32>
    %1226 = arith.subf %1224, %1225 : vector<8x128xf32>
    %1227 = arith.mulf %1123, %1193 : vector<8x128xf32>
    %1228 = arith.mulf %1125, %1215 : vector<8x128xf32>
    %1229 = arith.addf %1227, %1228 : vector<8x128xf32>
    %1230 = arith.mulf %1127, %1220 : vector<8x128xf32>
    %1231 = arith.addf %1229, %1230 : vector<8x128xf32>
    %1232 = arith.mulf %1123, %1194 : vector<8x128xf32>
    %1233 = arith.mulf %1125, %1216 : vector<8x128xf32>
    %1234 = arith.addf %1232, %1233 : vector<8x128xf32>
    %1235 = arith.mulf %1127, %1223 : vector<8x128xf32>
    %1236 = arith.addf %1234, %1235 : vector<8x128xf32>
    %1237 = arith.mulf %1123, %1195 : vector<8x128xf32>
    %1238 = arith.mulf %1125, %1217 : vector<8x128xf32>
    %1239 = arith.addf %1237, %1238 : vector<8x128xf32>
    %1240 = arith.mulf %1127, %1226 : vector<8x128xf32>
    %1241 = arith.addf %1239, %1240 : vector<8x128xf32>
    %1242 = arith.mulf %1129, %1193 : vector<8x128xf32>
    %1243 = arith.mulf %1131, %1215 : vector<8x128xf32>
    %1244 = arith.addf %1242, %1243 : vector<8x128xf32>
    %1245 = arith.mulf %1133, %1220 : vector<8x128xf32>
    %1246 = arith.addf %1244, %1245 : vector<8x128xf32>
    %1247 = arith.mulf %1129, %1194 : vector<8x128xf32>
    %1248 = arith.mulf %1131, %1216 : vector<8x128xf32>
    %1249 = arith.addf %1247, %1248 : vector<8x128xf32>
    %1250 = arith.mulf %1133, %1223 : vector<8x128xf32>
    %1251 = arith.addf %1249, %1250 : vector<8x128xf32>
    %1252 = arith.mulf %1129, %1195 : vector<8x128xf32>
    %1253 = arith.mulf %1131, %1217 : vector<8x128xf32>
    %1254 = arith.addf %1252, %1253 : vector<8x128xf32>
    %1255 = arith.mulf %1133, %1226 : vector<8x128xf32>
    %1256 = arith.addf %1254, %1255 : vector<8x128xf32>
    %1257 = arith.mulf %1135, %1193 : vector<8x128xf32>
    %1258 = arith.mulf %1137, %1215 : vector<8x128xf32>
    %1259 = arith.addf %1257, %1258 : vector<8x128xf32>
    %1260 = arith.mulf %1139, %1220 : vector<8x128xf32>
    %1261 = arith.addf %1259, %1260 : vector<8x128xf32>
    %1262 = arith.mulf %1135, %1194 : vector<8x128xf32>
    %1263 = arith.mulf %1137, %1216 : vector<8x128xf32>
    %1264 = arith.addf %1262, %1263 : vector<8x128xf32>
    %1265 = arith.mulf %1139, %1223 : vector<8x128xf32>
    %1266 = arith.addf %1264, %1265 : vector<8x128xf32>
    %1267 = arith.mulf %1135, %1195 : vector<8x128xf32>
    %1268 = arith.mulf %1137, %1217 : vector<8x128xf32>
    %1269 = arith.addf %1267, %1268 : vector<8x128xf32>
    %1270 = arith.mulf %1139, %1226 : vector<8x128xf32>
    %1271 = arith.addf %1269, %1270 : vector<8x128xf32>
    %c63 = arith.constant 63 : index
    %c0_564 = arith.constant 0 : index
    %c0_565 = arith.constant 0 : index
    %1272 = vector.load %arg4[%c63, %c0_564, %c0_565] : memref<171x8x128xf32, #tpu.memory_space<vmem>>, vector<1x8x128xf32>
    %1273 = vector.shape_cast %1272 : vector<1x8x128xf32> to vector<8x128xf32>
    %1274 = vector.shape_cast %1231 : vector<8x128xf32> to vector<1x8x128xf32>
    tpu.vector_store %arg4[%c63, %c0_564, %c0_565], %1274 {strides = array<i32>} : memref<171x8x128xf32, #tpu.memory_space<vmem>>, vector<1x8x128xf32>,
    %c64 = arith.constant 64 : index
    %c0_566 = arith.constant 0 : index
    %c0_567 = arith.constant 0 : index
    %1275 = vector.load %arg4[%c64, %c0_566, %c0_567] : memref<171x8x128xf32, #tpu.memory_space<vmem>>, vector<1x8x128xf32>
    %1276 = vector.shape_cast %1275 : vector<1x8x128xf32> to vector<8x128xf32>
    %1277 = vector.shape_cast %1236 : vector<8x128xf32> to vector<1x8x128xf32>
    tpu.vector_store %arg4[%c64, %c0_566, %c0_567], %1277 {strides = array<i32>} : memref<171x8x128xf32, #tpu.memory_space<vmem>>, vector<1x8x128xf32>,
    %c65 = arith.constant 65 : index
    %c0_568 = arith.constant 0 : index
    %c0_569 = arith.constant 0 : index
    %1278 = vector.load %arg4[%c65, %c0_568, %c0_569] : memref<171x8x128xf32, #tpu.memory_space<vmem>>, vector<1x8x128xf32>
    %1279 = vector.shape_cast %1278 : vector<1x8x128xf32> to vector<8x128xf32>
    %1280 = vector.shape_cast %1241 : vector<8x128xf32> to vector<1x8x128xf32>
    tpu.vector_store %arg4[%c65, %c0_568, %c0_569], %1280 {strides = array<i32>} : memref<171x8x128xf32, #tpu.memory_space<vmem>>, vector<1x8x128xf32>,
    %c66 = arith.constant 66 : index
    %c0_570 = arith.constant 0 : index
    %c0_571 = arith.constant 0 : index
    %1281 = vector.load %arg4[%c66, %c0_570, %c0_571] : memref<171x8x128xf32, #tpu.memory_space<vmem>>, vector<1x8x128xf32>
    %1282 = vector.shape_cast %1281 : vector<1x8x128xf32> to vector<8x128xf32>
    %1283 = vector.shape_cast %1246 : vector<8x128xf32> to vector<1x8x128xf32>
    tpu.vector_store %arg4[%c66, %c0_570, %c0_571], %1283 {strides = array<i32>} : memref<171x8x128xf32, #tpu.memory_space<vmem>>, vector<1x8x128xf32>,
    %c67 = arith.constant 67 : index
    %c0_572 = arith.constant 0 : index
    %c0_573 = arith.constant 0 : index
    %1284 = vector.load %arg4[%c67, %c0_572, %c0_573] : memref<171x8x128xf32, #tpu.memory_space<vmem>>, vector<1x8x128xf32>
    %1285 = vector.shape_cast %1284 : vector<1x8x128xf32> to vector<8x128xf32>
    %1286 = vector.shape_cast %1251 : vector<8x128xf32> to vector<1x8x128xf32>
    tpu.vector_store %arg4[%c67, %c0_572, %c0_573], %1286 {strides = array<i32>} : memref<171x8x128xf32, #tpu.memory_space<vmem>>, vector<1x8x128xf32>,
    %c68 = arith.constant 68 : index
    %c0_574 = arith.constant 0 : index
    %c0_575 = arith.constant 0 : index
    %1287 = vector.load %arg4[%c68, %c0_574, %c0_575] : memref<171x8x128xf32, #tpu.memory_space<vmem>>, vector<1x8x128xf32>
    %1288 = vector.shape_cast %1287 : vector<1x8x128xf32> to vector<8x128xf32>
    %1289 = vector.shape_cast %1256 : vector<8x128xf32> to vector<1x8x128xf32>
    tpu.vector_store %arg4[%c68, %c0_574, %c0_575], %1289 {strides = array<i32>} : memref<171x8x128xf32, #tpu.memory_space<vmem>>, vector<1x8x128xf32>,
    %c69 = arith.constant 69 : index
    %c0_576 = arith.constant 0 : index
    %c0_577 = arith.constant 0 : index
    %1290 = vector.load %arg4[%c69, %c0_576, %c0_577] : memref<171x8x128xf32, #tpu.memory_space<vmem>>, vector<1x8x128xf32>
    %1291 = vector.shape_cast %1290 : vector<1x8x128xf32> to vector<8x128xf32>
    %1292 = vector.shape_cast %1261 : vector<8x128xf32> to vector<1x8x128xf32>
    tpu.vector_store %arg4[%c69, %c0_576, %c0_577], %1292 {strides = array<i32>} : memref<171x8x128xf32, #tpu.memory_space<vmem>>, vector<1x8x128xf32>,
    %c70 = arith.constant 70 : index
    %c0_578 = arith.constant 0 : index
    %c0_579 = arith.constant 0 : index
    %1293 = vector.load %arg4[%c70, %c0_578, %c0_579] : memref<171x8x128xf32, #tpu.memory_space<vmem>>, vector<1x8x128xf32>
    %1294 = vector.shape_cast %1293 : vector<1x8x128xf32> to vector<8x128xf32>
    %1295 = vector.shape_cast %1266 : vector<8x128xf32> to vector<1x8x128xf32>
    tpu.vector_store %arg4[%c70, %c0_578, %c0_579], %1295 {strides = array<i32>} : memref<171x8x128xf32, #tpu.memory_space<vmem>>, vector<1x8x128xf32>,
    %c71 = arith.constant 71 : index
    %c0_580 = arith.constant 0 : index
    %c0_581 = arith.constant 0 : index
    %1296 = vector.load %arg4[%c71, %c0_580, %c0_581] : memref<171x8x128xf32, #tpu.memory_space<vmem>>, vector<1x8x128xf32>
    %1297 = vector.shape_cast %1296 : vector<1x8x128xf32> to vector<8x128xf32>
    %1298 = vector.shape_cast %1271 : vector<8x128xf32> to vector<1x8x128xf32>
    tpu.vector_store %arg4[%c71, %c0_580, %c0_581], %1298 {strides = array<i32>} : memref<171x8x128xf32, #tpu.memory_space<vmem>>, vector<1x8x128xf32>,
    %c45_582 = arith.constant 45 : index
    %c0_583 = arith.constant 0 : index
    %c0_584 = arith.constant 0 : index
    %1299 = vector.load %arg4[%c45_582, %c0_583, %c0_584] : memref<171x8x128xf32, #tpu.memory_space<vmem>>, vector<1x8x128xf32>
    %1300 = vector.shape_cast %1299 : vector<1x8x128xf32> to vector<8x128xf32>
    %c46_585 = arith.constant 46 : index
    %c0_586 = arith.constant 0 : index
    %c0_587 = arith.constant 0 : index
    %1301 = vector.load %arg4[%c46_585, %c0_586, %c0_587] : memref<171x8x128xf32, #tpu.memory_space<vmem>>, vector<1x8x128xf32>
    %1302 = vector.shape_cast %1301 : vector<1x8x128xf32> to vector<8x128xf32>
    %c47_588 = arith.constant 47 : index
    %c0_589 = arith.constant 0 : index
    %c0_590 = arith.constant 0 : index
    %1303 = vector.load %arg4[%c47_588, %c0_589, %c0_590] : memref<171x8x128xf32, #tpu.memory_space<vmem>>, vector<1x8x128xf32>
    %1304 = vector.shape_cast %1303 : vector<1x8x128xf32> to vector<8x128xf32>
    %c48_591 = arith.constant 48 : index
    %c0_592 = arith.constant 0 : index
    %c0_593 = arith.constant 0 : index
    %1305 = vector.load %arg4[%c48_591, %c0_592, %c0_593] : memref<171x8x128xf32, #tpu.memory_space<vmem>>, vector<1x8x128xf32>
    %1306 = vector.shape_cast %1305 : vector<1x8x128xf32> to vector<8x128xf32>
    %c49_594 = arith.constant 49 : index
    %c0_595 = arith.constant 0 : index
    %c0_596 = arith.constant 0 : index
    %1307 = vector.load %arg4[%c49_594, %c0_595, %c0_596] : memref<171x8x128xf32, #tpu.memory_space<vmem>>, vector<1x8x128xf32>
    %1308 = vector.shape_cast %1307 : vector<1x8x128xf32> to vector<8x128xf32>
    %c50_597 = arith.constant 50 : index
    %c0_598 = arith.constant 0 : index
    %c0_599 = arith.constant 0 : index
    %1309 = vector.load %arg4[%c50_597, %c0_598, %c0_599] : memref<171x8x128xf32, #tpu.memory_space<vmem>>, vector<1x8x128xf32>
    %1310 = vector.shape_cast %1309 : vector<1x8x128xf32> to vector<8x128xf32>
    %c51_600 = arith.constant 51 : index
    %c0_601 = arith.constant 0 : index
    %c0_602 = arith.constant 0 : index
    %1311 = vector.load %arg4[%c51_600, %c0_601, %c0_602] : memref<171x8x128xf32, #tpu.memory_space<vmem>>, vector<1x8x128xf32>
    %1312 = vector.shape_cast %1311 : vector<1x8x128xf32> to vector<8x128xf32>
    %c52_603 = arith.constant 52 : index
    %c0_604 = arith.constant 0 : index
    %c0_605 = arith.constant 0 : index
    %1313 = vector.load %arg4[%c52_603, %c0_604, %c0_605] : memref<171x8x128xf32, #tpu.memory_space<vmem>>, vector<1x8x128xf32>
    %1314 = vector.shape_cast %1313 : vector<1x8x128xf32> to vector<8x128xf32>
    %c53_606 = arith.constant 53 : index
    %c0_607 = arith.constant 0 : index
    %c0_608 = arith.constant 0 : index
    %1315 = vector.load %arg4[%c53_606, %c0_607, %c0_608] : memref<171x8x128xf32, #tpu.memory_space<vmem>>, vector<1x8x128xf32>
    %1316 = vector.shape_cast %1315 : vector<1x8x128xf32> to vector<8x128xf32>
    %c24_609 = arith.constant 24 : index
    %c0_610 = arith.constant 0 : index
    %c0_611 = arith.constant 0 : index
    %1317 = vector.load %arg2[%c24_609, %c0_610, %c0_611] : memref<72x8x128xf32, #tpu.memory_space<vmem>>, vector<1x8x128xf32>
    %1318 = vector.shape_cast %1317 : vector<1x8x128xf32> to vector<8x128xf32>
    %c25_612 = arith.constant 25 : index
    %c0_613 = arith.constant 0 : index
    %c0_614 = arith.constant 0 : index
    %1319 = vector.load %arg2[%c25_612, %c0_613, %c0_614] : memref<72x8x128xf32, #tpu.memory_space<vmem>>, vector<1x8x128xf32>
    %1320 = vector.shape_cast %1319 : vector<1x8x128xf32> to vector<8x128xf32>
    %c26_615 = arith.constant 26 : index
    %c0_616 = arith.constant 0 : index
    %c0_617 = arith.constant 0 : index
    %1321 = vector.load %arg2[%c26_615, %c0_616, %c0_617] : memref<72x8x128xf32, #tpu.memory_space<vmem>>, vector<1x8x128xf32>
    %1322 = vector.shape_cast %1321 : vector<1x8x128xf32> to vector<8x128xf32>
    %1323 = arith.mulf %1300, %1318 : vector<8x128xf32>
    %1324 = arith.mulf %1302, %1320 : vector<8x128xf32>
    %1325 = arith.addf %1323, %1324 : vector<8x128xf32>
    %1326 = arith.mulf %1304, %1322 : vector<8x128xf32>
    %1327 = arith.addf %1325, %1326 : vector<8x128xf32>
    %1328 = arith.mulf %1306, %1318 : vector<8x128xf32>
    %1329 = arith.mulf %1308, %1320 : vector<8x128xf32>
    %1330 = arith.addf %1328, %1329 : vector<8x128xf32>
    %1331 = arith.mulf %1310, %1322 : vector<8x128xf32>
    %1332 = arith.addf %1330, %1331 : vector<8x128xf32>
    %1333 = arith.mulf %1312, %1318 : vector<8x128xf32>
    %1334 = arith.mulf %1314, %1320 : vector<8x128xf32>
    %1335 = arith.addf %1333, %1334 : vector<8x128xf32>
    %1336 = arith.mulf %1316, %1322 : vector<8x128xf32>
    %1337 = arith.addf %1335, %1336 : vector<8x128xf32>
    %1338 = arith.addf %1327, %807 : vector<8x128xf32>
    %1339 = arith.addf %1332, %808 : vector<8x128xf32>
    %1340 = arith.addf %1337, %809 : vector<8x128xf32>
    %c24_618 = arith.constant 24 : index
    %c0_619 = arith.constant 0 : index
    %c0_620 = arith.constant 0 : index
    %1341 = vector.load %arg3[%c24_618, %c0_619, %c0_620] : memref<72x8x128xf32, #tpu.memory_space<vmem>>, vector<1x8x128xf32>
    %1342 = vector.shape_cast %1341 : vector<1x8x128xf32> to vector<8x128xf32>
    %1343 = vector.shape_cast %1338 : vector<8x128xf32> to vector<1x8x128xf32>
    tpu.vector_store %arg3[%c24_618, %c0_619, %c0_620], %1343 {strides = array<i32>} : memref<72x8x128xf32, #tpu.memory_space<vmem>>, vector<1x8x128xf32>,
    %c25_621 = arith.constant 25 : index
    %c0_622 = arith.constant 0 : index
    %c0_623 = arith.constant 0 : index
    %1344 = vector.load %arg3[%c25_621, %c0_622, %c0_623] : memref<72x8x128xf32, #tpu.memory_space<vmem>>, vector<1x8x128xf32>
    %1345 = vector.shape_cast %1344 : vector<1x8x128xf32> to vector<8x128xf32>
    %1346 = vector.shape_cast %1339 : vector<8x128xf32> to vector<1x8x128xf32>
    tpu.vector_store %arg3[%c25_621, %c0_622, %c0_623], %1346 {strides = array<i32>} : memref<72x8x128xf32, #tpu.memory_space<vmem>>, vector<1x8x128xf32>,
    %c26_624 = arith.constant 26 : index
    %c0_625 = arith.constant 0 : index
    %c0_626 = arith.constant 0 : index
    %1347 = vector.load %arg3[%c26_624, %c0_625, %c0_626] : memref<72x8x128xf32, #tpu.memory_space<vmem>>, vector<1x8x128xf32>
    %1348 = vector.shape_cast %1347 : vector<1x8x128xf32> to vector<8x128xf32>
    %1349 = vector.shape_cast %1340 : vector<8x128xf32> to vector<1x8x128xf32>
    tpu.vector_store %arg3[%c26_624, %c0_625, %c0_626], %1349 {strides = array<i32>} : memref<72x8x128xf32, #tpu.memory_space<vmem>>, vector<1x8x128xf32>,
    %c48_627 = arith.constant 48 : index
    %c0_628 = arith.constant 0 : index
    %c0_629 = arith.constant 0 : index
    %1350 = vector.load %arg1[%c48_627, %c0_628, %c0_629] : memref<144x8x128xf32, #tpu.memory_space<vmem>>, vector<1x8x128xf32>
    %1351 = vector.shape_cast %1350 : vector<1x8x128xf32> to vector<8x128xf32>
    %c49_630 = arith.constant 49 : index
    %c0_631 = arith.constant 0 : index
    %c0_632 = arith.constant 0 : index
    %1352 = vector.load %arg1[%c49_630, %c0_631, %c0_632] : memref<144x8x128xf32, #tpu.memory_space<vmem>>, vector<1x8x128xf32>
    %1353 = vector.shape_cast %1352 : vector<1x8x128xf32> to vector<8x128xf32>
    %c50_633 = arith.constant 50 : index
    %c0_634 = arith.constant 0 : index
    %c0_635 = arith.constant 0 : index
    %1354 = vector.load %arg1[%c50_633, %c0_634, %c0_635] : memref<144x8x128xf32, #tpu.memory_space<vmem>>, vector<1x8x128xf32>
    %1355 = vector.shape_cast %1354 : vector<1x8x128xf32> to vector<8x128xf32>
    %c51_636 = arith.constant 51 : index
    %c0_637 = arith.constant 0 : index
    %c0_638 = arith.constant 0 : index
    %1356 = vector.load %arg1[%c51_636, %c0_637, %c0_638] : memref<144x8x128xf32, #tpu.memory_space<vmem>>, vector<1x8x128xf32>
    %1357 = vector.shape_cast %1356 : vector<1x8x128xf32> to vector<8x128xf32>
    %c52_639 = arith.constant 52 : index
    %c0_640 = arith.constant 0 : index
    %c0_641 = arith.constant 0 : index
    %1358 = vector.load %arg1[%c52_639, %c0_640, %c0_641] : memref<144x8x128xf32, #tpu.memory_space<vmem>>, vector<1x8x128xf32>
    %1359 = vector.shape_cast %1358 : vector<1x8x128xf32> to vector<8x128xf32>
    %c53_642 = arith.constant 53 : index
    %c0_643 = arith.constant 0 : index
    %c0_644 = arith.constant 0 : index
    %1360 = vector.load %arg1[%c53_642, %c0_643, %c0_644] : memref<144x8x128xf32, #tpu.memory_space<vmem>>, vector<1x8x128xf32>
    %1361 = vector.shape_cast %1360 : vector<1x8x128xf32> to vector<8x128xf32>
    %1362 = arith.mulf %1351, %1351 : vector<8x128xf32>
    %1363 = arith.mulf %1353, %1353 : vector<8x128xf32>
    %1364 = arith.addf %1362, %1363 : vector<8x128xf32>
    %1365 = arith.mulf %1355, %1355 : vector<8x128xf32>
    %1366 = arith.addf %1364, %1365 : vector<8x128xf32>
    %cst_645 = arith.constant 1.000000e-24 : f32
    %1367 = vector.broadcast %cst_645 : f32 to vector<8x128xf32>
    %1368 = arith.maximumf %1366, %1367 : vector<8x128xf32>
    %1369 = math.rsqrt %1368 : vector<8x128xf32>
    %1370 = arith.mulf %1351, %1369 : vector<8x128xf32>
    %1371 = arith.mulf %1353, %1369 : vector<8x128xf32>
    %1372 = arith.mulf %1355, %1369 : vector<8x128xf32>
    %1373 = arith.mulf %1370, %1357 : vector<8x128xf32>
    %1374 = arith.mulf %1371, %1359 : vector<8x128xf32>
    %1375 = arith.addf %1373, %1374 : vector<8x128xf32>
    %1376 = arith.mulf %1372, %1361 : vector<8x128xf32>
    %1377 = arith.addf %1375, %1376 : vector<8x128xf32>
    %1378 = arith.mulf %1377, %1370 : vector<8x128xf32>
    %1379 = arith.subf %1357, %1378 : vector<8x128xf32>
    %1380 = arith.mulf %1377, %1371 : vector<8x128xf32>
    %1381 = arith.subf %1359, %1380 : vector<8x128xf32>
    %1382 = arith.mulf %1377, %1372 : vector<8x128xf32>
    %1383 = arith.subf %1361, %1382 : vector<8x128xf32>
    %1384 = arith.mulf %1379, %1379 : vector<8x128xf32>
    %1385 = arith.mulf %1381, %1381 : vector<8x128xf32>
    %1386 = arith.addf %1384, %1385 : vector<8x128xf32>
    %1387 = arith.mulf %1383, %1383 : vector<8x128xf32>
    %1388 = arith.addf %1386, %1387 : vector<8x128xf32>
    %cst_646 = arith.constant 1.000000e-24 : f32
    %1389 = vector.broadcast %cst_646 : f32 to vector<8x128xf32>
    %1390 = arith.maximumf %1388, %1389 : vector<8x128xf32>
    %1391 = math.rsqrt %1390 : vector<8x128xf32>
    %1392 = arith.mulf %1379, %1391 : vector<8x128xf32>
    %1393 = arith.mulf %1381, %1391 : vector<8x128xf32>
    %1394 = arith.mulf %1383, %1391 : vector<8x128xf32>
    %1395 = arith.mulf %1371, %1394 : vector<8x128xf32>
    %1396 = arith.mulf %1372, %1393 : vector<8x128xf32>
    %1397 = arith.subf %1395, %1396 : vector<8x128xf32>
    %1398 = arith.mulf %1372, %1392 : vector<8x128xf32>
    %1399 = arith.mulf %1370, %1394 : vector<8x128xf32>
    %1400 = arith.subf %1398, %1399 : vector<8x128xf32>
    %1401 = arith.mulf %1370, %1393 : vector<8x128xf32>
    %1402 = arith.mulf %1371, %1392 : vector<8x128xf32>
    %1403 = arith.subf %1401, %1402 : vector<8x128xf32>
    %1404 = arith.mulf %1300, %1370 : vector<8x128xf32>
    %1405 = arith.mulf %1302, %1392 : vector<8x128xf32>
    %1406 = arith.addf %1404, %1405 : vector<8x128xf32>
    %1407 = arith.mulf %1304, %1397 : vector<8x128xf32>
    %1408 = arith.addf %1406, %1407 : vector<8x128xf32>
    %1409 = arith.mulf %1300, %1371 : vector<8x128xf32>
    %1410 = arith.mulf %1302, %1393 : vector<8x128xf32>
    %1411 = arith.addf %1409, %1410 : vector<8x128xf32>
    %1412 = arith.mulf %1304, %1400 : vector<8x128xf32>
    %1413 = arith.addf %1411, %1412 : vector<8x128xf32>
    %1414 = arith.mulf %1300, %1372 : vector<8x128xf32>
    %1415 = arith.mulf %1302, %1394 : vector<8x128xf32>
    %1416 = arith.addf %1414, %1415 : vector<8x128xf32>
    %1417 = arith.mulf %1304, %1403 : vector<8x128xf32>
    %1418 = arith.addf %1416, %1417 : vector<8x128xf32>
    %1419 = arith.mulf %1306, %1370 : vector<8x128xf32>
    %1420 = arith.mulf %1308, %1392 : vector<8x128xf32>
    %1421 = arith.addf %1419, %1420 : vector<8x128xf32>
    %1422 = arith.mulf %1310, %1397 : vector<8x128xf32>
    %1423 = arith.addf %1421, %1422 : vector<8x128xf32>
    %1424 = arith.mulf %1306, %1371 : vector<8x128xf32>
    %1425 = arith.mulf %1308, %1393 : vector<8x128xf32>
    %1426 = arith.addf %1424, %1425 : vector<8x128xf32>
    %1427 = arith.mulf %1310, %1400 : vector<8x128xf32>
    %1428 = arith.addf %1426, %1427 : vector<8x128xf32>
    %1429 = arith.mulf %1306, %1372 : vector<8x128xf32>
    %1430 = arith.mulf %1308, %1394 : vector<8x128xf32>
    %1431 = arith.addf %1429, %1430 : vector<8x128xf32>
    %1432 = arith.mulf %1310, %1403 : vector<8x128xf32>
    %1433 = arith.addf %1431, %1432 : vector<8x128xf32>
    %1434 = arith.mulf %1312, %1370 : vector<8x128xf32>
    %1435 = arith.mulf %1314, %1392 : vector<8x128xf32>
    %1436 = arith.addf %1434, %1435 : vector<8x128xf32>
    %1437 = arith.mulf %1316, %1397 : vector<8x128xf32>
    %1438 = arith.addf %1436, %1437 : vector<8x128xf32>
    %1439 = arith.mulf %1312, %1371 : vector<8x128xf32>
    %1440 = arith.mulf %1314, %1393 : vector<8x128xf32>
    %1441 = arith.addf %1439, %1440 : vector<8x128xf32>
    %1442 = arith.mulf %1316, %1400 : vector<8x128xf32>
    %1443 = arith.addf %1441, %1442 : vector<8x128xf32>
    %1444 = arith.mulf %1312, %1372 : vector<8x128xf32>
    %1445 = arith.mulf %1314, %1394 : vector<8x128xf32>
    %1446 = arith.addf %1444, %1445 : vector<8x128xf32>
    %1447 = arith.mulf %1316, %1403 : vector<8x128xf32>
    %1448 = arith.addf %1446, %1447 : vector<8x128xf32>
    %c72 = arith.constant 72 : index
    %c0_647 = arith.constant 0 : index
    %c0_648 = arith.constant 0 : index
    %1449 = vector.load %arg4[%c72, %c0_647, %c0_648] : memref<171x8x128xf32, #tpu.memory_space<vmem>>, vector<1x8x128xf32>
    %1450 = vector.shape_cast %1449 : vector<1x8x128xf32> to vector<8x128xf32>
    %1451 = vector.shape_cast %1408 : vector<8x128xf32> to vector<1x8x128xf32>
    tpu.vector_store %arg4[%c72, %c0_647, %c0_648], %1451 {strides = array<i32>} : memref<171x8x128xf32, #tpu.memory_space<vmem>>, vector<1x8x128xf32>,
    %c73 = arith.constant 73 : index
    %c0_649 = arith.constant 0 : index
    %c0_650 = arith.constant 0 : index
    %1452 = vector.load %arg4[%c73, %c0_649, %c0_650] : memref<171x8x128xf32, #tpu.memory_space<vmem>>, vector<1x8x128xf32>
    %1453 = vector.shape_cast %1452 : vector<1x8x128xf32> to vector<8x128xf32>
    %1454 = vector.shape_cast %1413 : vector<8x128xf32> to vector<1x8x128xf32>
    tpu.vector_store %arg4[%c73, %c0_649, %c0_650], %1454 {strides = array<i32>} : memref<171x8x128xf32, #tpu.memory_space<vmem>>, vector<1x8x128xf32>,
    %c74 = arith.constant 74 : index
    %c0_651 = arith.constant 0 : index
    %c0_652 = arith.constant 0 : index
    %1455 = vector.load %arg4[%c74, %c0_651, %c0_652] : memref<171x8x128xf32, #tpu.memory_space<vmem>>, vector<1x8x128xf32>
    %1456 = vector.shape_cast %1455 : vector<1x8x128xf32> to vector<8x128xf32>
    %1457 = vector.shape_cast %1418 : vector<8x128xf32> to vector<1x8x128xf32>
    tpu.vector_store %arg4[%c74, %c0_651, %c0_652], %1457 {strides = array<i32>} : memref<171x8x128xf32, #tpu.memory_space<vmem>>, vector<1x8x128xf32>,
    %c75 = arith.constant 75 : index
    %c0_653 = arith.constant 0 : index
    %c0_654 = arith.constant 0 : index
    %1458 = vector.load %arg4[%c75, %c0_653, %c0_654] : memref<171x8x128xf32, #tpu.memory_space<vmem>>, vector<1x8x128xf32>
    %1459 = vector.shape_cast %1458 : vector<1x8x128xf32> to vector<8x128xf32>
    %1460 = vector.shape_cast %1423 : vector<8x128xf32> to vector<1x8x128xf32>
    tpu.vector_store %arg4[%c75, %c0_653, %c0_654], %1460 {strides = array<i32>} : memref<171x8x128xf32, #tpu.memory_space<vmem>>, vector<1x8x128xf32>,
    %c76 = arith.constant 76 : index
    %c0_655 = arith.constant 0 : index
    %c0_656 = arith.constant 0 : index
    %1461 = vector.load %arg4[%c76, %c0_655, %c0_656] : memref<171x8x128xf32, #tpu.memory_space<vmem>>, vector<1x8x128xf32>
    %1462 = vector.shape_cast %1461 : vector<1x8x128xf32> to vector<8x128xf32>
    %1463 = vector.shape_cast %1428 : vector<8x128xf32> to vector<1x8x128xf32>
    tpu.vector_store %arg4[%c76, %c0_655, %c0_656], %1463 {strides = array<i32>} : memref<171x8x128xf32, #tpu.memory_space<vmem>>, vector<1x8x128xf32>,
    %c77 = arith.constant 77 : index
    %c0_657 = arith.constant 0 : index
    %c0_658 = arith.constant 0 : index
    %1464 = vector.load %arg4[%c77, %c0_657, %c0_658] : memref<171x8x128xf32, #tpu.memory_space<vmem>>, vector<1x8x128xf32>
    %1465 = vector.shape_cast %1464 : vector<1x8x128xf32> to vector<8x128xf32>
    %1466 = vector.shape_cast %1433 : vector<8x128xf32> to vector<1x8x128xf32>
    tpu.vector_store %arg4[%c77, %c0_657, %c0_658], %1466 {strides = array<i32>} : memref<171x8x128xf32, #tpu.memory_space<vmem>>, vector<1x8x128xf32>,
    %c78 = arith.constant 78 : index
    %c0_659 = arith.constant 0 : index
    %c0_660 = arith.constant 0 : index
    %1467 = vector.load %arg4[%c78, %c0_659, %c0_660] : memref<171x8x128xf32, #tpu.memory_space<vmem>>, vector<1x8x128xf32>
    %1468 = vector.shape_cast %1467 : vector<1x8x128xf32> to vector<8x128xf32>
    %1469 = vector.shape_cast %1438 : vector<8x128xf32> to vector<1x8x128xf32>
    tpu.vector_store %arg4[%c78, %c0_659, %c0_660], %1469 {strides = array<i32>} : memref<171x8x128xf32, #tpu.memory_space<vmem>>, vector<1x8x128xf32>,
    %c79 = arith.constant 79 : index
    %c0_661 = arith.constant 0 : index
    %c0_662 = arith.constant 0 : index
    %1470 = vector.load %arg4[%c79, %c0_661, %c0_662] : memref<171x8x128xf32, #tpu.memory_space<vmem>>, vector<1x8x128xf32>
    %1471 = vector.shape_cast %1470 : vector<1x8x128xf32> to vector<8x128xf32>
    %1472 = vector.shape_cast %1443 : vector<8x128xf32> to vector<1x8x128xf32>
    tpu.vector_store %arg4[%c79, %c0_661, %c0_662], %1472 {strides = array<i32>} : memref<171x8x128xf32, #tpu.memory_space<vmem>>, vector<1x8x128xf32>,
    %c80 = arith.constant 80 : index
    %c0_663 = arith.constant 0 : index
    %c0_664 = arith.constant 0 : index
    %1473 = vector.load %arg4[%c80, %c0_663, %c0_664] : memref<171x8x128xf32, #tpu.memory_space<vmem>>, vector<1x8x128xf32>
    %1474 = vector.shape_cast %1473 : vector<1x8x128xf32> to vector<8x128xf32>
    %1475 = vector.shape_cast %1448 : vector<8x128xf32> to vector<1x8x128xf32>
    tpu.vector_store %arg4[%c80, %c0_663, %c0_664], %1475 {strides = array<i32>} : memref<171x8x128xf32, #tpu.memory_space<vmem>>, vector<1x8x128xf32>,
    %c54_665 = arith.constant 54 : index
    %c0_666 = arith.constant 0 : index
    %c0_667 = arith.constant 0 : index
    %1476 = vector.load %arg4[%c54_665, %c0_666, %c0_667] : memref<171x8x128xf32, #tpu.memory_space<vmem>>, vector<1x8x128xf32>
    %1477 = vector.shape_cast %1476 : vector<1x8x128xf32> to vector<8x128xf32>
    %c55_668 = arith.constant 55 : index
    %c0_669 = arith.constant 0 : index
    %c0_670 = arith.constant 0 : index
    %1478 = vector.load %arg4[%c55_668, %c0_669, %c0_670] : memref<171x8x128xf32, #tpu.memory_space<vmem>>, vector<1x8x128xf32>
    %1479 = vector.shape_cast %1478 : vector<1x8x128xf32> to vector<8x128xf32>
    %c56_671 = arith.constant 56 : index
    %c0_672 = arith.constant 0 : index
    %c0_673 = arith.constant 0 : index
    %1480 = vector.load %arg4[%c56_671, %c0_672, %c0_673] : memref<171x8x128xf32, #tpu.memory_space<vmem>>, vector<1x8x128xf32>
    %1481 = vector.shape_cast %1480 : vector<1x8x128xf32> to vector<8x128xf32>
    %c57_674 = arith.constant 57 : index
    %c0_675 = arith.constant 0 : index
    %c0_676 = arith.constant 0 : index
    %1482 = vector.load %arg4[%c57_674, %c0_675, %c0_676] : memref<171x8x128xf32, #tpu.memory_space<vmem>>, vector<1x8x128xf32>
    %1483 = vector.shape_cast %1482 : vector<1x8x128xf32> to vector<8x128xf32>
    %c58_677 = arith.constant 58 : index
    %c0_678 = arith.constant 0 : index
    %c0_679 = arith.constant 0 : index
    %1484 = vector.load %arg4[%c58_677, %c0_678, %c0_679] : memref<171x8x128xf32, #tpu.memory_space<vmem>>, vector<1x8x128xf32>
    %1485 = vector.shape_cast %1484 : vector<1x8x128xf32> to vector<8x128xf32>
    %c59_680 = arith.constant 59 : index
    %c0_681 = arith.constant 0 : index
    %c0_682 = arith.constant 0 : index
    %1486 = vector.load %arg4[%c59_680, %c0_681, %c0_682] : memref<171x8x128xf32, #tpu.memory_space<vmem>>, vector<1x8x128xf32>
    %1487 = vector.shape_cast %1486 : vector<1x8x128xf32> to vector<8x128xf32>
    %c60_683 = arith.constant 60 : index
    %c0_684 = arith.constant 0 : index
    %c0_685 = arith.constant 0 : index
    %1488 = vector.load %arg4[%c60_683, %c0_684, %c0_685] : memref<171x8x128xf32, #tpu.memory_space<vmem>>, vector<1x8x128xf32>
    %1489 = vector.shape_cast %1488 : vector<1x8x128xf32> to vector<8x128xf32>
    %c61_686 = arith.constant 61 : index
    %c0_687 = arith.constant 0 : index
    %c0_688 = arith.constant 0 : index
    %1490 = vector.load %arg4[%c61_686, %c0_687, %c0_688] : memref<171x8x128xf32, #tpu.memory_space<vmem>>, vector<1x8x128xf32>
    %1491 = vector.shape_cast %1490 : vector<1x8x128xf32> to vector<8x128xf32>
    %c62_689 = arith.constant 62 : index
    %c0_690 = arith.constant 0 : index
    %c0_691 = arith.constant 0 : index
    %1492 = vector.load %arg4[%c62_689, %c0_690, %c0_691] : memref<171x8x128xf32, #tpu.memory_space<vmem>>, vector<1x8x128xf32>
    %1493 = vector.shape_cast %1492 : vector<1x8x128xf32> to vector<8x128xf32>
    %c27_692 = arith.constant 27 : index
    %c0_693 = arith.constant 0 : index
    %c0_694 = arith.constant 0 : index
    %1494 = vector.load %arg2[%c27_692, %c0_693, %c0_694] : memref<72x8x128xf32, #tpu.memory_space<vmem>>, vector<1x8x128xf32>
    %1495 = vector.shape_cast %1494 : vector<1x8x128xf32> to vector<8x128xf32>
    %c28_695 = arith.constant 28 : index
    %c0_696 = arith.constant 0 : index
    %c0_697 = arith.constant 0 : index
    %1496 = vector.load %arg2[%c28_695, %c0_696, %c0_697] : memref<72x8x128xf32, #tpu.memory_space<vmem>>, vector<1x8x128xf32>
    %1497 = vector.shape_cast %1496 : vector<1x8x128xf32> to vector<8x128xf32>
    %c29_698 = arith.constant 29 : index
    %c0_699 = arith.constant 0 : index
    %c0_700 = arith.constant 0 : index
    %1498 = vector.load %arg2[%c29_698, %c0_699, %c0_700] : memref<72x8x128xf32, #tpu.memory_space<vmem>>, vector<1x8x128xf32>
    %1499 = vector.shape_cast %1498 : vector<1x8x128xf32> to vector<8x128xf32>
    %1500 = arith.mulf %1477, %1495 : vector<8x128xf32>
    %1501 = arith.mulf %1479, %1497 : vector<8x128xf32>
    %1502 = arith.addf %1500, %1501 : vector<8x128xf32>
    %1503 = arith.mulf %1481, %1499 : vector<8x128xf32>
    %1504 = arith.addf %1502, %1503 : vector<8x128xf32>
    %1505 = arith.mulf %1483, %1495 : vector<8x128xf32>
    %1506 = arith.mulf %1485, %1497 : vector<8x128xf32>
    %1507 = arith.addf %1505, %1506 : vector<8x128xf32>
    %1508 = arith.mulf %1487, %1499 : vector<8x128xf32>
    %1509 = arith.addf %1507, %1508 : vector<8x128xf32>
    %1510 = arith.mulf %1489, %1495 : vector<8x128xf32>
    %1511 = arith.mulf %1491, %1497 : vector<8x128xf32>
    %1512 = arith.addf %1510, %1511 : vector<8x128xf32>
    %1513 = arith.mulf %1493, %1499 : vector<8x128xf32>
    %1514 = arith.addf %1512, %1513 : vector<8x128xf32>
    %1515 = arith.addf %1504, %984 : vector<8x128xf32>
    %1516 = arith.addf %1509, %985 : vector<8x128xf32>
    %1517 = arith.addf %1514, %986 : vector<8x128xf32>
    %c27_701 = arith.constant 27 : index
    %c0_702 = arith.constant 0 : index
    %c0_703 = arith.constant 0 : index
    %1518 = vector.load %arg3[%c27_701, %c0_702, %c0_703] : memref<72x8x128xf32, #tpu.memory_space<vmem>>, vector<1x8x128xf32>
    %1519 = vector.shape_cast %1518 : vector<1x8x128xf32> to vector<8x128xf32>
    %1520 = vector.shape_cast %1515 : vector<8x128xf32> to vector<1x8x128xf32>
    tpu.vector_store %arg3[%c27_701, %c0_702, %c0_703], %1520 {strides = array<i32>} : memref<72x8x128xf32, #tpu.memory_space<vmem>>, vector<1x8x128xf32>,
    %c28_704 = arith.constant 28 : index
    %c0_705 = arith.constant 0 : index
    %c0_706 = arith.constant 0 : index
    %1521 = vector.load %arg3[%c28_704, %c0_705, %c0_706] : memref<72x8x128xf32, #tpu.memory_space<vmem>>, vector<1x8x128xf32>
    %1522 = vector.shape_cast %1521 : vector<1x8x128xf32> to vector<8x128xf32>
    %1523 = vector.shape_cast %1516 : vector<8x128xf32> to vector<1x8x128xf32>
    tpu.vector_store %arg3[%c28_704, %c0_705, %c0_706], %1523 {strides = array<i32>} : memref<72x8x128xf32, #tpu.memory_space<vmem>>, vector<1x8x128xf32>,
    %c29_707 = arith.constant 29 : index
    %c0_708 = arith.constant 0 : index
    %c0_709 = arith.constant 0 : index
    %1524 = vector.load %arg3[%c29_707, %c0_708, %c0_709] : memref<72x8x128xf32, #tpu.memory_space<vmem>>, vector<1x8x128xf32>
    %1525 = vector.shape_cast %1524 : vector<1x8x128xf32> to vector<8x128xf32>
    %1526 = vector.shape_cast %1517 : vector<8x128xf32> to vector<1x8x128xf32>
    tpu.vector_store %arg3[%c29_707, %c0_708, %c0_709], %1526 {strides = array<i32>} : memref<72x8x128xf32, #tpu.memory_space<vmem>>, vector<1x8x128xf32>,
    %c54_710 = arith.constant 54 : index
    %c0_711 = arith.constant 0 : index
    %c0_712 = arith.constant 0 : index
    %1527 = vector.load %arg1[%c54_710, %c0_711, %c0_712] : memref<144x8x128xf32, #tpu.memory_space<vmem>>, vector<1x8x128xf32>
    %1528 = vector.shape_cast %1527 : vector<1x8x128xf32> to vector<8x128xf32>
    %c55_713 = arith.constant 55 : index
    %c0_714 = arith.constant 0 : index
    %c0_715 = arith.constant 0 : index
    %1529 = vector.load %arg1[%c55_713, %c0_714, %c0_715] : memref<144x8x128xf32, #tpu.memory_space<vmem>>, vector<1x8x128xf32>
    %1530 = vector.shape_cast %1529 : vector<1x8x128xf32> to vector<8x128xf32>
    %c56_716 = arith.constant 56 : index
    %c0_717 = arith.constant 0 : index
    %c0_718 = arith.constant 0 : index
    %1531 = vector.load %arg1[%c56_716, %c0_717, %c0_718] : memref<144x8x128xf32, #tpu.memory_space<vmem>>, vector<1x8x128xf32>
    %1532 = vector.shape_cast %1531 : vector<1x8x128xf32> to vector<8x128xf32>
    %c57_719 = arith.constant 57 : index
    %c0_720 = arith.constant 0 : index
    %c0_721 = arith.constant 0 : index
    %1533 = vector.load %arg1[%c57_719, %c0_720, %c0_721] : memref<144x8x128xf32, #tpu.memory_space<vmem>>, vector<1x8x128xf32>
    %1534 = vector.shape_cast %1533 : vector<1x8x128xf32> to vector<8x128xf32>
    %c58_722 = arith.constant 58 : index
    %c0_723 = arith.constant 0 : index
    %c0_724 = arith.constant 0 : index
    %1535 = vector.load %arg1[%c58_722, %c0_723, %c0_724] : memref<144x8x128xf32, #tpu.memory_space<vmem>>, vector<1x8x128xf32>
    %1536 = vector.shape_cast %1535 : vector<1x8x128xf32> to vector<8x128xf32>
    %c59_725 = arith.constant 59 : index
    %c0_726 = arith.constant 0 : index
    %c0_727 = arith.constant 0 : index
    %1537 = vector.load %arg1[%c59_725, %c0_726, %c0_727] : memref<144x8x128xf32, #tpu.memory_space<vmem>>, vector<1x8x128xf32>
    %1538 = vector.shape_cast %1537 : vector<1x8x128xf32> to vector<8x128xf32>
    %1539 = arith.mulf %1528, %1528 : vector<8x128xf32>
    %1540 = arith.mulf %1530, %1530 : vector<8x128xf32>
    %1541 = arith.addf %1539, %1540 : vector<8x128xf32>
    %1542 = arith.mulf %1532, %1532 : vector<8x128xf32>
    %1543 = arith.addf %1541, %1542 : vector<8x128xf32>
    %cst_728 = arith.constant 1.000000e-24 : f32
    %1544 = vector.broadcast %cst_728 : f32 to vector<8x128xf32>
    %1545 = arith.maximumf %1543, %1544 : vector<8x128xf32>
    %1546 = math.rsqrt %1545 : vector<8x128xf32>
    %1547 = arith.mulf %1528, %1546 : vector<8x128xf32>
    %1548 = arith.mulf %1530, %1546 : vector<8x128xf32>
    %1549 = arith.mulf %1532, %1546 : vector<8x128xf32>
    %1550 = arith.mulf %1547, %1534 : vector<8x128xf32>
    %1551 = arith.mulf %1548, %1536 : vector<8x128xf32>
    %1552 = arith.addf %1550, %1551 : vector<8x128xf32>
    %1553 = arith.mulf %1549, %1538 : vector<8x128xf32>
    %1554 = arith.addf %1552, %1553 : vector<8x128xf32>
    %1555 = arith.mulf %1554, %1547 : vector<8x128xf32>
    %1556 = arith.subf %1534, %1555 : vector<8x128xf32>
    %1557 = arith.mulf %1554, %1548 : vector<8x128xf32>
    %1558 = arith.subf %1536, %1557 : vector<8x128xf32>
    %1559 = arith.mulf %1554, %1549 : vector<8x128xf32>
    %1560 = arith.subf %1538, %1559 : vector<8x128xf32>
    %1561 = arith.mulf %1556, %1556 : vector<8x128xf32>
    %1562 = arith.mulf %1558, %1558 : vector<8x128xf32>
    %1563 = arith.addf %1561, %1562 : vector<8x128xf32>
    %1564 = arith.mulf %1560, %1560 : vector<8x128xf32>
    %1565 = arith.addf %1563, %1564 : vector<8x128xf32>
    %cst_729 = arith.constant 1.000000e-24 : f32
    %1566 = vector.broadcast %cst_729 : f32 to vector<8x128xf32>
    %1567 = arith.maximumf %1565, %1566 : vector<8x128xf32>
    %1568 = math.rsqrt %1567 : vector<8x128xf32>
    %1569 = arith.mulf %1556, %1568 : vector<8x128xf32>
    %1570 = arith.mulf %1558, %1568 : vector<8x128xf32>
    %1571 = arith.mulf %1560, %1568 : vector<8x128xf32>
    %1572 = arith.mulf %1548, %1571 : vector<8x128xf32>
    %1573 = arith.mulf %1549, %1570 : vector<8x128xf32>
    %1574 = arith.subf %1572, %1573 : vector<8x128xf32>
    %1575 = arith.mulf %1549, %1569 : vector<8x128xf32>
    %1576 = arith.mulf %1547, %1571 : vector<8x128xf32>
    %1577 = arith.subf %1575, %1576 : vector<8x128xf32>
    %1578 = arith.mulf %1547, %1570 : vector<8x128xf32>
    %1579 = arith.mulf %1548, %1569 : vector<8x128xf32>
    %1580 = arith.subf %1578, %1579 : vector<8x128xf32>
    %1581 = arith.mulf %1477, %1547 : vector<8x128xf32>
    %1582 = arith.mulf %1479, %1569 : vector<8x128xf32>
    %1583 = arith.addf %1581, %1582 : vector<8x128xf32>
    %1584 = arith.mulf %1481, %1574 : vector<8x128xf32>
    %1585 = arith.addf %1583, %1584 : vector<8x128xf32>
    %1586 = arith.mulf %1477, %1548 : vector<8x128xf32>
    %1587 = arith.mulf %1479, %1570 : vector<8x128xf32>
    %1588 = arith.addf %1586, %1587 : vector<8x128xf32>
    %1589 = arith.mulf %1481, %1577 : vector<8x128xf32>
    %1590 = arith.addf %1588, %1589 : vector<8x128xf32>
    %1591 = arith.mulf %1477, %1549 : vector<8x128xf32>
    %1592 = arith.mulf %1479, %1571 : vector<8x128xf32>
    %1593 = arith.addf %1591, %1592 : vector<8x128xf32>
    %1594 = arith.mulf %1481, %1580 : vector<8x128xf32>
    %1595 = arith.addf %1593, %1594 : vector<8x128xf32>
    %1596 = arith.mulf %1483, %1547 : vector<8x128xf32>
    %1597 = arith.mulf %1485, %1569 : vector<8x128xf32>
    %1598 = arith.addf %1596, %1597 : vector<8x128xf32>
    %1599 = arith.mulf %1487, %1574 : vector<8x128xf32>
    %1600 = arith.addf %1598, %1599 : vector<8x128xf32>
    %1601 = arith.mulf %1483, %1548 : vector<8x128xf32>
    %1602 = arith.mulf %1485, %1570 : vector<8x128xf32>
    %1603 = arith.addf %1601, %1602 : vector<8x128xf32>
    %1604 = arith.mulf %1487, %1577 : vector<8x128xf32>
    %1605 = arith.addf %1603, %1604 : vector<8x128xf32>
    %1606 = arith.mulf %1483, %1549 : vector<8x128xf32>
    %1607 = arith.mulf %1485, %1571 : vector<8x128xf32>
    %1608 = arith.addf %1606, %1607 : vector<8x128xf32>
    %1609 = arith.mulf %1487, %1580 : vector<8x128xf32>
    %1610 = arith.addf %1608, %1609 : vector<8x128xf32>
    %1611 = arith.mulf %1489, %1547 : vector<8x128xf32>
    %1612 = arith.mulf %1491, %1569 : vector<8x128xf32>
    %1613 = arith.addf %1611, %1612 : vector<8x128xf32>
    %1614 = arith.mulf %1493, %1574 : vector<8x128xf32>
    %1615 = arith.addf %1613, %1614 : vector<8x128xf32>
    %1616 = arith.mulf %1489, %1548 : vector<8x128xf32>
    %1617 = arith.mulf %1491, %1570 : vector<8x128xf32>
    %1618 = arith.addf %1616, %1617 : vector<8x128xf32>
    %1619 = arith.mulf %1493, %1577 : vector<8x128xf32>
    %1620 = arith.addf %1618, %1619 : vector<8x128xf32>
    %1621 = arith.mulf %1489, %1549 : vector<8x128xf32>
    %1622 = arith.mulf %1491, %1571 : vector<8x128xf32>
    %1623 = arith.addf %1621, %1622 : vector<8x128xf32>
    %1624 = arith.mulf %1493, %1580 : vector<8x128xf32>
    %1625 = arith.addf %1623, %1624 : vector<8x128xf32>
    %c81 = arith.constant 81 : index
    %c0_730 = arith.constant 0 : index
    %c0_731 = arith.constant 0 : index
    %1626 = vector.load %arg4[%c81, %c0_730, %c0_731] : memref<171x8x128xf32, #tpu.memory_space<vmem>>, vector<1x8x128xf32>
    %1627 = vector.shape_cast %1626 : vector<1x8x128xf32> to vector<8x128xf32>
    %1628 = vector.shape_cast %1585 : vector<8x128xf32> to vector<1x8x128xf32>
    tpu.vector_store %arg4[%c81, %c0_730, %c0_731], %1628 {strides = array<i32>} : memref<171x8x128xf32, #tpu.memory_space<vmem>>, vector<1x8x128xf32>,
    %c82 = arith.constant 82 : index
    %c0_732 = arith.constant 0 : index
    %c0_733 = arith.constant 0 : index
    %1629 = vector.load %arg4[%c82, %c0_732, %c0_733] : memref<171x8x128xf32, #tpu.memory_space<vmem>>, vector<1x8x128xf32>
    %1630 = vector.shape_cast %1629 : vector<1x8x128xf32> to vector<8x128xf32>
    %1631 = vector.shape_cast %1590 : vector<8x128xf32> to vector<1x8x128xf32>
    tpu.vector_store %arg4[%c82, %c0_732, %c0_733], %1631 {strides = array<i32>} : memref<171x8x128xf32, #tpu.memory_space<vmem>>, vector<1x8x128xf32>,
    %c83 = arith.constant 83 : index
    %c0_734 = arith.constant 0 : index
    %c0_735 = arith.constant 0 : index
    %1632 = vector.load %arg4[%c83, %c0_734, %c0_735] : memref<171x8x128xf32, #tpu.memory_space<vmem>>, vector<1x8x128xf32>
    %1633 = vector.shape_cast %1632 : vector<1x8x128xf32> to vector<8x128xf32>
    %1634 = vector.shape_cast %1595 : vector<8x128xf32> to vector<1x8x128xf32>
    tpu.vector_store %arg4[%c83, %c0_734, %c0_735], %1634 {strides = array<i32>} : memref<171x8x128xf32, #tpu.memory_space<vmem>>, vector<1x8x128xf32>,
    %c84 = arith.constant 84 : index
    %c0_736 = arith.constant 0 : index
    %c0_737 = arith.constant 0 : index
    %1635 = vector.load %arg4[%c84, %c0_736, %c0_737] : memref<171x8x128xf32, #tpu.memory_space<vmem>>, vector<1x8x128xf32>
    %1636 = vector.shape_cast %1635 : vector<1x8x128xf32> to vector<8x128xf32>
    %1637 = vector.shape_cast %1600 : vector<8x128xf32> to vector<1x8x128xf32>
    tpu.vector_store %arg4[%c84, %c0_736, %c0_737], %1637 {strides = array<i32>} : memref<171x8x128xf32, #tpu.memory_space<vmem>>, vector<1x8x128xf32>,
    %c85 = arith.constant 85 : index
    %c0_738 = arith.constant 0 : index
    %c0_739 = arith.constant 0 : index
    %1638 = vector.load %arg4[%c85, %c0_738, %c0_739] : memref<171x8x128xf32, #tpu.memory_space<vmem>>, vector<1x8x128xf32>
    %1639 = vector.shape_cast %1638 : vector<1x8x128xf32> to vector<8x128xf32>
    %1640 = vector.shape_cast %1605 : vector<8x128xf32> to vector<1x8x128xf32>
    tpu.vector_store %arg4[%c85, %c0_738, %c0_739], %1640 {strides = array<i32>} : memref<171x8x128xf32, #tpu.memory_space<vmem>>, vector<1x8x128xf32>,
    %c86 = arith.constant 86 : index
    %c0_740 = arith.constant 0 : index
    %c0_741 = arith.constant 0 : index
    %1641 = vector.load %arg4[%c86, %c0_740, %c0_741] : memref<171x8x128xf32, #tpu.memory_space<vmem>>, vector<1x8x128xf32>
    %1642 = vector.shape_cast %1641 : vector<1x8x128xf32> to vector<8x128xf32>
    %1643 = vector.shape_cast %1610 : vector<8x128xf32> to vector<1x8x128xf32>
    tpu.vector_store %arg4[%c86, %c0_740, %c0_741], %1643 {strides = array<i32>} : memref<171x8x128xf32, #tpu.memory_space<vmem>>, vector<1x8x128xf32>,
    %c87 = arith.constant 87 : index
    %c0_742 = arith.constant 0 : index
    %c0_743 = arith.constant 0 : index
    %1644 = vector.load %arg4[%c87, %c0_742, %c0_743] : memref<171x8x128xf32, #tpu.memory_space<vmem>>, vector<1x8x128xf32>
    %1645 = vector.shape_cast %1644 : vector<1x8x128xf32> to vector<8x128xf32>
    %1646 = vector.shape_cast %1615 : vector<8x128xf32> to vector<1x8x128xf32>
    tpu.vector_store %arg4[%c87, %c0_742, %c0_743], %1646 {strides = array<i32>} : memref<171x8x128xf32, #tpu.memory_space<vmem>>, vector<1x8x128xf32>,
    %c88 = arith.constant 88 : index
    %c0_744 = arith.constant 0 : index
    %c0_745 = arith.constant 0 : index
    %1647 = vector.load %arg4[%c88, %c0_744, %c0_745] : memref<171x8x128xf32, #tpu.memory_space<vmem>>, vector<1x8x128xf32>
    %1648 = vector.shape_cast %1647 : vector<1x8x128xf32> to vector<8x128xf32>
    %1649 = vector.shape_cast %1620 : vector<8x128xf32> to vector<1x8x128xf32>
    tpu.vector_store %arg4[%c88, %c0_744, %c0_745], %1649 {strides = array<i32>} : memref<171x8x128xf32, #tpu.memory_space<vmem>>, vector<1x8x128xf32>,
    %c89 = arith.constant 89 : index
    %c0_746 = arith.constant 0 : index
    %c0_747 = arith.constant 0 : index
    %1650 = vector.load %arg4[%c89, %c0_746, %c0_747] : memref<171x8x128xf32, #tpu.memory_space<vmem>>, vector<1x8x128xf32>
    %1651 = vector.shape_cast %1650 : vector<1x8x128xf32> to vector<8x128xf32>
    %1652 = vector.shape_cast %1625 : vector<8x128xf32> to vector<1x8x128xf32>
    tpu.vector_store %arg4[%c89, %c0_746, %c0_747], %1652 {strides = array<i32>} : memref<171x8x128xf32, #tpu.memory_space<vmem>>, vector<1x8x128xf32>,
    %c63_748 = arith.constant 63 : index
    %c0_749 = arith.constant 0 : index
    %c0_750 = arith.constant 0 : index
    %1653 = vector.load %arg4[%c63_748, %c0_749, %c0_750] : memref<171x8x128xf32, #tpu.memory_space<vmem>>, vector<1x8x128xf32>
    %1654 = vector.shape_cast %1653 : vector<1x8x128xf32> to vector<8x128xf32>
    %c64_751 = arith.constant 64 : index
    %c0_752 = arith.constant 0 : index
    %c0_753 = arith.constant 0 : index
    %1655 = vector.load %arg4[%c64_751, %c0_752, %c0_753] : memref<171x8x128xf32, #tpu.memory_space<vmem>>, vector<1x8x128xf32>
    %1656 = vector.shape_cast %1655 : vector<1x8x128xf32> to vector<8x128xf32>
    %c65_754 = arith.constant 65 : index
    %c0_755 = arith.constant 0 : index
    %c0_756 = arith.constant 0 : index
    %1657 = vector.load %arg4[%c65_754, %c0_755, %c0_756] : memref<171x8x128xf32, #tpu.memory_space<vmem>>, vector<1x8x128xf32>
    %1658 = vector.shape_cast %1657 : vector<1x8x128xf32> to vector<8x128xf32>
    %c66_757 = arith.constant 66 : index
    %c0_758 = arith.constant 0 : index
    %c0_759 = arith.constant 0 : index
    %1659 = vector.load %arg4[%c66_757, %c0_758, %c0_759] : memref<171x8x128xf32, #tpu.memory_space<vmem>>, vector<1x8x128xf32>
    %1660 = vector.shape_cast %1659 : vector<1x8x128xf32> to vector<8x128xf32>
    %c67_760 = arith.constant 67 : index
    %c0_761 = arith.constant 0 : index
    %c0_762 = arith.constant 0 : index
    %1661 = vector.load %arg4[%c67_760, %c0_761, %c0_762] : memref<171x8x128xf32, #tpu.memory_space<vmem>>, vector<1x8x128xf32>
    %1662 = vector.shape_cast %1661 : vector<1x8x128xf32> to vector<8x128xf32>
    %c68_763 = arith.constant 68 : index
    %c0_764 = arith.constant 0 : index
    %c0_765 = arith.constant 0 : index
    %1663 = vector.load %arg4[%c68_763, %c0_764, %c0_765] : memref<171x8x128xf32, #tpu.memory_space<vmem>>, vector<1x8x128xf32>
    %1664 = vector.shape_cast %1663 : vector<1x8x128xf32> to vector<8x128xf32>
    %c69_766 = arith.constant 69 : index
    %c0_767 = arith.constant 0 : index
    %c0_768 = arith.constant 0 : index
    %1665 = vector.load %arg4[%c69_766, %c0_767, %c0_768] : memref<171x8x128xf32, #tpu.memory_space<vmem>>, vector<1x8x128xf32>
    %1666 = vector.shape_cast %1665 : vector<1x8x128xf32> to vector<8x128xf32>
    %c70_769 = arith.constant 70 : index
    %c0_770 = arith.constant 0 : index
    %c0_771 = arith.constant 0 : index
    %1667 = vector.load %arg4[%c70_769, %c0_770, %c0_771] : memref<171x8x128xf32, #tpu.memory_space<vmem>>, vector<1x8x128xf32>
    %1668 = vector.shape_cast %1667 : vector<1x8x128xf32> to vector<8x128xf32>
    %c71_772 = arith.constant 71 : index
    %c0_773 = arith.constant 0 : index
    %c0_774 = arith.constant 0 : index
    %1669 = vector.load %arg4[%c71_772, %c0_773, %c0_774] : memref<171x8x128xf32, #tpu.memory_space<vmem>>, vector<1x8x128xf32>
    %1670 = vector.shape_cast %1669 : vector<1x8x128xf32> to vector<8x128xf32>
    %c30_775 = arith.constant 30 : index
    %c0_776 = arith.constant 0 : index
    %c0_777 = arith.constant 0 : index
    %1671 = vector.load %arg2[%c30_775, %c0_776, %c0_777] : memref<72x8x128xf32, #tpu.memory_space<vmem>>, vector<1x8x128xf32>
    %1672 = vector.shape_cast %1671 : vector<1x8x128xf32> to vector<8x128xf32>
    %c31_778 = arith.constant 31 : index
    %c0_779 = arith.constant 0 : index
    %c0_780 = arith.constant 0 : index
    %1673 = vector.load %arg2[%c31_778, %c0_779, %c0_780] : memref<72x8x128xf32, #tpu.memory_space<vmem>>, vector<1x8x128xf32>
    %1674 = vector.shape_cast %1673 : vector<1x8x128xf32> to vector<8x128xf32>
    %c32_781 = arith.constant 32 : index
    %c0_782 = arith.constant 0 : index
    %c0_783 = arith.constant 0 : index
    %1675 = vector.load %arg2[%c32_781, %c0_782, %c0_783] : memref<72x8x128xf32, #tpu.memory_space<vmem>>, vector<1x8x128xf32>
    %1676 = vector.shape_cast %1675 : vector<1x8x128xf32> to vector<8x128xf32>
    %1677 = arith.mulf %1654, %1672 : vector<8x128xf32>
    %1678 = arith.mulf %1656, %1674 : vector<8x128xf32>
    %1679 = arith.addf %1677, %1678 : vector<8x128xf32>
    %1680 = arith.mulf %1658, %1676 : vector<8x128xf32>
    %1681 = arith.addf %1679, %1680 : vector<8x128xf32>
    %1682 = arith.mulf %1660, %1672 : vector<8x128xf32>
    %1683 = arith.mulf %1662, %1674 : vector<8x128xf32>
    %1684 = arith.addf %1682, %1683 : vector<8x128xf32>
    %1685 = arith.mulf %1664, %1676 : vector<8x128xf32>
    %1686 = arith.addf %1684, %1685 : vector<8x128xf32>
    %1687 = arith.mulf %1666, %1672 : vector<8x128xf32>
    %1688 = arith.mulf %1668, %1674 : vector<8x128xf32>
    %1689 = arith.addf %1687, %1688 : vector<8x128xf32>
    %1690 = arith.mulf %1670, %1676 : vector<8x128xf32>
    %1691 = arith.addf %1689, %1690 : vector<8x128xf32>
    %1692 = arith.addf %1681, %1161 : vector<8x128xf32>
    %1693 = arith.addf %1686, %1162 : vector<8x128xf32>
    %1694 = arith.addf %1691, %1163 : vector<8x128xf32>
    %c30_784 = arith.constant 30 : index
    %c0_785 = arith.constant 0 : index
    %c0_786 = arith.constant 0 : index
    %1695 = vector.load %arg3[%c30_784, %c0_785, %c0_786] : memref<72x8x128xf32, #tpu.memory_space<vmem>>, vector<1x8x128xf32>
    %1696 = vector.shape_cast %1695 : vector<1x8x128xf32> to vector<8x128xf32>
    %1697 = vector.shape_cast %1692 : vector<8x128xf32> to vector<1x8x128xf32>
    tpu.vector_store %arg3[%c30_784, %c0_785, %c0_786], %1697 {strides = array<i32>} : memref<72x8x128xf32, #tpu.memory_space<vmem>>, vector<1x8x128xf32>,
    %c31_787 = arith.constant 31 : index
    %c0_788 = arith.constant 0 : index
    %c0_789 = arith.constant 0 : index
    %1698 = vector.load %arg3[%c31_787, %c0_788, %c0_789] : memref<72x8x128xf32, #tpu.memory_space<vmem>>, vector<1x8x128xf32>
    %1699 = vector.shape_cast %1698 : vector<1x8x128xf32> to vector<8x128xf32>
    %1700 = vector.shape_cast %1693 : vector<8x128xf32> to vector<1x8x128xf32>
    tpu.vector_store %arg3[%c31_787, %c0_788, %c0_789], %1700 {strides = array<i32>} : memref<72x8x128xf32, #tpu.memory_space<vmem>>, vector<1x8x128xf32>,
    %c32_790 = arith.constant 32 : index
    %c0_791 = arith.constant 0 : index
    %c0_792 = arith.constant 0 : index
    %1701 = vector.load %arg3[%c32_790, %c0_791, %c0_792] : memref<72x8x128xf32, #tpu.memory_space<vmem>>, vector<1x8x128xf32>
    %1702 = vector.shape_cast %1701 : vector<1x8x128xf32> to vector<8x128xf32>
    %1703 = vector.shape_cast %1694 : vector<8x128xf32> to vector<1x8x128xf32>
    tpu.vector_store %arg3[%c32_790, %c0_791, %c0_792], %1703 {strides = array<i32>} : memref<72x8x128xf32, #tpu.memory_space<vmem>>, vector<1x8x128xf32>,
    %c72_793 = arith.constant 72 : index
    %c0_794 = arith.constant 0 : index
    %c0_795 = arith.constant 0 : index
    %1704 = vector.load %arg4[%c72_793, %c0_794, %c0_795] : memref<171x8x128xf32, #tpu.memory_space<vmem>>, vector<1x8x128xf32>
    %1705 = vector.shape_cast %1704 : vector<1x8x128xf32> to vector<8x128xf32>
    %c73_796 = arith.constant 73 : index
    %c0_797 = arith.constant 0 : index
    %c0_798 = arith.constant 0 : index
    %1706 = vector.load %arg4[%c73_796, %c0_797, %c0_798] : memref<171x8x128xf32, #tpu.memory_space<vmem>>, vector<1x8x128xf32>
    %1707 = vector.shape_cast %1706 : vector<1x8x128xf32> to vector<8x128xf32>
    %c74_799 = arith.constant 74 : index
    %c0_800 = arith.constant 0 : index
    %c0_801 = arith.constant 0 : index
    %1708 = vector.load %arg4[%c74_799, %c0_800, %c0_801] : memref<171x8x128xf32, #tpu.memory_space<vmem>>, vector<1x8x128xf32>
    %1709 = vector.shape_cast %1708 : vector<1x8x128xf32> to vector<8x128xf32>
    %c75_802 = arith.constant 75 : index
    %c0_803 = arith.constant 0 : index
    %c0_804 = arith.constant 0 : index
    %1710 = vector.load %arg4[%c75_802, %c0_803, %c0_804] : memref<171x8x128xf32, #tpu.memory_space<vmem>>, vector<1x8x128xf32>
    %1711 = vector.shape_cast %1710 : vector<1x8x128xf32> to vector<8x128xf32>
    %c76_805 = arith.constant 76 : index
    %c0_806 = arith.constant 0 : index
    %c0_807 = arith.constant 0 : index
    %1712 = vector.load %arg4[%c76_805, %c0_806, %c0_807] : memref<171x8x128xf32, #tpu.memory_space<vmem>>, vector<1x8x128xf32>
    %1713 = vector.shape_cast %1712 : vector<1x8x128xf32> to vector<8x128xf32>
    %c77_808 = arith.constant 77 : index
    %c0_809 = arith.constant 0 : index
    %c0_810 = arith.constant 0 : index
    %1714 = vector.load %arg4[%c77_808, %c0_809, %c0_810] : memref<171x8x128xf32, #tpu.memory_space<vmem>>, vector<1x8x128xf32>
    %1715 = vector.shape_cast %1714 : vector<1x8x128xf32> to vector<8x128xf32>
    %c78_811 = arith.constant 78 : index
    %c0_812 = arith.constant 0 : index
    %c0_813 = arith.constant 0 : index
    %1716 = vector.load %arg4[%c78_811, %c0_812, %c0_813] : memref<171x8x128xf32, #tpu.memory_space<vmem>>, vector<1x8x128xf32>
    %1717 = vector.shape_cast %1716 : vector<1x8x128xf32> to vector<8x128xf32>
    %c79_814 = arith.constant 79 : index
    %c0_815 = arith.constant 0 : index
    %c0_816 = arith.constant 0 : index
    %1718 = vector.load %arg4[%c79_814, %c0_815, %c0_816] : memref<171x8x128xf32, #tpu.memory_space<vmem>>, vector<1x8x128xf32>
    %1719 = vector.shape_cast %1718 : vector<1x8x128xf32> to vector<8x128xf32>
    %c80_817 = arith.constant 80 : index
    %c0_818 = arith.constant 0 : index
    %c0_819 = arith.constant 0 : index
    %1720 = vector.load %arg4[%c80_817, %c0_818, %c0_819] : memref<171x8x128xf32, #tpu.memory_space<vmem>>, vector<1x8x128xf32>
    %1721 = vector.shape_cast %1720 : vector<1x8x128xf32> to vector<8x128xf32>
    %c33_820 = arith.constant 33 : index
    %c0_821 = arith.constant 0 : index
    %c0_822 = arith.constant 0 : index
    %1722 = vector.load %arg2[%c33_820, %c0_821, %c0_822] : memref<72x8x128xf32, #tpu.memory_space<vmem>>, vector<1x8x128xf32>
    %1723 = vector.shape_cast %1722 : vector<1x8x128xf32> to vector<8x128xf32>
    %c34_823 = arith.constant 34 : index
    %c0_824 = arith.constant 0 : index
    %c0_825 = arith.constant 0 : index
    %1724 = vector.load %arg2[%c34_823, %c0_824, %c0_825] : memref<72x8x128xf32, #tpu.memory_space<vmem>>, vector<1x8x128xf32>
    %1725 = vector.shape_cast %1724 : vector<1x8x128xf32> to vector<8x128xf32>
    %c35_826 = arith.constant 35 : index
    %c0_827 = arith.constant 0 : index
    %c0_828 = arith.constant 0 : index
    %1726 = vector.load %arg2[%c35_826, %c0_827, %c0_828] : memref<72x8x128xf32, #tpu.memory_space<vmem>>, vector<1x8x128xf32>
    %1727 = vector.shape_cast %1726 : vector<1x8x128xf32> to vector<8x128xf32>
    %1728 = arith.mulf %1705, %1723 : vector<8x128xf32>
    %1729 = arith.mulf %1707, %1725 : vector<8x128xf32>
    %1730 = arith.addf %1728, %1729 : vector<8x128xf32>
    %1731 = arith.mulf %1709, %1727 : vector<8x128xf32>
    %1732 = arith.addf %1730, %1731 : vector<8x128xf32>
    %1733 = arith.mulf %1711, %1723 : vector<8x128xf32>
    %1734 = arith.mulf %1713, %1725 : vector<8x128xf32>
    %1735 = arith.addf %1733, %1734 : vector<8x128xf32>
    %1736 = arith.mulf %1715, %1727 : vector<8x128xf32>
    %1737 = arith.addf %1735, %1736 : vector<8x128xf32>
    %1738 = arith.mulf %1717, %1723 : vector<8x128xf32>
    %1739 = arith.mulf %1719, %1725 : vector<8x128xf32>
    %1740 = arith.addf %1738, %1739 : vector<8x128xf32>
    %1741 = arith.mulf %1721, %1727 : vector<8x128xf32>
    %1742 = arith.addf %1740, %1741 : vector<8x128xf32>
    %1743 = arith.addf %1732, %1338 : vector<8x128xf32>
    %1744 = arith.addf %1737, %1339 : vector<8x128xf32>
    %1745 = arith.addf %1742, %1340 : vector<8x128xf32>
    %c33_829 = arith.constant 33 : index
    %c0_830 = arith.constant 0 : index
    %c0_831 = arith.constant 0 : index
    %1746 = vector.load %arg3[%c33_829, %c0_830, %c0_831] : memref<72x8x128xf32, #tpu.memory_space<vmem>>, vector<1x8x128xf32>
    %1747 = vector.shape_cast %1746 : vector<1x8x128xf32> to vector<8x128xf32>
    %1748 = vector.shape_cast %1743 : vector<8x128xf32> to vector<1x8x128xf32>
    tpu.vector_store %arg3[%c33_829, %c0_830, %c0_831], %1748 {strides = array<i32>} : memref<72x8x128xf32, #tpu.memory_space<vmem>>, vector<1x8x128xf32>,
    %c34_832 = arith.constant 34 : index
    %c0_833 = arith.constant 0 : index
    %c0_834 = arith.constant 0 : index
    %1749 = vector.load %arg3[%c34_832, %c0_833, %c0_834] : memref<72x8x128xf32, #tpu.memory_space<vmem>>, vector<1x8x128xf32>
    %1750 = vector.shape_cast %1749 : vector<1x8x128xf32> to vector<8x128xf32>
    %1751 = vector.shape_cast %1744 : vector<8x128xf32> to vector<1x8x128xf32>
    tpu.vector_store %arg3[%c34_832, %c0_833, %c0_834], %1751 {strides = array<i32>} : memref<72x8x128xf32, #tpu.memory_space<vmem>>, vector<1x8x128xf32>,
    %c35_835 = arith.constant 35 : index
    %c0_836 = arith.constant 0 : index
    %c0_837 = arith.constant 0 : index
    %1752 = vector.load %arg3[%c35_835, %c0_836, %c0_837] : memref<72x8x128xf32, #tpu.memory_space<vmem>>, vector<1x8x128xf32>
    %1753 = vector.shape_cast %1752 : vector<1x8x128xf32> to vector<8x128xf32>
    %1754 = vector.shape_cast %1745 : vector<8x128xf32> to vector<1x8x128xf32>
    tpu.vector_store %arg3[%c35_835, %c0_836, %c0_837], %1754 {strides = array<i32>} : memref<72x8x128xf32, #tpu.memory_space<vmem>>, vector<1x8x128xf32>,
    %c81_838 = arith.constant 81 : index
    %c0_839 = arith.constant 0 : index
    %c0_840 = arith.constant 0 : index
    %1755 = vector.load %arg4[%c81_838, %c0_839, %c0_840] : memref<171x8x128xf32, #tpu.memory_space<vmem>>, vector<1x8x128xf32>
    %1756 = vector.shape_cast %1755 : vector<1x8x128xf32> to vector<8x128xf32>
    %c82_841 = arith.constant 82 : index
    %c0_842 = arith.constant 0 : index
    %c0_843 = arith.constant 0 : index
    %1757 = vector.load %arg4[%c82_841, %c0_842, %c0_843] : memref<171x8x128xf32, #tpu.memory_space<vmem>>, vector<1x8x128xf32>
    %1758 = vector.shape_cast %1757 : vector<1x8x128xf32> to vector<8x128xf32>
    %c83_844 = arith.constant 83 : index
    %c0_845 = arith.constant 0 : index
    %c0_846 = arith.constant 0 : index
    %1759 = vector.load %arg4[%c83_844, %c0_845, %c0_846] : memref<171x8x128xf32, #tpu.memory_space<vmem>>, vector<1x8x128xf32>
    %1760 = vector.shape_cast %1759 : vector<1x8x128xf32> to vector<8x128xf32>
    %c84_847 = arith.constant 84 : index
    %c0_848 = arith.constant 0 : index
    %c0_849 = arith.constant 0 : index
    %1761 = vector.load %arg4[%c84_847, %c0_848, %c0_849] : memref<171x8x128xf32, #tpu.memory_space<vmem>>, vector<1x8x128xf32>
    %1762 = vector.shape_cast %1761 : vector<1x8x128xf32> to vector<8x128xf32>
    %c85_850 = arith.constant 85 : index
    %c0_851 = arith.constant 0 : index
    %c0_852 = arith.constant 0 : index
    %1763 = vector.load %arg4[%c85_850, %c0_851, %c0_852] : memref<171x8x128xf32, #tpu.memory_space<vmem>>, vector<1x8x128xf32>
    %1764 = vector.shape_cast %1763 : vector<1x8x128xf32> to vector<8x128xf32>
    %c86_853 = arith.constant 86 : index
    %c0_854 = arith.constant 0 : index
    %c0_855 = arith.constant 0 : index
    %1765 = vector.load %arg4[%c86_853, %c0_854, %c0_855] : memref<171x8x128xf32, #tpu.memory_space<vmem>>, vector<1x8x128xf32>
    %1766 = vector.shape_cast %1765 : vector<1x8x128xf32> to vector<8x128xf32>
    %c87_856 = arith.constant 87 : index
    %c0_857 = arith.constant 0 : index
    %c0_858 = arith.constant 0 : index
    %1767 = vector.load %arg4[%c87_856, %c0_857, %c0_858] : memref<171x8x128xf32, #tpu.memory_space<vmem>>, vector<1x8x128xf32>
    %1768 = vector.shape_cast %1767 : vector<1x8x128xf32> to vector<8x128xf32>
    %c88_859 = arith.constant 88 : index
    %c0_860 = arith.constant 0 : index
    %c0_861 = arith.constant 0 : index
    %1769 = vector.load %arg4[%c88_859, %c0_860, %c0_861] : memref<171x8x128xf32, #tpu.memory_space<vmem>>, vector<1x8x128xf32>
    %1770 = vector.shape_cast %1769 : vector<1x8x128xf32> to vector<8x128xf32>
    %c89_862 = arith.constant 89 : index
    %c0_863 = arith.constant 0 : index
    %c0_864 = arith.constant 0 : index
    %1771 = vector.load %arg4[%c89_862, %c0_863, %c0_864] : memref<171x8x128xf32, #tpu.memory_space<vmem>>, vector<1x8x128xf32>
    %1772 = vector.shape_cast %1771 : vector<1x8x128xf32> to vector<8x128xf32>
    %c36_865 = arith.constant 36 : index
    %c0_866 = arith.constant 0 : index
    %c0_867 = arith.constant 0 : index
    %1773 = vector.load %arg2[%c36_865, %c0_866, %c0_867] : memref<72x8x128xf32, #tpu.memory_space<vmem>>, vector<1x8x128xf32>
    %1774 = vector.shape_cast %1773 : vector<1x8x128xf32> to vector<8x128xf32>
    %c37_868 = arith.constant 37 : index
    %c0_869 = arith.constant 0 : index
    %c0_870 = arith.constant 0 : index
    %1775 = vector.load %arg2[%c37_868, %c0_869, %c0_870] : memref<72x8x128xf32, #tpu.memory_space<vmem>>, vector<1x8x128xf32>
    %1776 = vector.shape_cast %1775 : vector<1x8x128xf32> to vector<8x128xf32>
    %c38_871 = arith.constant 38 : index
    %c0_872 = arith.constant 0 : index
    %c0_873 = arith.constant 0 : index
    %1777 = vector.load %arg2[%c38_871, %c0_872, %c0_873] : memref<72x8x128xf32, #tpu.memory_space<vmem>>, vector<1x8x128xf32>
    %1778 = vector.shape_cast %1777 : vector<1x8x128xf32> to vector<8x128xf32>
    %1779 = arith.mulf %1756, %1774 : vector<8x128xf32>
    %1780 = arith.mulf %1758, %1776 : vector<8x128xf32>
    %1781 = arith.addf %1779, %1780 : vector<8x128xf32>
    %1782 = arith.mulf %1760, %1778 : vector<8x128xf32>
    %1783 = arith.addf %1781, %1782 : vector<8x128xf32>
    %1784 = arith.mulf %1762, %1774 : vector<8x128xf32>
    %1785 = arith.mulf %1764, %1776 : vector<8x128xf32>
    %1786 = arith.addf %1784, %1785 : vector<8x128xf32>
    %1787 = arith.mulf %1766, %1778 : vector<8x128xf32>
    %1788 = arith.addf %1786, %1787 : vector<8x128xf32>
    %1789 = arith.mulf %1768, %1774 : vector<8x128xf32>
    %1790 = arith.mulf %1770, %1776 : vector<8x128xf32>
    %1791 = arith.addf %1789, %1790 : vector<8x128xf32>
    %1792 = arith.mulf %1772, %1778 : vector<8x128xf32>
    %1793 = arith.addf %1791, %1792 : vector<8x128xf32>
    %1794 = arith.addf %1783, %1515 : vector<8x128xf32>
    %1795 = arith.addf %1788, %1516 : vector<8x128xf32>
    %1796 = arith.addf %1793, %1517 : vector<8x128xf32>
    %c36_874 = arith.constant 36 : index
    %c0_875 = arith.constant 0 : index
    %c0_876 = arith.constant 0 : index
    %1797 = vector.load %arg3[%c36_874, %c0_875, %c0_876] : memref<72x8x128xf32, #tpu.memory_space<vmem>>, vector<1x8x128xf32>
    %1798 = vector.shape_cast %1797 : vector<1x8x128xf32> to vector<8x128xf32>
    %1799 = vector.shape_cast %1794 : vector<8x128xf32> to vector<1x8x128xf32>
    tpu.vector_store %arg3[%c36_874, %c0_875, %c0_876], %1799 {strides = array<i32>} : memref<72x8x128xf32, #tpu.memory_space<vmem>>, vector<1x8x128xf32>,
    %c37_877 = arith.constant 37 : index
    %c0_878 = arith.constant 0 : index
    %c0_879 = arith.constant 0 : index
    %1800 = vector.load %arg3[%c37_877, %c0_878, %c0_879] : memref<72x8x128xf32, #tpu.memory_space<vmem>>, vector<1x8x128xf32>
    %1801 = vector.shape_cast %1800 : vector<1x8x128xf32> to vector<8x128xf32>
    %1802 = vector.shape_cast %1795 : vector<8x128xf32> to vector<1x8x128xf32>
    tpu.vector_store %arg3[%c37_877, %c0_878, %c0_879], %1802 {strides = array<i32>} : memref<72x8x128xf32, #tpu.memory_space<vmem>>, vector<1x8x128xf32>,
    %c38_880 = arith.constant 38 : index
    %c0_881 = arith.constant 0 : index
    %c0_882 = arith.constant 0 : index
    %1803 = vector.load %arg3[%c38_880, %c0_881, %c0_882] : memref<72x8x128xf32, #tpu.memory_space<vmem>>, vector<1x8x128xf32>
    %1804 = vector.shape_cast %1803 : vector<1x8x128xf32> to vector<8x128xf32>
    %1805 = vector.shape_cast %1796 : vector<8x128xf32> to vector<1x8x128xf32>
    tpu.vector_store %arg3[%c38_880, %c0_881, %c0_882], %1805 {strides = array<i32>} : memref<72x8x128xf32, #tpu.memory_space<vmem>>, vector<1x8x128xf32>,
    %c72_883 = arith.constant 72 : index
    %c0_884 = arith.constant 0 : index
    %c0_885 = arith.constant 0 : index
    %1806 = vector.load %arg1[%c72_883, %c0_884, %c0_885] : memref<144x8x128xf32, #tpu.memory_space<vmem>>, vector<1x8x128xf32>
    %1807 = vector.shape_cast %1806 : vector<1x8x128xf32> to vector<8x128xf32>
    %c73_886 = arith.constant 73 : index
    %c0_887 = arith.constant 0 : index
    %c0_888 = arith.constant 0 : index
    %1808 = vector.load %arg1[%c73_886, %c0_887, %c0_888] : memref<144x8x128xf32, #tpu.memory_space<vmem>>, vector<1x8x128xf32>
    %1809 = vector.shape_cast %1808 : vector<1x8x128xf32> to vector<8x128xf32>
    %c74_889 = arith.constant 74 : index
    %c0_890 = arith.constant 0 : index
    %c0_891 = arith.constant 0 : index
    %1810 = vector.load %arg1[%c74_889, %c0_890, %c0_891] : memref<144x8x128xf32, #tpu.memory_space<vmem>>, vector<1x8x128xf32>
    %1811 = vector.shape_cast %1810 : vector<1x8x128xf32> to vector<8x128xf32>
    %c75_892 = arith.constant 75 : index
    %c0_893 = arith.constant 0 : index
    %c0_894 = arith.constant 0 : index
    %1812 = vector.load %arg1[%c75_892, %c0_893, %c0_894] : memref<144x8x128xf32, #tpu.memory_space<vmem>>, vector<1x8x128xf32>
    %1813 = vector.shape_cast %1812 : vector<1x8x128xf32> to vector<8x128xf32>
    %c76_895 = arith.constant 76 : index
    %c0_896 = arith.constant 0 : index
    %c0_897 = arith.constant 0 : index
    %1814 = vector.load %arg1[%c76_895, %c0_896, %c0_897] : memref<144x8x128xf32, #tpu.memory_space<vmem>>, vector<1x8x128xf32>
    %1815 = vector.shape_cast %1814 : vector<1x8x128xf32> to vector<8x128xf32>
    %c77_898 = arith.constant 77 : index
    %c0_899 = arith.constant 0 : index
    %c0_900 = arith.constant 0 : index
    %1816 = vector.load %arg1[%c77_898, %c0_899, %c0_900] : memref<144x8x128xf32, #tpu.memory_space<vmem>>, vector<1x8x128xf32>
    %1817 = vector.shape_cast %1816 : vector<1x8x128xf32> to vector<8x128xf32>
    %1818 = arith.mulf %1807, %1807 : vector<8x128xf32>
    %1819 = arith.mulf %1809, %1809 : vector<8x128xf32>
    %1820 = arith.addf %1818, %1819 : vector<8x128xf32>
    %1821 = arith.mulf %1811, %1811 : vector<8x128xf32>
    %1822 = arith.addf %1820, %1821 : vector<8x128xf32>
    %cst_901 = arith.constant 1.000000e-24 : f32
    %1823 = vector.broadcast %cst_901 : f32 to vector<8x128xf32>
    %1824 = arith.maximumf %1822, %1823 : vector<8x128xf32>
    %1825 = math.rsqrt %1824 : vector<8x128xf32>
    %1826 = arith.mulf %1807, %1825 : vector<8x128xf32>
    %1827 = arith.mulf %1809, %1825 : vector<8x128xf32>
    %1828 = arith.mulf %1811, %1825 : vector<8x128xf32>
    %1829 = arith.mulf %1826, %1813 : vector<8x128xf32>
    %1830 = arith.mulf %1827, %1815 : vector<8x128xf32>
    %1831 = arith.addf %1829, %1830 : vector<8x128xf32>
    %1832 = arith.mulf %1828, %1817 : vector<8x128xf32>
    %1833 = arith.addf %1831, %1832 : vector<8x128xf32>
    %1834 = arith.mulf %1833, %1826 : vector<8x128xf32>
    %1835 = arith.subf %1813, %1834 : vector<8x128xf32>
    %1836 = arith.mulf %1833, %1827 : vector<8x128xf32>
    %1837 = arith.subf %1815, %1836 : vector<8x128xf32>
    %1838 = arith.mulf %1833, %1828 : vector<8x128xf32>
    %1839 = arith.subf %1817, %1838 : vector<8x128xf32>
    %1840 = arith.mulf %1835, %1835 : vector<8x128xf32>
    %1841 = arith.mulf %1837, %1837 : vector<8x128xf32>
    %1842 = arith.addf %1840, %1841 : vector<8x128xf32>
    %1843 = arith.mulf %1839, %1839 : vector<8x128xf32>
    %1844 = arith.addf %1842, %1843 : vector<8x128xf32>
    %cst_902 = arith.constant 1.000000e-24 : f32
    %1845 = vector.broadcast %cst_902 : f32 to vector<8x128xf32>
    %1846 = arith.maximumf %1844, %1845 : vector<8x128xf32>
    %1847 = math.rsqrt %1846 : vector<8x128xf32>
    %1848 = arith.mulf %1835, %1847 : vector<8x128xf32>
    %1849 = arith.mulf %1837, %1847 : vector<8x128xf32>
    %1850 = arith.mulf %1839, %1847 : vector<8x128xf32>
    %1851 = arith.mulf %1827, %1850 : vector<8x128xf32>
    %1852 = arith.mulf %1828, %1849 : vector<8x128xf32>
    %1853 = arith.subf %1851, %1852 : vector<8x128xf32>
    %1854 = arith.mulf %1828, %1848 : vector<8x128xf32>
    %1855 = arith.mulf %1826, %1850 : vector<8x128xf32>
    %1856 = arith.subf %1854, %1855 : vector<8x128xf32>
    %1857 = arith.mulf %1826, %1849 : vector<8x128xf32>
    %1858 = arith.mulf %1827, %1848 : vector<8x128xf32>
    %1859 = arith.subf %1857, %1858 : vector<8x128xf32>
    %1860 = arith.mulf %1756, %1826 : vector<8x128xf32>
    %1861 = arith.mulf %1758, %1848 : vector<8x128xf32>
    %1862 = arith.addf %1860, %1861 : vector<8x128xf32>
    %1863 = arith.mulf %1760, %1853 : vector<8x128xf32>
    %1864 = arith.addf %1862, %1863 : vector<8x128xf32>
    %1865 = arith.mulf %1756, %1827 : vector<8x128xf32>
    %1866 = arith.mulf %1758, %1849 : vector<8x128xf32>
    %1867 = arith.addf %1865, %1866 : vector<8x128xf32>
    %1868 = arith.mulf %1760, %1856 : vector<8x128xf32>
    %1869 = arith.addf %1867, %1868 : vector<8x128xf32>
    %1870 = arith.mulf %1756, %1828 : vector<8x128xf32>
    %1871 = arith.mulf %1758, %1850 : vector<8x128xf32>
    %1872 = arith.addf %1870, %1871 : vector<8x128xf32>
    %1873 = arith.mulf %1760, %1859 : vector<8x128xf32>
    %1874 = arith.addf %1872, %1873 : vector<8x128xf32>
    %1875 = arith.mulf %1762, %1826 : vector<8x128xf32>
    %1876 = arith.mulf %1764, %1848 : vector<8x128xf32>
    %1877 = arith.addf %1875, %1876 : vector<8x128xf32>
    %1878 = arith.mulf %1766, %1853 : vector<8x128xf32>
    %1879 = arith.addf %1877, %1878 : vector<8x128xf32>
    %1880 = arith.mulf %1762, %1827 : vector<8x128xf32>
    %1881 = arith.mulf %1764, %1849 : vector<8x128xf32>
    %1882 = arith.addf %1880, %1881 : vector<8x128xf32>
    %1883 = arith.mulf %1766, %1856 : vector<8x128xf32>
    %1884 = arith.addf %1882, %1883 : vector<8x128xf32>
    %1885 = arith.mulf %1762, %1828 : vector<8x128xf32>
    %1886 = arith.mulf %1764, %1850 : vector<8x128xf32>
    %1887 = arith.addf %1885, %1886 : vector<8x128xf32>
    %1888 = arith.mulf %1766, %1859 : vector<8x128xf32>
    %1889 = arith.addf %1887, %1888 : vector<8x128xf32>
    %1890 = arith.mulf %1768, %1826 : vector<8x128xf32>
    %1891 = arith.mulf %1770, %1848 : vector<8x128xf32>
    %1892 = arith.addf %1890, %1891 : vector<8x128xf32>
    %1893 = arith.mulf %1772, %1853 : vector<8x128xf32>
    %1894 = arith.addf %1892, %1893 : vector<8x128xf32>
    %1895 = arith.mulf %1768, %1827 : vector<8x128xf32>
    %1896 = arith.mulf %1770, %1849 : vector<8x128xf32>
    %1897 = arith.addf %1895, %1896 : vector<8x128xf32>
    %1898 = arith.mulf %1772, %1856 : vector<8x128xf32>
    %1899 = arith.addf %1897, %1898 : vector<8x128xf32>
    %1900 = arith.mulf %1768, %1828 : vector<8x128xf32>
    %1901 = arith.mulf %1770, %1850 : vector<8x128xf32>
    %1902 = arith.addf %1900, %1901 : vector<8x128xf32>
    %1903 = arith.mulf %1772, %1859 : vector<8x128xf32>
    %1904 = arith.addf %1902, %1903 : vector<8x128xf32>
    %c90 = arith.constant 90 : index
    %c0_903 = arith.constant 0 : index
    %c0_904 = arith.constant 0 : index
    %1905 = vector.load %arg4[%c90, %c0_903, %c0_904] : memref<171x8x128xf32, #tpu.memory_space<vmem>>, vector<1x8x128xf32>
    %1906 = vector.shape_cast %1905 : vector<1x8x128xf32> to vector<8x128xf32>
    %1907 = vector.shape_cast %1864 : vector<8x128xf32> to vector<1x8x128xf32>
    tpu.vector_store %arg4[%c90, %c0_903, %c0_904], %1907 {strides = array<i32>} : memref<171x8x128xf32, #tpu.memory_space<vmem>>, vector<1x8x128xf32>,
    %c91 = arith.constant 91 : index
    %c0_905 = arith.constant 0 : index
    %c0_906 = arith.constant 0 : index
    %1908 = vector.load %arg4[%c91, %c0_905, %c0_906] : memref<171x8x128xf32, #tpu.memory_space<vmem>>, vector<1x8x128xf32>
    %1909 = vector.shape_cast %1908 : vector<1x8x128xf32> to vector<8x128xf32>
    %1910 = vector.shape_cast %1869 : vector<8x128xf32> to vector<1x8x128xf32>
    tpu.vector_store %arg4[%c91, %c0_905, %c0_906], %1910 {strides = array<i32>} : memref<171x8x128xf32, #tpu.memory_space<vmem>>, vector<1x8x128xf32>,
    %c92 = arith.constant 92 : index
    %c0_907 = arith.constant 0 : index
    %c0_908 = arith.constant 0 : index
    %1911 = vector.load %arg4[%c92, %c0_907, %c0_908] : memref<171x8x128xf32, #tpu.memory_space<vmem>>, vector<1x8x128xf32>
    %1912 = vector.shape_cast %1911 : vector<1x8x128xf32> to vector<8x128xf32>
    %1913 = vector.shape_cast %1874 : vector<8x128xf32> to vector<1x8x128xf32>
    tpu.vector_store %arg4[%c92, %c0_907, %c0_908], %1913 {strides = array<i32>} : memref<171x8x128xf32, #tpu.memory_space<vmem>>, vector<1x8x128xf32>,
    %c93 = arith.constant 93 : index
    %c0_909 = arith.constant 0 : index
    %c0_910 = arith.constant 0 : index
    %1914 = vector.load %arg4[%c93, %c0_909, %c0_910] : memref<171x8x128xf32, #tpu.memory_space<vmem>>, vector<1x8x128xf32>
    %1915 = vector.shape_cast %1914 : vector<1x8x128xf32> to vector<8x128xf32>
    %1916 = vector.shape_cast %1879 : vector<8x128xf32> to vector<1x8x128xf32>
    tpu.vector_store %arg4[%c93, %c0_909, %c0_910], %1916 {strides = array<i32>} : memref<171x8x128xf32, #tpu.memory_space<vmem>>, vector<1x8x128xf32>,
    %c94 = arith.constant 94 : index
    %c0_911 = arith.constant 0 : index
    %c0_912 = arith.constant 0 : index
    %1917 = vector.load %arg4[%c94, %c0_911, %c0_912] : memref<171x8x128xf32, #tpu.memory_space<vmem>>, vector<1x8x128xf32>
    %1918 = vector.shape_cast %1917 : vector<1x8x128xf32> to vector<8x128xf32>
    %1919 = vector.shape_cast %1884 : vector<8x128xf32> to vector<1x8x128xf32>
    tpu.vector_store %arg4[%c94, %c0_911, %c0_912], %1919 {strides = array<i32>} : memref<171x8x128xf32, #tpu.memory_space<vmem>>, vector<1x8x128xf32>,
    %c95 = arith.constant 95 : index
    %c0_913 = arith.constant 0 : index
    %c0_914 = arith.constant 0 : index
    %1920 = vector.load %arg4[%c95, %c0_913, %c0_914] : memref<171x8x128xf32, #tpu.memory_space<vmem>>, vector<1x8x128xf32>
    %1921 = vector.shape_cast %1920 : vector<1x8x128xf32> to vector<8x128xf32>
    %1922 = vector.shape_cast %1889 : vector<8x128xf32> to vector<1x8x128xf32>
    tpu.vector_store %arg4[%c95, %c0_913, %c0_914], %1922 {strides = array<i32>} : memref<171x8x128xf32, #tpu.memory_space<vmem>>, vector<1x8x128xf32>,
    %c96 = arith.constant 96 : index
    %c0_915 = arith.constant 0 : index
    %c0_916 = arith.constant 0 : index
    %1923 = vector.load %arg4[%c96, %c0_915, %c0_916] : memref<171x8x128xf32, #tpu.memory_space<vmem>>, vector<1x8x128xf32>
    %1924 = vector.shape_cast %1923 : vector<1x8x128xf32> to vector<8x128xf32>
    %1925 = vector.shape_cast %1894 : vector<8x128xf32> to vector<1x8x128xf32>
    tpu.vector_store %arg4[%c96, %c0_915, %c0_916], %1925 {strides = array<i32>} : memref<171x8x128xf32, #tpu.memory_space<vmem>>, vector<1x8x128xf32>,
    %c97 = arith.constant 97 : index
    %c0_917 = arith.constant 0 : index
    %c0_918 = arith.constant 0 : index
    %1926 = vector.load %arg4[%c97, %c0_917, %c0_918] : memref<171x8x128xf32, #tpu.memory_space<vmem>>, vector<1x8x128xf32>
    %1927 = vector.shape_cast %1926 : vector<1x8x128xf32> to vector<8x128xf32>
    %1928 = vector.shape_cast %1899 : vector<8x128xf32> to vector<1x8x128xf32>
    tpu.vector_store %arg4[%c97, %c0_917, %c0_918], %1928 {strides = array<i32>} : memref<171x8x128xf32, #tpu.memory_space<vmem>>, vector<1x8x128xf32>,
    %c98 = arith.constant 98 : index
    %c0_919 = arith.constant 0 : index
    %c0_920 = arith.constant 0 : index
    %1929 = vector.load %arg4[%c98, %c0_919, %c0_920] : memref<171x8x128xf32, #tpu.memory_space<vmem>>, vector<1x8x128xf32>
    %1930 = vector.shape_cast %1929 : vector<1x8x128xf32> to vector<8x128xf32>
    %1931 = vector.shape_cast %1904 : vector<8x128xf32> to vector<1x8x128xf32>
    tpu.vector_store %arg4[%c98, %c0_919, %c0_920], %1931 {strides = array<i32>} : memref<171x8x128xf32, #tpu.memory_space<vmem>>, vector<1x8x128xf32>,
    %c39_921 = arith.constant 39 : index
    %c0_922 = arith.constant 0 : index
    %c0_923 = arith.constant 0 : index
    %1932 = vector.load %arg2[%c39_921, %c0_922, %c0_923] : memref<72x8x128xf32, #tpu.memory_space<vmem>>, vector<1x8x128xf32>
    %1933 = vector.shape_cast %1932 : vector<1x8x128xf32> to vector<8x128xf32>
    %c40_924 = arith.constant 40 : index
    %c0_925 = arith.constant 0 : index
    %c0_926 = arith.constant 0 : index
    %1934 = vector.load %arg2[%c40_924, %c0_925, %c0_926] : memref<72x8x128xf32, #tpu.memory_space<vmem>>, vector<1x8x128xf32>
    %1935 = vector.shape_cast %1934 : vector<1x8x128xf32> to vector<8x128xf32>
    %c41_927 = arith.constant 41 : index
    %c0_928 = arith.constant 0 : index
    %c0_929 = arith.constant 0 : index
    %1936 = vector.load %arg2[%c41_927, %c0_928, %c0_929] : memref<72x8x128xf32, #tpu.memory_space<vmem>>, vector<1x8x128xf32>
    %1937 = vector.shape_cast %1936 : vector<1x8x128xf32> to vector<8x128xf32>
    %1938 = arith.mulf %1756, %1933 : vector<8x128xf32>
    %1939 = arith.mulf %1758, %1935 : vector<8x128xf32>
    %1940 = arith.addf %1938, %1939 : vector<8x128xf32>
    %1941 = arith.mulf %1760, %1937 : vector<8x128xf32>
    %1942 = arith.addf %1940, %1941 : vector<8x128xf32>
    %1943 = arith.mulf %1762, %1933 : vector<8x128xf32>
    %1944 = arith.mulf %1764, %1935 : vector<8x128xf32>
    %1945 = arith.addf %1943, %1944 : vector<8x128xf32>
    %1946 = arith.mulf %1766, %1937 : vector<8x128xf32>
    %1947 = arith.addf %1945, %1946 : vector<8x128xf32>
    %1948 = arith.mulf %1768, %1933 : vector<8x128xf32>
    %1949 = arith.mulf %1770, %1935 : vector<8x128xf32>
    %1950 = arith.addf %1948, %1949 : vector<8x128xf32>
    %1951 = arith.mulf %1772, %1937 : vector<8x128xf32>
    %1952 = arith.addf %1950, %1951 : vector<8x128xf32>
    %1953 = arith.addf %1942, %1515 : vector<8x128xf32>
    %1954 = arith.addf %1947, %1516 : vector<8x128xf32>
    %1955 = arith.addf %1952, %1517 : vector<8x128xf32>
    %c39_930 = arith.constant 39 : index
    %c0_931 = arith.constant 0 : index
    %c0_932 = arith.constant 0 : index
    %1956 = vector.load %arg3[%c39_930, %c0_931, %c0_932] : memref<72x8x128xf32, #tpu.memory_space<vmem>>, vector<1x8x128xf32>
    %1957 = vector.shape_cast %1956 : vector<1x8x128xf32> to vector<8x128xf32>
    %1958 = vector.shape_cast %1953 : vector<8x128xf32> to vector<1x8x128xf32>
    tpu.vector_store %arg3[%c39_930, %c0_931, %c0_932], %1958 {strides = array<i32>} : memref<72x8x128xf32, #tpu.memory_space<vmem>>, vector<1x8x128xf32>,
    %c40_933 = arith.constant 40 : index
    %c0_934 = arith.constant 0 : index
    %c0_935 = arith.constant 0 : index
    %1959 = vector.load %arg3[%c40_933, %c0_934, %c0_935] : memref<72x8x128xf32, #tpu.memory_space<vmem>>, vector<1x8x128xf32>
    %1960 = vector.shape_cast %1959 : vector<1x8x128xf32> to vector<8x128xf32>
    %1961 = vector.shape_cast %1954 : vector<8x128xf32> to vector<1x8x128xf32>
    tpu.vector_store %arg3[%c40_933, %c0_934, %c0_935], %1961 {strides = array<i32>} : memref<72x8x128xf32, #tpu.memory_space<vmem>>, vector<1x8x128xf32>,
    %c41_936 = arith.constant 41 : index
    %c0_937 = arith.constant 0 : index
    %c0_938 = arith.constant 0 : index
    %1962 = vector.load %arg3[%c41_936, %c0_937, %c0_938] : memref<72x8x128xf32, #tpu.memory_space<vmem>>, vector<1x8x128xf32>
    %1963 = vector.shape_cast %1962 : vector<1x8x128xf32> to vector<8x128xf32>
    %1964 = vector.shape_cast %1955 : vector<8x128xf32> to vector<1x8x128xf32>
    tpu.vector_store %arg3[%c41_936, %c0_937, %c0_938], %1964 {strides = array<i32>} : memref<72x8x128xf32, #tpu.memory_space<vmem>>, vector<1x8x128xf32>,
    %c78_939 = arith.constant 78 : index
    %c0_940 = arith.constant 0 : index
    %c0_941 = arith.constant 0 : index
    %1965 = vector.load %arg1[%c78_939, %c0_940, %c0_941] : memref<144x8x128xf32, #tpu.memory_space<vmem>>, vector<1x8x128xf32>
    %1966 = vector.shape_cast %1965 : vector<1x8x128xf32> to vector<8x128xf32>
    %c79_942 = arith.constant 79 : index
    %c0_943 = arith.constant 0 : index
    %c0_944 = arith.constant 0 : index
    %1967 = vector.load %arg1[%c79_942, %c0_943, %c0_944] : memref<144x8x128xf32, #tpu.memory_space<vmem>>, vector<1x8x128xf32>
    %1968 = vector.shape_cast %1967 : vector<1x8x128xf32> to vector<8x128xf32>
    %c80_945 = arith.constant 80 : index
    %c0_946 = arith.constant 0 : index
    %c0_947 = arith.constant 0 : index
    %1969 = vector.load %arg1[%c80_945, %c0_946, %c0_947] : memref<144x8x128xf32, #tpu.memory_space<vmem>>, vector<1x8x128xf32>
    %1970 = vector.shape_cast %1969 : vector<1x8x128xf32> to vector<8x128xf32>
    %c81_948 = arith.constant 81 : index
    %c0_949 = arith.constant 0 : index
    %c0_950 = arith.constant 0 : index
    %1971 = vector.load %arg1[%c81_948, %c0_949, %c0_950] : memref<144x8x128xf32, #tpu.memory_space<vmem>>, vector<1x8x128xf32>
    %1972 = vector.shape_cast %1971 : vector<1x8x128xf32> to vector<8x128xf32>
    %c82_951 = arith.constant 82 : index
    %c0_952 = arith.constant 0 : index
    %c0_953 = arith.constant 0 : index
    %1973 = vector.load %arg1[%c82_951, %c0_952, %c0_953] : memref<144x8x128xf32, #tpu.memory_space<vmem>>, vector<1x8x128xf32>
    %1974 = vector.shape_cast %1973 : vector<1x8x128xf32> to vector<8x128xf32>
    %c83_954 = arith.constant 83 : index
    %c0_955 = arith.constant 0 : index
    %c0_956 = arith.constant 0 : index
    %1975 = vector.load %arg1[%c83_954, %c0_955, %c0_956] : memref<144x8x128xf32, #tpu.memory_space<vmem>>, vector<1x8x128xf32>
    %1976 = vector.shape_cast %1975 : vector<1x8x128xf32> to vector<8x128xf32>
    %1977 = arith.mulf %1966, %1966 : vector<8x128xf32>
    %1978 = arith.mulf %1968, %1968 : vector<8x128xf32>
    %1979 = arith.addf %1977, %1978 : vector<8x128xf32>
    %1980 = arith.mulf %1970, %1970 : vector<8x128xf32>
    %1981 = arith.addf %1979, %1980 : vector<8x128xf32>
    %cst_957 = arith.constant 1.000000e-24 : f32
    %1982 = vector.broadcast %cst_957 : f32 to vector<8x128xf32>
    %1983 = arith.maximumf %1981, %1982 : vector<8x128xf32>
    %1984 = math.rsqrt %1983 : vector<8x128xf32>
    %1985 = arith.mulf %1966, %1984 : vector<8x128xf32>
    %1986 = arith.mulf %1968, %1984 : vector<8x128xf32>
    %1987 = arith.mulf %1970, %1984 : vector<8x128xf32>
    %1988 = arith.mulf %1985, %1972 : vector<8x128xf32>
    %1989 = arith.mulf %1986, %1974 : vector<8x128xf32>
    %1990 = arith.addf %1988, %1989 : vector<8x128xf32>
    %1991 = arith.mulf %1987, %1976 : vector<8x128xf32>
    %1992 = arith.addf %1990, %1991 : vector<8x128xf32>
    %1993 = arith.mulf %1992, %1985 : vector<8x128xf32>
    %1994 = arith.subf %1972, %1993 : vector<8x128xf32>
    %1995 = arith.mulf %1992, %1986 : vector<8x128xf32>
    %1996 = arith.subf %1974, %1995 : vector<8x128xf32>
    %1997 = arith.mulf %1992, %1987 : vector<8x128xf32>
    %1998 = arith.subf %1976, %1997 : vector<8x128xf32>
    %1999 = arith.mulf %1994, %1994 : vector<8x128xf32>
    %2000 = arith.mulf %1996, %1996 : vector<8x128xf32>
    %2001 = arith.addf %1999, %2000 : vector<8x128xf32>
    %2002 = arith.mulf %1998, %1998 : vector<8x128xf32>
    %2003 = arith.addf %2001, %2002 : vector<8x128xf32>
    %cst_958 = arith.constant 1.000000e-24 : f32
    %2004 = vector.broadcast %cst_958 : f32 to vector<8x128xf32>
    %2005 = arith.maximumf %2003, %2004 : vector<8x128xf32>
    %2006 = math.rsqrt %2005 : vector<8x128xf32>
    %2007 = arith.mulf %1994, %2006 : vector<8x128xf32>
    %2008 = arith.mulf %1996, %2006 : vector<8x128xf32>
    %2009 = arith.mulf %1998, %2006 : vector<8x128xf32>
    %2010 = arith.mulf %1986, %2009 : vector<8x128xf32>
    %2011 = arith.mulf %1987, %2008 : vector<8x128xf32>
    %2012 = arith.subf %2010, %2011 : vector<8x128xf32>
    %2013 = arith.mulf %1987, %2007 : vector<8x128xf32>
    %2014 = arith.mulf %1985, %2009 : vector<8x128xf32>
    %2015 = arith.subf %2013, %2014 : vector<8x128xf32>
    %2016 = arith.mulf %1985, %2008 : vector<8x128xf32>
    %2017 = arith.mulf %1986, %2007 : vector<8x128xf32>
    %2018 = arith.subf %2016, %2017 : vector<8x128xf32>
    %2019 = arith.mulf %1756, %1985 : vector<8x128xf32>
    %2020 = arith.mulf %1758, %2007 : vector<8x128xf32>
    %2021 = arith.addf %2019, %2020 : vector<8x128xf32>
    %2022 = arith.mulf %1760, %2012 : vector<8x128xf32>
    %2023 = arith.addf %2021, %2022 : vector<8x128xf32>
    %2024 = arith.mulf %1756, %1986 : vector<8x128xf32>
    %2025 = arith.mulf %1758, %2008 : vector<8x128xf32>
    %2026 = arith.addf %2024, %2025 : vector<8x128xf32>
    %2027 = arith.mulf %1760, %2015 : vector<8x128xf32>
    %2028 = arith.addf %2026, %2027 : vector<8x128xf32>
    %2029 = arith.mulf %1756, %1987 : vector<8x128xf32>
    %2030 = arith.mulf %1758, %2009 : vector<8x128xf32>
    %2031 = arith.addf %2029, %2030 : vector<8x128xf32>
    %2032 = arith.mulf %1760, %2018 : vector<8x128xf32>
    %2033 = arith.addf %2031, %2032 : vector<8x128xf32>
    %2034 = arith.mulf %1762, %1985 : vector<8x128xf32>
    %2035 = arith.mulf %1764, %2007 : vector<8x128xf32>
    %2036 = arith.addf %2034, %2035 : vector<8x128xf32>
    %2037 = arith.mulf %1766, %2012 : vector<8x128xf32>
    %2038 = arith.addf %2036, %2037 : vector<8x128xf32>
    %2039 = arith.mulf %1762, %1986 : vector<8x128xf32>
    %2040 = arith.mulf %1764, %2008 : vector<8x128xf32>
    %2041 = arith.addf %2039, %2040 : vector<8x128xf32>
    %2042 = arith.mulf %1766, %2015 : vector<8x128xf32>
    %2043 = arith.addf %2041, %2042 : vector<8x128xf32>
    %2044 = arith.mulf %1762, %1987 : vector<8x128xf32>
    %2045 = arith.mulf %1764, %2009 : vector<8x128xf32>
    %2046 = arith.addf %2044, %2045 : vector<8x128xf32>
    %2047 = arith.mulf %1766, %2018 : vector<8x128xf32>
    %2048 = arith.addf %2046, %2047 : vector<8x128xf32>
    %2049 = arith.mulf %1768, %1985 : vector<8x128xf32>
    %2050 = arith.mulf %1770, %2007 : vector<8x128xf32>
    %2051 = arith.addf %2049, %2050 : vector<8x128xf32>
    %2052 = arith.mulf %1772, %2012 : vector<8x128xf32>
    %2053 = arith.addf %2051, %2052 : vector<8x128xf32>
    %2054 = arith.mulf %1768, %1986 : vector<8x128xf32>
    %2055 = arith.mulf %1770, %2008 : vector<8x128xf32>
    %2056 = arith.addf %2054, %2055 : vector<8x128xf32>
    %2057 = arith.mulf %1772, %2015 : vector<8x128xf32>
    %2058 = arith.addf %2056, %2057 : vector<8x128xf32>
    %2059 = arith.mulf %1768, %1987 : vector<8x128xf32>
    %2060 = arith.mulf %1770, %2009 : vector<8x128xf32>
    %2061 = arith.addf %2059, %2060 : vector<8x128xf32>
    %2062 = arith.mulf %1772, %2018 : vector<8x128xf32>
    %2063 = arith.addf %2061, %2062 : vector<8x128xf32>
    %c99 = arith.constant 99 : index
    %c0_959 = arith.constant 0 : index
    %c0_960 = arith.constant 0 : index
    %2064 = vector.load %arg4[%c99, %c0_959, %c0_960] : memref<171x8x128xf32, #tpu.memory_space<vmem>>, vector<1x8x128xf32>
    %2065 = vector.shape_cast %2064 : vector<1x8x128xf32> to vector<8x128xf32>
    %2066 = vector.shape_cast %2023 : vector<8x128xf32> to vector<1x8x128xf32>
    tpu.vector_store %arg4[%c99, %c0_959, %c0_960], %2066 {strides = array<i32>} : memref<171x8x128xf32, #tpu.memory_space<vmem>>, vector<1x8x128xf32>,
    %c100 = arith.constant 100 : index
    %c0_961 = arith.constant 0 : index
    %c0_962 = arith.constant 0 : index
    %2067 = vector.load %arg4[%c100, %c0_961, %c0_962] : memref<171x8x128xf32, #tpu.memory_space<vmem>>, vector<1x8x128xf32>
    %2068 = vector.shape_cast %2067 : vector<1x8x128xf32> to vector<8x128xf32>
    %2069 = vector.shape_cast %2028 : vector<8x128xf32> to vector<1x8x128xf32>
    tpu.vector_store %arg4[%c100, %c0_961, %c0_962], %2069 {strides = array<i32>} : memref<171x8x128xf32, #tpu.memory_space<vmem>>, vector<1x8x128xf32>,
    %c101 = arith.constant 101 : index
    %c0_963 = arith.constant 0 : index
    %c0_964 = arith.constant 0 : index
    %2070 = vector.load %arg4[%c101, %c0_963, %c0_964] : memref<171x8x128xf32, #tpu.memory_space<vmem>>, vector<1x8x128xf32>
    %2071 = vector.shape_cast %2070 : vector<1x8x128xf32> to vector<8x128xf32>
    %2072 = vector.shape_cast %2033 : vector<8x128xf32> to vector<1x8x128xf32>
    tpu.vector_store %arg4[%c101, %c0_963, %c0_964], %2072 {strides = array<i32>} : memref<171x8x128xf32, #tpu.memory_space<vmem>>, vector<1x8x128xf32>,
    %c102 = arith.constant 102 : index
    %c0_965 = arith.constant 0 : index
    %c0_966 = arith.constant 0 : index
    %2073 = vector.load %arg4[%c102, %c0_965, %c0_966] : memref<171x8x128xf32, #tpu.memory_space<vmem>>, vector<1x8x128xf32>
    %2074 = vector.shape_cast %2073 : vector<1x8x128xf32> to vector<8x128xf32>
    %2075 = vector.shape_cast %2038 : vector<8x128xf32> to vector<1x8x128xf32>
    tpu.vector_store %arg4[%c102, %c0_965, %c0_966], %2075 {strides = array<i32>} : memref<171x8x128xf32, #tpu.memory_space<vmem>>, vector<1x8x128xf32>,
    %c103 = arith.constant 103 : index
    %c0_967 = arith.constant 0 : index
    %c0_968 = arith.constant 0 : index
    %2076 = vector.load %arg4[%c103, %c0_967, %c0_968] : memref<171x8x128xf32, #tpu.memory_space<vmem>>, vector<1x8x128xf32>
    %2077 = vector.shape_cast %2076 : vector<1x8x128xf32> to vector<8x128xf32>
    %2078 = vector.shape_cast %2043 : vector<8x128xf32> to vector<1x8x128xf32>
    tpu.vector_store %arg4[%c103, %c0_967, %c0_968], %2078 {strides = array<i32>} : memref<171x8x128xf32, #tpu.memory_space<vmem>>, vector<1x8x128xf32>,
    %c104 = arith.constant 104 : index
    %c0_969 = arith.constant 0 : index
    %c0_970 = arith.constant 0 : index
    %2079 = vector.load %arg4[%c104, %c0_969, %c0_970] : memref<171x8x128xf32, #tpu.memory_space<vmem>>, vector<1x8x128xf32>
    %2080 = vector.shape_cast %2079 : vector<1x8x128xf32> to vector<8x128xf32>
    %2081 = vector.shape_cast %2048 : vector<8x128xf32> to vector<1x8x128xf32>
    tpu.vector_store %arg4[%c104, %c0_969, %c0_970], %2081 {strides = array<i32>} : memref<171x8x128xf32, #tpu.memory_space<vmem>>, vector<1x8x128xf32>,
    %c105 = arith.constant 105 : index
    %c0_971 = arith.constant 0 : index
    %c0_972 = arith.constant 0 : index
    %2082 = vector.load %arg4[%c105, %c0_971, %c0_972] : memref<171x8x128xf32, #tpu.memory_space<vmem>>, vector<1x8x128xf32>
    %2083 = vector.shape_cast %2082 : vector<1x8x128xf32> to vector<8x128xf32>
    %2084 = vector.shape_cast %2053 : vector<8x128xf32> to vector<1x8x128xf32>
    tpu.vector_store %arg4[%c105, %c0_971, %c0_972], %2084 {strides = array<i32>} : memref<171x8x128xf32, #tpu.memory_space<vmem>>, vector<1x8x128xf32>,
    %c106 = arith.constant 106 : index
    %c0_973 = arith.constant 0 : index
    %c0_974 = arith.constant 0 : index
    %2085 = vector.load %arg4[%c106, %c0_973, %c0_974] : memref<171x8x128xf32, #tpu.memory_space<vmem>>, vector<1x8x128xf32>
    %2086 = vector.shape_cast %2085 : vector<1x8x128xf32> to vector<8x128xf32>
    %2087 = vector.shape_cast %2058 : vector<8x128xf32> to vector<1x8x128xf32>
    tpu.vector_store %arg4[%c106, %c0_973, %c0_974], %2087 {strides = array<i32>} : memref<171x8x128xf32, #tpu.memory_space<vmem>>, vector<1x8x128xf32>,
    %c107 = arith.constant 107 : index
    %c0_975 = arith.constant 0 : index
    %c0_976 = arith.constant 0 : index
    %2088 = vector.load %arg4[%c107, %c0_975, %c0_976] : memref<171x8x128xf32, #tpu.memory_space<vmem>>, vector<1x8x128xf32>
    %2089 = vector.shape_cast %2088 : vector<1x8x128xf32> to vector<8x128xf32>
    %2090 = vector.shape_cast %2063 : vector<8x128xf32> to vector<1x8x128xf32>
    tpu.vector_store %arg4[%c107, %c0_975, %c0_976], %2090 {strides = array<i32>} : memref<171x8x128xf32, #tpu.memory_space<vmem>>, vector<1x8x128xf32>,
    %c42_977 = arith.constant 42 : index
    %c0_978 = arith.constant 0 : index
    %c0_979 = arith.constant 0 : index
    %2091 = vector.load %arg2[%c42_977, %c0_978, %c0_979] : memref<72x8x128xf32, #tpu.memory_space<vmem>>, vector<1x8x128xf32>
    %2092 = vector.shape_cast %2091 : vector<1x8x128xf32> to vector<8x128xf32>
    %c43_980 = arith.constant 43 : index
    %c0_981 = arith.constant 0 : index
    %c0_982 = arith.constant 0 : index
    %2093 = vector.load %arg2[%c43_980, %c0_981, %c0_982] : memref<72x8x128xf32, #tpu.memory_space<vmem>>, vector<1x8x128xf32>
    %2094 = vector.shape_cast %2093 : vector<1x8x128xf32> to vector<8x128xf32>
    %c44_983 = arith.constant 44 : index
    %c0_984 = arith.constant 0 : index
    %c0_985 = arith.constant 0 : index
    %2095 = vector.load %arg2[%c44_983, %c0_984, %c0_985] : memref<72x8x128xf32, #tpu.memory_space<vmem>>, vector<1x8x128xf32>
    %2096 = vector.shape_cast %2095 : vector<1x8x128xf32> to vector<8x128xf32>
    %2097 = arith.mulf %1756, %2092 : vector<8x128xf32>
    %2098 = arith.mulf %1758, %2094 : vector<8x128xf32>
    %2099 = arith.addf %2097, %2098 : vector<8x128xf32>
    %2100 = arith.mulf %1760, %2096 : vector<8x128xf32>
    %2101 = arith.addf %2099, %2100 : vector<8x128xf32>
    %2102 = arith.mulf %1762, %2092 : vector<8x128xf32>
    %2103 = arith.mulf %1764, %2094 : vector<8x128xf32>
    %2104 = arith.addf %2102, %2103 : vector<8x128xf32>
    %2105 = arith.mulf %1766, %2096 : vector<8x128xf32>
    %2106 = arith.addf %2104, %2105 : vector<8x128xf32>
    %2107 = arith.mulf %1768, %2092 : vector<8x128xf32>
    %2108 = arith.mulf %1770, %2094 : vector<8x128xf32>
    %2109 = arith.addf %2107, %2108 : vector<8x128xf32>
    %2110 = arith.mulf %1772, %2096 : vector<8x128xf32>
    %2111 = arith.addf %2109, %2110 : vector<8x128xf32>
    %2112 = arith.addf %2101, %1515 : vector<8x128xf32>
    %2113 = arith.addf %2106, %1516 : vector<8x128xf32>
    %2114 = arith.addf %2111, %1517 : vector<8x128xf32>
    %c42_986 = arith.constant 42 : index
    %c0_987 = arith.constant 0 : index
    %c0_988 = arith.constant 0 : index
    %2115 = vector.load %arg3[%c42_986, %c0_987, %c0_988] : memref<72x8x128xf32, #tpu.memory_space<vmem>>, vector<1x8x128xf32>
    %2116 = vector.shape_cast %2115 : vector<1x8x128xf32> to vector<8x128xf32>
    %2117 = vector.shape_cast %2112 : vector<8x128xf32> to vector<1x8x128xf32>
    tpu.vector_store %arg3[%c42_986, %c0_987, %c0_988], %2117 {strides = array<i32>} : memref<72x8x128xf32, #tpu.memory_space<vmem>>, vector<1x8x128xf32>,
    %c43_989 = arith.constant 43 : index
    %c0_990 = arith.constant 0 : index
    %c0_991 = arith.constant 0 : index
    %2118 = vector.load %arg3[%c43_989, %c0_990, %c0_991] : memref<72x8x128xf32, #tpu.memory_space<vmem>>, vector<1x8x128xf32>
    %2119 = vector.shape_cast %2118 : vector<1x8x128xf32> to vector<8x128xf32>
    %2120 = vector.shape_cast %2113 : vector<8x128xf32> to vector<1x8x128xf32>
    tpu.vector_store %arg3[%c43_989, %c0_990, %c0_991], %2120 {strides = array<i32>} : memref<72x8x128xf32, #tpu.memory_space<vmem>>, vector<1x8x128xf32>,
    %c44_992 = arith.constant 44 : index
    %c0_993 = arith.constant 0 : index
    %c0_994 = arith.constant 0 : index
    %2121 = vector.load %arg3[%c44_992, %c0_993, %c0_994] : memref<72x8x128xf32, #tpu.memory_space<vmem>>, vector<1x8x128xf32>
    %2122 = vector.shape_cast %2121 : vector<1x8x128xf32> to vector<8x128xf32>
    %2123 = vector.shape_cast %2114 : vector<8x128xf32> to vector<1x8x128xf32>
    tpu.vector_store %arg3[%c44_992, %c0_993, %c0_994], %2123 {strides = array<i32>} : memref<72x8x128xf32, #tpu.memory_space<vmem>>, vector<1x8x128xf32>,
    %c84_995 = arith.constant 84 : index
    %c0_996 = arith.constant 0 : index
    %c0_997 = arith.constant 0 : index
    %2124 = vector.load %arg1[%c84_995, %c0_996, %c0_997] : memref<144x8x128xf32, #tpu.memory_space<vmem>>, vector<1x8x128xf32>
    %2125 = vector.shape_cast %2124 : vector<1x8x128xf32> to vector<8x128xf32>
    %c85_998 = arith.constant 85 : index
    %c0_999 = arith.constant 0 : index
    %c0_1000 = arith.constant 0 : index
    %2126 = vector.load %arg1[%c85_998, %c0_999, %c0_1000] : memref<144x8x128xf32, #tpu.memory_space<vmem>>, vector<1x8x128xf32>
    %2127 = vector.shape_cast %2126 : vector<1x8x128xf32> to vector<8x128xf32>
    %c86_1001 = arith.constant 86 : index
    %c0_1002 = arith.constant 0 : index
    %c0_1003 = arith.constant 0 : index
    %2128 = vector.load %arg1[%c86_1001, %c0_1002, %c0_1003] : memref<144x8x128xf32, #tpu.memory_space<vmem>>, vector<1x8x128xf32>
    %2129 = vector.shape_cast %2128 : vector<1x8x128xf32> to vector<8x128xf32>
    %c87_1004 = arith.constant 87 : index
    %c0_1005 = arith.constant 0 : index
    %c0_1006 = arith.constant 0 : index
    %2130 = vector.load %arg1[%c87_1004, %c0_1005, %c0_1006] : memref<144x8x128xf32, #tpu.memory_space<vmem>>, vector<1x8x128xf32>
    %2131 = vector.shape_cast %2130 : vector<1x8x128xf32> to vector<8x128xf32>
    %c88_1007 = arith.constant 88 : index
    %c0_1008 = arith.constant 0 : index
    %c0_1009 = arith.constant 0 : index
    %2132 = vector.load %arg1[%c88_1007, %c0_1008, %c0_1009] : memref<144x8x128xf32, #tpu.memory_space<vmem>>, vector<1x8x128xf32>
    %2133 = vector.shape_cast %2132 : vector<1x8x128xf32> to vector<8x128xf32>
    %c89_1010 = arith.constant 89 : index
    %c0_1011 = arith.constant 0 : index
    %c0_1012 = arith.constant 0 : index
    %2134 = vector.load %arg1[%c89_1010, %c0_1011, %c0_1012] : memref<144x8x128xf32, #tpu.memory_space<vmem>>, vector<1x8x128xf32>
    %2135 = vector.shape_cast %2134 : vector<1x8x128xf32> to vector<8x128xf32>
    %2136 = arith.mulf %2125, %2125 : vector<8x128xf32>
    %2137 = arith.mulf %2127, %2127 : vector<8x128xf32>
    %2138 = arith.addf %2136, %2137 : vector<8x128xf32>
    %2139 = arith.mulf %2129, %2129 : vector<8x128xf32>
    %2140 = arith.addf %2138, %2139 : vector<8x128xf32>
    %cst_1013 = arith.constant 1.000000e-24 : f32
    %2141 = vector.broadcast %cst_1013 : f32 to vector<8x128xf32>
    %2142 = arith.maximumf %2140, %2141 : vector<8x128xf32>
    %2143 = math.rsqrt %2142 : vector<8x128xf32>
    %2144 = arith.mulf %2125, %2143 : vector<8x128xf32>
    %2145 = arith.mulf %2127, %2143 : vector<8x128xf32>
    %2146 = arith.mulf %2129, %2143 : vector<8x128xf32>
    %2147 = arith.mulf %2144, %2131 : vector<8x128xf32>
    %2148 = arith.mulf %2145, %2133 : vector<8x128xf32>
    %2149 = arith.addf %2147, %2148 : vector<8x128xf32>
    %2150 = arith.mulf %2146, %2135 : vector<8x128xf32>
    %2151 = arith.addf %2149, %2150 : vector<8x128xf32>
    %2152 = arith.mulf %2151, %2144 : vector<8x128xf32>
    %2153 = arith.subf %2131, %2152 : vector<8x128xf32>
    %2154 = arith.mulf %2151, %2145 : vector<8x128xf32>
    %2155 = arith.subf %2133, %2154 : vector<8x128xf32>
    %2156 = arith.mulf %2151, %2146 : vector<8x128xf32>
    %2157 = arith.subf %2135, %2156 : vector<8x128xf32>
    %2158 = arith.mulf %2153, %2153 : vector<8x128xf32>
    %2159 = arith.mulf %2155, %2155 : vector<8x128xf32>
    %2160 = arith.addf %2158, %2159 : vector<8x128xf32>
    %2161 = arith.mulf %2157, %2157 : vector<8x128xf32>
    %2162 = arith.addf %2160, %2161 : vector<8x128xf32>
    %cst_1014 = arith.constant 1.000000e-24 : f32
    %2163 = vector.broadcast %cst_1014 : f32 to vector<8x128xf32>
    %2164 = arith.maximumf %2162, %2163 : vector<8x128xf32>
    %2165 = math.rsqrt %2164 : vector<8x128xf32>
    %2166 = arith.mulf %2153, %2165 : vector<8x128xf32>
    %2167 = arith.mulf %2155, %2165 : vector<8x128xf32>
    %2168 = arith.mulf %2157, %2165 : vector<8x128xf32>
    %2169 = arith.mulf %2145, %2168 : vector<8x128xf32>
    %2170 = arith.mulf %2146, %2167 : vector<8x128xf32>
    %2171 = arith.subf %2169, %2170 : vector<8x128xf32>
    %2172 = arith.mulf %2146, %2166 : vector<8x128xf32>
    %2173 = arith.mulf %2144, %2168 : vector<8x128xf32>
    %2174 = arith.subf %2172, %2173 : vector<8x128xf32>
    %2175 = arith.mulf %2144, %2167 : vector<8x128xf32>
    %2176 = arith.mulf %2145, %2166 : vector<8x128xf32>
    %2177 = arith.subf %2175, %2176 : vector<8x128xf32>
    %2178 = arith.mulf %1756, %2144 : vector<8x128xf32>
    %2179 = arith.mulf %1758, %2166 : vector<8x128xf32>
    %2180 = arith.addf %2178, %2179 : vector<8x128xf32>
    %2181 = arith.mulf %1760, %2171 : vector<8x128xf32>
    %2182 = arith.addf %2180, %2181 : vector<8x128xf32>
    %2183 = arith.mulf %1756, %2145 : vector<8x128xf32>
    %2184 = arith.mulf %1758, %2167 : vector<8x128xf32>
    %2185 = arith.addf %2183, %2184 : vector<8x128xf32>
    %2186 = arith.mulf %1760, %2174 : vector<8x128xf32>
    %2187 = arith.addf %2185, %2186 : vector<8x128xf32>
    %2188 = arith.mulf %1756, %2146 : vector<8x128xf32>
    %2189 = arith.mulf %1758, %2168 : vector<8x128xf32>
    %2190 = arith.addf %2188, %2189 : vector<8x128xf32>
    %2191 = arith.mulf %1760, %2177 : vector<8x128xf32>
    %2192 = arith.addf %2190, %2191 : vector<8x128xf32>
    %2193 = arith.mulf %1762, %2144 : vector<8x128xf32>
    %2194 = arith.mulf %1764, %2166 : vector<8x128xf32>
    %2195 = arith.addf %2193, %2194 : vector<8x128xf32>
    %2196 = arith.mulf %1766, %2171 : vector<8x128xf32>
    %2197 = arith.addf %2195, %2196 : vector<8x128xf32>
    %2198 = arith.mulf %1762, %2145 : vector<8x128xf32>
    %2199 = arith.mulf %1764, %2167 : vector<8x128xf32>
    %2200 = arith.addf %2198, %2199 : vector<8x128xf32>
    %2201 = arith.mulf %1766, %2174 : vector<8x128xf32>
    %2202 = arith.addf %2200, %2201 : vector<8x128xf32>
    %2203 = arith.mulf %1762, %2146 : vector<8x128xf32>
    %2204 = arith.mulf %1764, %2168 : vector<8x128xf32>
    %2205 = arith.addf %2203, %2204 : vector<8x128xf32>
    %2206 = arith.mulf %1766, %2177 : vector<8x128xf32>
    %2207 = arith.addf %2205, %2206 : vector<8x128xf32>
    %2208 = arith.mulf %1768, %2144 : vector<8x128xf32>
    %2209 = arith.mulf %1770, %2166 : vector<8x128xf32>
    %2210 = arith.addf %2208, %2209 : vector<8x128xf32>
    %2211 = arith.mulf %1772, %2171 : vector<8x128xf32>
    %2212 = arith.addf %2210, %2211 : vector<8x128xf32>
    %2213 = arith.mulf %1768, %2145 : vector<8x128xf32>
    %2214 = arith.mulf %1770, %2167 : vector<8x128xf32>
    %2215 = arith.addf %2213, %2214 : vector<8x128xf32>
    %2216 = arith.mulf %1772, %2174 : vector<8x128xf32>
    %2217 = arith.addf %2215, %2216 : vector<8x128xf32>
    %2218 = arith.mulf %1768, %2146 : vector<8x128xf32>
    %2219 = arith.mulf %1770, %2168 : vector<8x128xf32>
    %2220 = arith.addf %2218, %2219 : vector<8x128xf32>
    %2221 = arith.mulf %1772, %2177 : vector<8x128xf32>
    %2222 = arith.addf %2220, %2221 : vector<8x128xf32>
    %c108 = arith.constant 108 : index
    %c0_1015 = arith.constant 0 : index
    %c0_1016 = arith.constant 0 : index
    %2223 = vector.load %arg4[%c108, %c0_1015, %c0_1016] : memref<171x8x128xf32, #tpu.memory_space<vmem>>, vector<1x8x128xf32>
    %2224 = vector.shape_cast %2223 : vector<1x8x128xf32> to vector<8x128xf32>
    %2225 = vector.shape_cast %2182 : vector<8x128xf32> to vector<1x8x128xf32>
    tpu.vector_store %arg4[%c108, %c0_1015, %c0_1016], %2225 {strides = array<i32>} : memref<171x8x128xf32, #tpu.memory_space<vmem>>, vector<1x8x128xf32>,
    %c109 = arith.constant 109 : index
    %c0_1017 = arith.constant 0 : index
    %c0_1018 = arith.constant 0 : index
    %2226 = vector.load %arg4[%c109, %c0_1017, %c0_1018] : memref<171x8x128xf32, #tpu.memory_space<vmem>>, vector<1x8x128xf32>
    %2227 = vector.shape_cast %2226 : vector<1x8x128xf32> to vector<8x128xf32>
    %2228 = vector.shape_cast %2187 : vector<8x128xf32> to vector<1x8x128xf32>
    tpu.vector_store %arg4[%c109, %c0_1017, %c0_1018], %2228 {strides = array<i32>} : memref<171x8x128xf32, #tpu.memory_space<vmem>>, vector<1x8x128xf32>,
    %c110 = arith.constant 110 : index
    %c0_1019 = arith.constant 0 : index
    %c0_1020 = arith.constant 0 : index
    %2229 = vector.load %arg4[%c110, %c0_1019, %c0_1020] : memref<171x8x128xf32, #tpu.memory_space<vmem>>, vector<1x8x128xf32>
    %2230 = vector.shape_cast %2229 : vector<1x8x128xf32> to vector<8x128xf32>
    %2231 = vector.shape_cast %2192 : vector<8x128xf32> to vector<1x8x128xf32>
    tpu.vector_store %arg4[%c110, %c0_1019, %c0_1020], %2231 {strides = array<i32>} : memref<171x8x128xf32, #tpu.memory_space<vmem>>, vector<1x8x128xf32>,
    %c111 = arith.constant 111 : index
    %c0_1021 = arith.constant 0 : index
    %c0_1022 = arith.constant 0 : index
    %2232 = vector.load %arg4[%c111, %c0_1021, %c0_1022] : memref<171x8x128xf32, #tpu.memory_space<vmem>>, vector<1x8x128xf32>
    %2233 = vector.shape_cast %2232 : vector<1x8x128xf32> to vector<8x128xf32>
    %2234 = vector.shape_cast %2197 : vector<8x128xf32> to vector<1x8x128xf32>
    tpu.vector_store %arg4[%c111, %c0_1021, %c0_1022], %2234 {strides = array<i32>} : memref<171x8x128xf32, #tpu.memory_space<vmem>>, vector<1x8x128xf32>,
    %c112 = arith.constant 112 : index
    %c0_1023 = arith.constant 0 : index
    %c0_1024 = arith.constant 0 : index
    %2235 = vector.load %arg4[%c112, %c0_1023, %c0_1024] : memref<171x8x128xf32, #tpu.memory_space<vmem>>, vector<1x8x128xf32>
    %2236 = vector.shape_cast %2235 : vector<1x8x128xf32> to vector<8x128xf32>
    %2237 = vector.shape_cast %2202 : vector<8x128xf32> to vector<1x8x128xf32>
    tpu.vector_store %arg4[%c112, %c0_1023, %c0_1024], %2237 {strides = array<i32>} : memref<171x8x128xf32, #tpu.memory_space<vmem>>, vector<1x8x128xf32>,
    %c113 = arith.constant 113 : index
    %c0_1025 = arith.constant 0 : index
    %c0_1026 = arith.constant 0 : index
    %2238 = vector.load %arg4[%c113, %c0_1025, %c0_1026] : memref<171x8x128xf32, #tpu.memory_space<vmem>>, vector<1x8x128xf32>
    %2239 = vector.shape_cast %2238 : vector<1x8x128xf32> to vector<8x128xf32>
    %2240 = vector.shape_cast %2207 : vector<8x128xf32> to vector<1x8x128xf32>
    tpu.vector_store %arg4[%c113, %c0_1025, %c0_1026], %2240 {strides = array<i32>} : memref<171x8x128xf32, #tpu.memory_space<vmem>>, vector<1x8x128xf32>,
    %c114 = arith.constant 114 : index
    %c0_1027 = arith.constant 0 : index
    %c0_1028 = arith.constant 0 : index
    %2241 = vector.load %arg4[%c114, %c0_1027, %c0_1028] : memref<171x8x128xf32, #tpu.memory_space<vmem>>, vector<1x8x128xf32>
    %2242 = vector.shape_cast %2241 : vector<1x8x128xf32> to vector<8x128xf32>
    %2243 = vector.shape_cast %2212 : vector<8x128xf32> to vector<1x8x128xf32>
    tpu.vector_store %arg4[%c114, %c0_1027, %c0_1028], %2243 {strides = array<i32>} : memref<171x8x128xf32, #tpu.memory_space<vmem>>, vector<1x8x128xf32>,
    %c115 = arith.constant 115 : index
    %c0_1029 = arith.constant 0 : index
    %c0_1030 = arith.constant 0 : index
    %2244 = vector.load %arg4[%c115, %c0_1029, %c0_1030] : memref<171x8x128xf32, #tpu.memory_space<vmem>>, vector<1x8x128xf32>
    %2245 = vector.shape_cast %2244 : vector<1x8x128xf32> to vector<8x128xf32>
    %2246 = vector.shape_cast %2217 : vector<8x128xf32> to vector<1x8x128xf32>
    tpu.vector_store %arg4[%c115, %c0_1029, %c0_1030], %2246 {strides = array<i32>} : memref<171x8x128xf32, #tpu.memory_space<vmem>>, vector<1x8x128xf32>,
    %c116 = arith.constant 116 : index
    %c0_1031 = arith.constant 0 : index
    %c0_1032 = arith.constant 0 : index
    %2247 = vector.load %arg4[%c116, %c0_1031, %c0_1032] : memref<171x8x128xf32, #tpu.memory_space<vmem>>, vector<1x8x128xf32>
    %2248 = vector.shape_cast %2247 : vector<1x8x128xf32> to vector<8x128xf32>
    %2249 = vector.shape_cast %2222 : vector<8x128xf32> to vector<1x8x128xf32>
    tpu.vector_store %arg4[%c116, %c0_1031, %c0_1032], %2249 {strides = array<i32>} : memref<171x8x128xf32, #tpu.memory_space<vmem>>, vector<1x8x128xf32>,
    %c90_1033 = arith.constant 90 : index
    %c0_1034 = arith.constant 0 : index
    %c0_1035 = arith.constant 0 : index
    %2250 = vector.load %arg4[%c90_1033, %c0_1034, %c0_1035] : memref<171x8x128xf32, #tpu.memory_space<vmem>>, vector<1x8x128xf32>
    %2251 = vector.shape_cast %2250 : vector<1x8x128xf32> to vector<8x128xf32>
    %c91_1036 = arith.constant 91 : index
    %c0_1037 = arith.constant 0 : index
    %c0_1038 = arith.constant 0 : index
    %2252 = vector.load %arg4[%c91_1036, %c0_1037, %c0_1038] : memref<171x8x128xf32, #tpu.memory_space<vmem>>, vector<1x8x128xf32>
    %2253 = vector.shape_cast %2252 : vector<1x8x128xf32> to vector<8x128xf32>
    %c92_1039 = arith.constant 92 : index
    %c0_1040 = arith.constant 0 : index
    %c0_1041 = arith.constant 0 : index
    %2254 = vector.load %arg4[%c92_1039, %c0_1040, %c0_1041] : memref<171x8x128xf32, #tpu.memory_space<vmem>>, vector<1x8x128xf32>
    %2255 = vector.shape_cast %2254 : vector<1x8x128xf32> to vector<8x128xf32>
    %c93_1042 = arith.constant 93 : index
    %c0_1043 = arith.constant 0 : index
    %c0_1044 = arith.constant 0 : index
    %2256 = vector.load %arg4[%c93_1042, %c0_1043, %c0_1044] : memref<171x8x128xf32, #tpu.memory_space<vmem>>, vector<1x8x128xf32>
    %2257 = vector.shape_cast %2256 : vector<1x8x128xf32> to vector<8x128xf32>
    %c94_1045 = arith.constant 94 : index
    %c0_1046 = arith.constant 0 : index
    %c0_1047 = arith.constant 0 : index
    %2258 = vector.load %arg4[%c94_1045, %c0_1046, %c0_1047] : memref<171x8x128xf32, #tpu.memory_space<vmem>>, vector<1x8x128xf32>
    %2259 = vector.shape_cast %2258 : vector<1x8x128xf32> to vector<8x128xf32>
    %c95_1048 = arith.constant 95 : index
    %c0_1049 = arith.constant 0 : index
    %c0_1050 = arith.constant 0 : index
    %2260 = vector.load %arg4[%c95_1048, %c0_1049, %c0_1050] : memref<171x8x128xf32, #tpu.memory_space<vmem>>, vector<1x8x128xf32>
    %2261 = vector.shape_cast %2260 : vector<1x8x128xf32> to vector<8x128xf32>
    %c96_1051 = arith.constant 96 : index
    %c0_1052 = arith.constant 0 : index
    %c0_1053 = arith.constant 0 : index
    %2262 = vector.load %arg4[%c96_1051, %c0_1052, %c0_1053] : memref<171x8x128xf32, #tpu.memory_space<vmem>>, vector<1x8x128xf32>
    %2263 = vector.shape_cast %2262 : vector<1x8x128xf32> to vector<8x128xf32>
    %c97_1054 = arith.constant 97 : index
    %c0_1055 = arith.constant 0 : index
    %c0_1056 = arith.constant 0 : index
    %2264 = vector.load %arg4[%c97_1054, %c0_1055, %c0_1056] : memref<171x8x128xf32, #tpu.memory_space<vmem>>, vector<1x8x128xf32>
    %2265 = vector.shape_cast %2264 : vector<1x8x128xf32> to vector<8x128xf32>
    %c98_1057 = arith.constant 98 : index
    %c0_1058 = arith.constant 0 : index
    %c0_1059 = arith.constant 0 : index
    %2266 = vector.load %arg4[%c98_1057, %c0_1058, %c0_1059] : memref<171x8x128xf32, #tpu.memory_space<vmem>>, vector<1x8x128xf32>
    %2267 = vector.shape_cast %2266 : vector<1x8x128xf32> to vector<8x128xf32>
    %c45_1060 = arith.constant 45 : index
    %c0_1061 = arith.constant 0 : index
    %c0_1062 = arith.constant 0 : index
    %2268 = vector.load %arg2[%c45_1060, %c0_1061, %c0_1062] : memref<72x8x128xf32, #tpu.memory_space<vmem>>, vector<1x8x128xf32>
    %2269 = vector.shape_cast %2268 : vector<1x8x128xf32> to vector<8x128xf32>
    %c46_1063 = arith.constant 46 : index
    %c0_1064 = arith.constant 0 : index
    %c0_1065 = arith.constant 0 : index
    %2270 = vector.load %arg2[%c46_1063, %c0_1064, %c0_1065] : memref<72x8x128xf32, #tpu.memory_space<vmem>>, vector<1x8x128xf32>
    %2271 = vector.shape_cast %2270 : vector<1x8x128xf32> to vector<8x128xf32>
    %c47_1066 = arith.constant 47 : index
    %c0_1067 = arith.constant 0 : index
    %c0_1068 = arith.constant 0 : index
    %2272 = vector.load %arg2[%c47_1066, %c0_1067, %c0_1068] : memref<72x8x128xf32, #tpu.memory_space<vmem>>, vector<1x8x128xf32>
    %2273 = vector.shape_cast %2272 : vector<1x8x128xf32> to vector<8x128xf32>
    %2274 = arith.mulf %2251, %2269 : vector<8x128xf32>
    %2275 = arith.mulf %2253, %2271 : vector<8x128xf32>
    %2276 = arith.addf %2274, %2275 : vector<8x128xf32>
    %2277 = arith.mulf %2255, %2273 : vector<8x128xf32>
    %2278 = arith.addf %2276, %2277 : vector<8x128xf32>
    %2279 = arith.mulf %2257, %2269 : vector<8x128xf32>
    %2280 = arith.mulf %2259, %2271 : vector<8x128xf32>
    %2281 = arith.addf %2279, %2280 : vector<8x128xf32>
    %2282 = arith.mulf %2261, %2273 : vector<8x128xf32>
    %2283 = arith.addf %2281, %2282 : vector<8x128xf32>
    %2284 = arith.mulf %2263, %2269 : vector<8x128xf32>
    %2285 = arith.mulf %2265, %2271 : vector<8x128xf32>
    %2286 = arith.addf %2284, %2285 : vector<8x128xf32>
    %2287 = arith.mulf %2267, %2273 : vector<8x128xf32>
    %2288 = arith.addf %2286, %2287 : vector<8x128xf32>
    %2289 = arith.addf %2278, %1794 : vector<8x128xf32>
    %2290 = arith.addf %2283, %1795 : vector<8x128xf32>
    %2291 = arith.addf %2288, %1796 : vector<8x128xf32>
    %c45_1069 = arith.constant 45 : index
    %c0_1070 = arith.constant 0 : index
    %c0_1071 = arith.constant 0 : index
    %2292 = vector.load %arg3[%c45_1069, %c0_1070, %c0_1071] : memref<72x8x128xf32, #tpu.memory_space<vmem>>, vector<1x8x128xf32>
    %2293 = vector.shape_cast %2292 : vector<1x8x128xf32> to vector<8x128xf32>
    %2294 = vector.shape_cast %2289 : vector<8x128xf32> to vector<1x8x128xf32>
    tpu.vector_store %arg3[%c45_1069, %c0_1070, %c0_1071], %2294 {strides = array<i32>} : memref<72x8x128xf32, #tpu.memory_space<vmem>>, vector<1x8x128xf32>,
    %c46_1072 = arith.constant 46 : index
    %c0_1073 = arith.constant 0 : index
    %c0_1074 = arith.constant 0 : index
    %2295 = vector.load %arg3[%c46_1072, %c0_1073, %c0_1074] : memref<72x8x128xf32, #tpu.memory_space<vmem>>, vector<1x8x128xf32>
    %2296 = vector.shape_cast %2295 : vector<1x8x128xf32> to vector<8x128xf32>
    %2297 = vector.shape_cast %2290 : vector<8x128xf32> to vector<1x8x128xf32>
    tpu.vector_store %arg3[%c46_1072, %c0_1073, %c0_1074], %2297 {strides = array<i32>} : memref<72x8x128xf32, #tpu.memory_space<vmem>>, vector<1x8x128xf32>,
    %c47_1075 = arith.constant 47 : index
    %c0_1076 = arith.constant 0 : index
    %c0_1077 = arith.constant 0 : index
    %2298 = vector.load %arg3[%c47_1075, %c0_1076, %c0_1077] : memref<72x8x128xf32, #tpu.memory_space<vmem>>, vector<1x8x128xf32>
    %2299 = vector.shape_cast %2298 : vector<1x8x128xf32> to vector<8x128xf32>
    %2300 = vector.shape_cast %2291 : vector<8x128xf32> to vector<1x8x128xf32>
    tpu.vector_store %arg3[%c47_1075, %c0_1076, %c0_1077], %2300 {strides = array<i32>} : memref<72x8x128xf32, #tpu.memory_space<vmem>>, vector<1x8x128xf32>,
    %c99_1078 = arith.constant 99 : index
    %c0_1079 = arith.constant 0 : index
    %c0_1080 = arith.constant 0 : index
    %2301 = vector.load %arg4[%c99_1078, %c0_1079, %c0_1080] : memref<171x8x128xf32, #tpu.memory_space<vmem>>, vector<1x8x128xf32>
    %2302 = vector.shape_cast %2301 : vector<1x8x128xf32> to vector<8x128xf32>
    %c100_1081 = arith.constant 100 : index
    %c0_1082 = arith.constant 0 : index
    %c0_1083 = arith.constant 0 : index
    %2303 = vector.load %arg4[%c100_1081, %c0_1082, %c0_1083] : memref<171x8x128xf32, #tpu.memory_space<vmem>>, vector<1x8x128xf32>
    %2304 = vector.shape_cast %2303 : vector<1x8x128xf32> to vector<8x128xf32>
    %c101_1084 = arith.constant 101 : index
    %c0_1085 = arith.constant 0 : index
    %c0_1086 = arith.constant 0 : index
    %2305 = vector.load %arg4[%c101_1084, %c0_1085, %c0_1086] : memref<171x8x128xf32, #tpu.memory_space<vmem>>, vector<1x8x128xf32>
    %2306 = vector.shape_cast %2305 : vector<1x8x128xf32> to vector<8x128xf32>
    %c102_1087 = arith.constant 102 : index
    %c0_1088 = arith.constant 0 : index
    %c0_1089 = arith.constant 0 : index
    %2307 = vector.load %arg4[%c102_1087, %c0_1088, %c0_1089] : memref<171x8x128xf32, #tpu.memory_space<vmem>>, vector<1x8x128xf32>
    %2308 = vector.shape_cast %2307 : vector<1x8x128xf32> to vector<8x128xf32>
    %c103_1090 = arith.constant 103 : index
    %c0_1091 = arith.constant 0 : index
    %c0_1092 = arith.constant 0 : index
    %2309 = vector.load %arg4[%c103_1090, %c0_1091, %c0_1092] : memref<171x8x128xf32, #tpu.memory_space<vmem>>, vector<1x8x128xf32>
    %2310 = vector.shape_cast %2309 : vector<1x8x128xf32> to vector<8x128xf32>
    %c104_1093 = arith.constant 104 : index
    %c0_1094 = arith.constant 0 : index
    %c0_1095 = arith.constant 0 : index
    %2311 = vector.load %arg4[%c104_1093, %c0_1094, %c0_1095] : memref<171x8x128xf32, #tpu.memory_space<vmem>>, vector<1x8x128xf32>
    %2312 = vector.shape_cast %2311 : vector<1x8x128xf32> to vector<8x128xf32>
    %c105_1096 = arith.constant 105 : index
    %c0_1097 = arith.constant 0 : index
    %c0_1098 = arith.constant 0 : index
    %2313 = vector.load %arg4[%c105_1096, %c0_1097, %c0_1098] : memref<171x8x128xf32, #tpu.memory_space<vmem>>, vector<1x8x128xf32>
    %2314 = vector.shape_cast %2313 : vector<1x8x128xf32> to vector<8x128xf32>
    %c106_1099 = arith.constant 106 : index
    %c0_1100 = arith.constant 0 : index
    %c0_1101 = arith.constant 0 : index
    %2315 = vector.load %arg4[%c106_1099, %c0_1100, %c0_1101] : memref<171x8x128xf32, #tpu.memory_space<vmem>>, vector<1x8x128xf32>
    %2316 = vector.shape_cast %2315 : vector<1x8x128xf32> to vector<8x128xf32>
    %c107_1102 = arith.constant 107 : index
    %c0_1103 = arith.constant 0 : index
    %c0_1104 = arith.constant 0 : index
    %2317 = vector.load %arg4[%c107_1102, %c0_1103, %c0_1104] : memref<171x8x128xf32, #tpu.memory_space<vmem>>, vector<1x8x128xf32>
    %2318 = vector.shape_cast %2317 : vector<1x8x128xf32> to vector<8x128xf32>
    %c48_1105 = arith.constant 48 : index
    %c0_1106 = arith.constant 0 : index
    %c0_1107 = arith.constant 0 : index
    %2319 = vector.load %arg2[%c48_1105, %c0_1106, %c0_1107] : memref<72x8x128xf32, #tpu.memory_space<vmem>>, vector<1x8x128xf32>
    %2320 = vector.shape_cast %2319 : vector<1x8x128xf32> to vector<8x128xf32>
    %c49_1108 = arith.constant 49 : index
    %c0_1109 = arith.constant 0 : index
    %c0_1110 = arith.constant 0 : index
    %2321 = vector.load %arg2[%c49_1108, %c0_1109, %c0_1110] : memref<72x8x128xf32, #tpu.memory_space<vmem>>, vector<1x8x128xf32>
    %2322 = vector.shape_cast %2321 : vector<1x8x128xf32> to vector<8x128xf32>
    %c50_1111 = arith.constant 50 : index
    %c0_1112 = arith.constant 0 : index
    %c0_1113 = arith.constant 0 : index
    %2323 = vector.load %arg2[%c50_1111, %c0_1112, %c0_1113] : memref<72x8x128xf32, #tpu.memory_space<vmem>>, vector<1x8x128xf32>
    %2324 = vector.shape_cast %2323 : vector<1x8x128xf32> to vector<8x128xf32>
    %2325 = arith.mulf %2302, %2320 : vector<8x128xf32>
    %2326 = arith.mulf %2304, %2322 : vector<8x128xf32>
    %2327 = arith.addf %2325, %2326 : vector<8x128xf32>
    %2328 = arith.mulf %2306, %2324 : vector<8x128xf32>
    %2329 = arith.addf %2327, %2328 : vector<8x128xf32>
    %2330 = arith.mulf %2308, %2320 : vector<8x128xf32>
    %2331 = arith.mulf %2310, %2322 : vector<8x128xf32>
    %2332 = arith.addf %2330, %2331 : vector<8x128xf32>
    %2333 = arith.mulf %2312, %2324 : vector<8x128xf32>
    %2334 = arith.addf %2332, %2333 : vector<8x128xf32>
    %2335 = arith.mulf %2314, %2320 : vector<8x128xf32>
    %2336 = arith.mulf %2316, %2322 : vector<8x128xf32>
    %2337 = arith.addf %2335, %2336 : vector<8x128xf32>
    %2338 = arith.mulf %2318, %2324 : vector<8x128xf32>
    %2339 = arith.addf %2337, %2338 : vector<8x128xf32>
    %2340 = arith.addf %2329, %1953 : vector<8x128xf32>
    %2341 = arith.addf %2334, %1954 : vector<8x128xf32>
    %2342 = arith.addf %2339, %1955 : vector<8x128xf32>
    %c48_1114 = arith.constant 48 : index
    %c0_1115 = arith.constant 0 : index
    %c0_1116 = arith.constant 0 : index
    %2343 = vector.load %arg3[%c48_1114, %c0_1115, %c0_1116] : memref<72x8x128xf32, #tpu.memory_space<vmem>>, vector<1x8x128xf32>
    %2344 = vector.shape_cast %2343 : vector<1x8x128xf32> to vector<8x128xf32>
    %2345 = vector.shape_cast %2340 : vector<8x128xf32> to vector<1x8x128xf32>
    tpu.vector_store %arg3[%c48_1114, %c0_1115, %c0_1116], %2345 {strides = array<i32>} : memref<72x8x128xf32, #tpu.memory_space<vmem>>, vector<1x8x128xf32>,
    %c49_1117 = arith.constant 49 : index
    %c0_1118 = arith.constant 0 : index
    %c0_1119 = arith.constant 0 : index
    %2346 = vector.load %arg3[%c49_1117, %c0_1118, %c0_1119] : memref<72x8x128xf32, #tpu.memory_space<vmem>>, vector<1x8x128xf32>
    %2347 = vector.shape_cast %2346 : vector<1x8x128xf32> to vector<8x128xf32>
    %2348 = vector.shape_cast %2341 : vector<8x128xf32> to vector<1x8x128xf32>
    tpu.vector_store %arg3[%c49_1117, %c0_1118, %c0_1119], %2348 {strides = array<i32>} : memref<72x8x128xf32, #tpu.memory_space<vmem>>, vector<1x8x128xf32>,
    %c50_1120 = arith.constant 50 : index
    %c0_1121 = arith.constant 0 : index
    %c0_1122 = arith.constant 0 : index
    %2349 = vector.load %arg3[%c50_1120, %c0_1121, %c0_1122] : memref<72x8x128xf32, #tpu.memory_space<vmem>>, vector<1x8x128xf32>
    %2350 = vector.shape_cast %2349 : vector<1x8x128xf32> to vector<8x128xf32>
    %2351 = vector.shape_cast %2342 : vector<8x128xf32> to vector<1x8x128xf32>
    tpu.vector_store %arg3[%c50_1120, %c0_1121, %c0_1122], %2351 {strides = array<i32>} : memref<72x8x128xf32, #tpu.memory_space<vmem>>, vector<1x8x128xf32>,
    %c96_1123 = arith.constant 96 : index
    %c0_1124 = arith.constant 0 : index
    %c0_1125 = arith.constant 0 : index
    %2352 = vector.load %arg1[%c96_1123, %c0_1124, %c0_1125] : memref<144x8x128xf32, #tpu.memory_space<vmem>>, vector<1x8x128xf32>
    %2353 = vector.shape_cast %2352 : vector<1x8x128xf32> to vector<8x128xf32>
    %c97_1126 = arith.constant 97 : index
    %c0_1127 = arith.constant 0 : index
    %c0_1128 = arith.constant 0 : index
    %2354 = vector.load %arg1[%c97_1126, %c0_1127, %c0_1128] : memref<144x8x128xf32, #tpu.memory_space<vmem>>, vector<1x8x128xf32>
    %2355 = vector.shape_cast %2354 : vector<1x8x128xf32> to vector<8x128xf32>
    %c98_1129 = arith.constant 98 : index
    %c0_1130 = arith.constant 0 : index
    %c0_1131 = arith.constant 0 : index
    %2356 = vector.load %arg1[%c98_1129, %c0_1130, %c0_1131] : memref<144x8x128xf32, #tpu.memory_space<vmem>>, vector<1x8x128xf32>
    %2357 = vector.shape_cast %2356 : vector<1x8x128xf32> to vector<8x128xf32>
    %c99_1132 = arith.constant 99 : index
    %c0_1133 = arith.constant 0 : index
    %c0_1134 = arith.constant 0 : index
    %2358 = vector.load %arg1[%c99_1132, %c0_1133, %c0_1134] : memref<144x8x128xf32, #tpu.memory_space<vmem>>, vector<1x8x128xf32>
    %2359 = vector.shape_cast %2358 : vector<1x8x128xf32> to vector<8x128xf32>
    %c100_1135 = arith.constant 100 : index
    %c0_1136 = arith.constant 0 : index
    %c0_1137 = arith.constant 0 : index
    %2360 = vector.load %arg1[%c100_1135, %c0_1136, %c0_1137] : memref<144x8x128xf32, #tpu.memory_space<vmem>>, vector<1x8x128xf32>
    %2361 = vector.shape_cast %2360 : vector<1x8x128xf32> to vector<8x128xf32>
    %c101_1138 = arith.constant 101 : index
    %c0_1139 = arith.constant 0 : index
    %c0_1140 = arith.constant 0 : index
    %2362 = vector.load %arg1[%c101_1138, %c0_1139, %c0_1140] : memref<144x8x128xf32, #tpu.memory_space<vmem>>, vector<1x8x128xf32>
    %2363 = vector.shape_cast %2362 : vector<1x8x128xf32> to vector<8x128xf32>
    %2364 = arith.mulf %2353, %2353 : vector<8x128xf32>
    %2365 = arith.mulf %2355, %2355 : vector<8x128xf32>
    %2366 = arith.addf %2364, %2365 : vector<8x128xf32>
    %2367 = arith.mulf %2357, %2357 : vector<8x128xf32>
    %2368 = arith.addf %2366, %2367 : vector<8x128xf32>
    %cst_1141 = arith.constant 1.000000e-24 : f32
    %2369 = vector.broadcast %cst_1141 : f32 to vector<8x128xf32>
    %2370 = arith.maximumf %2368, %2369 : vector<8x128xf32>
    %2371 = math.rsqrt %2370 : vector<8x128xf32>
    %2372 = arith.mulf %2353, %2371 : vector<8x128xf32>
    %2373 = arith.mulf %2355, %2371 : vector<8x128xf32>
    %2374 = arith.mulf %2357, %2371 : vector<8x128xf32>
    %2375 = arith.mulf %2372, %2359 : vector<8x128xf32>
    %2376 = arith.mulf %2373, %2361 : vector<8x128xf32>
    %2377 = arith.addf %2375, %2376 : vector<8x128xf32>
    %2378 = arith.mulf %2374, %2363 : vector<8x128xf32>
    %2379 = arith.addf %2377, %2378 : vector<8x128xf32>
    %2380 = arith.mulf %2379, %2372 : vector<8x128xf32>
    %2381 = arith.subf %2359, %2380 : vector<8x128xf32>
    %2382 = arith.mulf %2379, %2373 : vector<8x128xf32>
    %2383 = arith.subf %2361, %2382 : vector<8x128xf32>
    %2384 = arith.mulf %2379, %2374 : vector<8x128xf32>
    %2385 = arith.subf %2363, %2384 : vector<8x128xf32>
    %2386 = arith.mulf %2381, %2381 : vector<8x128xf32>
    %2387 = arith.mulf %2383, %2383 : vector<8x128xf32>
    %2388 = arith.addf %2386, %2387 : vector<8x128xf32>
    %2389 = arith.mulf %2385, %2385 : vector<8x128xf32>
    %2390 = arith.addf %2388, %2389 : vector<8x128xf32>
    %cst_1142 = arith.constant 1.000000e-24 : f32
    %2391 = vector.broadcast %cst_1142 : f32 to vector<8x128xf32>
    %2392 = arith.maximumf %2390, %2391 : vector<8x128xf32>
    %2393 = math.rsqrt %2392 : vector<8x128xf32>
    %2394 = arith.mulf %2381, %2393 : vector<8x128xf32>
    %2395 = arith.mulf %2383, %2393 : vector<8x128xf32>
    %2396 = arith.mulf %2385, %2393 : vector<8x128xf32>
    %2397 = arith.mulf %2373, %2396 : vector<8x128xf32>
    %2398 = arith.mulf %2374, %2395 : vector<8x128xf32>
    %2399 = arith.subf %2397, %2398 : vector<8x128xf32>
    %2400 = arith.mulf %2374, %2394 : vector<8x128xf32>
    %2401 = arith.mulf %2372, %2396 : vector<8x128xf32>
    %2402 = arith.subf %2400, %2401 : vector<8x128xf32>
    %2403 = arith.mulf %2372, %2395 : vector<8x128xf32>
    %2404 = arith.mulf %2373, %2394 : vector<8x128xf32>
    %2405 = arith.subf %2403, %2404 : vector<8x128xf32>
    %2406 = arith.mulf %2302, %2372 : vector<8x128xf32>
    %2407 = arith.mulf %2304, %2394 : vector<8x128xf32>
    %2408 = arith.addf %2406, %2407 : vector<8x128xf32>
    %2409 = arith.mulf %2306, %2399 : vector<8x128xf32>
    %2410 = arith.addf %2408, %2409 : vector<8x128xf32>
    %2411 = arith.mulf %2302, %2373 : vector<8x128xf32>
    %2412 = arith.mulf %2304, %2395 : vector<8x128xf32>
    %2413 = arith.addf %2411, %2412 : vector<8x128xf32>
    %2414 = arith.mulf %2306, %2402 : vector<8x128xf32>
    %2415 = arith.addf %2413, %2414 : vector<8x128xf32>
    %2416 = arith.mulf %2302, %2374 : vector<8x128xf32>
    %2417 = arith.mulf %2304, %2396 : vector<8x128xf32>
    %2418 = arith.addf %2416, %2417 : vector<8x128xf32>
    %2419 = arith.mulf %2306, %2405 : vector<8x128xf32>
    %2420 = arith.addf %2418, %2419 : vector<8x128xf32>
    %2421 = arith.mulf %2308, %2372 : vector<8x128xf32>
    %2422 = arith.mulf %2310, %2394 : vector<8x128xf32>
    %2423 = arith.addf %2421, %2422 : vector<8x128xf32>
    %2424 = arith.mulf %2312, %2399 : vector<8x128xf32>
    %2425 = arith.addf %2423, %2424 : vector<8x128xf32>
    %2426 = arith.mulf %2308, %2373 : vector<8x128xf32>
    %2427 = arith.mulf %2310, %2395 : vector<8x128xf32>
    %2428 = arith.addf %2426, %2427 : vector<8x128xf32>
    %2429 = arith.mulf %2312, %2402 : vector<8x128xf32>
    %2430 = arith.addf %2428, %2429 : vector<8x128xf32>
    %2431 = arith.mulf %2308, %2374 : vector<8x128xf32>
    %2432 = arith.mulf %2310, %2396 : vector<8x128xf32>
    %2433 = arith.addf %2431, %2432 : vector<8x128xf32>
    %2434 = arith.mulf %2312, %2405 : vector<8x128xf32>
    %2435 = arith.addf %2433, %2434 : vector<8x128xf32>
    %2436 = arith.mulf %2314, %2372 : vector<8x128xf32>
    %2437 = arith.mulf %2316, %2394 : vector<8x128xf32>
    %2438 = arith.addf %2436, %2437 : vector<8x128xf32>
    %2439 = arith.mulf %2318, %2399 : vector<8x128xf32>
    %2440 = arith.addf %2438, %2439 : vector<8x128xf32>
    %2441 = arith.mulf %2314, %2373 : vector<8x128xf32>
    %2442 = arith.mulf %2316, %2395 : vector<8x128xf32>
    %2443 = arith.addf %2441, %2442 : vector<8x128xf32>
    %2444 = arith.mulf %2318, %2402 : vector<8x128xf32>
    %2445 = arith.addf %2443, %2444 : vector<8x128xf32>
    %2446 = arith.mulf %2314, %2374 : vector<8x128xf32>
    %2447 = arith.mulf %2316, %2396 : vector<8x128xf32>
    %2448 = arith.addf %2446, %2447 : vector<8x128xf32>
    %2449 = arith.mulf %2318, %2405 : vector<8x128xf32>
    %2450 = arith.addf %2448, %2449 : vector<8x128xf32>
    %c117 = arith.constant 117 : index
    %c0_1143 = arith.constant 0 : index
    %c0_1144 = arith.constant 0 : index
    %2451 = vector.load %arg4[%c117, %c0_1143, %c0_1144] : memref<171x8x128xf32, #tpu.memory_space<vmem>>, vector<1x8x128xf32>
    %2452 = vector.shape_cast %2451 : vector<1x8x128xf32> to vector<8x128xf32>
    %2453 = vector.shape_cast %2410 : vector<8x128xf32> to vector<1x8x128xf32>
    tpu.vector_store %arg4[%c117, %c0_1143, %c0_1144], %2453 {strides = array<i32>} : memref<171x8x128xf32, #tpu.memory_space<vmem>>, vector<1x8x128xf32>,
    %c118 = arith.constant 118 : index
    %c0_1145 = arith.constant 0 : index
    %c0_1146 = arith.constant 0 : index
    %2454 = vector.load %arg4[%c118, %c0_1145, %c0_1146] : memref<171x8x128xf32, #tpu.memory_space<vmem>>, vector<1x8x128xf32>
    %2455 = vector.shape_cast %2454 : vector<1x8x128xf32> to vector<8x128xf32>
    %2456 = vector.shape_cast %2415 : vector<8x128xf32> to vector<1x8x128xf32>
    tpu.vector_store %arg4[%c118, %c0_1145, %c0_1146], %2456 {strides = array<i32>} : memref<171x8x128xf32, #tpu.memory_space<vmem>>, vector<1x8x128xf32>,
    %c119 = arith.constant 119 : index
    %c0_1147 = arith.constant 0 : index
    %c0_1148 = arith.constant 0 : index
    %2457 = vector.load %arg4[%c119, %c0_1147, %c0_1148] : memref<171x8x128xf32, #tpu.memory_space<vmem>>, vector<1x8x128xf32>
    %2458 = vector.shape_cast %2457 : vector<1x8x128xf32> to vector<8x128xf32>
    %2459 = vector.shape_cast %2420 : vector<8x128xf32> to vector<1x8x128xf32>
    tpu.vector_store %arg4[%c119, %c0_1147, %c0_1148], %2459 {strides = array<i32>} : memref<171x8x128xf32, #tpu.memory_space<vmem>>, vector<1x8x128xf32>,
    %c120 = arith.constant 120 : index
    %c0_1149 = arith.constant 0 : index
    %c0_1150 = arith.constant 0 : index
    %2460 = vector.load %arg4[%c120, %c0_1149, %c0_1150] : memref<171x8x128xf32, #tpu.memory_space<vmem>>, vector<1x8x128xf32>
    %2461 = vector.shape_cast %2460 : vector<1x8x128xf32> to vector<8x128xf32>
    %2462 = vector.shape_cast %2425 : vector<8x128xf32> to vector<1x8x128xf32>
    tpu.vector_store %arg4[%c120, %c0_1149, %c0_1150], %2462 {strides = array<i32>} : memref<171x8x128xf32, #tpu.memory_space<vmem>>, vector<1x8x128xf32>,
    %c121 = arith.constant 121 : index
    %c0_1151 = arith.constant 0 : index
    %c0_1152 = arith.constant 0 : index
    %2463 = vector.load %arg4[%c121, %c0_1151, %c0_1152] : memref<171x8x128xf32, #tpu.memory_space<vmem>>, vector<1x8x128xf32>
    %2464 = vector.shape_cast %2463 : vector<1x8x128xf32> to vector<8x128xf32>
    %2465 = vector.shape_cast %2430 : vector<8x128xf32> to vector<1x8x128xf32>
    tpu.vector_store %arg4[%c121, %c0_1151, %c0_1152], %2465 {strides = array<i32>} : memref<171x8x128xf32, #tpu.memory_space<vmem>>, vector<1x8x128xf32>,
    %c122 = arith.constant 122 : index
    %c0_1153 = arith.constant 0 : index
    %c0_1154 = arith.constant 0 : index
    %2466 = vector.load %arg4[%c122, %c0_1153, %c0_1154] : memref<171x8x128xf32, #tpu.memory_space<vmem>>, vector<1x8x128xf32>
    %2467 = vector.shape_cast %2466 : vector<1x8x128xf32> to vector<8x128xf32>
    %2468 = vector.shape_cast %2435 : vector<8x128xf32> to vector<1x8x128xf32>
    tpu.vector_store %arg4[%c122, %c0_1153, %c0_1154], %2468 {strides = array<i32>} : memref<171x8x128xf32, #tpu.memory_space<vmem>>, vector<1x8x128xf32>,
    %c123 = arith.constant 123 : index
    %c0_1155 = arith.constant 0 : index
    %c0_1156 = arith.constant 0 : index
    %2469 = vector.load %arg4[%c123, %c0_1155, %c0_1156] : memref<171x8x128xf32, #tpu.memory_space<vmem>>, vector<1x8x128xf32>
    %2470 = vector.shape_cast %2469 : vector<1x8x128xf32> to vector<8x128xf32>
    %2471 = vector.shape_cast %2440 : vector<8x128xf32> to vector<1x8x128xf32>
    tpu.vector_store %arg4[%c123, %c0_1155, %c0_1156], %2471 {strides = array<i32>} : memref<171x8x128xf32, #tpu.memory_space<vmem>>, vector<1x8x128xf32>,
    %c124 = arith.constant 124 : index
    %c0_1157 = arith.constant 0 : index
    %c0_1158 = arith.constant 0 : index
    %2472 = vector.load %arg4[%c124, %c0_1157, %c0_1158] : memref<171x8x128xf32, #tpu.memory_space<vmem>>, vector<1x8x128xf32>
    %2473 = vector.shape_cast %2472 : vector<1x8x128xf32> to vector<8x128xf32>
    %2474 = vector.shape_cast %2445 : vector<8x128xf32> to vector<1x8x128xf32>
    tpu.vector_store %arg4[%c124, %c0_1157, %c0_1158], %2474 {strides = array<i32>} : memref<171x8x128xf32, #tpu.memory_space<vmem>>, vector<1x8x128xf32>,
    %c125 = arith.constant 125 : index
    %c0_1159 = arith.constant 0 : index
    %c0_1160 = arith.constant 0 : index
    %2475 = vector.load %arg4[%c125, %c0_1159, %c0_1160] : memref<171x8x128xf32, #tpu.memory_space<vmem>>, vector<1x8x128xf32>
    %2476 = vector.shape_cast %2475 : vector<1x8x128xf32> to vector<8x128xf32>
    %2477 = vector.shape_cast %2450 : vector<8x128xf32> to vector<1x8x128xf32>
    tpu.vector_store %arg4[%c125, %c0_1159, %c0_1160], %2477 {strides = array<i32>} : memref<171x8x128xf32, #tpu.memory_space<vmem>>, vector<1x8x128xf32>,
    %c108_1161 = arith.constant 108 : index
    %c0_1162 = arith.constant 0 : index
    %c0_1163 = arith.constant 0 : index
    %2478 = vector.load %arg4[%c108_1161, %c0_1162, %c0_1163] : memref<171x8x128xf32, #tpu.memory_space<vmem>>, vector<1x8x128xf32>
    %2479 = vector.shape_cast %2478 : vector<1x8x128xf32> to vector<8x128xf32>
    %c109_1164 = arith.constant 109 : index
    %c0_1165 = arith.constant 0 : index
    %c0_1166 = arith.constant 0 : index
    %2480 = vector.load %arg4[%c109_1164, %c0_1165, %c0_1166] : memref<171x8x128xf32, #tpu.memory_space<vmem>>, vector<1x8x128xf32>
    %2481 = vector.shape_cast %2480 : vector<1x8x128xf32> to vector<8x128xf32>
    %c110_1167 = arith.constant 110 : index
    %c0_1168 = arith.constant 0 : index
    %c0_1169 = arith.constant 0 : index
    %2482 = vector.load %arg4[%c110_1167, %c0_1168, %c0_1169] : memref<171x8x128xf32, #tpu.memory_space<vmem>>, vector<1x8x128xf32>
    %2483 = vector.shape_cast %2482 : vector<1x8x128xf32> to vector<8x128xf32>
    %c111_1170 = arith.constant 111 : index
    %c0_1171 = arith.constant 0 : index
    %c0_1172 = arith.constant 0 : index
    %2484 = vector.load %arg4[%c111_1170, %c0_1171, %c0_1172] : memref<171x8x128xf32, #tpu.memory_space<vmem>>, vector<1x8x128xf32>
    %2485 = vector.shape_cast %2484 : vector<1x8x128xf32> to vector<8x128xf32>
    %c112_1173 = arith.constant 112 : index
    %c0_1174 = arith.constant 0 : index
    %c0_1175 = arith.constant 0 : index
    %2486 = vector.load %arg4[%c112_1173, %c0_1174, %c0_1175] : memref<171x8x128xf32, #tpu.memory_space<vmem>>, vector<1x8x128xf32>
    %2487 = vector.shape_cast %2486 : vector<1x8x128xf32> to vector<8x128xf32>
    %c113_1176 = arith.constant 113 : index
    %c0_1177 = arith.constant 0 : index
    %c0_1178 = arith.constant 0 : index
    %2488 = vector.load %arg4[%c113_1176, %c0_1177, %c0_1178] : memref<171x8x128xf32, #tpu.memory_space<vmem>>, vector<1x8x128xf32>
    %2489 = vector.shape_cast %2488 : vector<1x8x128xf32> to vector<8x128xf32>
    %c114_1179 = arith.constant 114 : index
    %c0_1180 = arith.constant 0 : index
    %c0_1181 = arith.constant 0 : index
    %2490 = vector.load %arg4[%c114_1179, %c0_1180, %c0_1181] : memref<171x8x128xf32, #tpu.memory_space<vmem>>, vector<1x8x128xf32>
    %2491 = vector.shape_cast %2490 : vector<1x8x128xf32> to vector<8x128xf32>
    %c115_1182 = arith.constant 115 : index
    %c0_1183 = arith.constant 0 : index
    %c0_1184 = arith.constant 0 : index
    %2492 = vector.load %arg4[%c115_1182, %c0_1183, %c0_1184] : memref<171x8x128xf32, #tpu.memory_space<vmem>>, vector<1x8x128xf32>
    %2493 = vector.shape_cast %2492 : vector<1x8x128xf32> to vector<8x128xf32>
    %c116_1185 = arith.constant 116 : index
    %c0_1186 = arith.constant 0 : index
    %c0_1187 = arith.constant 0 : index
    %2494 = vector.load %arg4[%c116_1185, %c0_1186, %c0_1187] : memref<171x8x128xf32, #tpu.memory_space<vmem>>, vector<1x8x128xf32>
    %2495 = vector.shape_cast %2494 : vector<1x8x128xf32> to vector<8x128xf32>
    %c51_1188 = arith.constant 51 : index
    %c0_1189 = arith.constant 0 : index
    %c0_1190 = arith.constant 0 : index
    %2496 = vector.load %arg2[%c51_1188, %c0_1189, %c0_1190] : memref<72x8x128xf32, #tpu.memory_space<vmem>>, vector<1x8x128xf32>
    %2497 = vector.shape_cast %2496 : vector<1x8x128xf32> to vector<8x128xf32>
    %c52_1191 = arith.constant 52 : index
    %c0_1192 = arith.constant 0 : index
    %c0_1193 = arith.constant 0 : index
    %2498 = vector.load %arg2[%c52_1191, %c0_1192, %c0_1193] : memref<72x8x128xf32, #tpu.memory_space<vmem>>, vector<1x8x128xf32>
    %2499 = vector.shape_cast %2498 : vector<1x8x128xf32> to vector<8x128xf32>
    %c53_1194 = arith.constant 53 : index
    %c0_1195 = arith.constant 0 : index
    %c0_1196 = arith.constant 0 : index
    %2500 = vector.load %arg2[%c53_1194, %c0_1195, %c0_1196] : memref<72x8x128xf32, #tpu.memory_space<vmem>>, vector<1x8x128xf32>
    %2501 = vector.shape_cast %2500 : vector<1x8x128xf32> to vector<8x128xf32>
    %2502 = arith.mulf %2479, %2497 : vector<8x128xf32>
    %2503 = arith.mulf %2481, %2499 : vector<8x128xf32>
    %2504 = arith.addf %2502, %2503 : vector<8x128xf32>
    %2505 = arith.mulf %2483, %2501 : vector<8x128xf32>
    %2506 = arith.addf %2504, %2505 : vector<8x128xf32>
    %2507 = arith.mulf %2485, %2497 : vector<8x128xf32>
    %2508 = arith.mulf %2487, %2499 : vector<8x128xf32>
    %2509 = arith.addf %2507, %2508 : vector<8x128xf32>
    %2510 = arith.mulf %2489, %2501 : vector<8x128xf32>
    %2511 = arith.addf %2509, %2510 : vector<8x128xf32>
    %2512 = arith.mulf %2491, %2497 : vector<8x128xf32>
    %2513 = arith.mulf %2493, %2499 : vector<8x128xf32>
    %2514 = arith.addf %2512, %2513 : vector<8x128xf32>
    %2515 = arith.mulf %2495, %2501 : vector<8x128xf32>
    %2516 = arith.addf %2514, %2515 : vector<8x128xf32>
    %2517 = arith.addf %2506, %2112 : vector<8x128xf32>
    %2518 = arith.addf %2511, %2113 : vector<8x128xf32>
    %2519 = arith.addf %2516, %2114 : vector<8x128xf32>
    %c51_1197 = arith.constant 51 : index
    %c0_1198 = arith.constant 0 : index
    %c0_1199 = arith.constant 0 : index
    %2520 = vector.load %arg3[%c51_1197, %c0_1198, %c0_1199] : memref<72x8x128xf32, #tpu.memory_space<vmem>>, vector<1x8x128xf32>
    %2521 = vector.shape_cast %2520 : vector<1x8x128xf32> to vector<8x128xf32>
    %2522 = vector.shape_cast %2517 : vector<8x128xf32> to vector<1x8x128xf32>
    tpu.vector_store %arg3[%c51_1197, %c0_1198, %c0_1199], %2522 {strides = array<i32>} : memref<72x8x128xf32, #tpu.memory_space<vmem>>, vector<1x8x128xf32>,
    %c52_1200 = arith.constant 52 : index
    %c0_1201 = arith.constant 0 : index
    %c0_1202 = arith.constant 0 : index
    %2523 = vector.load %arg3[%c52_1200, %c0_1201, %c0_1202] : memref<72x8x128xf32, #tpu.memory_space<vmem>>, vector<1x8x128xf32>
    %2524 = vector.shape_cast %2523 : vector<1x8x128xf32> to vector<8x128xf32>
    %2525 = vector.shape_cast %2518 : vector<8x128xf32> to vector<1x8x128xf32>
    tpu.vector_store %arg3[%c52_1200, %c0_1201, %c0_1202], %2525 {strides = array<i32>} : memref<72x8x128xf32, #tpu.memory_space<vmem>>, vector<1x8x128xf32>,
    %c53_1203 = arith.constant 53 : index
    %c0_1204 = arith.constant 0 : index
    %c0_1205 = arith.constant 0 : index
    %2526 = vector.load %arg3[%c53_1203, %c0_1204, %c0_1205] : memref<72x8x128xf32, #tpu.memory_space<vmem>>, vector<1x8x128xf32>
    %2527 = vector.shape_cast %2526 : vector<1x8x128xf32> to vector<8x128xf32>
    %2528 = vector.shape_cast %2519 : vector<8x128xf32> to vector<1x8x128xf32>
    tpu.vector_store %arg3[%c53_1203, %c0_1204, %c0_1205], %2528 {strides = array<i32>} : memref<72x8x128xf32, #tpu.memory_space<vmem>>, vector<1x8x128xf32>,
    %c102_1206 = arith.constant 102 : index
    %c0_1207 = arith.constant 0 : index
    %c0_1208 = arith.constant 0 : index
    %2529 = vector.load %arg1[%c102_1206, %c0_1207, %c0_1208] : memref<144x8x128xf32, #tpu.memory_space<vmem>>, vector<1x8x128xf32>
    %2530 = vector.shape_cast %2529 : vector<1x8x128xf32> to vector<8x128xf32>
    %c103_1209 = arith.constant 103 : index
    %c0_1210 = arith.constant 0 : index
    %c0_1211 = arith.constant 0 : index
    %2531 = vector.load %arg1[%c103_1209, %c0_1210, %c0_1211] : memref<144x8x128xf32, #tpu.memory_space<vmem>>, vector<1x8x128xf32>
    %2532 = vector.shape_cast %2531 : vector<1x8x128xf32> to vector<8x128xf32>
    %c104_1212 = arith.constant 104 : index
    %c0_1213 = arith.constant 0 : index
    %c0_1214 = arith.constant 0 : index
    %2533 = vector.load %arg1[%c104_1212, %c0_1213, %c0_1214] : memref<144x8x128xf32, #tpu.memory_space<vmem>>, vector<1x8x128xf32>
    %2534 = vector.shape_cast %2533 : vector<1x8x128xf32> to vector<8x128xf32>
    %c105_1215 = arith.constant 105 : index
    %c0_1216 = arith.constant 0 : index
    %c0_1217 = arith.constant 0 : index
    %2535 = vector.load %arg1[%c105_1215, %c0_1216, %c0_1217] : memref<144x8x128xf32, #tpu.memory_space<vmem>>, vector<1x8x128xf32>
    %2536 = vector.shape_cast %2535 : vector<1x8x128xf32> to vector<8x128xf32>
    %c106_1218 = arith.constant 106 : index
    %c0_1219 = arith.constant 0 : index
    %c0_1220 = arith.constant 0 : index
    %2537 = vector.load %arg1[%c106_1218, %c0_1219, %c0_1220] : memref<144x8x128xf32, #tpu.memory_space<vmem>>, vector<1x8x128xf32>
    %2538 = vector.shape_cast %2537 : vector<1x8x128xf32> to vector<8x128xf32>
    %c107_1221 = arith.constant 107 : index
    %c0_1222 = arith.constant 0 : index
    %c0_1223 = arith.constant 0 : index
    %2539 = vector.load %arg1[%c107_1221, %c0_1222, %c0_1223] : memref<144x8x128xf32, #tpu.memory_space<vmem>>, vector<1x8x128xf32>
    %2540 = vector.shape_cast %2539 : vector<1x8x128xf32> to vector<8x128xf32>
    %2541 = arith.mulf %2530, %2530 : vector<8x128xf32>
    %2542 = arith.mulf %2532, %2532 : vector<8x128xf32>
    %2543 = arith.addf %2541, %2542 : vector<8x128xf32>
    %2544 = arith.mulf %2534, %2534 : vector<8x128xf32>
    %2545 = arith.addf %2543, %2544 : vector<8x128xf32>
    %cst_1224 = arith.constant 1.000000e-24 : f32
    %2546 = vector.broadcast %cst_1224 : f32 to vector<8x128xf32>
    %2547 = arith.maximumf %2545, %2546 : vector<8x128xf32>
    %2548 = math.rsqrt %2547 : vector<8x128xf32>
    %2549 = arith.mulf %2530, %2548 : vector<8x128xf32>
    %2550 = arith.mulf %2532, %2548 : vector<8x128xf32>
    %2551 = arith.mulf %2534, %2548 : vector<8x128xf32>
    %2552 = arith.mulf %2549, %2536 : vector<8x128xf32>
    %2553 = arith.mulf %2550, %2538 : vector<8x128xf32>
    %2554 = arith.addf %2552, %2553 : vector<8x128xf32>
    %2555 = arith.mulf %2551, %2540 : vector<8x128xf32>
    %2556 = arith.addf %2554, %2555 : vector<8x128xf32>
    %2557 = arith.mulf %2556, %2549 : vector<8x128xf32>
    %2558 = arith.subf %2536, %2557 : vector<8x128xf32>
    %2559 = arith.mulf %2556, %2550 : vector<8x128xf32>
    %2560 = arith.subf %2538, %2559 : vector<8x128xf32>
    %2561 = arith.mulf %2556, %2551 : vector<8x128xf32>
    %2562 = arith.subf %2540, %2561 : vector<8x128xf32>
    %2563 = arith.mulf %2558, %2558 : vector<8x128xf32>
    %2564 = arith.mulf %2560, %2560 : vector<8x128xf32>
    %2565 = arith.addf %2563, %2564 : vector<8x128xf32>
    %2566 = arith.mulf %2562, %2562 : vector<8x128xf32>
    %2567 = arith.addf %2565, %2566 : vector<8x128xf32>
    %cst_1225 = arith.constant 1.000000e-24 : f32
    %2568 = vector.broadcast %cst_1225 : f32 to vector<8x128xf32>
    %2569 = arith.maximumf %2567, %2568 : vector<8x128xf32>
    %2570 = math.rsqrt %2569 : vector<8x128xf32>
    %2571 = arith.mulf %2558, %2570 : vector<8x128xf32>
    %2572 = arith.mulf %2560, %2570 : vector<8x128xf32>
    %2573 = arith.mulf %2562, %2570 : vector<8x128xf32>
    %2574 = arith.mulf %2550, %2573 : vector<8x128xf32>
    %2575 = arith.mulf %2551, %2572 : vector<8x128xf32>
    %2576 = arith.subf %2574, %2575 : vector<8x128xf32>
    %2577 = arith.mulf %2551, %2571 : vector<8x128xf32>
    %2578 = arith.mulf %2549, %2573 : vector<8x128xf32>
    %2579 = arith.subf %2577, %2578 : vector<8x128xf32>
    %2580 = arith.mulf %2549, %2572 : vector<8x128xf32>
    %2581 = arith.mulf %2550, %2571 : vector<8x128xf32>
    %2582 = arith.subf %2580, %2581 : vector<8x128xf32>
    %2583 = arith.mulf %2479, %2549 : vector<8x128xf32>
    %2584 = arith.mulf %2481, %2571 : vector<8x128xf32>
    %2585 = arith.addf %2583, %2584 : vector<8x128xf32>
    %2586 = arith.mulf %2483, %2576 : vector<8x128xf32>
    %2587 = arith.addf %2585, %2586 : vector<8x128xf32>
    %2588 = arith.mulf %2479, %2550 : vector<8x128xf32>
    %2589 = arith.mulf %2481, %2572 : vector<8x128xf32>
    %2590 = arith.addf %2588, %2589 : vector<8x128xf32>
    %2591 = arith.mulf %2483, %2579 : vector<8x128xf32>
    %2592 = arith.addf %2590, %2591 : vector<8x128xf32>
    %2593 = arith.mulf %2479, %2551 : vector<8x128xf32>
    %2594 = arith.mulf %2481, %2573 : vector<8x128xf32>
    %2595 = arith.addf %2593, %2594 : vector<8x128xf32>
    %2596 = arith.mulf %2483, %2582 : vector<8x128xf32>
    %2597 = arith.addf %2595, %2596 : vector<8x128xf32>
    %2598 = arith.mulf %2485, %2549 : vector<8x128xf32>
    %2599 = arith.mulf %2487, %2571 : vector<8x128xf32>
    %2600 = arith.addf %2598, %2599 : vector<8x128xf32>
    %2601 = arith.mulf %2489, %2576 : vector<8x128xf32>
    %2602 = arith.addf %2600, %2601 : vector<8x128xf32>
    %2603 = arith.mulf %2485, %2550 : vector<8x128xf32>
    %2604 = arith.mulf %2487, %2572 : vector<8x128xf32>
    %2605 = arith.addf %2603, %2604 : vector<8x128xf32>
    %2606 = arith.mulf %2489, %2579 : vector<8x128xf32>
    %2607 = arith.addf %2605, %2606 : vector<8x128xf32>
    %2608 = arith.mulf %2485, %2551 : vector<8x128xf32>
    %2609 = arith.mulf %2487, %2573 : vector<8x128xf32>
    %2610 = arith.addf %2608, %2609 : vector<8x128xf32>
    %2611 = arith.mulf %2489, %2582 : vector<8x128xf32>
    %2612 = arith.addf %2610, %2611 : vector<8x128xf32>
    %2613 = arith.mulf %2491, %2549 : vector<8x128xf32>
    %2614 = arith.mulf %2493, %2571 : vector<8x128xf32>
    %2615 = arith.addf %2613, %2614 : vector<8x128xf32>
    %2616 = arith.mulf %2495, %2576 : vector<8x128xf32>
    %2617 = arith.addf %2615, %2616 : vector<8x128xf32>
    %2618 = arith.mulf %2491, %2550 : vector<8x128xf32>
    %2619 = arith.mulf %2493, %2572 : vector<8x128xf32>
    %2620 = arith.addf %2618, %2619 : vector<8x128xf32>
    %2621 = arith.mulf %2495, %2579 : vector<8x128xf32>
    %2622 = arith.addf %2620, %2621 : vector<8x128xf32>
    %2623 = arith.mulf %2491, %2551 : vector<8x128xf32>
    %2624 = arith.mulf %2493, %2573 : vector<8x128xf32>
    %2625 = arith.addf %2623, %2624 : vector<8x128xf32>
    %2626 = arith.mulf %2495, %2582 : vector<8x128xf32>
    %2627 = arith.addf %2625, %2626 : vector<8x128xf32>
    %c126 = arith.constant 126 : index
    %c0_1226 = arith.constant 0 : index
    %c0_1227 = arith.constant 0 : index
    %2628 = vector.load %arg4[%c126, %c0_1226, %c0_1227] : memref<171x8x128xf32, #tpu.memory_space<vmem>>, vector<1x8x128xf32>
    %2629 = vector.shape_cast %2628 : vector<1x8x128xf32> to vector<8x128xf32>
    %2630 = vector.shape_cast %2587 : vector<8x128xf32> to vector<1x8x128xf32>
    tpu.vector_store %arg4[%c126, %c0_1226, %c0_1227], %2630 {strides = array<i32>} : memref<171x8x128xf32, #tpu.memory_space<vmem>>, vector<1x8x128xf32>,
    %c127 = arith.constant 127 : index
    %c0_1228 = arith.constant 0 : index
    %c0_1229 = arith.constant 0 : index
    %2631 = vector.load %arg4[%c127, %c0_1228, %c0_1229] : memref<171x8x128xf32, #tpu.memory_space<vmem>>, vector<1x8x128xf32>
    %2632 = vector.shape_cast %2631 : vector<1x8x128xf32> to vector<8x128xf32>
    %2633 = vector.shape_cast %2592 : vector<8x128xf32> to vector<1x8x128xf32>
    tpu.vector_store %arg4[%c127, %c0_1228, %c0_1229], %2633 {strides = array<i32>} : memref<171x8x128xf32, #tpu.memory_space<vmem>>, vector<1x8x128xf32>,
    %c128 = arith.constant 128 : index
    %c0_1230 = arith.constant 0 : index
    %c0_1231 = arith.constant 0 : index
    %2634 = vector.load %arg4[%c128, %c0_1230, %c0_1231] : memref<171x8x128xf32, #tpu.memory_space<vmem>>, vector<1x8x128xf32>
    %2635 = vector.shape_cast %2634 : vector<1x8x128xf32> to vector<8x128xf32>
    %2636 = vector.shape_cast %2597 : vector<8x128xf32> to vector<1x8x128xf32>
    tpu.vector_store %arg4[%c128, %c0_1230, %c0_1231], %2636 {strides = array<i32>} : memref<171x8x128xf32, #tpu.memory_space<vmem>>, vector<1x8x128xf32>,
    %c129 = arith.constant 129 : index
    %c0_1232 = arith.constant 0 : index
    %c0_1233 = arith.constant 0 : index
    %2637 = vector.load %arg4[%c129, %c0_1232, %c0_1233] : memref<171x8x128xf32, #tpu.memory_space<vmem>>, vector<1x8x128xf32>
    %2638 = vector.shape_cast %2637 : vector<1x8x128xf32> to vector<8x128xf32>
    %2639 = vector.shape_cast %2602 : vector<8x128xf32> to vector<1x8x128xf32>
    tpu.vector_store %arg4[%c129, %c0_1232, %c0_1233], %2639 {strides = array<i32>} : memref<171x8x128xf32, #tpu.memory_space<vmem>>, vector<1x8x128xf32>,
    %c130 = arith.constant 130 : index
    %c0_1234 = arith.constant 0 : index
    %c0_1235 = arith.constant 0 : index
    %2640 = vector.load %arg4[%c130, %c0_1234, %c0_1235] : memref<171x8x128xf32, #tpu.memory_space<vmem>>, vector<1x8x128xf32>
    %2641 = vector.shape_cast %2640 : vector<1x8x128xf32> to vector<8x128xf32>
    %2642 = vector.shape_cast %2607 : vector<8x128xf32> to vector<1x8x128xf32>
    tpu.vector_store %arg4[%c130, %c0_1234, %c0_1235], %2642 {strides = array<i32>} : memref<171x8x128xf32, #tpu.memory_space<vmem>>, vector<1x8x128xf32>,
    %c131 = arith.constant 131 : index
    %c0_1236 = arith.constant 0 : index
    %c0_1237 = arith.constant 0 : index
    %2643 = vector.load %arg4[%c131, %c0_1236, %c0_1237] : memref<171x8x128xf32, #tpu.memory_space<vmem>>, vector<1x8x128xf32>
    %2644 = vector.shape_cast %2643 : vector<1x8x128xf32> to vector<8x128xf32>
    %2645 = vector.shape_cast %2612 : vector<8x128xf32> to vector<1x8x128xf32>
    tpu.vector_store %arg4[%c131, %c0_1236, %c0_1237], %2645 {strides = array<i32>} : memref<171x8x128xf32, #tpu.memory_space<vmem>>, vector<1x8x128xf32>,
    %c132 = arith.constant 132 : index
    %c0_1238 = arith.constant 0 : index
    %c0_1239 = arith.constant 0 : index
    %2646 = vector.load %arg4[%c132, %c0_1238, %c0_1239] : memref<171x8x128xf32, #tpu.memory_space<vmem>>, vector<1x8x128xf32>
    %2647 = vector.shape_cast %2646 : vector<1x8x128xf32> to vector<8x128xf32>
    %2648 = vector.shape_cast %2617 : vector<8x128xf32> to vector<1x8x128xf32>
    tpu.vector_store %arg4[%c132, %c0_1238, %c0_1239], %2648 {strides = array<i32>} : memref<171x8x128xf32, #tpu.memory_space<vmem>>, vector<1x8x128xf32>,
    %c133 = arith.constant 133 : index
    %c0_1240 = arith.constant 0 : index
    %c0_1241 = arith.constant 0 : index
    %2649 = vector.load %arg4[%c133, %c0_1240, %c0_1241] : memref<171x8x128xf32, #tpu.memory_space<vmem>>, vector<1x8x128xf32>
    %2650 = vector.shape_cast %2649 : vector<1x8x128xf32> to vector<8x128xf32>
    %2651 = vector.shape_cast %2622 : vector<8x128xf32> to vector<1x8x128xf32>
    tpu.vector_store %arg4[%c133, %c0_1240, %c0_1241], %2651 {strides = array<i32>} : memref<171x8x128xf32, #tpu.memory_space<vmem>>, vector<1x8x128xf32>,
    %c134 = arith.constant 134 : index
    %c0_1242 = arith.constant 0 : index
    %c0_1243 = arith.constant 0 : index
    %2652 = vector.load %arg4[%c134, %c0_1242, %c0_1243] : memref<171x8x128xf32, #tpu.memory_space<vmem>>, vector<1x8x128xf32>
    %2653 = vector.shape_cast %2652 : vector<1x8x128xf32> to vector<8x128xf32>
    %2654 = vector.shape_cast %2627 : vector<8x128xf32> to vector<1x8x128xf32>
    tpu.vector_store %arg4[%c134, %c0_1242, %c0_1243], %2654 {strides = array<i32>} : memref<171x8x128xf32, #tpu.memory_space<vmem>>, vector<1x8x128xf32>,
    %c117_1244 = arith.constant 117 : index
    %c0_1245 = arith.constant 0 : index
    %c0_1246 = arith.constant 0 : index
    %2655 = vector.load %arg4[%c117_1244, %c0_1245, %c0_1246] : memref<171x8x128xf32, #tpu.memory_space<vmem>>, vector<1x8x128xf32>
    %2656 = vector.shape_cast %2655 : vector<1x8x128xf32> to vector<8x128xf32>
    %c118_1247 = arith.constant 118 : index
    %c0_1248 = arith.constant 0 : index
    %c0_1249 = arith.constant 0 : index
    %2657 = vector.load %arg4[%c118_1247, %c0_1248, %c0_1249] : memref<171x8x128xf32, #tpu.memory_space<vmem>>, vector<1x8x128xf32>
    %2658 = vector.shape_cast %2657 : vector<1x8x128xf32> to vector<8x128xf32>
    %c119_1250 = arith.constant 119 : index
    %c0_1251 = arith.constant 0 : index
    %c0_1252 = arith.constant 0 : index
    %2659 = vector.load %arg4[%c119_1250, %c0_1251, %c0_1252] : memref<171x8x128xf32, #tpu.memory_space<vmem>>, vector<1x8x128xf32>
    %2660 = vector.shape_cast %2659 : vector<1x8x128xf32> to vector<8x128xf32>
    %c120_1253 = arith.constant 120 : index
    %c0_1254 = arith.constant 0 : index
    %c0_1255 = arith.constant 0 : index
    %2661 = vector.load %arg4[%c120_1253, %c0_1254, %c0_1255] : memref<171x8x128xf32, #tpu.memory_space<vmem>>, vector<1x8x128xf32>
    %2662 = vector.shape_cast %2661 : vector<1x8x128xf32> to vector<8x128xf32>
    %c121_1256 = arith.constant 121 : index
    %c0_1257 = arith.constant 0 : index
    %c0_1258 = arith.constant 0 : index
    %2663 = vector.load %arg4[%c121_1256, %c0_1257, %c0_1258] : memref<171x8x128xf32, #tpu.memory_space<vmem>>, vector<1x8x128xf32>
    %2664 = vector.shape_cast %2663 : vector<1x8x128xf32> to vector<8x128xf32>
    %c122_1259 = arith.constant 122 : index
    %c0_1260 = arith.constant 0 : index
    %c0_1261 = arith.constant 0 : index
    %2665 = vector.load %arg4[%c122_1259, %c0_1260, %c0_1261] : memref<171x8x128xf32, #tpu.memory_space<vmem>>, vector<1x8x128xf32>
    %2666 = vector.shape_cast %2665 : vector<1x8x128xf32> to vector<8x128xf32>
    %c123_1262 = arith.constant 123 : index
    %c0_1263 = arith.constant 0 : index
    %c0_1264 = arith.constant 0 : index
    %2667 = vector.load %arg4[%c123_1262, %c0_1263, %c0_1264] : memref<171x8x128xf32, #tpu.memory_space<vmem>>, vector<1x8x128xf32>
    %2668 = vector.shape_cast %2667 : vector<1x8x128xf32> to vector<8x128xf32>
    %c124_1265 = arith.constant 124 : index
    %c0_1266 = arith.constant 0 : index
    %c0_1267 = arith.constant 0 : index
    %2669 = vector.load %arg4[%c124_1265, %c0_1266, %c0_1267] : memref<171x8x128xf32, #tpu.memory_space<vmem>>, vector<1x8x128xf32>
    %2670 = vector.shape_cast %2669 : vector<1x8x128xf32> to vector<8x128xf32>
    %c125_1268 = arith.constant 125 : index
    %c0_1269 = arith.constant 0 : index
    %c0_1270 = arith.constant 0 : index
    %2671 = vector.load %arg4[%c125_1268, %c0_1269, %c0_1270] : memref<171x8x128xf32, #tpu.memory_space<vmem>>, vector<1x8x128xf32>
    %2672 = vector.shape_cast %2671 : vector<1x8x128xf32> to vector<8x128xf32>
    %c54_1271 = arith.constant 54 : index
    %c0_1272 = arith.constant 0 : index
    %c0_1273 = arith.constant 0 : index
    %2673 = vector.load %arg2[%c54_1271, %c0_1272, %c0_1273] : memref<72x8x128xf32, #tpu.memory_space<vmem>>, vector<1x8x128xf32>
    %2674 = vector.shape_cast %2673 : vector<1x8x128xf32> to vector<8x128xf32>
    %c55_1274 = arith.constant 55 : index
    %c0_1275 = arith.constant 0 : index
    %c0_1276 = arith.constant 0 : index
    %2675 = vector.load %arg2[%c55_1274, %c0_1275, %c0_1276] : memref<72x8x128xf32, #tpu.memory_space<vmem>>, vector<1x8x128xf32>
    %2676 = vector.shape_cast %2675 : vector<1x8x128xf32> to vector<8x128xf32>
    %c56_1277 = arith.constant 56 : index
    %c0_1278 = arith.constant 0 : index
    %c0_1279 = arith.constant 0 : index
    %2677 = vector.load %arg2[%c56_1277, %c0_1278, %c0_1279] : memref<72x8x128xf32, #tpu.memory_space<vmem>>, vector<1x8x128xf32>
    %2678 = vector.shape_cast %2677 : vector<1x8x128xf32> to vector<8x128xf32>
    %2679 = arith.mulf %2656, %2674 : vector<8x128xf32>
    %2680 = arith.mulf %2658, %2676 : vector<8x128xf32>
    %2681 = arith.addf %2679, %2680 : vector<8x128xf32>
    %2682 = arith.mulf %2660, %2678 : vector<8x128xf32>
    %2683 = arith.addf %2681, %2682 : vector<8x128xf32>
    %2684 = arith.mulf %2662, %2674 : vector<8x128xf32>
    %2685 = arith.mulf %2664, %2676 : vector<8x128xf32>
    %2686 = arith.addf %2684, %2685 : vector<8x128xf32>
    %2687 = arith.mulf %2666, %2678 : vector<8x128xf32>
    %2688 = arith.addf %2686, %2687 : vector<8x128xf32>
    %2689 = arith.mulf %2668, %2674 : vector<8x128xf32>
    %2690 = arith.mulf %2670, %2676 : vector<8x128xf32>
    %2691 = arith.addf %2689, %2690 : vector<8x128xf32>
    %2692 = arith.mulf %2672, %2678 : vector<8x128xf32>
    %2693 = arith.addf %2691, %2692 : vector<8x128xf32>
    %2694 = arith.addf %2683, %2340 : vector<8x128xf32>
    %2695 = arith.addf %2688, %2341 : vector<8x128xf32>
    %2696 = arith.addf %2693, %2342 : vector<8x128xf32>
    %c54_1280 = arith.constant 54 : index
    %c0_1281 = arith.constant 0 : index
    %c0_1282 = arith.constant 0 : index
    %2697 = vector.load %arg3[%c54_1280, %c0_1281, %c0_1282] : memref<72x8x128xf32, #tpu.memory_space<vmem>>, vector<1x8x128xf32>
    %2698 = vector.shape_cast %2697 : vector<1x8x128xf32> to vector<8x128xf32>
    %2699 = vector.shape_cast %2694 : vector<8x128xf32> to vector<1x8x128xf32>
    tpu.vector_store %arg3[%c54_1280, %c0_1281, %c0_1282], %2699 {strides = array<i32>} : memref<72x8x128xf32, #tpu.memory_space<vmem>>, vector<1x8x128xf32>,
    %c55_1283 = arith.constant 55 : index
    %c0_1284 = arith.constant 0 : index
    %c0_1285 = arith.constant 0 : index
    %2700 = vector.load %arg3[%c55_1283, %c0_1284, %c0_1285] : memref<72x8x128xf32, #tpu.memory_space<vmem>>, vector<1x8x128xf32>
    %2701 = vector.shape_cast %2700 : vector<1x8x128xf32> to vector<8x128xf32>
    %2702 = vector.shape_cast %2695 : vector<8x128xf32> to vector<1x8x128xf32>
    tpu.vector_store %arg3[%c55_1283, %c0_1284, %c0_1285], %2702 {strides = array<i32>} : memref<72x8x128xf32, #tpu.memory_space<vmem>>, vector<1x8x128xf32>,
    %c56_1286 = arith.constant 56 : index
    %c0_1287 = arith.constant 0 : index
    %c0_1288 = arith.constant 0 : index
    %2703 = vector.load %arg3[%c56_1286, %c0_1287, %c0_1288] : memref<72x8x128xf32, #tpu.memory_space<vmem>>, vector<1x8x128xf32>
    %2704 = vector.shape_cast %2703 : vector<1x8x128xf32> to vector<8x128xf32>
    %2705 = vector.shape_cast %2696 : vector<8x128xf32> to vector<1x8x128xf32>
    tpu.vector_store %arg3[%c56_1286, %c0_1287, %c0_1288], %2705 {strides = array<i32>} : memref<72x8x128xf32, #tpu.memory_space<vmem>>, vector<1x8x128xf32>,
    %c108_1289 = arith.constant 108 : index
    %c0_1290 = arith.constant 0 : index
    %c0_1291 = arith.constant 0 : index
    %2706 = vector.load %arg1[%c108_1289, %c0_1290, %c0_1291] : memref<144x8x128xf32, #tpu.memory_space<vmem>>, vector<1x8x128xf32>
    %2707 = vector.shape_cast %2706 : vector<1x8x128xf32> to vector<8x128xf32>
    %c109_1292 = arith.constant 109 : index
    %c0_1293 = arith.constant 0 : index
    %c0_1294 = arith.constant 0 : index
    %2708 = vector.load %arg1[%c109_1292, %c0_1293, %c0_1294] : memref<144x8x128xf32, #tpu.memory_space<vmem>>, vector<1x8x128xf32>
    %2709 = vector.shape_cast %2708 : vector<1x8x128xf32> to vector<8x128xf32>
    %c110_1295 = arith.constant 110 : index
    %c0_1296 = arith.constant 0 : index
    %c0_1297 = arith.constant 0 : index
    %2710 = vector.load %arg1[%c110_1295, %c0_1296, %c0_1297] : memref<144x8x128xf32, #tpu.memory_space<vmem>>, vector<1x8x128xf32>
    %2711 = vector.shape_cast %2710 : vector<1x8x128xf32> to vector<8x128xf32>
    %c111_1298 = arith.constant 111 : index
    %c0_1299 = arith.constant 0 : index
    %c0_1300 = arith.constant 0 : index
    %2712 = vector.load %arg1[%c111_1298, %c0_1299, %c0_1300] : memref<144x8x128xf32, #tpu.memory_space<vmem>>, vector<1x8x128xf32>
    %2713 = vector.shape_cast %2712 : vector<1x8x128xf32> to vector<8x128xf32>
    %c112_1301 = arith.constant 112 : index
    %c0_1302 = arith.constant 0 : index
    %c0_1303 = arith.constant 0 : index
    %2714 = vector.load %arg1[%c112_1301, %c0_1302, %c0_1303] : memref<144x8x128xf32, #tpu.memory_space<vmem>>, vector<1x8x128xf32>
    %2715 = vector.shape_cast %2714 : vector<1x8x128xf32> to vector<8x128xf32>
    %c113_1304 = arith.constant 113 : index
    %c0_1305 = arith.constant 0 : index
    %c0_1306 = arith.constant 0 : index
    %2716 = vector.load %arg1[%c113_1304, %c0_1305, %c0_1306] : memref<144x8x128xf32, #tpu.memory_space<vmem>>, vector<1x8x128xf32>
    %2717 = vector.shape_cast %2716 : vector<1x8x128xf32> to vector<8x128xf32>
    %2718 = arith.mulf %2707, %2707 : vector<8x128xf32>
    %2719 = arith.mulf %2709, %2709 : vector<8x128xf32>
    %2720 = arith.addf %2718, %2719 : vector<8x128xf32>
    %2721 = arith.mulf %2711, %2711 : vector<8x128xf32>
    %2722 = arith.addf %2720, %2721 : vector<8x128xf32>
    %cst_1307 = arith.constant 1.000000e-24 : f32
    %2723 = vector.broadcast %cst_1307 : f32 to vector<8x128xf32>
    %2724 = arith.maximumf %2722, %2723 : vector<8x128xf32>
    %2725 = math.rsqrt %2724 : vector<8x128xf32>
    %2726 = arith.mulf %2707, %2725 : vector<8x128xf32>
    %2727 = arith.mulf %2709, %2725 : vector<8x128xf32>
    %2728 = arith.mulf %2711, %2725 : vector<8x128xf32>
    %2729 = arith.mulf %2726, %2713 : vector<8x128xf32>
    %2730 = arith.mulf %2727, %2715 : vector<8x128xf32>
    %2731 = arith.addf %2729, %2730 : vector<8x128xf32>
    %2732 = arith.mulf %2728, %2717 : vector<8x128xf32>
    %2733 = arith.addf %2731, %2732 : vector<8x128xf32>
    %2734 = arith.mulf %2733, %2726 : vector<8x128xf32>
    %2735 = arith.subf %2713, %2734 : vector<8x128xf32>
    %2736 = arith.mulf %2733, %2727 : vector<8x128xf32>
    %2737 = arith.subf %2715, %2736 : vector<8x128xf32>
    %2738 = arith.mulf %2733, %2728 : vector<8x128xf32>
    %2739 = arith.subf %2717, %2738 : vector<8x128xf32>
    %2740 = arith.mulf %2735, %2735 : vector<8x128xf32>
    %2741 = arith.mulf %2737, %2737 : vector<8x128xf32>
    %2742 = arith.addf %2740, %2741 : vector<8x128xf32>
    %2743 = arith.mulf %2739, %2739 : vector<8x128xf32>
    %2744 = arith.addf %2742, %2743 : vector<8x128xf32>
    %cst_1308 = arith.constant 1.000000e-24 : f32
    %2745 = vector.broadcast %cst_1308 : f32 to vector<8x128xf32>
    %2746 = arith.maximumf %2744, %2745 : vector<8x128xf32>
    %2747 = math.rsqrt %2746 : vector<8x128xf32>
    %2748 = arith.mulf %2735, %2747 : vector<8x128xf32>
    %2749 = arith.mulf %2737, %2747 : vector<8x128xf32>
    %2750 = arith.mulf %2739, %2747 : vector<8x128xf32>
    %2751 = arith.mulf %2727, %2750 : vector<8x128xf32>
    %2752 = arith.mulf %2728, %2749 : vector<8x128xf32>
    %2753 = arith.subf %2751, %2752 : vector<8x128xf32>
    %2754 = arith.mulf %2728, %2748 : vector<8x128xf32>
    %2755 = arith.mulf %2726, %2750 : vector<8x128xf32>
    %2756 = arith.subf %2754, %2755 : vector<8x128xf32>
    %2757 = arith.mulf %2726, %2749 : vector<8x128xf32>
    %2758 = arith.mulf %2727, %2748 : vector<8x128xf32>
    %2759 = arith.subf %2757, %2758 : vector<8x128xf32>
    %2760 = arith.mulf %2656, %2726 : vector<8x128xf32>
    %2761 = arith.mulf %2658, %2748 : vector<8x128xf32>
    %2762 = arith.addf %2760, %2761 : vector<8x128xf32>
    %2763 = arith.mulf %2660, %2753 : vector<8x128xf32>
    %2764 = arith.addf %2762, %2763 : vector<8x128xf32>
    %2765 = arith.mulf %2656, %2727 : vector<8x128xf32>
    %2766 = arith.mulf %2658, %2749 : vector<8x128xf32>
    %2767 = arith.addf %2765, %2766 : vector<8x128xf32>
    %2768 = arith.mulf %2660, %2756 : vector<8x128xf32>
    %2769 = arith.addf %2767, %2768 : vector<8x128xf32>
    %2770 = arith.mulf %2656, %2728 : vector<8x128xf32>
    %2771 = arith.mulf %2658, %2750 : vector<8x128xf32>
    %2772 = arith.addf %2770, %2771 : vector<8x128xf32>
    %2773 = arith.mulf %2660, %2759 : vector<8x128xf32>
    %2774 = arith.addf %2772, %2773 : vector<8x128xf32>
    %2775 = arith.mulf %2662, %2726 : vector<8x128xf32>
    %2776 = arith.mulf %2664, %2748 : vector<8x128xf32>
    %2777 = arith.addf %2775, %2776 : vector<8x128xf32>
    %2778 = arith.mulf %2666, %2753 : vector<8x128xf32>
    %2779 = arith.addf %2777, %2778 : vector<8x128xf32>
    %2780 = arith.mulf %2662, %2727 : vector<8x128xf32>
    %2781 = arith.mulf %2664, %2749 : vector<8x128xf32>
    %2782 = arith.addf %2780, %2781 : vector<8x128xf32>
    %2783 = arith.mulf %2666, %2756 : vector<8x128xf32>
    %2784 = arith.addf %2782, %2783 : vector<8x128xf32>
    %2785 = arith.mulf %2662, %2728 : vector<8x128xf32>
    %2786 = arith.mulf %2664, %2750 : vector<8x128xf32>
    %2787 = arith.addf %2785, %2786 : vector<8x128xf32>
    %2788 = arith.mulf %2666, %2759 : vector<8x128xf32>
    %2789 = arith.addf %2787, %2788 : vector<8x128xf32>
    %2790 = arith.mulf %2668, %2726 : vector<8x128xf32>
    %2791 = arith.mulf %2670, %2748 : vector<8x128xf32>
    %2792 = arith.addf %2790, %2791 : vector<8x128xf32>
    %2793 = arith.mulf %2672, %2753 : vector<8x128xf32>
    %2794 = arith.addf %2792, %2793 : vector<8x128xf32>
    %2795 = arith.mulf %2668, %2727 : vector<8x128xf32>
    %2796 = arith.mulf %2670, %2749 : vector<8x128xf32>
    %2797 = arith.addf %2795, %2796 : vector<8x128xf32>
    %2798 = arith.mulf %2672, %2756 : vector<8x128xf32>
    %2799 = arith.addf %2797, %2798 : vector<8x128xf32>
    %2800 = arith.mulf %2668, %2728 : vector<8x128xf32>
    %2801 = arith.mulf %2670, %2750 : vector<8x128xf32>
    %2802 = arith.addf %2800, %2801 : vector<8x128xf32>
    %2803 = arith.mulf %2672, %2759 : vector<8x128xf32>
    %2804 = arith.addf %2802, %2803 : vector<8x128xf32>
    %c135 = arith.constant 135 : index
    %c0_1309 = arith.constant 0 : index
    %c0_1310 = arith.constant 0 : index
    %2805 = vector.load %arg4[%c135, %c0_1309, %c0_1310] : memref<171x8x128xf32, #tpu.memory_space<vmem>>, vector<1x8x128xf32>
    %2806 = vector.shape_cast %2805 : vector<1x8x128xf32> to vector<8x128xf32>
    %2807 = vector.shape_cast %2764 : vector<8x128xf32> to vector<1x8x128xf32>
    tpu.vector_store %arg4[%c135, %c0_1309, %c0_1310], %2807 {strides = array<i32>} : memref<171x8x128xf32, #tpu.memory_space<vmem>>, vector<1x8x128xf32>,
    %c136 = arith.constant 136 : index
    %c0_1311 = arith.constant 0 : index
    %c0_1312 = arith.constant 0 : index
    %2808 = vector.load %arg4[%c136, %c0_1311, %c0_1312] : memref<171x8x128xf32, #tpu.memory_space<vmem>>, vector<1x8x128xf32>
    %2809 = vector.shape_cast %2808 : vector<1x8x128xf32> to vector<8x128xf32>
    %2810 = vector.shape_cast %2769 : vector<8x128xf32> to vector<1x8x128xf32>
    tpu.vector_store %arg4[%c136, %c0_1311, %c0_1312], %2810 {strides = array<i32>} : memref<171x8x128xf32, #tpu.memory_space<vmem>>, vector<1x8x128xf32>,
    %c137 = arith.constant 137 : index
    %c0_1313 = arith.constant 0 : index
    %c0_1314 = arith.constant 0 : index
    %2811 = vector.load %arg4[%c137, %c0_1313, %c0_1314] : memref<171x8x128xf32, #tpu.memory_space<vmem>>, vector<1x8x128xf32>
    %2812 = vector.shape_cast %2811 : vector<1x8x128xf32> to vector<8x128xf32>
    %2813 = vector.shape_cast %2774 : vector<8x128xf32> to vector<1x8x128xf32>
    tpu.vector_store %arg4[%c137, %c0_1313, %c0_1314], %2813 {strides = array<i32>} : memref<171x8x128xf32, #tpu.memory_space<vmem>>, vector<1x8x128xf32>,
    %c138 = arith.constant 138 : index
    %c0_1315 = arith.constant 0 : index
    %c0_1316 = arith.constant 0 : index
    %2814 = vector.load %arg4[%c138, %c0_1315, %c0_1316] : memref<171x8x128xf32, #tpu.memory_space<vmem>>, vector<1x8x128xf32>
    %2815 = vector.shape_cast %2814 : vector<1x8x128xf32> to vector<8x128xf32>
    %2816 = vector.shape_cast %2779 : vector<8x128xf32> to vector<1x8x128xf32>
    tpu.vector_store %arg4[%c138, %c0_1315, %c0_1316], %2816 {strides = array<i32>} : memref<171x8x128xf32, #tpu.memory_space<vmem>>, vector<1x8x128xf32>,
    %c139 = arith.constant 139 : index
    %c0_1317 = arith.constant 0 : index
    %c0_1318 = arith.constant 0 : index
    %2817 = vector.load %arg4[%c139, %c0_1317, %c0_1318] : memref<171x8x128xf32, #tpu.memory_space<vmem>>, vector<1x8x128xf32>
    %2818 = vector.shape_cast %2817 : vector<1x8x128xf32> to vector<8x128xf32>
    %2819 = vector.shape_cast %2784 : vector<8x128xf32> to vector<1x8x128xf32>
    tpu.vector_store %arg4[%c139, %c0_1317, %c0_1318], %2819 {strides = array<i32>} : memref<171x8x128xf32, #tpu.memory_space<vmem>>, vector<1x8x128xf32>,
    %c140 = arith.constant 140 : index
    %c0_1319 = arith.constant 0 : index
    %c0_1320 = arith.constant 0 : index
    %2820 = vector.load %arg4[%c140, %c0_1319, %c0_1320] : memref<171x8x128xf32, #tpu.memory_space<vmem>>, vector<1x8x128xf32>
    %2821 = vector.shape_cast %2820 : vector<1x8x128xf32> to vector<8x128xf32>
    %2822 = vector.shape_cast %2789 : vector<8x128xf32> to vector<1x8x128xf32>
    tpu.vector_store %arg4[%c140, %c0_1319, %c0_1320], %2822 {strides = array<i32>} : memref<171x8x128xf32, #tpu.memory_space<vmem>>, vector<1x8x128xf32>,
    %c141 = arith.constant 141 : index
    %c0_1321 = arith.constant 0 : index
    %c0_1322 = arith.constant 0 : index
    %2823 = vector.load %arg4[%c141, %c0_1321, %c0_1322] : memref<171x8x128xf32, #tpu.memory_space<vmem>>, vector<1x8x128xf32>
    %2824 = vector.shape_cast %2823 : vector<1x8x128xf32> to vector<8x128xf32>
    %2825 = vector.shape_cast %2794 : vector<8x128xf32> to vector<1x8x128xf32>
    tpu.vector_store %arg4[%c141, %c0_1321, %c0_1322], %2825 {strides = array<i32>} : memref<171x8x128xf32, #tpu.memory_space<vmem>>, vector<1x8x128xf32>,
    %c142 = arith.constant 142 : index
    %c0_1323 = arith.constant 0 : index
    %c0_1324 = arith.constant 0 : index
    %2826 = vector.load %arg4[%c142, %c0_1323, %c0_1324] : memref<171x8x128xf32, #tpu.memory_space<vmem>>, vector<1x8x128xf32>
    %2827 = vector.shape_cast %2826 : vector<1x8x128xf32> to vector<8x128xf32>
    %2828 = vector.shape_cast %2799 : vector<8x128xf32> to vector<1x8x128xf32>
    tpu.vector_store %arg4[%c142, %c0_1323, %c0_1324], %2828 {strides = array<i32>} : memref<171x8x128xf32, #tpu.memory_space<vmem>>, vector<1x8x128xf32>,
    %c143 = arith.constant 143 : index
    %c0_1325 = arith.constant 0 : index
    %c0_1326 = arith.constant 0 : index
    %2829 = vector.load %arg4[%c143, %c0_1325, %c0_1326] : memref<171x8x128xf32, #tpu.memory_space<vmem>>, vector<1x8x128xf32>
    %2830 = vector.shape_cast %2829 : vector<1x8x128xf32> to vector<8x128xf32>
    %2831 = vector.shape_cast %2804 : vector<8x128xf32> to vector<1x8x128xf32>
    tpu.vector_store %arg4[%c143, %c0_1325, %c0_1326], %2831 {strides = array<i32>} : memref<171x8x128xf32, #tpu.memory_space<vmem>>, vector<1x8x128xf32>,
    %c126_1327 = arith.constant 126 : index
    %c0_1328 = arith.constant 0 : index
    %c0_1329 = arith.constant 0 : index
    %2832 = vector.load %arg4[%c126_1327, %c0_1328, %c0_1329] : memref<171x8x128xf32, #tpu.memory_space<vmem>>, vector<1x8x128xf32>
    %2833 = vector.shape_cast %2832 : vector<1x8x128xf32> to vector<8x128xf32>
    %c127_1330 = arith.constant 127 : index
    %c0_1331 = arith.constant 0 : index
    %c0_1332 = arith.constant 0 : index
    %2834 = vector.load %arg4[%c127_1330, %c0_1331, %c0_1332] : memref<171x8x128xf32, #tpu.memory_space<vmem>>, vector<1x8x128xf32>
    %2835 = vector.shape_cast %2834 : vector<1x8x128xf32> to vector<8x128xf32>
    %c128_1333 = arith.constant 128 : index
    %c0_1334 = arith.constant 0 : index
    %c0_1335 = arith.constant 0 : index
    %2836 = vector.load %arg4[%c128_1333, %c0_1334, %c0_1335] : memref<171x8x128xf32, #tpu.memory_space<vmem>>, vector<1x8x128xf32>
    %2837 = vector.shape_cast %2836 : vector<1x8x128xf32> to vector<8x128xf32>
    %c129_1336 = arith.constant 129 : index
    %c0_1337 = arith.constant 0 : index
    %c0_1338 = arith.constant 0 : index
    %2838 = vector.load %arg4[%c129_1336, %c0_1337, %c0_1338] : memref<171x8x128xf32, #tpu.memory_space<vmem>>, vector<1x8x128xf32>
    %2839 = vector.shape_cast %2838 : vector<1x8x128xf32> to vector<8x128xf32>
    %c130_1339 = arith.constant 130 : index
    %c0_1340 = arith.constant 0 : index
    %c0_1341 = arith.constant 0 : index
    %2840 = vector.load %arg4[%c130_1339, %c0_1340, %c0_1341] : memref<171x8x128xf32, #tpu.memory_space<vmem>>, vector<1x8x128xf32>
    %2841 = vector.shape_cast %2840 : vector<1x8x128xf32> to vector<8x128xf32>
    %c131_1342 = arith.constant 131 : index
    %c0_1343 = arith.constant 0 : index
    %c0_1344 = arith.constant 0 : index
    %2842 = vector.load %arg4[%c131_1342, %c0_1343, %c0_1344] : memref<171x8x128xf32, #tpu.memory_space<vmem>>, vector<1x8x128xf32>
    %2843 = vector.shape_cast %2842 : vector<1x8x128xf32> to vector<8x128xf32>
    %c132_1345 = arith.constant 132 : index
    %c0_1346 = arith.constant 0 : index
    %c0_1347 = arith.constant 0 : index
    %2844 = vector.load %arg4[%c132_1345, %c0_1346, %c0_1347] : memref<171x8x128xf32, #tpu.memory_space<vmem>>, vector<1x8x128xf32>
    %2845 = vector.shape_cast %2844 : vector<1x8x128xf32> to vector<8x128xf32>
    %c133_1348 = arith.constant 133 : index
    %c0_1349 = arith.constant 0 : index
    %c0_1350 = arith.constant 0 : index
    %2846 = vector.load %arg4[%c133_1348, %c0_1349, %c0_1350] : memref<171x8x128xf32, #tpu.memory_space<vmem>>, vector<1x8x128xf32>
    %2847 = vector.shape_cast %2846 : vector<1x8x128xf32> to vector<8x128xf32>
    %c134_1351 = arith.constant 134 : index
    %c0_1352 = arith.constant 0 : index
    %c0_1353 = arith.constant 0 : index
    %2848 = vector.load %arg4[%c134_1351, %c0_1352, %c0_1353] : memref<171x8x128xf32, #tpu.memory_space<vmem>>, vector<1x8x128xf32>
    %2849 = vector.shape_cast %2848 : vector<1x8x128xf32> to vector<8x128xf32>
    %c57_1354 = arith.constant 57 : index
    %c0_1355 = arith.constant 0 : index
    %c0_1356 = arith.constant 0 : index
    %2850 = vector.load %arg2[%c57_1354, %c0_1355, %c0_1356] : memref<72x8x128xf32, #tpu.memory_space<vmem>>, vector<1x8x128xf32>
    %2851 = vector.shape_cast %2850 : vector<1x8x128xf32> to vector<8x128xf32>
    %c58_1357 = arith.constant 58 : index
    %c0_1358 = arith.constant 0 : index
    %c0_1359 = arith.constant 0 : index
    %2852 = vector.load %arg2[%c58_1357, %c0_1358, %c0_1359] : memref<72x8x128xf32, #tpu.memory_space<vmem>>, vector<1x8x128xf32>
    %2853 = vector.shape_cast %2852 : vector<1x8x128xf32> to vector<8x128xf32>
    %c59_1360 = arith.constant 59 : index
    %c0_1361 = arith.constant 0 : index
    %c0_1362 = arith.constant 0 : index
    %2854 = vector.load %arg2[%c59_1360, %c0_1361, %c0_1362] : memref<72x8x128xf32, #tpu.memory_space<vmem>>, vector<1x8x128xf32>
    %2855 = vector.shape_cast %2854 : vector<1x8x128xf32> to vector<8x128xf32>
    %2856 = arith.mulf %2833, %2851 : vector<8x128xf32>
    %2857 = arith.mulf %2835, %2853 : vector<8x128xf32>
    %2858 = arith.addf %2856, %2857 : vector<8x128xf32>
    %2859 = arith.mulf %2837, %2855 : vector<8x128xf32>
    %2860 = arith.addf %2858, %2859 : vector<8x128xf32>
    %2861 = arith.mulf %2839, %2851 : vector<8x128xf32>
    %2862 = arith.mulf %2841, %2853 : vector<8x128xf32>
    %2863 = arith.addf %2861, %2862 : vector<8x128xf32>
    %2864 = arith.mulf %2843, %2855 : vector<8x128xf32>
    %2865 = arith.addf %2863, %2864 : vector<8x128xf32>
    %2866 = arith.mulf %2845, %2851 : vector<8x128xf32>
    %2867 = arith.mulf %2847, %2853 : vector<8x128xf32>
    %2868 = arith.addf %2866, %2867 : vector<8x128xf32>
    %2869 = arith.mulf %2849, %2855 : vector<8x128xf32>
    %2870 = arith.addf %2868, %2869 : vector<8x128xf32>
    %2871 = arith.addf %2860, %2517 : vector<8x128xf32>
    %2872 = arith.addf %2865, %2518 : vector<8x128xf32>
    %2873 = arith.addf %2870, %2519 : vector<8x128xf32>
    %c57_1363 = arith.constant 57 : index
    %c0_1364 = arith.constant 0 : index
    %c0_1365 = arith.constant 0 : index
    %2874 = vector.load %arg3[%c57_1363, %c0_1364, %c0_1365] : memref<72x8x128xf32, #tpu.memory_space<vmem>>, vector<1x8x128xf32>
    %2875 = vector.shape_cast %2874 : vector<1x8x128xf32> to vector<8x128xf32>
    %2876 = vector.shape_cast %2871 : vector<8x128xf32> to vector<1x8x128xf32>
    tpu.vector_store %arg3[%c57_1363, %c0_1364, %c0_1365], %2876 {strides = array<i32>} : memref<72x8x128xf32, #tpu.memory_space<vmem>>, vector<1x8x128xf32>,
    %c58_1366 = arith.constant 58 : index
    %c0_1367 = arith.constant 0 : index
    %c0_1368 = arith.constant 0 : index
    %2877 = vector.load %arg3[%c58_1366, %c0_1367, %c0_1368] : memref<72x8x128xf32, #tpu.memory_space<vmem>>, vector<1x8x128xf32>
    %2878 = vector.shape_cast %2877 : vector<1x8x128xf32> to vector<8x128xf32>
    %2879 = vector.shape_cast %2872 : vector<8x128xf32> to vector<1x8x128xf32>
    tpu.vector_store %arg3[%c58_1366, %c0_1367, %c0_1368], %2879 {strides = array<i32>} : memref<72x8x128xf32, #tpu.memory_space<vmem>>, vector<1x8x128xf32>,
    %c59_1369 = arith.constant 59 : index
    %c0_1370 = arith.constant 0 : index
    %c0_1371 = arith.constant 0 : index
    %2880 = vector.load %arg3[%c59_1369, %c0_1370, %c0_1371] : memref<72x8x128xf32, #tpu.memory_space<vmem>>, vector<1x8x128xf32>
    %2881 = vector.shape_cast %2880 : vector<1x8x128xf32> to vector<8x128xf32>
    %2882 = vector.shape_cast %2873 : vector<8x128xf32> to vector<1x8x128xf32>
    tpu.vector_store %arg3[%c59_1369, %c0_1370, %c0_1371], %2882 {strides = array<i32>} : memref<72x8x128xf32, #tpu.memory_space<vmem>>, vector<1x8x128xf32>,
    %c114_1372 = arith.constant 114 : index
    %c0_1373 = arith.constant 0 : index
    %c0_1374 = arith.constant 0 : index
    %2883 = vector.load %arg1[%c114_1372, %c0_1373, %c0_1374] : memref<144x8x128xf32, #tpu.memory_space<vmem>>, vector<1x8x128xf32>
    %2884 = vector.shape_cast %2883 : vector<1x8x128xf32> to vector<8x128xf32>
    %c115_1375 = arith.constant 115 : index
    %c0_1376 = arith.constant 0 : index
    %c0_1377 = arith.constant 0 : index
    %2885 = vector.load %arg1[%c115_1375, %c0_1376, %c0_1377] : memref<144x8x128xf32, #tpu.memory_space<vmem>>, vector<1x8x128xf32>
    %2886 = vector.shape_cast %2885 : vector<1x8x128xf32> to vector<8x128xf32>
    %c116_1378 = arith.constant 116 : index
    %c0_1379 = arith.constant 0 : index
    %c0_1380 = arith.constant 0 : index
    %2887 = vector.load %arg1[%c116_1378, %c0_1379, %c0_1380] : memref<144x8x128xf32, #tpu.memory_space<vmem>>, vector<1x8x128xf32>
    %2888 = vector.shape_cast %2887 : vector<1x8x128xf32> to vector<8x128xf32>
    %c117_1381 = arith.constant 117 : index
    %c0_1382 = arith.constant 0 : index
    %c0_1383 = arith.constant 0 : index
    %2889 = vector.load %arg1[%c117_1381, %c0_1382, %c0_1383] : memref<144x8x128xf32, #tpu.memory_space<vmem>>, vector<1x8x128xf32>
    %2890 = vector.shape_cast %2889 : vector<1x8x128xf32> to vector<8x128xf32>
    %c118_1384 = arith.constant 118 : index
    %c0_1385 = arith.constant 0 : index
    %c0_1386 = arith.constant 0 : index
    %2891 = vector.load %arg1[%c118_1384, %c0_1385, %c0_1386] : memref<144x8x128xf32, #tpu.memory_space<vmem>>, vector<1x8x128xf32>
    %2892 = vector.shape_cast %2891 : vector<1x8x128xf32> to vector<8x128xf32>
    %c119_1387 = arith.constant 119 : index
    %c0_1388 = arith.constant 0 : index
    %c0_1389 = arith.constant 0 : index
    %2893 = vector.load %arg1[%c119_1387, %c0_1388, %c0_1389] : memref<144x8x128xf32, #tpu.memory_space<vmem>>, vector<1x8x128xf32>
    %2894 = vector.shape_cast %2893 : vector<1x8x128xf32> to vector<8x128xf32>
    %2895 = arith.mulf %2884, %2884 : vector<8x128xf32>
    %2896 = arith.mulf %2886, %2886 : vector<8x128xf32>
    %2897 = arith.addf %2895, %2896 : vector<8x128xf32>
    %2898 = arith.mulf %2888, %2888 : vector<8x128xf32>
    %2899 = arith.addf %2897, %2898 : vector<8x128xf32>
    %cst_1390 = arith.constant 1.000000e-24 : f32
    %2900 = vector.broadcast %cst_1390 : f32 to vector<8x128xf32>
    %2901 = arith.maximumf %2899, %2900 : vector<8x128xf32>
    %2902 = math.rsqrt %2901 : vector<8x128xf32>
    %2903 = arith.mulf %2884, %2902 : vector<8x128xf32>
    %2904 = arith.mulf %2886, %2902 : vector<8x128xf32>
    %2905 = arith.mulf %2888, %2902 : vector<8x128xf32>
    %2906 = arith.mulf %2903, %2890 : vector<8x128xf32>
    %2907 = arith.mulf %2904, %2892 : vector<8x128xf32>
    %2908 = arith.addf %2906, %2907 : vector<8x128xf32>
    %2909 = arith.mulf %2905, %2894 : vector<8x128xf32>
    %2910 = arith.addf %2908, %2909 : vector<8x128xf32>
    %2911 = arith.mulf %2910, %2903 : vector<8x128xf32>
    %2912 = arith.subf %2890, %2911 : vector<8x128xf32>
    %2913 = arith.mulf %2910, %2904 : vector<8x128xf32>
    %2914 = arith.subf %2892, %2913 : vector<8x128xf32>
    %2915 = arith.mulf %2910, %2905 : vector<8x128xf32>
    %2916 = arith.subf %2894, %2915 : vector<8x128xf32>
    %2917 = arith.mulf %2912, %2912 : vector<8x128xf32>
    %2918 = arith.mulf %2914, %2914 : vector<8x128xf32>
    %2919 = arith.addf %2917, %2918 : vector<8x128xf32>
    %2920 = arith.mulf %2916, %2916 : vector<8x128xf32>
    %2921 = arith.addf %2919, %2920 : vector<8x128xf32>
    %cst_1391 = arith.constant 1.000000e-24 : f32
    %2922 = vector.broadcast %cst_1391 : f32 to vector<8x128xf32>
    %2923 = arith.maximumf %2921, %2922 : vector<8x128xf32>
    %2924 = math.rsqrt %2923 : vector<8x128xf32>
    %2925 = arith.mulf %2912, %2924 : vector<8x128xf32>
    %2926 = arith.mulf %2914, %2924 : vector<8x128xf32>
    %2927 = arith.mulf %2916, %2924 : vector<8x128xf32>
    %2928 = arith.mulf %2904, %2927 : vector<8x128xf32>
    %2929 = arith.mulf %2905, %2926 : vector<8x128xf32>
    %2930 = arith.subf %2928, %2929 : vector<8x128xf32>
    %2931 = arith.mulf %2905, %2925 : vector<8x128xf32>
    %2932 = arith.mulf %2903, %2927 : vector<8x128xf32>
    %2933 = arith.subf %2931, %2932 : vector<8x128xf32>
    %2934 = arith.mulf %2903, %2926 : vector<8x128xf32>
    %2935 = arith.mulf %2904, %2925 : vector<8x128xf32>
    %2936 = arith.subf %2934, %2935 : vector<8x128xf32>
    %2937 = arith.mulf %2833, %2903 : vector<8x128xf32>
    %2938 = arith.mulf %2835, %2925 : vector<8x128xf32>
    %2939 = arith.addf %2937, %2938 : vector<8x128xf32>
    %2940 = arith.mulf %2837, %2930 : vector<8x128xf32>
    %2941 = arith.addf %2939, %2940 : vector<8x128xf32>
    %2942 = arith.mulf %2833, %2904 : vector<8x128xf32>
    %2943 = arith.mulf %2835, %2926 : vector<8x128xf32>
    %2944 = arith.addf %2942, %2943 : vector<8x128xf32>
    %2945 = arith.mulf %2837, %2933 : vector<8x128xf32>
    %2946 = arith.addf %2944, %2945 : vector<8x128xf32>
    %2947 = arith.mulf %2833, %2905 : vector<8x128xf32>
    %2948 = arith.mulf %2835, %2927 : vector<8x128xf32>
    %2949 = arith.addf %2947, %2948 : vector<8x128xf32>
    %2950 = arith.mulf %2837, %2936 : vector<8x128xf32>
    %2951 = arith.addf %2949, %2950 : vector<8x128xf32>
    %2952 = arith.mulf %2839, %2903 : vector<8x128xf32>
    %2953 = arith.mulf %2841, %2925 : vector<8x128xf32>
    %2954 = arith.addf %2952, %2953 : vector<8x128xf32>
    %2955 = arith.mulf %2843, %2930 : vector<8x128xf32>
    %2956 = arith.addf %2954, %2955 : vector<8x128xf32>
    %2957 = arith.mulf %2839, %2904 : vector<8x128xf32>
    %2958 = arith.mulf %2841, %2926 : vector<8x128xf32>
    %2959 = arith.addf %2957, %2958 : vector<8x128xf32>
    %2960 = arith.mulf %2843, %2933 : vector<8x128xf32>
    %2961 = arith.addf %2959, %2960 : vector<8x128xf32>
    %2962 = arith.mulf %2839, %2905 : vector<8x128xf32>
    %2963 = arith.mulf %2841, %2927 : vector<8x128xf32>
    %2964 = arith.addf %2962, %2963 : vector<8x128xf32>
    %2965 = arith.mulf %2843, %2936 : vector<8x128xf32>
    %2966 = arith.addf %2964, %2965 : vector<8x128xf32>
    %2967 = arith.mulf %2845, %2903 : vector<8x128xf32>
    %2968 = arith.mulf %2847, %2925 : vector<8x128xf32>
    %2969 = arith.addf %2967, %2968 : vector<8x128xf32>
    %2970 = arith.mulf %2849, %2930 : vector<8x128xf32>
    %2971 = arith.addf %2969, %2970 : vector<8x128xf32>
    %2972 = arith.mulf %2845, %2904 : vector<8x128xf32>
    %2973 = arith.mulf %2847, %2926 : vector<8x128xf32>
    %2974 = arith.addf %2972, %2973 : vector<8x128xf32>
    %2975 = arith.mulf %2849, %2933 : vector<8x128xf32>
    %2976 = arith.addf %2974, %2975 : vector<8x128xf32>
    %2977 = arith.mulf %2845, %2905 : vector<8x128xf32>
    %2978 = arith.mulf %2847, %2927 : vector<8x128xf32>
    %2979 = arith.addf %2977, %2978 : vector<8x128xf32>
    %2980 = arith.mulf %2849, %2936 : vector<8x128xf32>
    %2981 = arith.addf %2979, %2980 : vector<8x128xf32>
    %c144 = arith.constant 144 : index
    %c0_1392 = arith.constant 0 : index
    %c0_1393 = arith.constant 0 : index
    %2982 = vector.load %arg4[%c144, %c0_1392, %c0_1393] : memref<171x8x128xf32, #tpu.memory_space<vmem>>, vector<1x8x128xf32>
    %2983 = vector.shape_cast %2982 : vector<1x8x128xf32> to vector<8x128xf32>
    %2984 = vector.shape_cast %2941 : vector<8x128xf32> to vector<1x8x128xf32>
    tpu.vector_store %arg4[%c144, %c0_1392, %c0_1393], %2984 {strides = array<i32>} : memref<171x8x128xf32, #tpu.memory_space<vmem>>, vector<1x8x128xf32>,
    %c145 = arith.constant 145 : index
    %c0_1394 = arith.constant 0 : index
    %c0_1395 = arith.constant 0 : index
    %2985 = vector.load %arg4[%c145, %c0_1394, %c0_1395] : memref<171x8x128xf32, #tpu.memory_space<vmem>>, vector<1x8x128xf32>
    %2986 = vector.shape_cast %2985 : vector<1x8x128xf32> to vector<8x128xf32>
    %2987 = vector.shape_cast %2946 : vector<8x128xf32> to vector<1x8x128xf32>
    tpu.vector_store %arg4[%c145, %c0_1394, %c0_1395], %2987 {strides = array<i32>} : memref<171x8x128xf32, #tpu.memory_space<vmem>>, vector<1x8x128xf32>,
    %c146 = arith.constant 146 : index
    %c0_1396 = arith.constant 0 : index
    %c0_1397 = arith.constant 0 : index
    %2988 = vector.load %arg4[%c146, %c0_1396, %c0_1397] : memref<171x8x128xf32, #tpu.memory_space<vmem>>, vector<1x8x128xf32>
    %2989 = vector.shape_cast %2988 : vector<1x8x128xf32> to vector<8x128xf32>
    %2990 = vector.shape_cast %2951 : vector<8x128xf32> to vector<1x8x128xf32>
    tpu.vector_store %arg4[%c146, %c0_1396, %c0_1397], %2990 {strides = array<i32>} : memref<171x8x128xf32, #tpu.memory_space<vmem>>, vector<1x8x128xf32>,
    %c147 = arith.constant 147 : index
    %c0_1398 = arith.constant 0 : index
    %c0_1399 = arith.constant 0 : index
    %2991 = vector.load %arg4[%c147, %c0_1398, %c0_1399] : memref<171x8x128xf32, #tpu.memory_space<vmem>>, vector<1x8x128xf32>
    %2992 = vector.shape_cast %2991 : vector<1x8x128xf32> to vector<8x128xf32>
    %2993 = vector.shape_cast %2956 : vector<8x128xf32> to vector<1x8x128xf32>
    tpu.vector_store %arg4[%c147, %c0_1398, %c0_1399], %2993 {strides = array<i32>} : memref<171x8x128xf32, #tpu.memory_space<vmem>>, vector<1x8x128xf32>,
    %c148 = arith.constant 148 : index
    %c0_1400 = arith.constant 0 : index
    %c0_1401 = arith.constant 0 : index
    %2994 = vector.load %arg4[%c148, %c0_1400, %c0_1401] : memref<171x8x128xf32, #tpu.memory_space<vmem>>, vector<1x8x128xf32>
    %2995 = vector.shape_cast %2994 : vector<1x8x128xf32> to vector<8x128xf32>
    %2996 = vector.shape_cast %2961 : vector<8x128xf32> to vector<1x8x128xf32>
    tpu.vector_store %arg4[%c148, %c0_1400, %c0_1401], %2996 {strides = array<i32>} : memref<171x8x128xf32, #tpu.memory_space<vmem>>, vector<1x8x128xf32>,
    %c149 = arith.constant 149 : index
    %c0_1402 = arith.constant 0 : index
    %c0_1403 = arith.constant 0 : index
    %2997 = vector.load %arg4[%c149, %c0_1402, %c0_1403] : memref<171x8x128xf32, #tpu.memory_space<vmem>>, vector<1x8x128xf32>
    %2998 = vector.shape_cast %2997 : vector<1x8x128xf32> to vector<8x128xf32>
    %2999 = vector.shape_cast %2966 : vector<8x128xf32> to vector<1x8x128xf32>
    tpu.vector_store %arg4[%c149, %c0_1402, %c0_1403], %2999 {strides = array<i32>} : memref<171x8x128xf32, #tpu.memory_space<vmem>>, vector<1x8x128xf32>,
    %c150 = arith.constant 150 : index
    %c0_1404 = arith.constant 0 : index
    %c0_1405 = arith.constant 0 : index
    %3000 = vector.load %arg4[%c150, %c0_1404, %c0_1405] : memref<171x8x128xf32, #tpu.memory_space<vmem>>, vector<1x8x128xf32>
    %3001 = vector.shape_cast %3000 : vector<1x8x128xf32> to vector<8x128xf32>
    %3002 = vector.shape_cast %2971 : vector<8x128xf32> to vector<1x8x128xf32>
    tpu.vector_store %arg4[%c150, %c0_1404, %c0_1405], %3002 {strides = array<i32>} : memref<171x8x128xf32, #tpu.memory_space<vmem>>, vector<1x8x128xf32>,
    %c151 = arith.constant 151 : index
    %c0_1406 = arith.constant 0 : index
    %c0_1407 = arith.constant 0 : index
    %3003 = vector.load %arg4[%c151, %c0_1406, %c0_1407] : memref<171x8x128xf32, #tpu.memory_space<vmem>>, vector<1x8x128xf32>
    %3004 = vector.shape_cast %3003 : vector<1x8x128xf32> to vector<8x128xf32>
    %3005 = vector.shape_cast %2976 : vector<8x128xf32> to vector<1x8x128xf32>
    tpu.vector_store %arg4[%c151, %c0_1406, %c0_1407], %3005 {strides = array<i32>} : memref<171x8x128xf32, #tpu.memory_space<vmem>>, vector<1x8x128xf32>,
    %c152 = arith.constant 152 : index
    %c0_1408 = arith.constant 0 : index
    %c0_1409 = arith.constant 0 : index
    %3006 = vector.load %arg4[%c152, %c0_1408, %c0_1409] : memref<171x8x128xf32, #tpu.memory_space<vmem>>, vector<1x8x128xf32>
    %3007 = vector.shape_cast %3006 : vector<1x8x128xf32> to vector<8x128xf32>
    %3008 = vector.shape_cast %2981 : vector<8x128xf32> to vector<1x8x128xf32>
    tpu.vector_store %arg4[%c152, %c0_1408, %c0_1409], %3008 {strides = array<i32>} : memref<171x8x128xf32, #tpu.memory_space<vmem>>, vector<1x8x128xf32>,
    %c135_1410 = arith.constant 135 : index
    %c0_1411 = arith.constant 0 : index
    %c0_1412 = arith.constant 0 : index
    %3009 = vector.load %arg4[%c135_1410, %c0_1411, %c0_1412] : memref<171x8x128xf32, #tpu.memory_space<vmem>>, vector<1x8x128xf32>
    %3010 = vector.shape_cast %3009 : vector<1x8x128xf32> to vector<8x128xf32>
    %c136_1413 = arith.constant 136 : index
    %c0_1414 = arith.constant 0 : index
    %c0_1415 = arith.constant 0 : index
    %3011 = vector.load %arg4[%c136_1413, %c0_1414, %c0_1415] : memref<171x8x128xf32, #tpu.memory_space<vmem>>, vector<1x8x128xf32>
    %3012 = vector.shape_cast %3011 : vector<1x8x128xf32> to vector<8x128xf32>
    %c137_1416 = arith.constant 137 : index
    %c0_1417 = arith.constant 0 : index
    %c0_1418 = arith.constant 0 : index
    %3013 = vector.load %arg4[%c137_1416, %c0_1417, %c0_1418] : memref<171x8x128xf32, #tpu.memory_space<vmem>>, vector<1x8x128xf32>
    %3014 = vector.shape_cast %3013 : vector<1x8x128xf32> to vector<8x128xf32>
    %c138_1419 = arith.constant 138 : index
    %c0_1420 = arith.constant 0 : index
    %c0_1421 = arith.constant 0 : index
    %3015 = vector.load %arg4[%c138_1419, %c0_1420, %c0_1421] : memref<171x8x128xf32, #tpu.memory_space<vmem>>, vector<1x8x128xf32>
    %3016 = vector.shape_cast %3015 : vector<1x8x128xf32> to vector<8x128xf32>
    %c139_1422 = arith.constant 139 : index
    %c0_1423 = arith.constant 0 : index
    %c0_1424 = arith.constant 0 : index
    %3017 = vector.load %arg4[%c139_1422, %c0_1423, %c0_1424] : memref<171x8x128xf32, #tpu.memory_space<vmem>>, vector<1x8x128xf32>
    %3018 = vector.shape_cast %3017 : vector<1x8x128xf32> to vector<8x128xf32>
    %c140_1425 = arith.constant 140 : index
    %c0_1426 = arith.constant 0 : index
    %c0_1427 = arith.constant 0 : index
    %3019 = vector.load %arg4[%c140_1425, %c0_1426, %c0_1427] : memref<171x8x128xf32, #tpu.memory_space<vmem>>, vector<1x8x128xf32>
    %3020 = vector.shape_cast %3019 : vector<1x8x128xf32> to vector<8x128xf32>
    %c141_1428 = arith.constant 141 : index
    %c0_1429 = arith.constant 0 : index
    %c0_1430 = arith.constant 0 : index
    %3021 = vector.load %arg4[%c141_1428, %c0_1429, %c0_1430] : memref<171x8x128xf32, #tpu.memory_space<vmem>>, vector<1x8x128xf32>
    %3022 = vector.shape_cast %3021 : vector<1x8x128xf32> to vector<8x128xf32>
    %c142_1431 = arith.constant 142 : index
    %c0_1432 = arith.constant 0 : index
    %c0_1433 = arith.constant 0 : index
    %3023 = vector.load %arg4[%c142_1431, %c0_1432, %c0_1433] : memref<171x8x128xf32, #tpu.memory_space<vmem>>, vector<1x8x128xf32>
    %3024 = vector.shape_cast %3023 : vector<1x8x128xf32> to vector<8x128xf32>
    %c143_1434 = arith.constant 143 : index
    %c0_1435 = arith.constant 0 : index
    %c0_1436 = arith.constant 0 : index
    %3025 = vector.load %arg4[%c143_1434, %c0_1435, %c0_1436] : memref<171x8x128xf32, #tpu.memory_space<vmem>>, vector<1x8x128xf32>
    %3026 = vector.shape_cast %3025 : vector<1x8x128xf32> to vector<8x128xf32>
    %c60_1437 = arith.constant 60 : index
    %c0_1438 = arith.constant 0 : index
    %c0_1439 = arith.constant 0 : index
    %3027 = vector.load %arg2[%c60_1437, %c0_1438, %c0_1439] : memref<72x8x128xf32, #tpu.memory_space<vmem>>, vector<1x8x128xf32>
    %3028 = vector.shape_cast %3027 : vector<1x8x128xf32> to vector<8x128xf32>
    %c61_1440 = arith.constant 61 : index
    %c0_1441 = arith.constant 0 : index
    %c0_1442 = arith.constant 0 : index
    %3029 = vector.load %arg2[%c61_1440, %c0_1441, %c0_1442] : memref<72x8x128xf32, #tpu.memory_space<vmem>>, vector<1x8x128xf32>
    %3030 = vector.shape_cast %3029 : vector<1x8x128xf32> to vector<8x128xf32>
    %c62_1443 = arith.constant 62 : index
    %c0_1444 = arith.constant 0 : index
    %c0_1445 = arith.constant 0 : index
    %3031 = vector.load %arg2[%c62_1443, %c0_1444, %c0_1445] : memref<72x8x128xf32, #tpu.memory_space<vmem>>, vector<1x8x128xf32>
    %3032 = vector.shape_cast %3031 : vector<1x8x128xf32> to vector<8x128xf32>
    %3033 = arith.mulf %3010, %3028 : vector<8x128xf32>
    %3034 = arith.mulf %3012, %3030 : vector<8x128xf32>
    %3035 = arith.addf %3033, %3034 : vector<8x128xf32>
    %3036 = arith.mulf %3014, %3032 : vector<8x128xf32>
    %3037 = arith.addf %3035, %3036 : vector<8x128xf32>
    %3038 = arith.mulf %3016, %3028 : vector<8x128xf32>
    %3039 = arith.mulf %3018, %3030 : vector<8x128xf32>
    %3040 = arith.addf %3038, %3039 : vector<8x128xf32>
    %3041 = arith.mulf %3020, %3032 : vector<8x128xf32>
    %3042 = arith.addf %3040, %3041 : vector<8x128xf32>
    %3043 = arith.mulf %3022, %3028 : vector<8x128xf32>
    %3044 = arith.mulf %3024, %3030 : vector<8x128xf32>
    %3045 = arith.addf %3043, %3044 : vector<8x128xf32>
    %3046 = arith.mulf %3026, %3032 : vector<8x128xf32>
    %3047 = arith.addf %3045, %3046 : vector<8x128xf32>
    %3048 = arith.addf %3037, %2694 : vector<8x128xf32>
    %3049 = arith.addf %3042, %2695 : vector<8x128xf32>
    %3050 = arith.addf %3047, %2696 : vector<8x128xf32>
    %c60_1446 = arith.constant 60 : index
    %c0_1447 = arith.constant 0 : index
    %c0_1448 = arith.constant 0 : index
    %3051 = vector.load %arg3[%c60_1446, %c0_1447, %c0_1448] : memref<72x8x128xf32, #tpu.memory_space<vmem>>, vector<1x8x128xf32>
    %3052 = vector.shape_cast %3051 : vector<1x8x128xf32> to vector<8x128xf32>
    %3053 = vector.shape_cast %3048 : vector<8x128xf32> to vector<1x8x128xf32>
    tpu.vector_store %arg3[%c60_1446, %c0_1447, %c0_1448], %3053 {strides = array<i32>} : memref<72x8x128xf32, #tpu.memory_space<vmem>>, vector<1x8x128xf32>,
    %c61_1449 = arith.constant 61 : index
    %c0_1450 = arith.constant 0 : index
    %c0_1451 = arith.constant 0 : index
    %3054 = vector.load %arg3[%c61_1449, %c0_1450, %c0_1451] : memref<72x8x128xf32, #tpu.memory_space<vmem>>, vector<1x8x128xf32>
    %3055 = vector.shape_cast %3054 : vector<1x8x128xf32> to vector<8x128xf32>
    %3056 = vector.shape_cast %3049 : vector<8x128xf32> to vector<1x8x128xf32>
    tpu.vector_store %arg3[%c61_1449, %c0_1450, %c0_1451], %3056 {strides = array<i32>} : memref<72x8x128xf32, #tpu.memory_space<vmem>>, vector<1x8x128xf32>,
    %c62_1452 = arith.constant 62 : index
    %c0_1453 = arith.constant 0 : index
    %c0_1454 = arith.constant 0 : index
    %3057 = vector.load %arg3[%c62_1452, %c0_1453, %c0_1454] : memref<72x8x128xf32, #tpu.memory_space<vmem>>, vector<1x8x128xf32>
    %3058 = vector.shape_cast %3057 : vector<1x8x128xf32> to vector<8x128xf32>
    %3059 = vector.shape_cast %3050 : vector<8x128xf32> to vector<1x8x128xf32>
    tpu.vector_store %arg3[%c62_1452, %c0_1453, %c0_1454], %3059 {strides = array<i32>} : memref<72x8x128xf32, #tpu.memory_space<vmem>>, vector<1x8x128xf32>,
    %c120_1455 = arith.constant 120 : index
    %c0_1456 = arith.constant 0 : index
    %c0_1457 = arith.constant 0 : index
    %3060 = vector.load %arg1[%c120_1455, %c0_1456, %c0_1457] : memref<144x8x128xf32, #tpu.memory_space<vmem>>, vector<1x8x128xf32>
    %3061 = vector.shape_cast %3060 : vector<1x8x128xf32> to vector<8x128xf32>
    %c121_1458 = arith.constant 121 : index
    %c0_1459 = arith.constant 0 : index
    %c0_1460 = arith.constant 0 : index
    %3062 = vector.load %arg1[%c121_1458, %c0_1459, %c0_1460] : memref<144x8x128xf32, #tpu.memory_space<vmem>>, vector<1x8x128xf32>
    %3063 = vector.shape_cast %3062 : vector<1x8x128xf32> to vector<8x128xf32>
    %c122_1461 = arith.constant 122 : index
    %c0_1462 = arith.constant 0 : index
    %c0_1463 = arith.constant 0 : index
    %3064 = vector.load %arg1[%c122_1461, %c0_1462, %c0_1463] : memref<144x8x128xf32, #tpu.memory_space<vmem>>, vector<1x8x128xf32>
    %3065 = vector.shape_cast %3064 : vector<1x8x128xf32> to vector<8x128xf32>
    %c123_1464 = arith.constant 123 : index
    %c0_1465 = arith.constant 0 : index
    %c0_1466 = arith.constant 0 : index
    %3066 = vector.load %arg1[%c123_1464, %c0_1465, %c0_1466] : memref<144x8x128xf32, #tpu.memory_space<vmem>>, vector<1x8x128xf32>
    %3067 = vector.shape_cast %3066 : vector<1x8x128xf32> to vector<8x128xf32>
    %c124_1467 = arith.constant 124 : index
    %c0_1468 = arith.constant 0 : index
    %c0_1469 = arith.constant 0 : index
    %3068 = vector.load %arg1[%c124_1467, %c0_1468, %c0_1469] : memref<144x8x128xf32, #tpu.memory_space<vmem>>, vector<1x8x128xf32>
    %3069 = vector.shape_cast %3068 : vector<1x8x128xf32> to vector<8x128xf32>
    %c125_1470 = arith.constant 125 : index
    %c0_1471 = arith.constant 0 : index
    %c0_1472 = arith.constant 0 : index
    %3070 = vector.load %arg1[%c125_1470, %c0_1471, %c0_1472] : memref<144x8x128xf32, #tpu.memory_space<vmem>>, vector<1x8x128xf32>
    %3071 = vector.shape_cast %3070 : vector<1x8x128xf32> to vector<8x128xf32>
    %3072 = arith.mulf %3061, %3061 : vector<8x128xf32>
    %3073 = arith.mulf %3063, %3063 : vector<8x128xf32>
    %3074 = arith.addf %3072, %3073 : vector<8x128xf32>
    %3075 = arith.mulf %3065, %3065 : vector<8x128xf32>
    %3076 = arith.addf %3074, %3075 : vector<8x128xf32>
    %cst_1473 = arith.constant 1.000000e-24 : f32
    %3077 = vector.broadcast %cst_1473 : f32 to vector<8x128xf32>
    %3078 = arith.maximumf %3076, %3077 : vector<8x128xf32>
    %3079 = math.rsqrt %3078 : vector<8x128xf32>
    %3080 = arith.mulf %3061, %3079 : vector<8x128xf32>
    %3081 = arith.mulf %3063, %3079 : vector<8x128xf32>
    %3082 = arith.mulf %3065, %3079 : vector<8x128xf32>
    %3083 = arith.mulf %3080, %3067 : vector<8x128xf32>
    %3084 = arith.mulf %3081, %3069 : vector<8x128xf32>
    %3085 = arith.addf %3083, %3084 : vector<8x128xf32>
    %3086 = arith.mulf %3082, %3071 : vector<8x128xf32>
    %3087 = arith.addf %3085, %3086 : vector<8x128xf32>
    %3088 = arith.mulf %3087, %3080 : vector<8x128xf32>
    %3089 = arith.subf %3067, %3088 : vector<8x128xf32>
    %3090 = arith.mulf %3087, %3081 : vector<8x128xf32>
    %3091 = arith.subf %3069, %3090 : vector<8x128xf32>
    %3092 = arith.mulf %3087, %3082 : vector<8x128xf32>
    %3093 = arith.subf %3071, %3092 : vector<8x128xf32>
    %3094 = arith.mulf %3089, %3089 : vector<8x128xf32>
    %3095 = arith.mulf %3091, %3091 : vector<8x128xf32>
    %3096 = arith.addf %3094, %3095 : vector<8x128xf32>
    %3097 = arith.mulf %3093, %3093 : vector<8x128xf32>
    %3098 = arith.addf %3096, %3097 : vector<8x128xf32>
    %cst_1474 = arith.constant 1.000000e-24 : f32
    %3099 = vector.broadcast %cst_1474 : f32 to vector<8x128xf32>
    %3100 = arith.maximumf %3098, %3099 : vector<8x128xf32>
    %3101 = math.rsqrt %3100 : vector<8x128xf32>
    %3102 = arith.mulf %3089, %3101 : vector<8x128xf32>
    %3103 = arith.mulf %3091, %3101 : vector<8x128xf32>
    %3104 = arith.mulf %3093, %3101 : vector<8x128xf32>
    %3105 = arith.mulf %3081, %3104 : vector<8x128xf32>
    %3106 = arith.mulf %3082, %3103 : vector<8x128xf32>
    %3107 = arith.subf %3105, %3106 : vector<8x128xf32>
    %3108 = arith.mulf %3082, %3102 : vector<8x128xf32>
    %3109 = arith.mulf %3080, %3104 : vector<8x128xf32>
    %3110 = arith.subf %3108, %3109 : vector<8x128xf32>
    %3111 = arith.mulf %3080, %3103 : vector<8x128xf32>
    %3112 = arith.mulf %3081, %3102 : vector<8x128xf32>
    %3113 = arith.subf %3111, %3112 : vector<8x128xf32>
    %3114 = arith.mulf %3010, %3080 : vector<8x128xf32>
    %3115 = arith.mulf %3012, %3102 : vector<8x128xf32>
    %3116 = arith.addf %3114, %3115 : vector<8x128xf32>
    %3117 = arith.mulf %3014, %3107 : vector<8x128xf32>
    %3118 = arith.addf %3116, %3117 : vector<8x128xf32>
    %3119 = arith.mulf %3010, %3081 : vector<8x128xf32>
    %3120 = arith.mulf %3012, %3103 : vector<8x128xf32>
    %3121 = arith.addf %3119, %3120 : vector<8x128xf32>
    %3122 = arith.mulf %3014, %3110 : vector<8x128xf32>
    %3123 = arith.addf %3121, %3122 : vector<8x128xf32>
    %3124 = arith.mulf %3010, %3082 : vector<8x128xf32>
    %3125 = arith.mulf %3012, %3104 : vector<8x128xf32>
    %3126 = arith.addf %3124, %3125 : vector<8x128xf32>
    %3127 = arith.mulf %3014, %3113 : vector<8x128xf32>
    %3128 = arith.addf %3126, %3127 : vector<8x128xf32>
    %3129 = arith.mulf %3016, %3080 : vector<8x128xf32>
    %3130 = arith.mulf %3018, %3102 : vector<8x128xf32>
    %3131 = arith.addf %3129, %3130 : vector<8x128xf32>
    %3132 = arith.mulf %3020, %3107 : vector<8x128xf32>
    %3133 = arith.addf %3131, %3132 : vector<8x128xf32>
    %3134 = arith.mulf %3016, %3081 : vector<8x128xf32>
    %3135 = arith.mulf %3018, %3103 : vector<8x128xf32>
    %3136 = arith.addf %3134, %3135 : vector<8x128xf32>
    %3137 = arith.mulf %3020, %3110 : vector<8x128xf32>
    %3138 = arith.addf %3136, %3137 : vector<8x128xf32>
    %3139 = arith.mulf %3016, %3082 : vector<8x128xf32>
    %3140 = arith.mulf %3018, %3104 : vector<8x128xf32>
    %3141 = arith.addf %3139, %3140 : vector<8x128xf32>
    %3142 = arith.mulf %3020, %3113 : vector<8x128xf32>
    %3143 = arith.addf %3141, %3142 : vector<8x128xf32>
    %3144 = arith.mulf %3022, %3080 : vector<8x128xf32>
    %3145 = arith.mulf %3024, %3102 : vector<8x128xf32>
    %3146 = arith.addf %3144, %3145 : vector<8x128xf32>
    %3147 = arith.mulf %3026, %3107 : vector<8x128xf32>
    %3148 = arith.addf %3146, %3147 : vector<8x128xf32>
    %3149 = arith.mulf %3022, %3081 : vector<8x128xf32>
    %3150 = arith.mulf %3024, %3103 : vector<8x128xf32>
    %3151 = arith.addf %3149, %3150 : vector<8x128xf32>
    %3152 = arith.mulf %3026, %3110 : vector<8x128xf32>
    %3153 = arith.addf %3151, %3152 : vector<8x128xf32>
    %3154 = arith.mulf %3022, %3082 : vector<8x128xf32>
    %3155 = arith.mulf %3024, %3104 : vector<8x128xf32>
    %3156 = arith.addf %3154, %3155 : vector<8x128xf32>
    %3157 = arith.mulf %3026, %3113 : vector<8x128xf32>
    %3158 = arith.addf %3156, %3157 : vector<8x128xf32>
    %c153 = arith.constant 153 : index
    %c0_1475 = arith.constant 0 : index
    %c0_1476 = arith.constant 0 : index
    %3159 = vector.load %arg4[%c153, %c0_1475, %c0_1476] : memref<171x8x128xf32, #tpu.memory_space<vmem>>, vector<1x8x128xf32>
    %3160 = vector.shape_cast %3159 : vector<1x8x128xf32> to vector<8x128xf32>
    %3161 = vector.shape_cast %3118 : vector<8x128xf32> to vector<1x8x128xf32>
    tpu.vector_store %arg4[%c153, %c0_1475, %c0_1476], %3161 {strides = array<i32>} : memref<171x8x128xf32, #tpu.memory_space<vmem>>, vector<1x8x128xf32>,
    %c154 = arith.constant 154 : index
    %c0_1477 = arith.constant 0 : index
    %c0_1478 = arith.constant 0 : index
    %3162 = vector.load %arg4[%c154, %c0_1477, %c0_1478] : memref<171x8x128xf32, #tpu.memory_space<vmem>>, vector<1x8x128xf32>
    %3163 = vector.shape_cast %3162 : vector<1x8x128xf32> to vector<8x128xf32>
    %3164 = vector.shape_cast %3123 : vector<8x128xf32> to vector<1x8x128xf32>
    tpu.vector_store %arg4[%c154, %c0_1477, %c0_1478], %3164 {strides = array<i32>} : memref<171x8x128xf32, #tpu.memory_space<vmem>>, vector<1x8x128xf32>,
    %c155 = arith.constant 155 : index
    %c0_1479 = arith.constant 0 : index
    %c0_1480 = arith.constant 0 : index
    %3165 = vector.load %arg4[%c155, %c0_1479, %c0_1480] : memref<171x8x128xf32, #tpu.memory_space<vmem>>, vector<1x8x128xf32>
    %3166 = vector.shape_cast %3165 : vector<1x8x128xf32> to vector<8x128xf32>
    %3167 = vector.shape_cast %3128 : vector<8x128xf32> to vector<1x8x128xf32>
    tpu.vector_store %arg4[%c155, %c0_1479, %c0_1480], %3167 {strides = array<i32>} : memref<171x8x128xf32, #tpu.memory_space<vmem>>, vector<1x8x128xf32>,
    %c156 = arith.constant 156 : index
    %c0_1481 = arith.constant 0 : index
    %c0_1482 = arith.constant 0 : index
    %3168 = vector.load %arg4[%c156, %c0_1481, %c0_1482] : memref<171x8x128xf32, #tpu.memory_space<vmem>>, vector<1x8x128xf32>
    %3169 = vector.shape_cast %3168 : vector<1x8x128xf32> to vector<8x128xf32>
    %3170 = vector.shape_cast %3133 : vector<8x128xf32> to vector<1x8x128xf32>
    tpu.vector_store %arg4[%c156, %c0_1481, %c0_1482], %3170 {strides = array<i32>} : memref<171x8x128xf32, #tpu.memory_space<vmem>>, vector<1x8x128xf32>,
    %c157 = arith.constant 157 : index
    %c0_1483 = arith.constant 0 : index
    %c0_1484 = arith.constant 0 : index
    %3171 = vector.load %arg4[%c157, %c0_1483, %c0_1484] : memref<171x8x128xf32, #tpu.memory_space<vmem>>, vector<1x8x128xf32>
    %3172 = vector.shape_cast %3171 : vector<1x8x128xf32> to vector<8x128xf32>
    %3173 = vector.shape_cast %3138 : vector<8x128xf32> to vector<1x8x128xf32>
    tpu.vector_store %arg4[%c157, %c0_1483, %c0_1484], %3173 {strides = array<i32>} : memref<171x8x128xf32, #tpu.memory_space<vmem>>, vector<1x8x128xf32>,
    %c158 = arith.constant 158 : index
    %c0_1485 = arith.constant 0 : index
    %c0_1486 = arith.constant 0 : index
    %3174 = vector.load %arg4[%c158, %c0_1485, %c0_1486] : memref<171x8x128xf32, #tpu.memory_space<vmem>>, vector<1x8x128xf32>
    %3175 = vector.shape_cast %3174 : vector<1x8x128xf32> to vector<8x128xf32>
    %3176 = vector.shape_cast %3143 : vector<8x128xf32> to vector<1x8x128xf32>
    tpu.vector_store %arg4[%c158, %c0_1485, %c0_1486], %3176 {strides = array<i32>} : memref<171x8x128xf32, #tpu.memory_space<vmem>>, vector<1x8x128xf32>,
    %c159 = arith.constant 159 : index
    %c0_1487 = arith.constant 0 : index
    %c0_1488 = arith.constant 0 : index
    %3177 = vector.load %arg4[%c159, %c0_1487, %c0_1488] : memref<171x8x128xf32, #tpu.memory_space<vmem>>, vector<1x8x128xf32>
    %3178 = vector.shape_cast %3177 : vector<1x8x128xf32> to vector<8x128xf32>
    %3179 = vector.shape_cast %3148 : vector<8x128xf32> to vector<1x8x128xf32>
    tpu.vector_store %arg4[%c159, %c0_1487, %c0_1488], %3179 {strides = array<i32>} : memref<171x8x128xf32, #tpu.memory_space<vmem>>, vector<1x8x128xf32>,
    %c160 = arith.constant 160 : index
    %c0_1489 = arith.constant 0 : index
    %c0_1490 = arith.constant 0 : index
    %3180 = vector.load %arg4[%c160, %c0_1489, %c0_1490] : memref<171x8x128xf32, #tpu.memory_space<vmem>>, vector<1x8x128xf32>
    %3181 = vector.shape_cast %3180 : vector<1x8x128xf32> to vector<8x128xf32>
    %3182 = vector.shape_cast %3153 : vector<8x128xf32> to vector<1x8x128xf32>
    tpu.vector_store %arg4[%c160, %c0_1489, %c0_1490], %3182 {strides = array<i32>} : memref<171x8x128xf32, #tpu.memory_space<vmem>>, vector<1x8x128xf32>,
    %c161 = arith.constant 161 : index
    %c0_1491 = arith.constant 0 : index
    %c0_1492 = arith.constant 0 : index
    %3183 = vector.load %arg4[%c161, %c0_1491, %c0_1492] : memref<171x8x128xf32, #tpu.memory_space<vmem>>, vector<1x8x128xf32>
    %3184 = vector.shape_cast %3183 : vector<1x8x128xf32> to vector<8x128xf32>
    %3185 = vector.shape_cast %3158 : vector<8x128xf32> to vector<1x8x128xf32>
    tpu.vector_store %arg4[%c161, %c0_1491, %c0_1492], %3185 {strides = array<i32>} : memref<171x8x128xf32, #tpu.memory_space<vmem>>, vector<1x8x128xf32>,
    %c144_1493 = arith.constant 144 : index
    %c0_1494 = arith.constant 0 : index
    %c0_1495 = arith.constant 0 : index
    %3186 = vector.load %arg4[%c144_1493, %c0_1494, %c0_1495] : memref<171x8x128xf32, #tpu.memory_space<vmem>>, vector<1x8x128xf32>
    %3187 = vector.shape_cast %3186 : vector<1x8x128xf32> to vector<8x128xf32>
    %c145_1496 = arith.constant 145 : index
    %c0_1497 = arith.constant 0 : index
    %c0_1498 = arith.constant 0 : index
    %3188 = vector.load %arg4[%c145_1496, %c0_1497, %c0_1498] : memref<171x8x128xf32, #tpu.memory_space<vmem>>, vector<1x8x128xf32>
    %3189 = vector.shape_cast %3188 : vector<1x8x128xf32> to vector<8x128xf32>
    %c146_1499 = arith.constant 146 : index
    %c0_1500 = arith.constant 0 : index
    %c0_1501 = arith.constant 0 : index
    %3190 = vector.load %arg4[%c146_1499, %c0_1500, %c0_1501] : memref<171x8x128xf32, #tpu.memory_space<vmem>>, vector<1x8x128xf32>
    %3191 = vector.shape_cast %3190 : vector<1x8x128xf32> to vector<8x128xf32>
    %c147_1502 = arith.constant 147 : index
    %c0_1503 = arith.constant 0 : index
    %c0_1504 = arith.constant 0 : index
    %3192 = vector.load %arg4[%c147_1502, %c0_1503, %c0_1504] : memref<171x8x128xf32, #tpu.memory_space<vmem>>, vector<1x8x128xf32>
    %3193 = vector.shape_cast %3192 : vector<1x8x128xf32> to vector<8x128xf32>
    %c148_1505 = arith.constant 148 : index
    %c0_1506 = arith.constant 0 : index
    %c0_1507 = arith.constant 0 : index
    %3194 = vector.load %arg4[%c148_1505, %c0_1506, %c0_1507] : memref<171x8x128xf32, #tpu.memory_space<vmem>>, vector<1x8x128xf32>
    %3195 = vector.shape_cast %3194 : vector<1x8x128xf32> to vector<8x128xf32>
    %c149_1508 = arith.constant 149 : index
    %c0_1509 = arith.constant 0 : index
    %c0_1510 = arith.constant 0 : index
    %3196 = vector.load %arg4[%c149_1508, %c0_1509, %c0_1510] : memref<171x8x128xf32, #tpu.memory_space<vmem>>, vector<1x8x128xf32>
    %3197 = vector.shape_cast %3196 : vector<1x8x128xf32> to vector<8x128xf32>
    %c150_1511 = arith.constant 150 : index
    %c0_1512 = arith.constant 0 : index
    %c0_1513 = arith.constant 0 : index
    %3198 = vector.load %arg4[%c150_1511, %c0_1512, %c0_1513] : memref<171x8x128xf32, #tpu.memory_space<vmem>>, vector<1x8x128xf32>
    %3199 = vector.shape_cast %3198 : vector<1x8x128xf32> to vector<8x128xf32>
    %c151_1514 = arith.constant 151 : index
    %c0_1515 = arith.constant 0 : index
    %c0_1516 = arith.constant 0 : index
    %3200 = vector.load %arg4[%c151_1514, %c0_1515, %c0_1516] : memref<171x8x128xf32, #tpu.memory_space<vmem>>, vector<1x8x128xf32>
    %3201 = vector.shape_cast %3200 : vector<1x8x128xf32> to vector<8x128xf32>
    %c152_1517 = arith.constant 152 : index
    %c0_1518 = arith.constant 0 : index
    %c0_1519 = arith.constant 0 : index
    %3202 = vector.load %arg4[%c152_1517, %c0_1518, %c0_1519] : memref<171x8x128xf32, #tpu.memory_space<vmem>>, vector<1x8x128xf32>
    %3203 = vector.shape_cast %3202 : vector<1x8x128xf32> to vector<8x128xf32>
    %c63_1520 = arith.constant 63 : index
    %c0_1521 = arith.constant 0 : index
    %c0_1522 = arith.constant 0 : index
    %3204 = vector.load %arg2[%c63_1520, %c0_1521, %c0_1522] : memref<72x8x128xf32, #tpu.memory_space<vmem>>, vector<1x8x128xf32>
    %3205 = vector.shape_cast %3204 : vector<1x8x128xf32> to vector<8x128xf32>
    %c64_1523 = arith.constant 64 : index
    %c0_1524 = arith.constant 0 : index
    %c0_1525 = arith.constant 0 : index
    %3206 = vector.load %arg2[%c64_1523, %c0_1524, %c0_1525] : memref<72x8x128xf32, #tpu.memory_space<vmem>>, vector<1x8x128xf32>
    %3207 = vector.shape_cast %3206 : vector<1x8x128xf32> to vector<8x128xf32>
    %c65_1526 = arith.constant 65 : index
    %c0_1527 = arith.constant 0 : index
    %c0_1528 = arith.constant 0 : index
    %3208 = vector.load %arg2[%c65_1526, %c0_1527, %c0_1528] : memref<72x8x128xf32, #tpu.memory_space<vmem>>, vector<1x8x128xf32>
    %3209 = vector.shape_cast %3208 : vector<1x8x128xf32> to vector<8x128xf32>
    %3210 = arith.mulf %3187, %3205 : vector<8x128xf32>
    %3211 = arith.mulf %3189, %3207 : vector<8x128xf32>
    %3212 = arith.addf %3210, %3211 : vector<8x128xf32>
    %3213 = arith.mulf %3191, %3209 : vector<8x128xf32>
    %3214 = arith.addf %3212, %3213 : vector<8x128xf32>
    %3215 = arith.mulf %3193, %3205 : vector<8x128xf32>
    %3216 = arith.mulf %3195, %3207 : vector<8x128xf32>
    %3217 = arith.addf %3215, %3216 : vector<8x128xf32>
    %3218 = arith.mulf %3197, %3209 : vector<8x128xf32>
    %3219 = arith.addf %3217, %3218 : vector<8x128xf32>
    %3220 = arith.mulf %3199, %3205 : vector<8x128xf32>
    %3221 = arith.mulf %3201, %3207 : vector<8x128xf32>
    %3222 = arith.addf %3220, %3221 : vector<8x128xf32>
    %3223 = arith.mulf %3203, %3209 : vector<8x128xf32>
    %3224 = arith.addf %3222, %3223 : vector<8x128xf32>
    %3225 = arith.addf %3214, %2871 : vector<8x128xf32>
    %3226 = arith.addf %3219, %2872 : vector<8x128xf32>
    %3227 = arith.addf %3224, %2873 : vector<8x128xf32>
    %c63_1529 = arith.constant 63 : index
    %c0_1530 = arith.constant 0 : index
    %c0_1531 = arith.constant 0 : index
    %3228 = vector.load %arg3[%c63_1529, %c0_1530, %c0_1531] : memref<72x8x128xf32, #tpu.memory_space<vmem>>, vector<1x8x128xf32>
    %3229 = vector.shape_cast %3228 : vector<1x8x128xf32> to vector<8x128xf32>
    %3230 = vector.shape_cast %3225 : vector<8x128xf32> to vector<1x8x128xf32>
    tpu.vector_store %arg3[%c63_1529, %c0_1530, %c0_1531], %3230 {strides = array<i32>} : memref<72x8x128xf32, #tpu.memory_space<vmem>>, vector<1x8x128xf32>,
    %c64_1532 = arith.constant 64 : index
    %c0_1533 = arith.constant 0 : index
    %c0_1534 = arith.constant 0 : index
    %3231 = vector.load %arg3[%c64_1532, %c0_1533, %c0_1534] : memref<72x8x128xf32, #tpu.memory_space<vmem>>, vector<1x8x128xf32>
    %3232 = vector.shape_cast %3231 : vector<1x8x128xf32> to vector<8x128xf32>
    %3233 = vector.shape_cast %3226 : vector<8x128xf32> to vector<1x8x128xf32>
    tpu.vector_store %arg3[%c64_1532, %c0_1533, %c0_1534], %3233 {strides = array<i32>} : memref<72x8x128xf32, #tpu.memory_space<vmem>>, vector<1x8x128xf32>,
    %c65_1535 = arith.constant 65 : index
    %c0_1536 = arith.constant 0 : index
    %c0_1537 = arith.constant 0 : index
    %3234 = vector.load %arg3[%c65_1535, %c0_1536, %c0_1537] : memref<72x8x128xf32, #tpu.memory_space<vmem>>, vector<1x8x128xf32>
    %3235 = vector.shape_cast %3234 : vector<1x8x128xf32> to vector<8x128xf32>
    %3236 = vector.shape_cast %3227 : vector<8x128xf32> to vector<1x8x128xf32>
    tpu.vector_store %arg3[%c65_1535, %c0_1536, %c0_1537], %3236 {strides = array<i32>} : memref<72x8x128xf32, #tpu.memory_space<vmem>>, vector<1x8x128xf32>,
    %c126_1538 = arith.constant 126 : index
    %c0_1539 = arith.constant 0 : index
    %c0_1540 = arith.constant 0 : index
    %3237 = vector.load %arg1[%c126_1538, %c0_1539, %c0_1540] : memref<144x8x128xf32, #tpu.memory_space<vmem>>, vector<1x8x128xf32>
    %3238 = vector.shape_cast %3237 : vector<1x8x128xf32> to vector<8x128xf32>
    %c127_1541 = arith.constant 127 : index
    %c0_1542 = arith.constant 0 : index
    %c0_1543 = arith.constant 0 : index
    %3239 = vector.load %arg1[%c127_1541, %c0_1542, %c0_1543] : memref<144x8x128xf32, #tpu.memory_space<vmem>>, vector<1x8x128xf32>
    %3240 = vector.shape_cast %3239 : vector<1x8x128xf32> to vector<8x128xf32>
    %c128_1544 = arith.constant 128 : index
    %c0_1545 = arith.constant 0 : index
    %c0_1546 = arith.constant 0 : index
    %3241 = vector.load %arg1[%c128_1544, %c0_1545, %c0_1546] : memref<144x8x128xf32, #tpu.memory_space<vmem>>, vector<1x8x128xf32>
    %3242 = vector.shape_cast %3241 : vector<1x8x128xf32> to vector<8x128xf32>
    %c129_1547 = arith.constant 129 : index
    %c0_1548 = arith.constant 0 : index
    %c0_1549 = arith.constant 0 : index
    %3243 = vector.load %arg1[%c129_1547, %c0_1548, %c0_1549] : memref<144x8x128xf32, #tpu.memory_space<vmem>>, vector<1x8x128xf32>
    %3244 = vector.shape_cast %3243 : vector<1x8x128xf32> to vector<8x128xf32>
    %c130_1550 = arith.constant 130 : index
    %c0_1551 = arith.constant 0 : index
    %c0_1552 = arith.constant 0 : index
    %3245 = vector.load %arg1[%c130_1550, %c0_1551, %c0_1552] : memref<144x8x128xf32, #tpu.memory_space<vmem>>, vector<1x8x128xf32>
    %3246 = vector.shape_cast %3245 : vector<1x8x128xf32> to vector<8x128xf32>
    %c131_1553 = arith.constant 131 : index
    %c0_1554 = arith.constant 0 : index
    %c0_1555 = arith.constant 0 : index
    %3247 = vector.load %arg1[%c131_1553, %c0_1554, %c0_1555] : memref<144x8x128xf32, #tpu.memory_space<vmem>>, vector<1x8x128xf32>
    %3248 = vector.shape_cast %3247 : vector<1x8x128xf32> to vector<8x128xf32>
    %3249 = arith.mulf %3238, %3238 : vector<8x128xf32>
    %3250 = arith.mulf %3240, %3240 : vector<8x128xf32>
    %3251 = arith.addf %3249, %3250 : vector<8x128xf32>
    %3252 = arith.mulf %3242, %3242 : vector<8x128xf32>
    %3253 = arith.addf %3251, %3252 : vector<8x128xf32>
    %cst_1556 = arith.constant 1.000000e-24 : f32
    %3254 = vector.broadcast %cst_1556 : f32 to vector<8x128xf32>
    %3255 = arith.maximumf %3253, %3254 : vector<8x128xf32>
    %3256 = math.rsqrt %3255 : vector<8x128xf32>
    %3257 = arith.mulf %3238, %3256 : vector<8x128xf32>
    %3258 = arith.mulf %3240, %3256 : vector<8x128xf32>
    %3259 = arith.mulf %3242, %3256 : vector<8x128xf32>
    %3260 = arith.mulf %3257, %3244 : vector<8x128xf32>
    %3261 = arith.mulf %3258, %3246 : vector<8x128xf32>
    %3262 = arith.addf %3260, %3261 : vector<8x128xf32>
    %3263 = arith.mulf %3259, %3248 : vector<8x128xf32>
    %3264 = arith.addf %3262, %3263 : vector<8x128xf32>
    %3265 = arith.mulf %3264, %3257 : vector<8x128xf32>
    %3266 = arith.subf %3244, %3265 : vector<8x128xf32>
    %3267 = arith.mulf %3264, %3258 : vector<8x128xf32>
    %3268 = arith.subf %3246, %3267 : vector<8x128xf32>
    %3269 = arith.mulf %3264, %3259 : vector<8x128xf32>
    %3270 = arith.subf %3248, %3269 : vector<8x128xf32>
    %3271 = arith.mulf %3266, %3266 : vector<8x128xf32>
    %3272 = arith.mulf %3268, %3268 : vector<8x128xf32>
    %3273 = arith.addf %3271, %3272 : vector<8x128xf32>
    %3274 = arith.mulf %3270, %3270 : vector<8x128xf32>
    %3275 = arith.addf %3273, %3274 : vector<8x128xf32>
    %cst_1557 = arith.constant 1.000000e-24 : f32
    %3276 = vector.broadcast %cst_1557 : f32 to vector<8x128xf32>
    %3277 = arith.maximumf %3275, %3276 : vector<8x128xf32>
    %3278 = math.rsqrt %3277 : vector<8x128xf32>
    %3279 = arith.mulf %3266, %3278 : vector<8x128xf32>
    %3280 = arith.mulf %3268, %3278 : vector<8x128xf32>
    %3281 = arith.mulf %3270, %3278 : vector<8x128xf32>
    %3282 = arith.mulf %3258, %3281 : vector<8x128xf32>
    %3283 = arith.mulf %3259, %3280 : vector<8x128xf32>
    %3284 = arith.subf %3282, %3283 : vector<8x128xf32>
    %3285 = arith.mulf %3259, %3279 : vector<8x128xf32>
    %3286 = arith.mulf %3257, %3281 : vector<8x128xf32>
    %3287 = arith.subf %3285, %3286 : vector<8x128xf32>
    %3288 = arith.mulf %3257, %3280 : vector<8x128xf32>
    %3289 = arith.mulf %3258, %3279 : vector<8x128xf32>
    %3290 = arith.subf %3288, %3289 : vector<8x128xf32>
    %3291 = arith.mulf %3187, %3257 : vector<8x128xf32>
    %3292 = arith.mulf %3189, %3279 : vector<8x128xf32>
    %3293 = arith.addf %3291, %3292 : vector<8x128xf32>
    %3294 = arith.mulf %3191, %3284 : vector<8x128xf32>
    %3295 = arith.addf %3293, %3294 : vector<8x128xf32>
    %3296 = arith.mulf %3187, %3258 : vector<8x128xf32>
    %3297 = arith.mulf %3189, %3280 : vector<8x128xf32>
    %3298 = arith.addf %3296, %3297 : vector<8x128xf32>
    %3299 = arith.mulf %3191, %3287 : vector<8x128xf32>
    %3300 = arith.addf %3298, %3299 : vector<8x128xf32>
    %3301 = arith.mulf %3187, %3259 : vector<8x128xf32>
    %3302 = arith.mulf %3189, %3281 : vector<8x128xf32>
    %3303 = arith.addf %3301, %3302 : vector<8x128xf32>
    %3304 = arith.mulf %3191, %3290 : vector<8x128xf32>
    %3305 = arith.addf %3303, %3304 : vector<8x128xf32>
    %3306 = arith.mulf %3193, %3257 : vector<8x128xf32>
    %3307 = arith.mulf %3195, %3279 : vector<8x128xf32>
    %3308 = arith.addf %3306, %3307 : vector<8x128xf32>
    %3309 = arith.mulf %3197, %3284 : vector<8x128xf32>
    %3310 = arith.addf %3308, %3309 : vector<8x128xf32>
    %3311 = arith.mulf %3193, %3258 : vector<8x128xf32>
    %3312 = arith.mulf %3195, %3280 : vector<8x128xf32>
    %3313 = arith.addf %3311, %3312 : vector<8x128xf32>
    %3314 = arith.mulf %3197, %3287 : vector<8x128xf32>
    %3315 = arith.addf %3313, %3314 : vector<8x128xf32>
    %3316 = arith.mulf %3193, %3259 : vector<8x128xf32>
    %3317 = arith.mulf %3195, %3281 : vector<8x128xf32>
    %3318 = arith.addf %3316, %3317 : vector<8x128xf32>
    %3319 = arith.mulf %3197, %3290 : vector<8x128xf32>
    %3320 = arith.addf %3318, %3319 : vector<8x128xf32>
    %3321 = arith.mulf %3199, %3257 : vector<8x128xf32>
    %3322 = arith.mulf %3201, %3279 : vector<8x128xf32>
    %3323 = arith.addf %3321, %3322 : vector<8x128xf32>
    %3324 = arith.mulf %3203, %3284 : vector<8x128xf32>
    %3325 = arith.addf %3323, %3324 : vector<8x128xf32>
    %3326 = arith.mulf %3199, %3258 : vector<8x128xf32>
    %3327 = arith.mulf %3201, %3280 : vector<8x128xf32>
    %3328 = arith.addf %3326, %3327 : vector<8x128xf32>
    %3329 = arith.mulf %3203, %3287 : vector<8x128xf32>
    %3330 = arith.addf %3328, %3329 : vector<8x128xf32>
    %3331 = arith.mulf %3199, %3259 : vector<8x128xf32>
    %3332 = arith.mulf %3201, %3281 : vector<8x128xf32>
    %3333 = arith.addf %3331, %3332 : vector<8x128xf32>
    %3334 = arith.mulf %3203, %3290 : vector<8x128xf32>
    %3335 = arith.addf %3333, %3334 : vector<8x128xf32>
    %c162 = arith.constant 162 : index
    %c0_1558 = arith.constant 0 : index
    %c0_1559 = arith.constant 0 : index
    %3336 = vector.load %arg4[%c162, %c0_1558, %c0_1559] : memref<171x8x128xf32, #tpu.memory_space<vmem>>, vector<1x8x128xf32>
    %3337 = vector.shape_cast %3336 : vector<1x8x128xf32> to vector<8x128xf32>
    %3338 = vector.shape_cast %3295 : vector<8x128xf32> to vector<1x8x128xf32>
    tpu.vector_store %arg4[%c162, %c0_1558, %c0_1559], %3338 {strides = array<i32>} : memref<171x8x128xf32, #tpu.memory_space<vmem>>, vector<1x8x128xf32>,
    %c163 = arith.constant 163 : index
    %c0_1560 = arith.constant 0 : index
    %c0_1561 = arith.constant 0 : index
    %3339 = vector.load %arg4[%c163, %c0_1560, %c0_1561] : memref<171x8x128xf32, #tpu.memory_space<vmem>>, vector<1x8x128xf32>
    %3340 = vector.shape_cast %3339 : vector<1x8x128xf32> to vector<8x128xf32>
    %3341 = vector.shape_cast %3300 : vector<8x128xf32> to vector<1x8x128xf32>
    tpu.vector_store %arg4[%c163, %c0_1560, %c0_1561], %3341 {strides = array<i32>} : memref<171x8x128xf32, #tpu.memory_space<vmem>>, vector<1x8x128xf32>,
    %c164 = arith.constant 164 : index
    %c0_1562 = arith.constant 0 : index
    %c0_1563 = arith.constant 0 : index
    %3342 = vector.load %arg4[%c164, %c0_1562, %c0_1563] : memref<171x8x128xf32, #tpu.memory_space<vmem>>, vector<1x8x128xf32>
    %3343 = vector.shape_cast %3342 : vector<1x8x128xf32> to vector<8x128xf32>
    %3344 = vector.shape_cast %3305 : vector<8x128xf32> to vector<1x8x128xf32>
    tpu.vector_store %arg4[%c164, %c0_1562, %c0_1563], %3344 {strides = array<i32>} : memref<171x8x128xf32, #tpu.memory_space<vmem>>, vector<1x8x128xf32>,
    %c165 = arith.constant 165 : index
    %c0_1564 = arith.constant 0 : index
    %c0_1565 = arith.constant 0 : index
    %3345 = vector.load %arg4[%c165, %c0_1564, %c0_1565] : memref<171x8x128xf32, #tpu.memory_space<vmem>>, vector<1x8x128xf32>
    %3346 = vector.shape_cast %3345 : vector<1x8x128xf32> to vector<8x128xf32>
    %3347 = vector.shape_cast %3310 : vector<8x128xf32> to vector<1x8x128xf32>
    tpu.vector_store %arg4[%c165, %c0_1564, %c0_1565], %3347 {strides = array<i32>} : memref<171x8x128xf32, #tpu.memory_space<vmem>>, vector<1x8x128xf32>,
    %c166 = arith.constant 166 : index
    %c0_1566 = arith.constant 0 : index
    %c0_1567 = arith.constant 0 : index
    %3348 = vector.load %arg4[%c166, %c0_1566, %c0_1567] : memref<171x8x128xf32, #tpu.memory_space<vmem>>, vector<1x8x128xf32>
    %3349 = vector.shape_cast %3348 : vector<1x8x128xf32> to vector<8x128xf32>
    %3350 = vector.shape_cast %3315 : vector<8x128xf32> to vector<1x8x128xf32>
    tpu.vector_store %arg4[%c166, %c0_1566, %c0_1567], %3350 {strides = array<i32>} : memref<171x8x128xf32, #tpu.memory_space<vmem>>, vector<1x8x128xf32>,
    %c167 = arith.constant 167 : index
    %c0_1568 = arith.constant 0 : index
    %c0_1569 = arith.constant 0 : index
    %3351 = vector.load %arg4[%c167, %c0_1568, %c0_1569] : memref<171x8x128xf32, #tpu.memory_space<vmem>>, vector<1x8x128xf32>
    %3352 = vector.shape_cast %3351 : vector<1x8x128xf32> to vector<8x128xf32>
    %3353 = vector.shape_cast %3320 : vector<8x128xf32> to vector<1x8x128xf32>
    tpu.vector_store %arg4[%c167, %c0_1568, %c0_1569], %3353 {strides = array<i32>} : memref<171x8x128xf32, #tpu.memory_space<vmem>>, vector<1x8x128xf32>,
    %c168 = arith.constant 168 : index
    %c0_1570 = arith.constant 0 : index
    %c0_1571 = arith.constant 0 : index
    %3354 = vector.load %arg4[%c168, %c0_1570, %c0_1571] : memref<171x8x128xf32, #tpu.memory_space<vmem>>, vector<1x8x128xf32>
    %3355 = vector.shape_cast %3354 : vector<1x8x128xf32> to vector<8x128xf32>
    %3356 = vector.shape_cast %3325 : vector<8x128xf32> to vector<1x8x128xf32>
    tpu.vector_store %arg4[%c168, %c0_1570, %c0_1571], %3356 {strides = array<i32>} : memref<171x8x128xf32, #tpu.memory_space<vmem>>, vector<1x8x128xf32>,
    %c169 = arith.constant 169 : index
    %c0_1572 = arith.constant 0 : index
    %c0_1573 = arith.constant 0 : index
    %3357 = vector.load %arg4[%c169, %c0_1572, %c0_1573] : memref<171x8x128xf32, #tpu.memory_space<vmem>>, vector<1x8x128xf32>
    %3358 = vector.shape_cast %3357 : vector<1x8x128xf32> to vector<8x128xf32>
    %3359 = vector.shape_cast %3330 : vector<8x128xf32> to vector<1x8x128xf32>
    tpu.vector_store %arg4[%c169, %c0_1572, %c0_1573], %3359 {strides = array<i32>} : memref<171x8x128xf32, #tpu.memory_space<vmem>>, vector<1x8x128xf32>,
    %c170 = arith.constant 170 : index
    %c0_1574 = arith.constant 0 : index
    %c0_1575 = arith.constant 0 : index
    %3360 = vector.load %arg4[%c170, %c0_1574, %c0_1575] : memref<171x8x128xf32, #tpu.memory_space<vmem>>, vector<1x8x128xf32>
    %3361 = vector.shape_cast %3360 : vector<1x8x128xf32> to vector<8x128xf32>
    %3362 = vector.shape_cast %3335 : vector<8x128xf32> to vector<1x8x128xf32>
    tpu.vector_store %arg4[%c170, %c0_1574, %c0_1575], %3362 {strides = array<i32>} : memref<171x8x128xf32, #tpu.memory_space<vmem>>, vector<1x8x128xf32>,
    %c153_1576 = arith.constant 153 : index
    %c0_1577 = arith.constant 0 : index
    %c0_1578 = arith.constant 0 : index
    %3363 = vector.load %arg4[%c153_1576, %c0_1577, %c0_1578] : memref<171x8x128xf32, #tpu.memory_space<vmem>>, vector<1x8x128xf32>
    %3364 = vector.shape_cast %3363 : vector<1x8x128xf32> to vector<8x128xf32>
    %c154_1579 = arith.constant 154 : index
    %c0_1580 = arith.constant 0 : index
    %c0_1581 = arith.constant 0 : index
    %3365 = vector.load %arg4[%c154_1579, %c0_1580, %c0_1581] : memref<171x8x128xf32, #tpu.memory_space<vmem>>, vector<1x8x128xf32>
    %3366 = vector.shape_cast %3365 : vector<1x8x128xf32> to vector<8x128xf32>
    %c155_1582 = arith.constant 155 : index
    %c0_1583 = arith.constant 0 : index
    %c0_1584 = arith.constant 0 : index
    %3367 = vector.load %arg4[%c155_1582, %c0_1583, %c0_1584] : memref<171x8x128xf32, #tpu.memory_space<vmem>>, vector<1x8x128xf32>
    %3368 = vector.shape_cast %3367 : vector<1x8x128xf32> to vector<8x128xf32>
    %c156_1585 = arith.constant 156 : index
    %c0_1586 = arith.constant 0 : index
    %c0_1587 = arith.constant 0 : index
    %3369 = vector.load %arg4[%c156_1585, %c0_1586, %c0_1587] : memref<171x8x128xf32, #tpu.memory_space<vmem>>, vector<1x8x128xf32>
    %3370 = vector.shape_cast %3369 : vector<1x8x128xf32> to vector<8x128xf32>
    %c157_1588 = arith.constant 157 : index
    %c0_1589 = arith.constant 0 : index
    %c0_1590 = arith.constant 0 : index
    %3371 = vector.load %arg4[%c157_1588, %c0_1589, %c0_1590] : memref<171x8x128xf32, #tpu.memory_space<vmem>>, vector<1x8x128xf32>
    %3372 = vector.shape_cast %3371 : vector<1x8x128xf32> to vector<8x128xf32>
    %c158_1591 = arith.constant 158 : index
    %c0_1592 = arith.constant 0 : index
    %c0_1593 = arith.constant 0 : index
    %3373 = vector.load %arg4[%c158_1591, %c0_1592, %c0_1593] : memref<171x8x128xf32, #tpu.memory_space<vmem>>, vector<1x8x128xf32>
    %3374 = vector.shape_cast %3373 : vector<1x8x128xf32> to vector<8x128xf32>
    %c159_1594 = arith.constant 159 : index
    %c0_1595 = arith.constant 0 : index
    %c0_1596 = arith.constant 0 : index
    %3375 = vector.load %arg4[%c159_1594, %c0_1595, %c0_1596] : memref<171x8x128xf32, #tpu.memory_space<vmem>>, vector<1x8x128xf32>
    %3376 = vector.shape_cast %3375 : vector<1x8x128xf32> to vector<8x128xf32>
    %c160_1597 = arith.constant 160 : index
    %c0_1598 = arith.constant 0 : index
    %c0_1599 = arith.constant 0 : index
    %3377 = vector.load %arg4[%c160_1597, %c0_1598, %c0_1599] : memref<171x8x128xf32, #tpu.memory_space<vmem>>, vector<1x8x128xf32>
    %3378 = vector.shape_cast %3377 : vector<1x8x128xf32> to vector<8x128xf32>
    %c161_1600 = arith.constant 161 : index
    %c0_1601 = arith.constant 0 : index
    %c0_1602 = arith.constant 0 : index
    %3379 = vector.load %arg4[%c161_1600, %c0_1601, %c0_1602] : memref<171x8x128xf32, #tpu.memory_space<vmem>>, vector<1x8x128xf32>
    %3380 = vector.shape_cast %3379 : vector<1x8x128xf32> to vector<8x128xf32>
    %c66_1603 = arith.constant 66 : index
    %c0_1604 = arith.constant 0 : index
    %c0_1605 = arith.constant 0 : index
    %3381 = vector.load %arg2[%c66_1603, %c0_1604, %c0_1605] : memref<72x8x128xf32, #tpu.memory_space<vmem>>, vector<1x8x128xf32>
    %3382 = vector.shape_cast %3381 : vector<1x8x128xf32> to vector<8x128xf32>
    %c67_1606 = arith.constant 67 : index
    %c0_1607 = arith.constant 0 : index
    %c0_1608 = arith.constant 0 : index
    %3383 = vector.load %arg2[%c67_1606, %c0_1607, %c0_1608] : memref<72x8x128xf32, #tpu.memory_space<vmem>>, vector<1x8x128xf32>
    %3384 = vector.shape_cast %3383 : vector<1x8x128xf32> to vector<8x128xf32>
    %c68_1609 = arith.constant 68 : index
    %c0_1610 = arith.constant 0 : index
    %c0_1611 = arith.constant 0 : index
    %3385 = vector.load %arg2[%c68_1609, %c0_1610, %c0_1611] : memref<72x8x128xf32, #tpu.memory_space<vmem>>, vector<1x8x128xf32>
    %3386 = vector.shape_cast %3385 : vector<1x8x128xf32> to vector<8x128xf32>
    %3387 = arith.mulf %3364, %3382 : vector<8x128xf32>
    %3388 = arith.mulf %3366, %3384 : vector<8x128xf32>
    %3389 = arith.addf %3387, %3388 : vector<8x128xf32>
    %3390 = arith.mulf %3368, %3386 : vector<8x128xf32>
    %3391 = arith.addf %3389, %3390 : vector<8x128xf32>
    %3392 = arith.mulf %3370, %3382 : vector<8x128xf32>
    %3393 = arith.mulf %3372, %3384 : vector<8x128xf32>
    %3394 = arith.addf %3392, %3393 : vector<8x128xf32>
    %3395 = arith.mulf %3374, %3386 : vector<8x128xf32>
    %3396 = arith.addf %3394, %3395 : vector<8x128xf32>
    %3397 = arith.mulf %3376, %3382 : vector<8x128xf32>
    %3398 = arith.mulf %3378, %3384 : vector<8x128xf32>
    %3399 = arith.addf %3397, %3398 : vector<8x128xf32>
    %3400 = arith.mulf %3380, %3386 : vector<8x128xf32>
    %3401 = arith.addf %3399, %3400 : vector<8x128xf32>
    %3402 = arith.addf %3391, %3048 : vector<8x128xf32>
    %3403 = arith.addf %3396, %3049 : vector<8x128xf32>
    %3404 = arith.addf %3401, %3050 : vector<8x128xf32>
    %c66_1612 = arith.constant 66 : index
    %c0_1613 = arith.constant 0 : index
    %c0_1614 = arith.constant 0 : index
    %3405 = vector.load %arg3[%c66_1612, %c0_1613, %c0_1614] : memref<72x8x128xf32, #tpu.memory_space<vmem>>, vector<1x8x128xf32>
    %3406 = vector.shape_cast %3405 : vector<1x8x128xf32> to vector<8x128xf32>
    %3407 = vector.shape_cast %3402 : vector<8x128xf32> to vector<1x8x128xf32>
    tpu.vector_store %arg3[%c66_1612, %c0_1613, %c0_1614], %3407 {strides = array<i32>} : memref<72x8x128xf32, #tpu.memory_space<vmem>>, vector<1x8x128xf32>,
    %c67_1615 = arith.constant 67 : index
    %c0_1616 = arith.constant 0 : index
    %c0_1617 = arith.constant 0 : index
    %3408 = vector.load %arg3[%c67_1615, %c0_1616, %c0_1617] : memref<72x8x128xf32, #tpu.memory_space<vmem>>, vector<1x8x128xf32>
    %3409 = vector.shape_cast %3408 : vector<1x8x128xf32> to vector<8x128xf32>
    %3410 = vector.shape_cast %3403 : vector<8x128xf32> to vector<1x8x128xf32>
    tpu.vector_store %arg3[%c67_1615, %c0_1616, %c0_1617], %3410 {strides = array<i32>} : memref<72x8x128xf32, #tpu.memory_space<vmem>>, vector<1x8x128xf32>,
    %c68_1618 = arith.constant 68 : index
    %c0_1619 = arith.constant 0 : index
    %c0_1620 = arith.constant 0 : index
    %3411 = vector.load %arg3[%c68_1618, %c0_1619, %c0_1620] : memref<72x8x128xf32, #tpu.memory_space<vmem>>, vector<1x8x128xf32>
    %3412 = vector.shape_cast %3411 : vector<1x8x128xf32> to vector<8x128xf32>
    %3413 = vector.shape_cast %3404 : vector<8x128xf32> to vector<1x8x128xf32>
    tpu.vector_store %arg3[%c68_1618, %c0_1619, %c0_1620], %3413 {strides = array<i32>} : memref<72x8x128xf32, #tpu.memory_space<vmem>>, vector<1x8x128xf32>,
    %c162_1621 = arith.constant 162 : index
    %c0_1622 = arith.constant 0 : index
    %c0_1623 = arith.constant 0 : index
    %3414 = vector.load %arg4[%c162_1621, %c0_1622, %c0_1623] : memref<171x8x128xf32, #tpu.memory_space<vmem>>, vector<1x8x128xf32>
    %3415 = vector.shape_cast %3414 : vector<1x8x128xf32> to vector<8x128xf32>
    %c163_1624 = arith.constant 163 : index
    %c0_1625 = arith.constant 0 : index
    %c0_1626 = arith.constant 0 : index
    %3416 = vector.load %arg4[%c163_1624, %c0_1625, %c0_1626] : memref<171x8x128xf32, #tpu.memory_space<vmem>>, vector<1x8x128xf32>
    %3417 = vector.shape_cast %3416 : vector<1x8x128xf32> to vector<8x128xf32>
    %c164_1627 = arith.constant 164 : index
    %c0_1628 = arith.constant 0 : index
    %c0_1629 = arith.constant 0 : index
    %3418 = vector.load %arg4[%c164_1627, %c0_1628, %c0_1629] : memref<171x8x128xf32, #tpu.memory_space<vmem>>, vector<1x8x128xf32>
    %3419 = vector.shape_cast %3418 : vector<1x8x128xf32> to vector<8x128xf32>
    %c165_1630 = arith.constant 165 : index
    %c0_1631 = arith.constant 0 : index
    %c0_1632 = arith.constant 0 : index
    %3420 = vector.load %arg4[%c165_1630, %c0_1631, %c0_1632] : memref<171x8x128xf32, #tpu.memory_space<vmem>>, vector<1x8x128xf32>
    %3421 = vector.shape_cast %3420 : vector<1x8x128xf32> to vector<8x128xf32>
    %c166_1633 = arith.constant 166 : index
    %c0_1634 = arith.constant 0 : index
    %c0_1635 = arith.constant 0 : index
    %3422 = vector.load %arg4[%c166_1633, %c0_1634, %c0_1635] : memref<171x8x128xf32, #tpu.memory_space<vmem>>, vector<1x8x128xf32>
    %3423 = vector.shape_cast %3422 : vector<1x8x128xf32> to vector<8x128xf32>
    %c167_1636 = arith.constant 167 : index
    %c0_1637 = arith.constant 0 : index
    %c0_1638 = arith.constant 0 : index
    %3424 = vector.load %arg4[%c167_1636, %c0_1637, %c0_1638] : memref<171x8x128xf32, #tpu.memory_space<vmem>>, vector<1x8x128xf32>
    %3425 = vector.shape_cast %3424 : vector<1x8x128xf32> to vector<8x128xf32>
    %c168_1639 = arith.constant 168 : index
    %c0_1640 = arith.constant 0 : index
    %c0_1641 = arith.constant 0 : index
    %3426 = vector.load %arg4[%c168_1639, %c0_1640, %c0_1641] : memref<171x8x128xf32, #tpu.memory_space<vmem>>, vector<1x8x128xf32>
    %3427 = vector.shape_cast %3426 : vector<1x8x128xf32> to vector<8x128xf32>
    %c169_1642 = arith.constant 169 : index
    %c0_1643 = arith.constant 0 : index
    %c0_1644 = arith.constant 0 : index
    %3428 = vector.load %arg4[%c169_1642, %c0_1643, %c0_1644] : memref<171x8x128xf32, #tpu.memory_space<vmem>>, vector<1x8x128xf32>
    %3429 = vector.shape_cast %3428 : vector<1x8x128xf32> to vector<8x128xf32>
    %c170_1645 = arith.constant 170 : index
    %c0_1646 = arith.constant 0 : index
    %c0_1647 = arith.constant 0 : index
    %3430 = vector.load %arg4[%c170_1645, %c0_1646, %c0_1647] : memref<171x8x128xf32, #tpu.memory_space<vmem>>, vector<1x8x128xf32>
    %3431 = vector.shape_cast %3430 : vector<1x8x128xf32> to vector<8x128xf32>
    %c69_1648 = arith.constant 69 : index
    %c0_1649 = arith.constant 0 : index
    %c0_1650 = arith.constant 0 : index
    %3432 = vector.load %arg2[%c69_1648, %c0_1649, %c0_1650] : memref<72x8x128xf32, #tpu.memory_space<vmem>>, vector<1x8x128xf32>
    %3433 = vector.shape_cast %3432 : vector<1x8x128xf32> to vector<8x128xf32>
    %c70_1651 = arith.constant 70 : index
    %c0_1652 = arith.constant 0 : index
    %c0_1653 = arith.constant 0 : index
    %3434 = vector.load %arg2[%c70_1651, %c0_1652, %c0_1653] : memref<72x8x128xf32, #tpu.memory_space<vmem>>, vector<1x8x128xf32>
    %3435 = vector.shape_cast %3434 : vector<1x8x128xf32> to vector<8x128xf32>
    %c71_1654 = arith.constant 71 : index
    %c0_1655 = arith.constant 0 : index
    %c0_1656 = arith.constant 0 : index
    %3436 = vector.load %arg2[%c71_1654, %c0_1655, %c0_1656] : memref<72x8x128xf32, #tpu.memory_space<vmem>>, vector<1x8x128xf32>
    %3437 = vector.shape_cast %3436 : vector<1x8x128xf32> to vector<8x128xf32>
    %3438 = arith.mulf %3415, %3433 : vector<8x128xf32>
    %3439 = arith.mulf %3417, %3435 : vector<8x128xf32>
    %3440 = arith.addf %3438, %3439 : vector<8x128xf32>
    %3441 = arith.mulf %3419, %3437 : vector<8x128xf32>
    %3442 = arith.addf %3440, %3441 : vector<8x128xf32>
    %3443 = arith.mulf %3421, %3433 : vector<8x128xf32>
    %3444 = arith.mulf %3423, %3435 : vector<8x128xf32>
    %3445 = arith.addf %3443, %3444 : vector<8x128xf32>
    %3446 = arith.mulf %3425, %3437 : vector<8x128xf32>
    %3447 = arith.addf %3445, %3446 : vector<8x128xf32>
    %3448 = arith.mulf %3427, %3433 : vector<8x128xf32>
    %3449 = arith.mulf %3429, %3435 : vector<8x128xf32>
    %3450 = arith.addf %3448, %3449 : vector<8x128xf32>
    %3451 = arith.mulf %3431, %3437 : vector<8x128xf32>
    %3452 = arith.addf %3450, %3451 : vector<8x128xf32>
    %3453 = arith.addf %3442, %3225 : vector<8x128xf32>
    %3454 = arith.addf %3447, %3226 : vector<8x128xf32>
    %3455 = arith.addf %3452, %3227 : vector<8x128xf32>
    %c69_1657 = arith.constant 69 : index
    %c0_1658 = arith.constant 0 : index
    %c0_1659 = arith.constant 0 : index
    %3456 = vector.load %arg3[%c69_1657, %c0_1658, %c0_1659] : memref<72x8x128xf32, #tpu.memory_space<vmem>>, vector<1x8x128xf32>
    %3457 = vector.shape_cast %3456 : vector<1x8x128xf32> to vector<8x128xf32>
    %3458 = vector.shape_cast %3453 : vector<8x128xf32> to vector<1x8x128xf32>
    tpu.vector_store %arg3[%c69_1657, %c0_1658, %c0_1659], %3458 {strides = array<i32>} : memref<72x8x128xf32, #tpu.memory_space<vmem>>, vector<1x8x128xf32>,
    %c70_1660 = arith.constant 70 : index
    %c0_1661 = arith.constant 0 : index
    %c0_1662 = arith.constant 0 : index
    %3459 = vector.load %arg3[%c70_1660, %c0_1661, %c0_1662] : memref<72x8x128xf32, #tpu.memory_space<vmem>>, vector<1x8x128xf32>
    %3460 = vector.shape_cast %3459 : vector<1x8x128xf32> to vector<8x128xf32>
    %3461 = vector.shape_cast %3454 : vector<8x128xf32> to vector<1x8x128xf32>
    tpu.vector_store %arg3[%c70_1660, %c0_1661, %c0_1662], %3461 {strides = array<i32>} : memref<72x8x128xf32, #tpu.memory_space<vmem>>, vector<1x8x128xf32>,
    %c71_1663 = arith.constant 71 : index
    %c0_1664 = arith.constant 0 : index
    %c0_1665 = arith.constant 0 : index
    %3462 = vector.load %arg3[%c71_1663, %c0_1664, %c0_1665] : memref<72x8x128xf32, #tpu.memory_space<vmem>>, vector<1x8x128xf32>
    %3463 = vector.shape_cast %3462 : vector<1x8x128xf32> to vector<8x128xf32>
    %3464 = vector.shape_cast %3455 : vector<8x128xf32> to vector<1x8x128xf32>
    tpu.vector_store %arg3[%c71_1663, %c0_1664, %c0_1665], %3464 {strides = array<i32>} : memref<72x8x128xf32, #tpu.memory_space<vmem>>, vector<1x8x128xf32>,
    return
  }
  func.func @transform_0(%arg0: i32) -> (i32, i32, i32) {
    %c0_i32 = arith.constant 0 : i32
    %c0_i32_0 = arith.constant 0 : i32
    %c0_i32_1 = arith.constant 0 : i32
    return %arg0, %c0_i32, %c0_i32_0 : i32, i32, i32
  }
  func.func @transform_1(%arg0: i32) -> (i32, i32, i32) {
    %c0_i32 = arith.constant 0 : i32
    %c0_i32_0 = arith.constant 0 : i32
    %c0_i32_1 = arith.constant 0 : i32
    return %arg0, %c0_i32, %c0_i32_0 : i32, i32, i32
  }
  func.func @transform_2(%arg0: i32) -> (i32, i32, i32) {
    %c0_i32 = arith.constant 0 : i32
    %c0_i32_0 = arith.constant 0 : i32
    %c0_i32_1 = arith.constant 0 : i32
    return %arg0, %c0_i32, %c0_i32_0 : i32, i32, i32
  }
}

</mosaic_0001>

<llo_original>
// kernel: fk.1
$region0: #{fk.1}
  #allocation0 [shape = 'u32[]', space=smem, size = 0x4, offset = 0x4, fixed_abs, tag = 'smem constant byte address 0x4 - core index']
  #allocation1 [shape = 'u32[144,128]{1,0:T(1,128)}', space=vmem, size = 0x12000, scoped, tag = 'internal scratch']
  #allocation2 [shape = 'f32[171,8,128]{2,1,0:T(8,128)}', space=vmem, size = 0xab000, scoped, tag = 'scratch operand']
  %s0 = inlined_call_operand.vmem [shape: f32[144,8,128], index: 0, kind: input, shape index: {}]
  %s1 = inlined_call_operand.vmem [shape: f32[72,8,128], index: 1, kind: input, shape index: {}]
  %s2 = inlined_call_operand.vmem [shape: f32[72,8,128], index: 2, kind: output, shape index: {}]
  %s3 = sld [smem:[#allocation0]]
  $region18: #{fk.1} parent=0
    _
  %s5 = ssub.s32 1, %s3
  %s6 = scalar_select 0, %s5, %s3
  // Predicated region
  $region2: #{fk.1} parent=0 // pred_check
    _
  $region3: #{fk.1} parent=0 // pred_check_branch
    %8 = sbr.rel (0) target = $region5
  $region4: #{fk.1} parent=0 // pred_region
    _
  $region5: #{fk.1} parent=0 // pred_fallthru
    _
  // Predicated region
  $region6: #{fk.1} parent=0 // pred_check
    _
  $region7: #{fk.1} parent=0 // pred_check_branch
    %10 = sbr.rel (0) target = $region9
  $region8: #{fk.1} parent=0 // pred_region
    _
  $region9: #{fk.1} parent=0 // pred_fallthru
    _
  %v11 = vld [vmem:[%s1] sm:$0xff]
  %s12 = scalar_lea.vmem %s1, 8
  %v13 = vld [vmem:[%s12] sm:$0xff]
  %s14 = scalar_lea.vmem %s1, 16
  %v15 = vld [vmem:[%s14] sm:$0xff]
  %16 = vst [vmem:[%s2] sm:$0xff] %v11
  %s17 = scalar_lea.vmem %s2, 8
  %18 = vst [vmem:[%s17] sm:$0xff] %v13
  %s19 = scalar_lea.vmem %s2, 16
  %20 = vst [vmem:[%s19] sm:$0xff] %v15
  %v21 = vld [vmem:[%s0] sm:$0xff]
  %s22 = scalar_lea.vmem %s0, 8
  %v23 = vld [vmem:[%s22] sm:$0xff]
  %s24 = scalar_lea.vmem %s0, 16
  %v25 = vld [vmem:[%s24] sm:$0xff]
  %s26 = scalar_lea.vmem %s0, 24
  %v27 = vld [vmem:[%s26] sm:$0xff]
  %s28 = scalar_lea.vmem %s0, 32
  %v29 = vld [vmem:[%s28] sm:$0xff]
  %s30 = scalar_lea.vmem %s0, 40
  %v31 = vld [vmem:[%s30] sm:$0xff]
  %v32 = vmul.f32 %v21, %v21
  %v33 = vmul.f32 %v23, %v23
  %v34 = vadd.f32 %v32, %v33
  %v35 = vmul.f32 %v25, %v25
  %v36 = vadd.f32 %v34, %v35
  %v37 = vmax.f32 %v36, 1e-24
  %v38 = vrsqrt.pop %v37
  %v39 = vmul.f32 %v21, %v38
  %v40 = vmul.f32 %v23, %v38
  %v41 = vmul.f32 %v25, %v38
  %v42 = vmul.f32 %v39, %v27
  %v43 = vmul.f32 %v40, %v29
  %v44 = vadd.f32 %v42, %v43
  %v45 = vmul.f32 %v41, %v31
  %v46 = vadd.f32 %v44, %v45
  %v47 = vmul.f32 %v46, %v39
  %v48 = vsub.f32 %v27, %v47
  %v49 = vmul.f32 %v46, %v40
  %v50 = vsub.f32 %v29, %v49
  %v51 = vmul.f32 %v46, %v41
  %v52 = vsub.f32 %v31, %v51
  %v53 = vmul.f32 %v48, %v48
  %v54 = vmul.f32 %v50, %v50
  %v55 = vadd.f32 %v53, %v54
  %v56 = vmul.f32 %v52, %v52
  %v57 = vadd.f32 %v55, %v56
  %v58 = vmax.f32 %v57, 1e-24
  %v59 = vrsqrt.pop %v58
  %v60 = vmul.f32 %v48, %v59
  %v61 = vmul.f32 %v50, %v59
  %v62 = vmul.f32 %v52, %v59
  %v63 = vmul.f32 %v40, %v62
  %v64 = vmul.f32 %v41, %v61
  %v65 = vsub.f32 %v63, %v64
  %v66 = vmul.f32 %v41, %v60
  %v67 = vmul.f32 %v39, %v62
  %v68 = vsub.f32 %v66, %v67
  %v69 = vmul.f32 %v39, %v61
  %v70 = vmul.f32 %v40, %v60
  %v71 = vsub.f32 %v69, %v70
  %72 = vst [vmem:[#allocation2] sm:$0xff] %v39
  %s73 = scalar_lea.vmem [#allocation2], 8
  %74 = vst [vmem:[%s73] sm:$0xff] %v40
  %s75 = scalar_lea.vmem [#allocation2], 16
  %76 = vst [vmem:[%s75] sm:$0xff] %v41
  %s77 = scalar_lea.vmem [#allocation2], 24
  %78 = vst [vmem:[%s77] sm:$0xff] %v60
  %s79 = scalar_lea.vmem [#allocation2], 32
  %80 = vst [vmem:[%s79] sm:$0xff] %v61
  %s81 = scalar_lea.vmem [#allocation2], 40
  %82 = vst [vmem:[%s81] sm:$0xff] %v62
  %s83 = scalar_lea.vmem [#allocation2], 48
  %84 = vst [vmem:[%s83] sm:$0xff] %v65
  %s85 = scalar_lea.vmem [#allocation2], 56
  %86 = vst [vmem:[%s85] sm:$0xff] %v68
  %s87 = scalar_lea.vmem [#allocation2], 64
  %88 = vst [vmem:[%s87] sm:$0xff] %v71
  %v89 = vld [vmem:[#allocation2] sm:$0xff]
  %v90 = vld [vmem:[%s73] sm:$0xff]
  %v91 = vld [vmem:[%s75] sm:$0xff]
  %v92 = vld [vmem:[%s77] sm:$0xff]
  %v93 = vld [vmem:[%s79] sm:$0xff]
  %v94 = vld [vmem:[%s81] sm:$0xff]
  %v95 = vld [vmem:[%s83] sm:$0xff]
  %v96 = vld [vmem:[%s85] sm:$0xff]
  %v97 = vld [vmem:[%s87] sm:$0xff]
  %s98 = scalar_lea.vmem %s1, 24
  %v99 = vld [vmem:[%s98] sm:$0xff]
  %s100 = scalar_lea.vmem %s1, 32
  %v101 = vld [vmem:[%s100] sm:$0xff]
  %s102 = scalar_lea.vmem %s1, 40
  %v103 = vld [vmem:[%s102] sm:$0xff]
  %v104 = vmul.f32 %v89, %v99
  %v105 = vmul.f32 %v90, %v101
  %v106 = vadd.f32 %v104, %v105
  %v107 = vmul.f32 %v91, %v103
  %v108 = vadd.f32 %v106, %v107
  %v109 = vmul.f32 %v92, %v99
  %v110 = vmul.f32 %v93, %v101
  %v111 = vadd.f32 %v109, %v110
  %v112 = vmul.f32 %v94, %v103
  %v113 = vadd.f32 %v111, %v112
  %v114 = vmul.f32 %v95, %v99
  %v115 = vmul.f32 %v96, %v101
  %v116 = vadd.f32 %v114, %v115
  %v117 = vmul.f32 %v97, %v103
  %v118 = vadd.f32 %v116, %v117
  %v119 = vadd.f32 %v108, %v11
  %v120 = vadd.f32 %v113, %v13
  %v121 = vadd.f32 %v118, %v15
  %s122 = scalar_lea.vmem %s2, 24
  %123 = vst [vmem:[%s122] sm:$0xff] %v119
  %s124 = scalar_lea.vmem %s2, 32
  %125 = vst [vmem:[%s124] sm:$0xff] %v120
  %s126 = scalar_lea.vmem %s2, 40
  %127 = vst [vmem:[%s126] sm:$0xff] %v121
  %s128 = scalar_lea.vmem %s0, 48
  %v129 = vld [vmem:[%s128] sm:$0xff]
  %s130 = scalar_lea.vmem %s0, 56
  %v131 = vld [vmem:[%s130] sm:$0xff]
  %s132 = scalar_lea.vmem %s0, 64
  %v133 = vld [vmem:[%s132] sm:$0xff]
  %s134 = scalar_lea.vmem %s0, 72
  %v135 = vld [vmem:[%s134] sm:$0xff]
  %s136 = scalar_lea.vmem %s0, 80
  %v137 = vld [vmem:[%s136] sm:$0xff]
  %s138 = scalar_lea.vmem %s0, 88
  %v139 = vld [vmem:[%s138] sm:$0xff]
  %v140 = vmul.f32 %v129, %v129
  %v141 = vmul.f32 %v131, %v131
  %v142 = vadd.f32 %v140, %v141
  %v143 = vmul.f32 %v133, %v133
  %v144 = vadd.f32 %v142, %v143
  %v145 = vmax.f32 %v144, 1e-24
  %v146 = vrsqrt.pop %v145
  %v147 = vmul.f32 %v129, %v146
  %v148 = vmul.f32 %v131, %v146
  %v149 = vmul.f32 %v133, %v146
  %v150 = vmul.f32 %v147, %v135
  %v151 = vmul.f32 %v148, %v137
  %v152 = vadd.f32 %v150, %v151
  %v153 = vmul.f32 %v149, %v139
  %v154 = vadd.f32 %v152, %v153
  %v155 = vmul.f32 %v154, %v147
  %v156 = vsub.f32 %v135, %v155
  %v157 = vmul.f32 %v154, %v148
  %v158 = vsub.f32 %v137, %v157
  %v159 = vmul.f32 %v154, %v149
  %v160 = vsub.f32 %v139, %v159
  %v161 = vmul.f32 %v156, %v156
  %v162 = vmul.f32 %v158, %v158
  %v163 = vadd.f32 %v161, %v162
  %v164 = vmul.f32 %v160, %v160
  %v165 = vadd.f32 %v163, %v164
  %v166 = vmax.f32 %v165, 1e-24
  %v167 = vrsqrt.pop %v166
  %v168 = vmul.f32 %v156, %v167
  %v169 = vmul.f32 %v158, %v167
  %v170 = vmul.f32 %v160, %v167
  %v171 = vmul.f32 %v148, %v170
  %v172 = vmul.f32 %v149, %v169
  %v173 = vsub.f32 %v171, %v172
  %v174 = vmul.f32 %v149, %v168
  %v175 = vmul.f32 %v147, %v170
  %v176 = vsub.f32 %v174, %v175
  %v177 = vmul.f32 %v147, %v169
  %v178 = vmul.f32 %v148, %v168
  %v179 = vsub.f32 %v177, %v178
  %v180 = vmul.f32 %v89, %v147
  %v181 = vmul.f32 %v90, %v168
  %v182 = vadd.f32 %v180, %v181
  %v183 = vmul.f32 %v91, %v173
  %v184 = vadd.f32 %v182, %v183
  %v185 = vmul.f32 %v89, %v148
  %v186 = vmul.f32 %v90, %v169
  %v187 = vadd.f32 %v185, %v186
  %v188 = vmul.f32 %v91, %v176
  %v189 = vadd.f32 %v187, %v188
  %v190 = vmul.f32 %v89, %v149
  %v191 = vmul.f32 %v90, %v170
  %v192 = vadd.f32 %v190, %v191
  %v193 = vmul.f32 %v91, %v179
  %v194 = vadd.f32 %v192, %v193
  %v195 = vmul.f32 %v92, %v147
  %v196 = vmul.f32 %v93, %v168
  %v197 = vadd.f32 %v195, %v196
  %v198 = vmul.f32 %v94, %v173
  %v199 = vadd.f32 %v197, %v198
  %v200 = vmul.f32 %v92, %v148
  %v201 = vmul.f32 %v93, %v169
  %v202 = vadd.f32 %v200, %v201
  %v203 = vmul.f32 %v94, %v176
  %v204 = vadd.f32 %v202, %v203
  %v205 = vmul.f32 %v92, %v149
  %v206 = vmul.f32 %v93, %v170
  %v207 = vadd.f32 %v205, %v206
  %v208 = vmul.f32 %v94, %v179
  %v209 = vadd.f32 %v207, %v208
  %v210 = vmul.f32 %v95, %v147
  %v211 = vmul.f32 %v96, %v168
  %v212 = vadd.f32 %v210, %v211
  %v213 = vmul.f32 %v97, %v173
  %v214 = vadd.f32 %v212, %v213
  %v215 = vmul.f32 %v95, %v148
  %v216 = vmul.f32 %v96, %v169
  %v217 = vadd.f32 %v215, %v216
  %v218 = vmul.f32 %v97, %v176
  %v219 = vadd.f32 %v217, %v218
  %v220 = vmul.f32 %v95, %v149
  %v221 = vmul.f32 %v96, %v170
  %v222 = vadd.f32 %v220, %v221
  %v223 = vmul.f32 %v97, %v179
  %v224 = vadd.f32 %v222, %v223
  %s225 = scalar_lea.vmem [#allocation2], 72
  %226 = vst [vmem:[%s225] sm:$0xff] %v184
  %s227 = scalar_lea.vmem [#allocation2], 80
  %228 = vst [vmem:[%s227] sm:$0xff] %v189
  %s229 = scalar_lea.vmem [#allocation2], 88
  %230 = vst [vmem:[%s229] sm:$0xff] %v194
  %s231 = scalar_lea.vmem [#allocation2], 96
  %232 = vst [vmem:[%s231] sm:$0xff] %v199
  %s233 = scalar_lea.vmem [#allocation2], 104
  %234 = vst [vmem:[%s233] sm:$0xff] %v204
  %s235 = scalar_lea.vmem [#allocation2], 112
  %236 = vst [vmem:[%s235] sm:$0xff] %v209
  %s237 = scalar_lea.vmem [#allocation2], 120
  %238 = vst [vmem:[%s237] sm:$0xff] %v214
  %s239 = scalar_lea.vmem [#allocation2], 128
  %240 = vst [vmem:[%s239] sm:$0xff] %v219
  %s241 = scalar_lea.vmem [#allocation2], 136
  %242 = vst [vmem:[%s241] sm:$0xff] %v224
  %s243 = scalar_lea.vmem %s1, 48
  %v244 = vld [vmem:[%s243] sm:$0xff]
  %s245 = scalar_lea.vmem %s1, 56
  %v246 = vld [vmem:[%s245] sm:$0xff]
  %s247 = scalar_lea.vmem %s1, 64
  %v248 = vld [vmem:[%s247] sm:$0xff]
  %v249 = vmul.f32 %v89, %v244
  %v250 = vmul.f32 %v90, %v246
  %v251 = vadd.f32 %v249, %v250
  %v252 = vmul.f32 %v91, %v248
  %v253 = vadd.f32 %v251, %v252
  %v254 = vmul.f32 %v92, %v244
  %v255 = vmul.f32 %v93, %v246
  %v256 = vadd.f32 %v254, %v255
  %v257 = vmul.f32 %v94, %v248
  %v258 = vadd.f32 %v256, %v257
  %v259 = vmul.f32 %v95, %v244
  %v260 = vmul.f32 %v96, %v246
  %v261 = vadd.f32 %v259, %v260
  %v262 = vmul.f32 %v97, %v248
  %v263 = vadd.f32 %v261, %v262
  %v264 = vadd.f32 %v253, %v11
  %v265 = vadd.f32 %v258, %v13
  %v266 = vadd.f32 %v263, %v15
  %s267 = scalar_lea.vmem %s2, 48
  %268 = vst [vmem:[%s267] sm:$0xff] %v264
  %s269 = scalar_lea.vmem %s2, 56
  %270 = vst [vmem:[%s269] sm:$0xff] %v265
  %s271 = scalar_lea.vmem %s2, 64
  %272 = vst [vmem:[%s271] sm:$0xff] %v266
  %s273 = scalar_lea.vmem %s0, 96
  %v274 = vld [vmem:[%s273] sm:$0xff]
  %s275 = scalar_lea.vmem %s0, 104
  %v276 = vld [vmem:[%s275] sm:$0xff]
  %s277 = scalar_lea.vmem %s0, 112
  %v278 = vld [vmem:[%s277] sm:$0xff]
  %s279 = scalar_lea.vmem %s0, 120
  %v280 = vld [vmem:[%s279] sm:$0xff]
  %s281 = scalar_lea.vmem %s0, 128
  %v282 = vld [vmem:[%s281] sm:$0xff]
  %s283 = scalar_lea.vmem %s0, 136
  %v284 = vld [vmem:[%s283] sm:$0xff]
  %v285 = vmul.f32 %v274, %v274
  %v286 = vmul.f32 %v276, %v276
  %v287 = vadd.f32 %v285, %v286
  %v288 = vmul.f32 %v278, %v278
  %v289 = vadd.f32 %v287, %v288
  %v290 = vmax.f32 %v289, 1e-24
  %v291 = vrsqrt.pop %v290
  %v292 = vmul.f32 %v274, %v291
  %v293 = vmul.f32 %v276, %v291
  %v294 = vmul.f32 %v278, %v291
  %v295 = vmul.f32 %v292, %v280
  %v296 = vmul.f32 %v293, %v282
  %v297 = vadd.f32 %v295, %v296
  %v298 = vmul.f32 %v294, %v284
  %v299 = vadd.f32 %v297, %v298
  %v300 = vmul.f32 %v299, %v292
  %v301 = vsub.f32 %v280, %v300
  %v302 = vmul.f32 %v299, %v293
  %v303 = vsub.f32 %v282, %v302
  %v304 = vmul.f32 %v299, %v294
  %v305 = vsub.f32 %v284, %v304
  %v306 = vmul.f32 %v301, %v301
  %v307 = vmul.f32 %v303, %v303
  %v308 = vadd.f32 %v306, %v307
  %v309 = vmul.f32 %v305, %v305
  %v310 = vadd.f32 %v308, %v309
  %v311 = vmax.f32 %v310, 1e-24
  %v312 = vrsqrt.pop %v311
  %v313 = vmul.f32 %v301, %v312
  %v314 = vmul.f32 %v303, %v312
  %v315 = vmul.f32 %v305, %v312
  %v316 = vmul.f32 %v293, %v315
  %v317 = vmul.f32 %v294, %v314
  %v318 = vsub.f32 %v316, %v317
  %v319 = vmul.f32 %v294, %v313
  %v320 = vmul.f32 %v292, %v315
  %v321 = vsub.f32 %v319, %v320
  %v322 = vmul.f32 %v292, %v314
  %v323 = vmul.f32 %v293, %v313
  %v324 = vsub.f32 %v322, %v323
  %v325 = vmul.f32 %v89, %v292
  %v326 = vmul.f32 %v90, %v313
  %v327 = vadd.f32 %v325, %v326
  %v328 = vmul.f32 %v91, %v318
  %v329 = vadd.f32 %v327, %v328
  %v330 = vmul.f32 %v89, %v293
  %v331 = vmul.f32 %v90, %v314
  %v332 = vadd.f32 %v330, %v331
  %v333 = vmul.f32 %v91, %v321
  %v334 = vadd.f32 %v332, %v333
  %v335 = vmul.f32 %v89, %v294
  %v336 = vmul.f32 %v90, %v315
  %v337 = vadd.f32 %v335, %v336
  %v338 = vmul.f32 %v91, %v324
  %v339 = vadd.f32 %v337, %v338
  %v340 = vmul.f32 %v92, %v292
  %v341 = vmul.f32 %v93, %v313
  %v342 = vadd.f32 %v340, %v341
  %v343 = vmul.f32 %v94, %v318
  %v344 = vadd.f32 %v342, %v343
  %v345 = vmul.f32 %v92, %v293
  %v346 = vmul.f32 %v93, %v314
  %v347 = vadd.f32 %v345, %v346
  %v348 = vmul.f32 %v94, %v321
  %v349 = vadd.f32 %v347, %v348
  %v350 = vmul.f32 %v92, %v294
  %v351 = vmul.f32 %v93, %v315
  %v352 = vadd.f32 %v350, %v351
  %v353 = vmul.f32 %v94, %v324
  %v354 = vadd.f32 %v352, %v353
  %v355 = vmul.f32 %v95, %v292
  %v356 = vmul.f32 %v96, %v313
  %v357 = vadd.f32 %v355, %v356
  %v358 = vmul.f32 %v97, %v318
  %v359 = vadd.f32 %v357, %v358
  %v360 = vmul.f32 %v95, %v293
  %v361 = vmul.f32 %v96, %v314
  %v362 = vadd.f32 %v360, %v361
  %v363 = vmul.f32 %v97, %v321
  %v364 = vadd.f32 %v362, %v363
  %v365 = vmul.f32 %v95, %v294
  %v366 = vmul.f32 %v96, %v315
  %v367 = vadd.f32 %v365, %v366
  %v368 = vmul.f32 %v97, %v324
  %v369 = vadd.f32 %v367, %v368
  %s370 = scalar_lea.vmem [#allocation2], 144
  %371 = vst [vmem:[%s370] sm:$0xff] %v329
  %s372 = scalar_lea.vmem [#allocation2], 152
  %373 = vst [vmem:[%s372] sm:$0xff] %v334
  %s374 = scalar_lea.vmem [#allocation2], 160
  %375 = vst [vmem:[%s374] sm:$0xff] %v339
  %s376 = scalar_lea.vmem [#allocation2], 168
  %377 = vst [vmem:[%s376] sm:$0xff] %v344
  %s378 = scalar_lea.vmem [#allocation2], 176
  %379 = vst [vmem:[%s378] sm:$0xff] %v349
  %s380 = scalar_lea.vmem [#allocation2], 184
  %381 = vst [vmem:[%s380] sm:$0xff] %v354
  %s382 = scalar_lea.vmem [#allocation2], 192
  %383 = vst [vmem:[%s382] sm:$0xff] %v359
  %s384 = scalar_lea.vmem [#allocation2], 200
  %385 = vst [vmem:[%s384] sm:$0xff] %v364
  %s386 = scalar_lea.vmem [#allocation2], 208
  %387 = vst [vmem:[%s386] sm:$0xff] %v369
  %s388 = scalar_lea.vmem %s1, 72
  %v389 = vld [vmem:[%s388] sm:$0xff]
  %s390 = scalar_lea.vmem %s1, 80
  %v391 = vld [vmem:[%s390] sm:$0xff]
  %s392 = scalar_lea.vmem %s1, 88
  %v393 = vld [vmem:[%s392] sm:$0xff]
  %v394 = vmul.f32 %v89, %v389
  %v395 = vmul.f32 %v90, %v391
  %v396 = vadd.f32 %v394, %v395
  %v397 = vmul.f32 %v91, %v393
  %v398 = vadd.f32 %v396, %v397
  %v399 = vmul.f32 %v92, %v389
  %v400 = vmul.f32 %v93, %v391
  %v401 = vadd.f32 %v399, %v400
  %v402 = vmul.f32 %v94, %v393
  %v403 = vadd.f32 %v401, %v402
  %v404 = vmul.f32 %v95, %v389
  %v405 = vmul.f32 %v96, %v391
  %v406 = vadd.f32 %v404, %v405
  %v407 = vmul.f32 %v97, %v393
  %v408 = vadd.f32 %v406, %v407
  %v409 = vadd.f32 %v398, %v11
  %v410 = vadd.f32 %v403, %v13
  %v411 = vadd.f32 %v408, %v15
  %s412 = scalar_lea.vmem %s2, 72
  %413 = vst [vmem:[%s412] sm:$0xff] %v409
  %s414 = scalar_lea.vmem %s2, 80
  %415 = vst [vmem:[%s414] sm:$0xff] %v410
  %s416 = scalar_lea.vmem %s2, 88
  %417 = vst [vmem:[%s416] sm:$0xff] %v411
  %s418 = scalar_lea.vmem %s0, 144
  %v419 = vld [vmem:[%s418] sm:$0xff]
  %s420 = scalar_lea.vmem %s0, 152
  %v421 = vld [vmem:[%s420] sm:$0xff]
  %s422 = scalar_lea.vmem %s0, 160
  %v423 = vld [vmem:[%s422] sm:$0xff]
  %s424 = scalar_lea.vmem %s0, 168
  %v425 = vld [vmem:[%s424] sm:$0xff]
  %s426 = scalar_lea.vmem %s0, 176
  %v427 = vld [vmem:[%s426] sm:$0xff]
  %s428 = scalar_lea.vmem %s0, 184
  %v429 = vld [vmem:[%s428] sm:$0xff]
  %v430 = vmul.f32 %v419, %v419
  %v431 = vmul.f32 %v421, %v421
  %v432 = vadd.f32 %v430, %v431
  %v433 = vmul.f32 %v423, %v423
  %v434 = vadd.f32 %v432, %v433
  %v435 = vmax.f32 %v434, 1e-24
  %v436 = vrsqrt.pop %v435
  %v437 = vmul.f32 %v419, %v436
  %v438 = vmul.f32 %v421, %v436
  %v439 = vmul.f32 %v423, %v436
  %v440 = vmul.f32 %v437, %v425
  %v441 = vmul.f32 %v438, %v427
  %v442 = vadd.f32 %v440, %v441
  %v443 = vmul.f32 %v439, %v429
  %v444 = vadd.f32 %v442, %v443
  %v445 = vmul.f32 %v444, %v437
  %v446 = vsub.f32 %v425, %v445
  %v447 = vmul.f32 %v444, %v438
  %v448 = vsub.f32 %v427, %v447
  %v449 = vmul.f32 %v444, %v439
  %v450 = vsub.f32 %v429, %v449
  %v451 = vmul.f32 %v446, %v446
  %v452 = vmul.f32 %v448, %v448
  %v453 = vadd.f32 %v451, %v452
  %v454 = vmul.f32 %v450, %v450
  %v455 = vadd.f32 %v453, %v454
  %v456 = vmax.f32 %v455, 1e-24
  %v457 = vrsqrt.pop %v456
  %v458 = vmul.f32 %v446, %v457
  %v459 = vmul.f32 %v448, %v457
  %v460 = vmul.f32 %v450, %v457
  %v461 = vmul.f32 %v438, %v460
  %v462 = vmul.f32 %v439, %v459
  %v463 = vsub.f32 %v461, %v462
  %v464 = vmul.f32 %v439, %v458
  %v465 = vmul.f32 %v437, %v460
  %v466 = vsub.f32 %v464, %v465
  %v467 = vmul.f32 %v437, %v459
  %v468 = vmul.f32 %v438, %v458
  %v469 = vsub.f32 %v467, %v468
  %v470 = vmul.f32 %v89, %v437
  %v471 = vmul.f32 %v90, %v458
  %v472 = vadd.f32 %v470, %v471
  %v473 = vmul.f32 %v91, %v463
  %v474 = vadd.f32 %v472, %v473
  %v475 = vmul.f32 %v89, %v438
  %v476 = vmul.f32 %v90, %v459
  %v477 = vadd.f32 %v475, %v476
  %v478 = vmul.f32 %v91, %v466
  %v479 = vadd.f32 %v477, %v478
  %v480 = vmul.f32 %v89, %v439
  %v481 = vmul.f32 %v90, %v460
  %v482 = vadd.f32 %v480, %v481
  %v483 = vmul.f32 %v91, %v469
  %v484 = vadd.f32 %v482, %v483
  %v485 = vmul.f32 %v92, %v437
  %v486 = vmul.f32 %v93, %v458
  %v487 = vadd.f32 %v485, %v486
  %v488 = vmul.f32 %v94, %v463
  %v489 = vadd.f32 %v487, %v488
  %v490 = vmul.f32 %v92, %v438
  %v491 = vmul.f32 %v93, %v459
  %v492 = vadd.f32 %v490, %v491
  %v493 = vmul.f32 %v94, %v466
  %v494 = vadd.f32 %v492, %v493
  %v495 = vmul.f32 %v92, %v439
  %v496 = vmul.f32 %v93, %v460
  %v497 = vadd.f32 %v495, %v496
  %v498 = vmul.f32 %v94, %v469
  %v499 = vadd.f32 %v497, %v498
  %v500 = vmul.f32 %v95, %v437
  %v501 = vmul.f32 %v96, %v458
  %v502 = vadd.f32 %v500, %v501
  %v503 = vmul.f32 %v97, %v463
  %v504 = vadd.f32 %v502, %v503
  %v505 = vmul.f32 %v95, %v438
  %v506 = vmul.f32 %v96, %v459
  %v507 = vadd.f32 %v505, %v506
  %v508 = vmul.f32 %v97, %v466
  %v509 = vadd.f32 %v507, %v508
  %v510 = vmul.f32 %v95, %v439
  %v511 = vmul.f32 %v96, %v460
  %v512 = vadd.f32 %v510, %v511
  %v513 = vmul.f32 %v97, %v469
  %v514 = vadd.f32 %v512, %v513
  %s515 = scalar_lea.vmem [#allocation2], 216
  %516 = vst [vmem:[%s515] sm:$0xff] %v474
  %s517 = scalar_lea.vmem [#allocation2], 224
  %518 = vst [vmem:[%s517] sm:$0xff] %v479
  %s519 = scalar_lea.vmem [#allocation2], 232
  %520 = vst [vmem:[%s519] sm:$0xff] %v484
  %s521 = scalar_lea.vmem [#allocation2], 240
  %522 = vst [vmem:[%s521] sm:$0xff] %v489
  %s523 = scalar_lea.vmem [#allocation2], 248
  %524 = vst [vmem:[%s523] sm:$0xff] %v494
  %s525 = scalar_lea.vmem [#allocation2], 256
  %526 = vst [vmem:[%s525] sm:$0xff] %v499
  %s527 = scalar_lea.vmem [#allocation2], 264
  %528 = vst [vmem:[%s527] sm:$0xff] %v504
  %s529 = scalar_lea.vmem [#allocation2], 272
  %530 = vst [vmem:[%s529] sm:$0xff] %v509
  %s531 = scalar_lea.vmem [#allocation2], 280
  %532 = vst [vmem:[%s531] sm:$0xff] %v514
  %v533 = vld [vmem:[%s225] sm:$0xff]
  %v534 = vld [vmem:[%s227] sm:$0xff]
  %v535 = vld [vmem:[%s229] sm:$0xff]
  %v536 = vld [vmem:[%s231] sm:$0xff]
  %v537 = vld [vmem:[%s233] sm:$0xff]
  %v538 = vld [vmem:[%s235] sm:$0xff]
  %v539 = vld [vmem:[%s237] sm:$0xff]
  %v540 = vld [vmem:[%s239] sm:$0xff]
  %v541 = vld [vmem:[%s241] sm:$0xff]
  %s542 = scalar_lea.vmem %s1, 96
  %v543 = vld [vmem:[%s542] sm:$0xff]
  %s544 = scalar_lea.vmem %s1, 104
  %v545 = vld [vmem:[%s544] sm:$0xff]
  %s546 = scalar_lea.vmem %s1, 112
  %v547 = vld [vmem:[%s546] sm:$0xff]
  %v548 = vmul.f32 %v533, %v543
  %v549 = vmul.f32 %v534, %v545
  %v550 = vadd.f32 %v548, %v549
  %v551 = vmul.f32 %v535, %v547
  %v552 = vadd.f32 %v550, %v551
  %v553 = vmul.f32 %v536, %v543
  %v554 = vmul.f32 %v537, %v545
  %v555 = vadd.f32 %v553, %v554
  %v556 = vmul.f32 %v538, %v547
  %v557 = vadd.f32 %v555, %v556
  %v558 = vmul.f32 %v539, %v543
  %v559 = vmul.f32 %v540, %v545
  %v560 = vadd.f32 %v558, %v559
  %v561 = vmul.f32 %v541, %v547
  %v562 = vadd.f32 %v560, %v561
  %v563 = vadd.f32 %v552, %v119
  %v564 = vadd.f32 %v557, %v120
  %v565 = vadd.f32 %v562, %v121
  %s566 = scalar_lea.vmem %s2, 96
  %567 = vst [vmem:[%s566] sm:$0xff] %v563
  %s568 = scalar_lea.vmem %s2, 104
  %569 = vst [vmem:[%s568] sm:$0xff] %v564
  %s570 = scalar_lea.vmem %s2, 112
  %571 = vst [vmem:[%s570] sm:$0xff] %v565
  %s572 = scalar_lea.vmem %s0, 192
  %v573 = vld [vmem:[%s572] sm:$0xff]
  %s574 = scalar_lea.vmem %s0, 200
  %v575 = vld [vmem:[%s574] sm:$0xff]
  %s576 = scalar_lea.vmem %s0, 208
  %v577 = vld [vmem:[%s576] sm:$0xff]
  %s578 = scalar_lea.vmem %s0, 216
  %v579 = vld [vmem:[%s578] sm:$0xff]
  %s580 = scalar_lea.vmem %s0, 224
  %v581 = vld [vmem:[%s580] sm:$0xff]
  %s582 = scalar_lea.vmem %s0, 232
  %v583 = vld [vmem:[%s582] sm:$0xff]
  %v584 = vmul.f32 %v573, %v573
  %v585 = vmul.f32 %v575, %v575
  %v586 = vadd.f32 %v584, %v585
  %v587 = vmul.f32 %v577, %v577
  %v588 = vadd.f32 %v586, %v587
  %v589 = vmax.f32 %v588, 1e-24
  %v590 = vrsqrt.pop %v589
  %v591 = vmul.f32 %v573, %v590
  %v592 = vmul.f32 %v575, %v590
  %v593 = vmul.f32 %v577, %v590
  %v594 = vmul.f32 %v591, %v579
  %v595 = vmul.f32 %v592, %v581
  %v596 = vadd.f32 %v594, %v595
  %v597 = vmul.f32 %v593, %v583
  %v598 = vadd.f32 %v596, %v597
  %v599 = vmul.f32 %v598, %v591
  %v600 = vsub.f32 %v579, %v599
  %v601 = vmul.f32 %v598, %v592
  %v602 = vsub.f32 %v581, %v601
  %v603 = vmul.f32 %v598, %v593
  %v604 = vsub.f32 %v583, %v603
  %v605 = vmul.f32 %v600, %v600
  %v606 = vmul.f32 %v602, %v602
  %v607 = vadd.f32 %v605, %v606
  %v608 = vmul.f32 %v604, %v604
  %v609 = vadd.f32 %v607, %v608
  %v610 = vmax.f32 %v609, 1e-24
  %v611 = vrsqrt.pop %v610
  %v612 = vmul.f32 %v600, %v611
  %v613 = vmul.f32 %v602, %v611
  %v614 = vmul.f32 %v604, %v611
  %v615 = vmul.f32 %v592, %v614
  %v616 = vmul.f32 %v593, %v613
  %v617 = vsub.f32 %v615, %v616
  %v618 = vmul.f32 %v593, %v612
  %v619 = vmul.f32 %v591, %v614
  %v620 = vsub.f32 %v618, %v619
  %v621 = vmul.f32 %v591, %v613
  %v622 = vmul.f32 %v592, %v612
  %v623 = vsub.f32 %v621, %v622
  %v624 = vmul.f32 %v533, %v591
  %v625 = vmul.f32 %v534, %v612
  %v626 = vadd.f32 %v624, %v625
  %v627 = vmul.f32 %v535, %v617
  %v628 = vadd.f32 %v626, %v627
  %v629 = vmul.f32 %v533, %v592
  %v630 = vmul.f32 %v534, %v613
  %v631 = vadd.f32 %v629, %v630
  %v632 = vmul.f32 %v535, %v620
  %v633 = vadd.f32 %v631, %v632
  %v634 = vmul.f32 %v533, %v593
  %v635 = vmul.f32 %v534, %v614
  %v636 = vadd.f32 %v634, %v635
  %v637 = vmul.f32 %v535, %v623
  %v638 = vadd.f32 %v636, %v637
  %v639 = vmul.f32 %v536, %v591
  %v640 = vmul.f32 %v537, %v612
  %v641 = vadd.f32 %v639, %v640
  %v642 = vmul.f32 %v538, %v617
  %v643 = vadd.f32 %v641, %v642
  %v644 = vmul.f32 %v536, %v592
  %v645 = vmul.f32 %v537, %v613
  %v646 = vadd.f32 %v644, %v645
  %v647 = vmul.f32 %v538, %v620
  %v648 = vadd.f32 %v646, %v647
  %v649 = vmul.f32 %v536, %v593
  %v650 = vmul.f32 %v537, %v614
  %v651 = vadd.f32 %v649, %v650
  %v652 = vmul.f32 %v538, %v623
  %v653 = vadd.f32 %v651, %v652
  %v654 = vmul.f32 %v539, %v591
  %v655 = vmul.f32 %v540, %v612
  %v656 = vadd.f32 %v654, %v655
  %v657 = vmul.f32 %v541, %v617
  %v658 = vadd.f32 %v656, %v657
  %v659 = vmul.f32 %v539, %v592
  %v660 = vmul.f32 %v540, %v613
  %v661 = vadd.f32 %v659, %v660
  %v662 = vmul.f32 %v541, %v620
  %v663 = vadd.f32 %v661, %v662
  %v664 = vmul.f32 %v539, %v593
  %v665 = vmul.f32 %v540, %v614
  %v666 = vadd.f32 %v664, %v665
  %v667 = vmul.f32 %v541, %v623
  %v668 = vadd.f32 %v666, %v667
  %s669 = scalar_lea.vmem [#allocation2], 288
  %670 = vst [vmem:[%s669] sm:$0xff] %v628
  %s671 = scalar_lea.vmem [#allocation2], 296
  %672 = vst [vmem:[%s671] sm:$0xff] %v633
  %s673 = scalar_lea.vmem [#allocation2], 304
  %674 = vst [vmem:[%s673] sm:$0xff] %v638
  %s675 = scalar_lea.vmem [#allocation2], 312
  %676 = vst [vmem:[%s675] sm:$0xff] %v643
  %s677 = scalar_lea.vmem [#allocation2], 320
  %678 = vst [vmem:[%s677] sm:$0xff] %v648
  %s679 = scalar_lea.vmem [#allocation2], 328
  %680 = vst [vmem:[%s679] sm:$0xff] %v653
  %s681 = scalar_lea.vmem [#allocation2], 336
  %682 = vst [vmem:[%s681] sm:$0xff] %v658
  %s683 = scalar_lea.vmem [#allocation2], 344
  %684 = vst [vmem:[%s683] sm:$0xff] %v663
  %s685 = scalar_lea.vmem [#allocation2], 352
  %686 = vst [vmem:[%s685] sm:$0xff] %v668
  %v687 = vld [vmem:[%s370] sm:$0xff]
  %v688 = vld [vmem:[%s372] sm:$0xff]
  %v689 = vld [vmem:[%s374] sm:$0xff]
  %v690 = vld [vmem:[%s376] sm:$0xff]
  %v691 = vld [vmem:[%s378] sm:$0xff]
  %v692 = vld [vmem:[%s380] sm:$0xff]
  %v693 = vld [vmem:[%s382] sm:$0xff]
  %v694 = vld [vmem:[%s384] sm:$0xff]
  %v695 = vld [vmem:[%s386] sm:$0xff]
  %s696 = scalar_lea.vmem %s1, 120
  %v697 = vld [vmem:[%s696] sm:$0xff]
  %s698 = scalar_lea.vmem %s1, 128
  %v699 = vld [vmem:[%s698] sm:$0xff]
  %s700 = scalar_lea.vmem %s1, 136
  %v701 = vld [vmem:[%s700] sm:$0xff]
  %v702 = vmul.f32 %v687, %v697
  %v703 = vmul.f32 %v688, %v699
  %v704 = vadd.f32 %v702, %v703
  %v705 = vmul.f32 %v689, %v701
  %v706 = vadd.f32 %v704, %v705
  %v707 = vmul.f32 %v690, %v697
  %v708 = vmul.f32 %v691, %v699
  %v709 = vadd.f32 %v707, %v708
  %v710 = vmul.f32 %v692, %v701
  %v711 = vadd.f32 %v709, %v710
  %v712 = vmul.f32 %v693, %v697
  %v713 = vmul.f32 %v694, %v699
  %v714 = vadd.f32 %v712, %v713
  %v715 = vmul.f32 %v695, %v701
  %v716 = vadd.f32 %v714, %v715
  %v717 = vadd.f32 %v706, %v264
  %v718 = vadd.f32 %v711, %v265
  %v719 = vadd.f32 %v716, %v266
  %s720 = scalar_lea.vmem %s2, 120
  %721 = vst [vmem:[%s720] sm:$0xff] %v717
  %s722 = scalar_lea.vmem %s2, 128
  %723 = vst [vmem:[%s722] sm:$0xff] %v718
  %s724 = scalar_lea.vmem %s2, 136
  %725 = vst [vmem:[%s724] sm:$0xff] %v719
  %s726 = scalar_lea.vmem %s0, 240
  %v727 = vld [vmem:[%s726] sm:$0xff]
  %s728 = scalar_lea.vmem %s0, 248
  %v729 = vld [vmem:[%s728] sm:$0xff]
  %s730 = scalar_lea.vmem %s0, 256
  %v731 = vld [vmem:[%s730] sm:$0xff]
  %s732 = scalar_lea.vmem %s0, 264
  %v733 = vld [vmem:[%s732] sm:$0xff]
  %s734 = scalar_lea.vmem %s0, 272
  %v735 = vld [vmem:[%s734] sm:$0xff]
  %s736 = scalar_lea.vmem %s0, 280
  %v737 = vld [vmem:[%s736] sm:$0xff]
  %v738 = vmul.f32 %v727, %v727
  %v739 = vmul.f32 %v729, %v729
  %v740 = vadd.f32 %v738, %v739
  %v741 = vmul.f32 %v731, %v731
  %v742 = vadd.f32 %v740, %v741
  %v743 = vmax.f32 %v742, 1e-24
  %v744 = vrsqrt.pop %v743
  %v745 = vmul.f32 %v727, %v744
  %v746 = vmul.f32 %v729, %v744
  %v747 = vmul.f32 %v731, %v744
  %v748 = vmul.f32 %v745, %v733
  %v749 = vmul.f32 %v746, %v735
  %v750 = vadd.f32 %v748, %v749
  %v751 = vmul.f32 %v747, %v737
  %v752 = vadd.f32 %v750, %v751
  %v753 = vmul.f32 %v752, %v745
  %v754 = vsub.f32 %v733, %v753
  %v755 = vmul.f32 %v752, %v746
  %v756 = vsub.f32 %v735, %v755
  %v757 = vmul.f32 %v752, %v747
  %v758 = vsub.f32 %v737, %v757
  %v759 = vmul.f32 %v754, %v754
  %v760 = vmul.f32 %v756, %v756
  %v761 = vadd.f32 %v759, %v760
  %v762 = vmul.f32 %v758, %v758
  %v763 = vadd.f32 %v761, %v762
  %v764 = vmax.f32 %v763, 1e-24
  %v765 = vrsqrt.pop %v764
  %v766 = vmul.f32 %v754, %v765
  %v767 = vmul.f32 %v756, %v765
  %v768 = vmul.f32 %v758, %v765
  %v769 = vmul.f32 %v746, %v768
  %v770 = vmul.f32 %v747, %v767
  %v771 = vsub.f32 %v769, %v770
  %v772 = vmul.f32 %v747, %v766
  %v773 = vmul.f32 %v745, %v768
  %v774 = vsub.f32 %v772, %v773
  %v775 = vmul.f32 %v745, %v767
  %v776 = vmul.f32 %v746, %v766
  %v777 = vsub.f32 %v775, %v776
  %v778 = vmul.f32 %v687, %v745
  %v779 = vmul.f32 %v688, %v766
  %v780 = vadd.f32 %v778, %v779
  %v781 = vmul.f32 %v689, %v771
  %v782 = vadd.f32 %v780, %v781
  %v783 = vmul.f32 %v687, %v746
  %v784 = vmul.f32 %v688, %v767
  %v785 = vadd.f32 %v783, %v784
  %v786 = vmul.f32 %v689, %v774
  %v787 = vadd.f32 %v785, %v786
  %v788 = vmul.f32 %v687, %v747
  %v789 = vmul.f32 %v688, %v768
  %v790 = vadd.f32 %v788, %v789
  %v791 = vmul.f32 %v689, %v777
  %v792 = vadd.f32 %v790, %v791
  %v793 = vmul.f32 %v690, %v745
  %v794 = vmul.f32 %v691, %v766
  %v795 = vadd.f32 %v793, %v794
  %v796 = vmul.f32 %v692, %v771
  %v797 = vadd.f32 %v795, %v796
  %v798 = vmul.f32 %v690, %v746
  %v799 = vmul.f32 %v691, %v767
  %v800 = vadd.f32 %v798, %v799
  %v801 = vmul.f32 %v692, %v774
  %v802 = vadd.f32 %v800, %v801
  %v803 = vmul.f32 %v690, %v747
  %v804 = vmul.f32 %v691, %v768
  %v805 = vadd.f32 %v803, %v804
  %v806 = vmul.f32 %v692, %v777
  %v807 = vadd.f32 %v805, %v806
  %v808 = vmul.f32 %v693, %v745
  %v809 = vmul.f32 %v694, %v766
  %v810 = vadd.f32 %v808, %v809
  %v811 = vmul.f32 %v695, %v771
  %v812 = vadd.f32 %v810, %v811
  %v813 = vmul.f32 %v693, %v746
  %v814 = vmul.f32 %v694, %v767
  %v815 = vadd.f32 %v813, %v814
  %v816 = vmul.f32 %v695, %v774
  %v817 = vadd.f32 %v815, %v816
  %v818 = vmul.f32 %v693, %v747
  %v819 = vmul.f32 %v694, %v768
  %v820 = vadd.f32 %v818, %v819
  %v821 = vmul.f32 %v695, %v777
  %v822 = vadd.f32 %v820, %v821
  %s823 = scalar_lea.vmem [#allocation2], 360
  %824 = vst [vmem:[%s823] sm:$0xff] %v782
  %s825 = scalar_lea.vmem [#allocation2], 368
  %826 = vst [vmem:[%s825] sm:$0xff] %v787
  %s827 = scalar_lea.vmem [#allocation2], 376
  %828 = vst [vmem:[%s827] sm:$0xff] %v792
  %s829 = scalar_lea.vmem [#allocation2], 384
  %830 = vst [vmem:[%s829] sm:$0xff] %v797
  %s831 = scalar_lea.vmem [#allocation2], 392
  %832 = vst [vmem:[%s831] sm:$0xff] %v802
  %s833 = scalar_lea.vmem [#allocation2], 400
  %834 = vst [vmem:[%s833] sm:$0xff] %v807
  %s835 = scalar_lea.vmem [#allocation2], 408
  %836 = vst [vmem:[%s835] sm:$0xff] %v812
  %s837 = scalar_lea.vmem [#allocation2], 416
  %838 = vst [vmem:[%s837] sm:$0xff] %v817
  %s839 = scalar_lea.vmem [#allocation2], 424
  %840 = vst [vmem:[%s839] sm:$0xff] %v822
  %v841 = vld [vmem:[%s515] sm:$0xff]
  %v842 = vld [vmem:[%s517] sm:$0xff]
  %v843 = vld [vmem:[%s519] sm:$0xff]
  %v844 = vld [vmem:[%s521] sm:$0xff]
  %v845 = vld [vmem:[%s523] sm:$0xff]
  %v846 = vld [vmem:[%s525] sm:$0xff]
  %v847 = vld [vmem:[%s527] sm:$0xff]
  %v848 = vld [vmem:[%s529] sm:$0xff]
  %v849 = vld [vmem:[%s531] sm:$0xff]
  %s850 = scalar_lea.vmem %s1, 144
  %v851 = vld [vmem:[%s850] sm:$0xff]
  %s852 = scalar_lea.vmem %s1, 152
  %v853 = vld [vmem:[%s852] sm:$0xff]
  %s854 = scalar_lea.vmem %s1, 160
  %v855 = vld [vmem:[%s854] sm:$0xff]
  %v856 = vmul.f32 %v841, %v851
  %v857 = vmul.f32 %v842, %v853
  %v858 = vadd.f32 %v856, %v857
  %v859 = vmul.f32 %v843, %v855
  %v860 = vadd.f32 %v858, %v859
  %v861 = vmul.f32 %v844, %v851
  %v862 = vmul.f32 %v845, %v853
  %v863 = vadd.f32 %v861, %v862
  %v864 = vmul.f32 %v846, %v855
  %v865 = vadd.f32 %v863, %v864
  %v866 = vmul.f32 %v847, %v851
  %v867 = vmul.f32 %v848, %v853
  %v868 = vadd.f32 %v866, %v867
  %v869 = vmul.f32 %v849, %v855
  %v870 = vadd.f32 %v868, %v869
  %v871 = vadd.f32 %v860, %v409
  %v872 = vadd.f32 %v865, %v410
  %v873 = vadd.f32 %v870, %v411
  %s874 = scalar_lea.vmem %s2, 144
  %875 = vst [vmem:[%s874] sm:$0xff] %v871
  %s876 = scalar_lea.vmem %s2, 152
  %877 = vst [vmem:[%s876] sm:$0xff] %v872
  %s878 = scalar_lea.vmem %s2, 160
  %879 = vst [vmem:[%s878] sm:$0xff] %v873
  %s880 = scalar_lea.vmem %s0, 288
  %v881 = vld [vmem:[%s880] sm:$0xff]
  %s882 = scalar_lea.vmem %s0, 296
  %v883 = vld [vmem:[%s882] sm:$0xff]
  %s884 = scalar_lea.vmem %s0, 304
  %v885 = vld [vmem:[%s884] sm:$0xff]
  %s886 = scalar_lea.vmem %s0, 312
  %v887 = vld [vmem:[%s886] sm:$0xff]
  %s888 = scalar_lea.vmem %s0, 320
  %v889 = vld [vmem:[%s888] sm:$0xff]
  %s890 = scalar_lea.vmem %s0, 328
  %v891 = vld [vmem:[%s890] sm:$0xff]
  %v892 = vmul.f32 %v881, %v881
  %v893 = vmul.f32 %v883, %v883
  %v894 = vadd.f32 %v892, %v893
  %v895 = vmul.f32 %v885, %v885
  %v896 = vadd.f32 %v894, %v895
  %v897 = vmax.f32 %v896, 1e-24
  %v898 = vrsqrt.pop %v897
  %v899 = vmul.f32 %v881, %v898
  %v900 = vmul.f32 %v883, %v898
  %v901 = vmul.f32 %v885, %v898
  %v902 = vmul.f32 %v899, %v887
  %v903 = vmul.f32 %v900, %v889
  %v904 = vadd.f32 %v902, %v903
  %v905 = vmul.f32 %v901, %v891
  %v906 = vadd.f32 %v904, %v905
  %v907 = vmul.f32 %v906, %v899
  %v908 = vsub.f32 %v887, %v907
  %v909 = vmul.f32 %v906, %v900
  %v910 = vsub.f32 %v889, %v909
  %v911 = vmul.f32 %v906, %v901
  %v912 = vsub.f32 %v891, %v911
  %v913 = vmul.f32 %v908, %v908
  %v914 = vmul.f32 %v910, %v910
  %v915 = vadd.f32 %v913, %v914
  %v916 = vmul.f32 %v912, %v912
  %v917 = vadd.f32 %v915, %v916
  %v918 = vmax.f32 %v917, 1e-24
  %v919 = vrsqrt.pop %v918
  %v920 = vmul.f32 %v908, %v919
  %v921 = vmul.f32 %v910, %v919
  %v922 = vmul.f32 %v912, %v919
  %v923 = vmul.f32 %v900, %v922
  %v924 = vmul.f32 %v901, %v921
  %v925 = vsub.f32 %v923, %v924
  %v926 = vmul.f32 %v901, %v920
  %v927 = vmul.f32 %v899, %v922
  %v928 = vsub.f32 %v926, %v927
  %v929 = vmul.f32 %v899, %v921
  %v930 = vmul.f32 %v900, %v920
  %v931 = vsub.f32 %v929, %v930
  %v932 = vmul.f32 %v841, %v899
  %v933 = vmul.f32 %v842, %v920
  %v934 = vadd.f32 %v932, %v933
  %v935 = vmul.f32 %v843, %v925
  %v936 = vadd.f32 %v934, %v935
  %v937 = vmul.f32 %v841, %v900
  %v938 = vmul.f32 %v842, %v921
  %v939 = vadd.f32 %v937, %v938
  %v940 = vmul.f32 %v843, %v928
  %v941 = vadd.f32 %v939, %v940
  %v942 = vmul.f32 %v841, %v901
  %v943 = vmul.f32 %v842, %v922
  %v944 = vadd.f32 %v942, %v943
  %v945 = vmul.f32 %v843, %v931
  %v946 = vadd.f32 %v944, %v945
  %v947 = vmul.f32 %v844, %v899
  %v948 = vmul.f32 %v845, %v920
  %v949 = vadd.f32 %v947, %v948
  %v950 = vmul.f32 %v846, %v925
  %v951 = vadd.f32 %v949, %v950
  %v952 = vmul.f32 %v844, %v900
  %v953 = vmul.f32 %v845, %v921
  %v954 = vadd.f32 %v952, %v953
  %v955 = vmul.f32 %v846, %v928
  %v956 = vadd.f32 %v954, %v955
  %v957 = vmul.f32 %v844, %v901
  %v958 = vmul.f32 %v845, %v922
  %v959 = vadd.f32 %v957, %v958
  %v960 = vmul.f32 %v846, %v931
  %v961 = vadd.f32 %v959, %v960
  %v962 = vmul.f32 %v847, %v899
  %v963 = vmul.f32 %v848, %v920
  %v964 = vadd.f32 %v962, %v963
  %v965 = vmul.f32 %v849, %v925
  %v966 = vadd.f32 %v964, %v965
  %v967 = vmul.f32 %v847, %v900
  %v968 = vmul.f32 %v848, %v921
  %v969 = vadd.f32 %v967, %v968
  %v970 = vmul.f32 %v849, %v928
  %v971 = vadd.f32 %v969, %v970
  %v972 = vmul.f32 %v847, %v901
  %v973 = vmul.f32 %v848, %v922
  %v974 = vadd.f32 %v972, %v973
  %v975 = vmul.f32 %v849, %v931
  %v976 = vadd.f32 %v974, %v975
  %s977 = scalar_lea.vmem [#allocation2], 432
  %978 = vst [vmem:[%s977] sm:$0xff] %v936
  %s979 = scalar_lea.vmem [#allocation2], 440
  %980 = vst [vmem:[%s979] sm:$0xff] %v941
  %s981 = scalar_lea.vmem [#allocation2], 448
  %982 = vst [vmem:[%s981] sm:$0xff] %v946
  %s983 = scalar_lea.vmem [#allocation2], 456
  %984 = vst [vmem:[%s983] sm:$0xff] %v951
  %s985 = scalar_lea.vmem [#allocation2], 464
  %986 = vst [vmem:[%s985] sm:$0xff] %v956
  %s987 = scalar_lea.vmem [#allocation2], 472
  %988 = vst [vmem:[%s987] sm:$0xff] %v961
  %s989 = scalar_lea.vmem [#allocation2], 480
  %990 = vst [vmem:[%s989] sm:$0xff] %v966
  %s991 = scalar_lea.vmem [#allocation2], 488
  %992 = vst [vmem:[%s991] sm:$0xff] %v971
  %s993 = scalar_lea.vmem [#allocation2], 496
  %994 = vst [vmem:[%s993] sm:$0xff] %v976
  %v995 = vld [vmem:[%s669] sm:$0xff]
  %v996 = vld [vmem:[%s671] sm:$0xff]
  %v997 = vld [vmem:[%s673] sm:$0xff]
  %v998 = vld [vmem:[%s675] sm:$0xff]
  %v999 = vld [vmem:[%s677] sm:$0xff]
  %v1000 = vld [vmem:[%s679] sm:$0xff]
  %v1001 = vld [vmem:[%s681] sm:$0xff]
  %v1002 = vld [vmem:[%s683] sm:$0xff]
  %v1003 = vld [vmem:[%s685] sm:$0xff]
  %s1004 = scalar_lea.vmem %s1, 168
  %v1005 = vld [vmem:[%s1004] sm:$0xff]
  %s1006 = scalar_lea.vmem %s1, 176
  %v1007 = vld [vmem:[%s1006] sm:$0xff]
  %s1008 = scalar_lea.vmem %s1, 184
  %v1009 = vld [vmem:[%s1008] sm:$0xff]
  %v1010 = vmul.f32 %v995, %v1005
  %v1011 = vmul.f32 %v996, %v1007
  %v1012 = vadd.f32 %v1010, %v1011
  %v1013 = vmul.f32 %v997, %v1009
  %v1014 = vadd.f32 %v1012, %v1013
  %v1015 = vmul.f32 %v998, %v1005
  %v1016 = vmul.f32 %v999, %v1007
  %v1017 = vadd.f32 %v1015, %v1016
  %v1018 = vmul.f32 %v1000, %v1009
  %v1019 = vadd.f32 %v1017, %v1018
  %v1020 = vmul.f32 %v1001, %v1005
  %v1021 = vmul.f32 %v1002, %v1007
  %v1022 = vadd.f32 %v1020, %v1021
  %v1023 = vmul.f32 %v1003, %v1009
  %v1024 = vadd.f32 %v1022, %v1023
  %v1025 = vadd.f32 %v1014, %v563
  %v1026 = vadd.f32 %v1019, %v564
  %v1027 = vadd.f32 %v1024, %v565
  %s1028 = scalar_lea.vmem %s2, 168
  %1029 = vst [vmem:[%s1028] sm:$0xff] %v1025
  %s1030 = scalar_lea.vmem %s2, 176
  %1031 = vst [vmem:[%s1030] sm:$0xff] %v1026
  %s1032 = scalar_lea.vmem %s2, 184
  %1033 = vst [vmem:[%s1032] sm:$0xff] %v1027
  %s1034 = scalar_lea.vmem %s0, 336
  %v1035 = vld [vmem:[%s1034] sm:$0xff]
  %s1036 = scalar_lea.vmem %s0, 344
  %v1037 = vld [vmem:[%s1036] sm:$0xff]
  %s1038 = scalar_lea.vmem %s0, 352
  %v1039 = vld [vmem:[%s1038] sm:$0xff]
  %s1040 = scalar_lea.vmem %s0, 360
  %v1041 = vld [vmem:[%s1040] sm:$0xff]
  %s1042 = scalar_lea.vmem %s0, 368
  %v1043 = vld [vmem:[%s1042] sm:$0xff]
  %s1044 = scalar_lea.vmem %s0, 376
  %v1045 = vld [vmem:[%s1044] sm:$0xff]
  %v1046 = vmul.f32 %v1035, %v1035
  %v1047 = vmul.f32 %v1037, %v1037
  %v1048 = vadd.f32 %v1046, %v1047
  %v1049 = vmul.f32 %v1039, %v1039
  %v1050 = vadd.f32 %v1048, %v1049
  %v1051 = vmax.f32 %v1050, 1e-24
  %v1052 = vrsqrt.pop %v1051
  %v1053 = vmul.f32 %v1035, %v1052
  %v1054 = vmul.f32 %v1037, %v1052
  %v1055 = vmul.f32 %v1039, %v1052
  %v1056 = vmul.f32 %v1053, %v1041
  %v1057 = vmul.f32 %v1054, %v1043
  %v1058 = vadd.f32 %v1056, %v1057
  %v1059 = vmul.f32 %v1055, %v1045
  %v1060 = vadd.f32 %v1058, %v1059
  %v1061 = vmul.f32 %v1060, %v1053
  %v1062 = vsub.f32 %v1041, %v1061
  %v1063 = vmul.f32 %v1060, %v1054
  %v1064 = vsub.f32 %v1043, %v1063
  %v1065 = vmul.f32 %v1060, %v1055
  %v1066 = vsub.f32 %v1045, %v1065
  %v1067 = vmul.f32 %v1062, %v1062
  %v1068 = vmul.f32 %v1064, %v1064
  %v1069 = vadd.f32 %v1067, %v1068
  %v1070 = vmul.f32 %v1066, %v1066
  %v1071 = vadd.f32 %v1069, %v1070
  %v1072 = vmax.f32 %v1071, 1e-24
  %v1073 = vrsqrt.pop %v1072
  %v1074 = vmul.f32 %v1062, %v1073
  %v1075 = vmul.f32 %v1064, %v1073
  %v1076 = vmul.f32 %v1066, %v1073
  %v1077 = vmul.f32 %v1054, %v1076
  %v1078 = vmul.f32 %v1055, %v1075
  %v1079 = vsub.f32 %v1077, %v1078
  %v1080 = vmul.f32 %v1055, %v1074
  %v1081 = vmul.f32 %v1053, %v1076
  %v1082 = vsub.f32 %v1080, %v1081
  %v1083 = vmul.f32 %v1053, %v1075
  %v1084 = vmul.f32 %v1054, %v1074
  %v1085 = vsub.f32 %v1083, %v1084
  %v1086 = vmul.f32 %v995, %v1053
  %v1087 = vmul.f32 %v996, %v1074
  %v1088 = vadd.f32 %v1086, %v1087
  %v1089 = vmul.f32 %v997, %v1079
  %v1090 = vadd.f32 %v1088, %v1089
  %v1091 = vmul.f32 %v995, %v1054
  %v1092 = vmul.f32 %v996, %v1075
  %v1093 = vadd.f32 %v1091, %v1092
  %v1094 = vmul.f32 %v997, %v1082
  %v1095 = vadd.f32 %v1093, %v1094
  %v1096 = vmul.f32 %v995, %v1055
  %v1097 = vmul.f32 %v996, %v1076
  %v1098 = vadd.f32 %v1096, %v1097
  %v1099 = vmul.f32 %v997, %v1085
  %v1100 = vadd.f32 %v1098, %v1099
  %v1101 = vmul.f32 %v998, %v1053
  %v1102 = vmul.f32 %v999, %v1074
  %v1103 = vadd.f32 %v1101, %v1102
  %v1104 = vmul.f32 %v1000, %v1079
  %v1105 = vadd.f32 %v1103, %v1104
  %v1106 = vmul.f32 %v998, %v1054
  %v1107 = vmul.f32 %v999, %v1075
  %v1108 = vadd.f32 %v1106, %v1107
  %v1109 = vmul.f32 %v1000, %v1082
  %v1110 = vadd.f32 %v1108, %v1109
  %v1111 = vmul.f32 %v998, %v1055
  %v1112 = vmul.f32 %v999, %v1076
  %v1113 = vadd.f32 %v1111, %v1112
  %v1114 = vmul.f32 %v1000, %v1085
  %v1115 = vadd.f32 %v1113, %v1114
  %v1116 = vmul.f32 %v1001, %v1053
  %v1117 = vmul.f32 %v1002, %v1074
  %v1118 = vadd.f32 %v1116, %v1117
  %v1119 = vmul.f32 %v1003, %v1079
  %v1120 = vadd.f32 %v1118, %v1119
  %v1121 = vmul.f32 %v1001, %v1054
  %v1122 = vmul.f32 %v1002, %v1075
  %v1123 = vadd.f32 %v1121, %v1122
  %v1124 = vmul.f32 %v1003, %v1082
  %v1125 = vadd.f32 %v1123, %v1124
  %v1126 = vmul.f32 %v1001, %v1055
  %v1127 = vmul.f32 %v1002, %v1076
  %v1128 = vadd.f32 %v1126, %v1127
  %v1129 = vmul.f32 %v1003, %v1085
  %v1130 = vadd.f32 %v1128, %v1129
  %s1131 = scalar_lea.vmem [#allocation2], 504
  %1132 = vst [vmem:[%s1131] sm:$0xff] %v1090
  %s1133 = scalar_lea.vmem [#allocation2], 512
  %1134 = vst [vmem:[%s1133] sm:$0xff] %v1095
  %s1135 = scalar_lea.vmem [#allocation2], 520
  %1136 = vst [vmem:[%s1135] sm:$0xff] %v1100
  %s1137 = scalar_lea.vmem [#allocation2], 528
  %1138 = vst [vmem:[%s1137] sm:$0xff] %v1105
  %s1139 = scalar_lea.vmem [#allocation2], 536
  %1140 = vst [vmem:[%s1139] sm:$0xff] %v1110
  %s1141 = scalar_lea.vmem [#allocation2], 544
  %1142 = vst [vmem:[%s1141] sm:$0xff] %v1115
  %s1143 = scalar_lea.vmem [#allocation2], 552
  %1144 = vst [vmem:[%s1143] sm:$0xff] %v1120
  %s1145 = scalar_lea.vmem [#allocation2], 560
  %1146 = vst [vmem:[%s1145] sm:$0xff] %v1125
  %s1147 = scalar_lea.vmem [#allocation2], 568
  %1148 = vst [vmem:[%s1147] sm:$0xff] %v1130
  %v1149 = vld [vmem:[%s823] sm:$0xff]
  %v1150 = vld [vmem:[%s825] sm:$0xff]
  %v1151 = vld [vmem:[%s827] sm:$0xff]
  %v1152 = vld [vmem:[%s829] sm:$0xff]
  %v1153 = vld [vmem:[%s831] sm:$0xff]
  %v1154 = vld [vmem:[%s833] sm:$0xff]
  %v1155 = vld [vmem:[%s835] sm:$0xff]
  %v1156 = vld [vmem:[%s837] sm:$0xff]
  %v1157 = vld [vmem:[%s839] sm:$0xff]
  %s1158 = scalar_lea.vmem %s1, 192
  %v1159 = vld [vmem:[%s1158] sm:$0xff]
  %s1160 = scalar_lea.vmem %s1, 200
  %v1161 = vld [vmem:[%s1160] sm:$0xff]
  %s1162 = scalar_lea.vmem %s1, 208
  %v1163 = vld [vmem:[%s1162] sm:$0xff]
  %v1164 = vmul.f32 %v1149, %v1159
  %v1165 = vmul.f32 %v1150, %v1161
  %v1166 = vadd.f32 %v1164, %v1165
  %v1167 = vmul.f32 %v1151, %v1163
  %v1168 = vadd.f32 %v1166, %v1167
  %v1169 = vmul.f32 %v1152, %v1159
  %v1170 = vmul.f32 %v1153, %v1161
  %v1171 = vadd.f32 %v1169, %v1170
  %v1172 = vmul.f32 %v1154, %v1163
  %v1173 = vadd.f32 %v1171, %v1172
  %v1174 = vmul.f32 %v1155, %v1159
  %v1175 = vmul.f32 %v1156, %v1161
  %v1176 = vadd.f32 %v1174, %v1175
  %v1177 = vmul.f32 %v1157, %v1163
  %v1178 = vadd.f32 %v1176, %v1177
  %v1179 = vadd.f32 %v1168, %v717
  %v1180 = vadd.f32 %v1173, %v718
  %v1181 = vadd.f32 %v1178, %v719
  %s1182 = scalar_lea.vmem %s2, 192
  %1183 = vst [vmem:[%s1182] sm:$0xff] %v1179
  %s1184 = scalar_lea.vmem %s2, 200
  %1185 = vst [vmem:[%s1184] sm:$0xff] %v1180
  %s1186 = scalar_lea.vmem %s2, 208
  %1187 = vst [vmem:[%s1186] sm:$0xff] %v1181
  %s1188 = scalar_lea.vmem %s0, 384
  %v1189 = vld [vmem:[%s1188] sm:$0xff]
  %s1190 = scalar_lea.vmem %s0, 392
  %v1191 = vld [vmem:[%s1190] sm:$0xff]
  %s1192 = scalar_lea.vmem %s0, 400
  %v1193 = vld [vmem:[%s1192] sm:$0xff]
  %s1194 = scalar_lea.vmem %s0, 408
  %v1195 = vld [vmem:[%s1194] sm:$0xff]
  %s1196 = scalar_lea.vmem %s0, 416
  %v1197 = vld [vmem:[%s1196] sm:$0xff]
  %s1198 = scalar_lea.vmem %s0, 424
  %v1199 = vld [vmem:[%s1198] sm:$0xff]
  %v1200 = vmul.f32 %v1189, %v1189
  %v1201 = vmul.f32 %v1191, %v1191
  %v1202 = vadd.f32 %v1200, %v1201
  %v1203 = vmul.f32 %v1193, %v1193
  %v1204 = vadd.f32 %v1202, %v1203
  %v1205 = vmax.f32 %v1204, 1e-24
  %v1206 = vrsqrt.pop %v1205
  %v1207 = vmul.f32 %v1189, %v1206
  %v1208 = vmul.f32 %v1191, %v1206
  %v1209 = vmul.f32 %v1193, %v1206
  %v1210 = vmul.f32 %v1207, %v1195
  %v1211 = vmul.f32 %v1208, %v1197
  %v1212 = vadd.f32 %v1210, %v1211
  %v1213 = vmul.f32 %v1209, %v1199
  %v1214 = vadd.f32 %v1212, %v1213
  %v1215 = vmul.f32 %v1214, %v1207
  %v1216 = vsub.f32 %v1195, %v1215
  %v1217 = vmul.f32 %v1214, %v1208
  %v1218 = vsub.f32 %v1197, %v1217
  %v1219 = vmul.f32 %v1214, %v1209
  %v1220 = vsub.f32 %v1199, %v1219
  %v1221 = vmul.f32 %v1216, %v1216
  %v1222 = vmul.f32 %v1218, %v1218
  %v1223 = vadd.f32 %v1221, %v1222
  %v1224 = vmul.f32 %v1220, %v1220
  %v1225 = vadd.f32 %v1223, %v1224
  %v1226 = vmax.f32 %v1225, 1e-24
  %v1227 = vrsqrt.pop %v1226
  %v1228 = vmul.f32 %v1216, %v1227
  %v1229 = vmul.f32 %v1218, %v1227
  %v1230 = vmul.f32 %v1220, %v1227
  %v1231 = vmul.f32 %v1208, %v1230
  %v1232 = vmul.f32 %v1209, %v1229
  %v1233 = vsub.f32 %v1231, %v1232
  %v1234 = vmul.f32 %v1209, %v1228
  %v1235 = vmul.f32 %v1207, %v1230
  %v1236 = vsub.f32 %v1234, %v1235
  %v1237 = vmul.f32 %v1207, %v1229
  %v1238 = vmul.f32 %v1208, %v1228
  %v1239 = vsub.f32 %v1237, %v1238
  %v1240 = vmul.f32 %v1149, %v1207
  %v1241 = vmul.f32 %v1150, %v1228
  %v1242 = vadd.f32 %v1240, %v1241
  %v1243 = vmul.f32 %v1151, %v1233
  %v1244 = vadd.f32 %v1242, %v1243
  %v1245 = vmul.f32 %v1149, %v1208
  %v1246 = vmul.f32 %v1150, %v1229
  %v1247 = vadd.f32 %v1245, %v1246
  %v1248 = vmul.f32 %v1151, %v1236
  %v1249 = vadd.f32 %v1247, %v1248
  %v1250 = vmul.f32 %v1149, %v1209
  %v1251 = vmul.f32 %v1150, %v1230
  %v1252 = vadd.f32 %v1250, %v1251
  %v1253 = vmul.f32 %v1151, %v1239
  %v1254 = vadd.f32 %v1252, %v1253
  %v1255 = vmul.f32 %v1152, %v1207
  %v1256 = vmul.f32 %v1153, %v1228
  %v1257 = vadd.f32 %v1255, %v1256
  %v1258 = vmul.f32 %v1154, %v1233
  %v1259 = vadd.f32 %v1257, %v1258
  %v1260 = vmul.f32 %v1152, %v1208
  %v1261 = vmul.f32 %v1153, %v1229
  %v1262 = vadd.f32 %v1260, %v1261
  %v1263 = vmul.f32 %v1154, %v1236
  %v1264 = vadd.f32 %v1262, %v1263
  %v1265 = vmul.f32 %v1152, %v1209
  %v1266 = vmul.f32 %v1153, %v1230
  %v1267 = vadd.f32 %v1265, %v1266
  %v1268 = vmul.f32 %v1154, %v1239
  %v1269 = vadd.f32 %v1267, %v1268
  %v1270 = vmul.f32 %v1155, %v1207
  %v1271 = vmul.f32 %v1156, %v1228
  %v1272 = vadd.f32 %v1270, %v1271
  %v1273 = vmul.f32 %v1157, %v1233
  %v1274 = vadd.f32 %v1272, %v1273
  %v1275 = vmul.f32 %v1155, %v1208
  %v1276 = vmul.f32 %v1156, %v1229
  %v1277 = vadd.f32 %v1275, %v1276
  %v1278 = vmul.f32 %v1157, %v1236
  %v1279 = vadd.f32 %v1277, %v1278
  %v1280 = vmul.f32 %v1155, %v1209
  %v1281 = vmul.f32 %v1156, %v1230
  %v1282 = vadd.f32 %v1280, %v1281
  %v1283 = vmul.f32 %v1157, %v1239
  %v1284 = vadd.f32 %v1282, %v1283
  %s1285 = scalar_lea.vmem [#allocation2], 576
  %1286 = vst [vmem:[%s1285] sm:$0xff] %v1244
  %s1287 = scalar_lea.vmem [#allocation2], 584
  %1288 = vst [vmem:[%s1287] sm:$0xff] %v1249
  %s1289 = scalar_lea.vmem [#allocation2], 592
  %1290 = vst [vmem:[%s1289] sm:$0xff] %v1254
  %s1291 = scalar_lea.vmem [#allocation2], 600
  %1292 = vst [vmem:[%s1291] sm:$0xff] %v1259
  %s1293 = scalar_lea.vmem [#allocation2], 608
  %1294 = vst [vmem:[%s1293] sm:$0xff] %v1264
  %s1295 = scalar_lea.vmem [#allocation2], 616
  %1296 = vst [vmem:[%s1295] sm:$0xff] %v1269
  %s1297 = scalar_lea.vmem [#allocation2], 624
  %1298 = vst [vmem:[%s1297] sm:$0xff] %v1274
  %s1299 = scalar_lea.vmem [#allocation2], 632
  %1300 = vst [vmem:[%s1299] sm:$0xff] %v1279
  %s1301 = scalar_lea.vmem [#allocation2], 640
  %1302 = vst [vmem:[%s1301] sm:$0xff] %v1284
  %v1303 = vld [vmem:[%s977] sm:$0xff]
  %v1304 = vld [vmem:[%s979] sm:$0xff]
  %v1305 = vld [vmem:[%s981] sm:$0xff]
  %v1306 = vld [vmem:[%s983] sm:$0xff]
  %v1307 = vld [vmem:[%s985] sm:$0xff]
  %v1308 = vld [vmem:[%s987] sm:$0xff]
  %v1309 = vld [vmem:[%s989] sm:$0xff]
  %v1310 = vld [vmem:[%s991] sm:$0xff]
  %v1311 = vld [vmem:[%s993] sm:$0xff]
  %s1312 = scalar_lea.vmem %s1, 216
  %v1313 = vld [vmem:[%s1312] sm:$0xff]
  %s1314 = scalar_lea.vmem %s1, 224
  %v1315 = vld [vmem:[%s1314] sm:$0xff]
  %s1316 = scalar_lea.vmem %s1, 232
  %v1317 = vld [vmem:[%s1316] sm:$0xff]
  %v1318 = vmul.f32 %v1303, %v1313
  %v1319 = vmul.f32 %v1304, %v1315
  %v1320 = vadd.f32 %v1318, %v1319
  %v1321 = vmul.f32 %v1305, %v1317
  %v1322 = vadd.f32 %v1320, %v1321
  %v1323 = vmul.f32 %v1306, %v1313
  %v1324 = vmul.f32 %v1307, %v1315
  %v1325 = vadd.f32 %v1323, %v1324
  %v1326 = vmul.f32 %v1308, %v1317
  %v1327 = vadd.f32 %v1325, %v1326
  %v1328 = vmul.f32 %v1309, %v1313
  %v1329 = vmul.f32 %v1310, %v1315
  %v1330 = vadd.f32 %v1328, %v1329
  %v1331 = vmul.f32 %v1311, %v1317
  %v1332 = vadd.f32 %v1330, %v1331
  %v1333 = vadd.f32 %v1322, %v871
  %v1334 = vadd.f32 %v1327, %v872
  %v1335 = vadd.f32 %v1332, %v873
  %s1336 = scalar_lea.vmem %s2, 216
  %1337 = vst [vmem:[%s1336] sm:$0xff] %v1333
  %s1338 = scalar_lea.vmem %s2, 224
  %1339 = vst [vmem:[%s1338] sm:$0xff] %v1334
  %s1340 = scalar_lea.vmem %s2, 232
  %1341 = vst [vmem:[%s1340] sm:$0xff] %v1335
  %s1342 = scalar_lea.vmem %s0, 432
  %v1343 = vld [vmem:[%s1342] sm:$0xff]
  %s1344 = scalar_lea.vmem %s0, 440
  %v1345 = vld [vmem:[%s1344] sm:$0xff]
  %s1346 = scalar_lea.vmem %s0, 448
  %v1347 = vld [vmem:[%s1346] sm:$0xff]
  %s1348 = scalar_lea.vmem %s0, 456
  %v1349 = vld [vmem:[%s1348] sm:$0xff]
  %s1350 = scalar_lea.vmem %s0, 464
  %v1351 = vld [vmem:[%s1350] sm:$0xff]
  %s1352 = scalar_lea.vmem %s0, 472
  %v1353 = vld [vmem:[%s1352] sm:$0xff]
  %v1354 = vmul.f32 %v1343, %v1343
  %v1355 = vmul.f32 %v1345, %v1345
  %v1356 = vadd.f32 %v1354, %v1355
  %v1357 = vmul.f32 %v1347, %v1347
  %v1358 = vadd.f32 %v1356, %v1357
  %v1359 = vmax.f32 %v1358, 1e-24
  %v1360 = vrsqrt.pop %v1359
  %v1361 = vmul.f32 %v1343, %v1360
  %v1362 = vmul.f32 %v1345, %v1360
  %v1363 = vmul.f32 %v1347, %v1360
  %v1364 = vmul.f32 %v1361, %v1349
  %v1365 = vmul.f32 %v1362, %v1351
  %v1366 = vadd.f32 %v1364, %v1365
  %v1367 = vmul.f32 %v1363, %v1353
  %v1368 = vadd.f32 %v1366, %v1367
  %v1369 = vmul.f32 %v1368, %v1361
  %v1370 = vsub.f32 %v1349, %v1369
  %v1371 = vmul.f32 %v1368, %v1362
  %v1372 = vsub.f32 %v1351, %v1371
  %v1373 = vmul.f32 %v1368, %v1363
  %v1374 = vsub.f32 %v1353, %v1373
  %v1375 = vmul.f32 %v1370, %v1370
  %v1376 = vmul.f32 %v1372, %v1372
  %v1377 = vadd.f32 %v1375, %v1376
  %v1378 = vmul.f32 %v1374, %v1374
  %v1379 = vadd.f32 %v1377, %v1378
  %v1380 = vmax.f32 %v1379, 1e-24
  %v1381 = vrsqrt.pop %v1380
  %v1382 = vmul.f32 %v1370, %v1381
  %v1383 = vmul.f32 %v1372, %v1381
  %v1384 = vmul.f32 %v1374, %v1381
  %v1385 = vmul.f32 %v1362, %v1384
  %v1386 = vmul.f32 %v1363, %v1383
  %v1387 = vsub.f32 %v1385, %v1386
  %v1388 = vmul.f32 %v1363, %v1382
  %v1389 = vmul.f32 %v1361, %v1384
  %v1390 = vsub.f32 %v1388, %v1389
  %v1391 = vmul.f32 %v1361, %v1383
  %v1392 = vmul.f32 %v1362, %v1382
  %v1393 = vsub.f32 %v1391, %v1392
  %v1394 = vmul.f32 %v1303, %v1361
  %v1395 = vmul.f32 %v1304, %v1382
  %v1396 = vadd.f32 %v1394, %v1395
  %v1397 = vmul.f32 %v1305, %v1387
  %v1398 = vadd.f32 %v1396, %v1397
  %v1399 = vmul.f32 %v1303, %v1362
  %v1400 = vmul.f32 %v1304, %v1383
  %v1401 = vadd.f32 %v1399, %v1400
  %v1402 = vmul.f32 %v1305, %v1390
  %v1403 = vadd.f32 %v1401, %v1402
  %v1404 = vmul.f32 %v1303, %v1363
  %v1405 = vmul.f32 %v1304, %v1384
  %v1406 = vadd.f32 %v1404, %v1405
  %v1407 = vmul.f32 %v1305, %v1393
  %v1408 = vadd.f32 %v1406, %v1407
  %v1409 = vmul.f32 %v1306, %v1361
  %v1410 = vmul.f32 %v1307, %v1382
  %v1411 = vadd.f32 %v1409, %v1410
  %v1412 = vmul.f32 %v1308, %v1387
  %v1413 = vadd.f32 %v1411, %v1412
  %v1414 = vmul.f32 %v1306, %v1362
  %v1415 = vmul.f32 %v1307, %v1383
  %v1416 = vadd.f32 %v1414, %v1415
  %v1417 = vmul.f32 %v1308, %v1390
  %v1418 = vadd.f32 %v1416, %v1417
  %v1419 = vmul.f32 %v1306, %v1363
  %v1420 = vmul.f32 %v1307, %v1384
  %v1421 = vadd.f32 %v1419, %v1420
  %v1422 = vmul.f32 %v1308, %v1393
  %v1423 = vadd.f32 %v1421, %v1422
  %v1424 = vmul.f32 %v1309, %v1361
  %v1425 = vmul.f32 %v1310, %v1382
  %v1426 = vadd.f32 %v1424, %v1425
  %v1427 = vmul.f32 %v1311, %v1387
  %v1428 = vadd.f32 %v1426, %v1427
  %v1429 = vmul.f32 %v1309, %v1362
  %v1430 = vmul.f32 %v1310, %v1383
  %v1431 = vadd.f32 %v1429, %v1430
  %v1432 = vmul.f32 %v1311, %v1390
  %v1433 = vadd.f32 %v1431, %v1432
  %v1434 = vmul.f32 %v1309, %v1363
  %v1435 = vmul.f32 %v1310, %v1384
  %v1436 = vadd.f32 %v1434, %v1435
  %v1437 = vmul.f32 %v1311, %v1393
  %v1438 = vadd.f32 %v1436, %v1437
  %s1439 = scalar_lea.vmem [#allocation2], 648
  %1440 = vst [vmem:[%s1439] sm:$0xff] %v1398
  %s1441 = scalar_lea.vmem [#allocation2], 656
  %1442 = vst [vmem:[%s1441] sm:$0xff] %v1403
  %s1443 = scalar_lea.vmem [#allocation2], 664
  %1444 = vst [vmem:[%s1443] sm:$0xff] %v1408
  %s1445 = scalar_lea.vmem [#allocation2], 672
  %1446 = vst [vmem:[%s1445] sm:$0xff] %v1413
  %s1447 = scalar_lea.vmem [#allocation2], 680
  %1448 = vst [vmem:[%s1447] sm:$0xff] %v1418
  %s1449 = scalar_lea.vmem [#allocation2], 688
  %1450 = vst [vmem:[%s1449] sm:$0xff] %v1423
  %s1451 = scalar_lea.vmem [#allocation2], 696
  %1452 = vst [vmem:[%s1451] sm:$0xff] %v1428
  %s1453 = scalar_lea.vmem [#allocation2], 704
  %1454 = vst [vmem:[%s1453] sm:$0xff] %v1433
  %s1455 = scalar_lea.vmem [#allocation2], 712
  %1456 = vst [vmem:[%s1455] sm:$0xff] %v1438
  %v1457 = vld [vmem:[%s1131] sm:$0xff]
  %v1458 = vld [vmem:[%s1133] sm:$0xff]
  %v1459 = vld [vmem:[%s1135] sm:$0xff]
  %v1460 = vld [vmem:[%s1137] sm:$0xff]
  %v1461 = vld [vmem:[%s1139] sm:$0xff]
  %v1462 = vld [vmem:[%s1141] sm:$0xff]
  %v1463 = vld [vmem:[%s1143] sm:$0xff]
  %v1464 = vld [vmem:[%s1145] sm:$0xff]
  %v1465 = vld [vmem:[%s1147] sm:$0xff]
  %s1466 = scalar_lea.vmem %s1, 240
  %v1467 = vld [vmem:[%s1466] sm:$0xff]
  %s1468 = scalar_lea.vmem %s1, 248
  %v1469 = vld [vmem:[%s1468] sm:$0xff]
  %s1470 = scalar_lea.vmem %s1, 256
  %v1471 = vld [vmem:[%s1470] sm:$0xff]
  %v1472 = vmul.f32 %v1457, %v1467
  %v1473 = vmul.f32 %v1458, %v1469
  %v1474 = vadd.f32 %v1472, %v1473
  %v1475 = vmul.f32 %v1459, %v1471
  %v1476 = vadd.f32 %v1474, %v1475
  %v1477 = vmul.f32 %v1460, %v1467
  %v1478 = vmul.f32 %v1461, %v1469
  %v1479 = vadd.f32 %v1477, %v1478
  %v1480 = vmul.f32 %v1462, %v1471
  %v1481 = vadd.f32 %v1479, %v1480
  %v1482 = vmul.f32 %v1463, %v1467
  %v1483 = vmul.f32 %v1464, %v1469
  %v1484 = vadd.f32 %v1482, %v1483
  %v1485 = vmul.f32 %v1465, %v1471
  %v1486 = vadd.f32 %v1484, %v1485
  %v1487 = vadd.f32 %v1476, %v1025
  %v1488 = vadd.f32 %v1481, %v1026
  %v1489 = vadd.f32 %v1486, %v1027
  %s1490 = scalar_lea.vmem %s2, 240
  %1491 = vst [vmem:[%s1490] sm:$0xff] %v1487
  %s1492 = scalar_lea.vmem %s2, 248
  %1493 = vst [vmem:[%s1492] sm:$0xff] %v1488
  %s1494 = scalar_lea.vmem %s2, 256
  %1495 = vst [vmem:[%s1494] sm:$0xff] %v1489
  %v1496 = vld [vmem:[%s1285] sm:$0xff]
  %v1497 = vld [vmem:[%s1287] sm:$0xff]
  %v1498 = vld [vmem:[%s1289] sm:$0xff]
  %v1499 = vld [vmem:[%s1291] sm:$0xff]
  %v1500 = vld [vmem:[%s1293] sm:$0xff]
  %v1501 = vld [vmem:[%s1295] sm:$0xff]
  %v1502 = vld [vmem:[%s1297] sm:$0xff]
  %v1503 = vld [vmem:[%s1299] sm:$0xff]
  %v1504 = vld [vmem:[%s1301] sm:$0xff]
  %s1505 = scalar_lea.vmem %s1, 264
  %v1506 = vld [vmem:[%s1505] sm:$0xff]
  %s1507 = scalar_lea.vmem %s1, 272
  %v1508 = vld [vmem:[%s1507] sm:$0xff]
  %s1509 = scalar_lea.vmem %s1, 280
  %v1510 = vld [vmem:[%s1509] sm:$0xff]
  %v1511 = vmul.f32 %v1496, %v1506
  %v1512 = vmul.f32 %v1497, %v1508
  %v1513 = vadd.f32 %v1511, %v1512
  %v1514 = vmul.f32 %v1498, %v1510
  %v1515 = vadd.f32 %v1513, %v1514
  %v1516 = vmul.f32 %v1499, %v1506
  %v1517 = vmul.f32 %v1500, %v1508
  %v1518 = vadd.f32 %v1516, %v1517
  %v1519 = vmul.f32 %v1501, %v1510
  %v1520 = vadd.f32 %v1518, %v1519
  %v1521 = vmul.f32 %v1502, %v1506
  %v1522 = vmul.f32 %v1503, %v1508
  %v1523 = vadd.f32 %v1521, %v1522
  %v1524 = vmul.f32 %v1504, %v1510
  %v1525 = vadd.f32 %v1523, %v1524
  %v1526 = vadd.f32 %v1515, %v1179
  %v1527 = vadd.f32 %v1520, %v1180
  %v1528 = vadd.f32 %v1525, %v1181
  %s1529 = scalar_lea.vmem %s2, 264
  %1530 = vst [vmem:[%s1529] sm:$0xff] %v1526
  %s1531 = scalar_lea.vmem %s2, 272
  %1532 = vst [vmem:[%s1531] sm:$0xff] %v1527
  %s1533 = scalar_lea.vmem %s2, 280
  %1534 = vst [vmem:[%s1533] sm:$0xff] %v1528
  %v1535 = vld [vmem:[%s1439] sm:$0xff]
  %v1536 = vld [vmem:[%s1441] sm:$0xff]
  %v1537 = vld [vmem:[%s1443] sm:$0xff]
  %v1538 = vld [vmem:[%s1445] sm:$0xff]
  %v1539 = vld [vmem:[%s1447] sm:$0xff]
  %v1540 = vld [vmem:[%s1449] sm:$0xff]
  %v1541 = vld [vmem:[%s1451] sm:$0xff]
  %v1542 = vld [vmem:[%s1453] sm:$0xff]
  %v1543 = vld [vmem:[%s1455] sm:$0xff]
  %s1544 = scalar_lea.vmem %s1, 288
  %v1545 = vld [vmem:[%s1544] sm:$0xff]
  %s1546 = scalar_lea.vmem %s1, 296
  %v1547 = vld [vmem:[%s1546] sm:$0xff]
  %s1548 = scalar_lea.vmem %s1, 304
  %v1549 = vld [vmem:[%s1548] sm:$0xff]
  %v1550 = vmul.f32 %v1535, %v1545
  %v1551 = vmul.f32 %v1536, %v1547
  %v1552 = vadd.f32 %v1550, %v1551
  %v1553 = vmul.f32 %v1537, %v1549
  %v1554 = vadd.f32 %v1552, %v1553
  %v1555 = vmul.f32 %v1538, %v1545
  %v1556 = vmul.f32 %v1539, %v1547
  %v1557 = vadd.f32 %v1555, %v1556
  %v1558 = vmul.f32 %v1540, %v1549
  %v1559 = vadd.f32 %v1557, %v1558
  %v1560 = vmul.f32 %v1541, %v1545
  %v1561 = vmul.f32 %v1542, %v1547
  %v1562 = vadd.f32 %v1560, %v1561
  %v1563 = vmul.f32 %v1543, %v1549
  %v1564 = vadd.f32 %v1562, %v1563
  %v1565 = vadd.f32 %v1554, %v1333
  %v1566 = vadd.f32 %v1559, %v1334
  %v1567 = vadd.f32 %v1564, %v1335
  %s1568 = scalar_lea.vmem %s2, 288
  %1569 = vst [vmem:[%s1568] sm:$0xff] %v1565
  %s1570 = scalar_lea.vmem %s2, 296
  %1571 = vst [vmem:[%s1570] sm:$0xff] %v1566
  %s1572 = scalar_lea.vmem %s2, 304
  %1573 = vst [vmem:[%s1572] sm:$0xff] %v1567
  %s1574 = scalar_lea.vmem %s0, 576
  %v1575 = vld [vmem:[%s1574] sm:$0xff]
  %s1576 = scalar_lea.vmem %s0, 584
  %v1577 = vld [vmem:[%s1576] sm:$0xff]
  %s1578 = scalar_lea.vmem %s0, 592
  %v1579 = vld [vmem:[%s1578] sm:$0xff]
  %s1580 = scalar_lea.vmem %s0, 600
  %v1581 = vld [vmem:[%s1580] sm:$0xff]
  %s1582 = scalar_lea.vmem %s0, 608
  %v1583 = vld [vmem:[%s1582] sm:$0xff]
  %s1584 = scalar_lea.vmem %s0, 616
  %v1585 = vld [vmem:[%s1584] sm:$0xff]
  %v1586 = vmul.f32 %v1575, %v1575
  %v1587 = vmul.f32 %v1577, %v1577
  %v1588 = vadd.f32 %v1586, %v1587
  %v1589 = vmul.f32 %v1579, %v1579
  %v1590 = vadd.f32 %v1588, %v1589
  %v1591 = vmax.f32 %v1590, 1e-24
  %v1592 = vrsqrt.pop %v1591
  %v1593 = vmul.f32 %v1575, %v1592
  %v1594 = vmul.f32 %v1577, %v1592
  %v1595 = vmul.f32 %v1579, %v1592
  %v1596 = vmul.f32 %v1593, %v1581
  %v1597 = vmul.f32 %v1594, %v1583
  %v1598 = vadd.f32 %v1596, %v1597
  %v1599 = vmul.f32 %v1595, %v1585
  %v1600 = vadd.f32 %v1598, %v1599
  %v1601 = vmul.f32 %v1600, %v1593
  %v1602 = vsub.f32 %v1581, %v1601
  %v1603 = vmul.f32 %v1600, %v1594
  %v1604 = vsub.f32 %v1583, %v1603
  %v1605 = vmul.f32 %v1600, %v1595
  %v1606 = vsub.f32 %v1585, %v1605
  %v1607 = vmul.f32 %v1602, %v1602
  %v1608 = vmul.f32 %v1604, %v1604
  %v1609 = vadd.f32 %v1607, %v1608
  %v1610 = vmul.f32 %v1606, %v1606
  %v1611 = vadd.f32 %v1609, %v1610
  %v1612 = vmax.f32 %v1611, 1e-24
  %v1613 = vrsqrt.pop %v1612
  %v1614 = vmul.f32 %v1602, %v1613
  %v1615 = vmul.f32 %v1604, %v1613
  %v1616 = vmul.f32 %v1606, %v1613
  %v1617 = vmul.f32 %v1594, %v1616
  %v1618 = vmul.f32 %v1595, %v1615
  %v1619 = vsub.f32 %v1617, %v1618
  %v1620 = vmul.f32 %v1595, %v1614
  %v1621 = vmul.f32 %v1593, %v1616
  %v1622 = vsub.f32 %v1620, %v1621
  %v1623 = vmul.f32 %v1593, %v1615
  %v1624 = vmul.f32 %v1594, %v1614
  %v1625 = vsub.f32 %v1623, %v1624
  %v1626 = vmul.f32 %v1535, %v1593
  %v1627 = vmul.f32 %v1536, %v1614
  %v1628 = vadd.f32 %v1626, %v1627
  %v1629 = vmul.f32 %v1537, %v1619
  %v1630 = vadd.f32 %v1628, %v1629
  %v1631 = vmul.f32 %v1535, %v1594
  %v1632 = vmul.f32 %v1536, %v1615
  %v1633 = vadd.f32 %v1631, %v1632
  %v1634 = vmul.f32 %v1537, %v1622
  %v1635 = vadd.f32 %v1633, %v1634
  %v1636 = vmul.f32 %v1535, %v1595
  %v1637 = vmul.f32 %v1536, %v1616
  %v1638 = vadd.f32 %v1636, %v1637
  %v1639 = vmul.f32 %v1537, %v1625
  %v1640 = vadd.f32 %v1638, %v1639
  %v1641 = vmul.f32 %v1538, %v1593
  %v1642 = vmul.f32 %v1539, %v1614
  %v1643 = vadd.f32 %v1641, %v1642
  %v1644 = vmul.f32 %v1540, %v1619
  %v1645 = vadd.f32 %v1643, %v1644
  %v1646 = vmul.f32 %v1538, %v1594
  %v1647 = vmul.f32 %v1539, %v1615
  %v1648 = vadd.f32 %v1646, %v1647
  %v1649 = vmul.f32 %v1540, %v1622
  %v1650 = vadd.f32 %v1648, %v1649
  %v1651 = vmul.f32 %v1538, %v1595
  %v1652 = vmul.f32 %v1539, %v1616
  %v1653 = vadd.f32 %v1651, %v1652
  %v1654 = vmul.f32 %v1540, %v1625
  %v1655 = vadd.f32 %v1653, %v1654
  %v1656 = vmul.f32 %v1541, %v1593
  %v1657 = vmul.f32 %v1542, %v1614
  %v1658 = vadd.f32 %v1656, %v1657
  %v1659 = vmul.f32 %v1543, %v1619
  %v1660 = vadd.f32 %v1658, %v1659
  %v1661 = vmul.f32 %v1541, %v1594
  %v1662 = vmul.f32 %v1542, %v1615
  %v1663 = vadd.f32 %v1661, %v1662
  %v1664 = vmul.f32 %v1543, %v1622
  %v1665 = vadd.f32 %v1663, %v1664
  %v1666 = vmul.f32 %v1541, %v1595
  %v1667 = vmul.f32 %v1542, %v1616
  %v1668 = vadd.f32 %v1666, %v1667
  %v1669 = vmul.f32 %v1543, %v1625
  %v1670 = vadd.f32 %v1668, %v1669
  %s1671 = scalar_lea.vmem [#allocation2], 720
  %1672 = vst [vmem:[%s1671] sm:$0xff] %v1630
  %s1673 = scalar_lea.vmem [#allocation2], 728
  %1674 = vst [vmem:[%s1673] sm:$0xff] %v1635
  %s1675 = scalar_lea.vmem [#allocation2], 736
  %1676 = vst [vmem:[%s1675] sm:$0xff] %v1640
  %s1677 = scalar_lea.vmem [#allocation2], 744
  %1678 = vst [vmem:[%s1677] sm:$0xff] %v1645
  %s1679 = scalar_lea.vmem [#allocation2], 752
  %1680 = vst [vmem:[%s1679] sm:$0xff] %v1650
  %s1681 = scalar_lea.vmem [#allocation2], 760
  %1682 = vst [vmem:[%s1681] sm:$0xff] %v1655
  %s1683 = scalar_lea.vmem [#allocation2], 768
  %1684 = vst [vmem:[%s1683] sm:$0xff] %v1660
  %s1685 = scalar_lea.vmem [#allocation2], 776
  %1686 = vst [vmem:[%s1685] sm:$0xff] %v1665
  %s1687 = scalar_lea.vmem [#allocation2], 784
  %1688 = vst [vmem:[%s1687] sm:$0xff] %v1670
  %s1689 = scalar_lea.vmem %s1, 312
  %v1690 = vld [vmem:[%s1689] sm:$0xff]
  %s1691 = scalar_lea.vmem %s1, 320
  %v1692 = vld [vmem:[%s1691] sm:$0xff]
  %s1693 = scalar_lea.vmem %s1, 328
  %v1694 = vld [vmem:[%s1693] sm:$0xff]
  %v1695 = vmul.f32 %v1535, %v1690
  %v1696 = vmul.f32 %v1536, %v1692
  %v1697 = vadd.f32 %v1695, %v1696
  %v1698 = vmul.f32 %v1537, %v1694
  %v1699 = vadd.f32 %v1697, %v1698
  %v1700 = vmul.f32 %v1538, %v1690
  %v1701 = vmul.f32 %v1539, %v1692
  %v1702 = vadd.f32 %v1700, %v1701
  %v1703 = vmul.f32 %v1540, %v1694
  %v1704 = vadd.f32 %v1702, %v1703
  %v1705 = vmul.f32 %v1541, %v1690
  %v1706 = vmul.f32 %v1542, %v1692
  %v1707 = vadd.f32 %v1705, %v1706
  %v1708 = vmul.f32 %v1543, %v1694
  %v1709 = vadd.f32 %v1707, %v1708
  %v1710 = vadd.f32 %v1699, %v1333
  %v1711 = vadd.f32 %v1704, %v1334
  %v1712 = vadd.f32 %v1709, %v1335
  %s1713 = scalar_lea.vmem %s2, 312
  %1714 = vst [vmem:[%s1713] sm:$0xff] %v1710
  %s1715 = scalar_lea.vmem %s2, 320
  %1716 = vst [vmem:[%s1715] sm:$0xff] %v1711
  %s1717 = scalar_lea.vmem %s2, 328
  %1718 = vst [vmem:[%s1717] sm:$0xff] %v1712
  %s1719 = scalar_lea.vmem %s0, 624
  %v1720 = vld [vmem:[%s1719] sm:$0xff]
  %s1721 = scalar_lea.vmem %s0, 632
  %v1722 = vld [vmem:[%s1721] sm:$0xff]
  %s1723 = scalar_lea.vmem %s0, 640
  %v1724 = vld [vmem:[%s1723] sm:$0xff]
  %s1725 = scalar_lea.vmem %s0, 648
  %v1726 = vld [vmem:[%s1725] sm:$0xff]
  %s1727 = scalar_lea.vmem %s0, 656
  %v1728 = vld [vmem:[%s1727] sm:$0xff]
  %s1729 = scalar_lea.vmem %s0, 664
  %v1730 = vld [vmem:[%s1729] sm:$0xff]
  %v1731 = vmul.f32 %v1720, %v1720
  %v1732 = vmul.f32 %v1722, %v1722
  %v1733 = vadd.f32 %v1731, %v1732
  %v1734 = vmul.f32 %v1724, %v1724
  %v1735 = vadd.f32 %v1733, %v1734
  %v1736 = vmax.f32 %v1735, 1e-24
  %v1737 = vrsqrt.pop %v1736
  %v1738 = vmul.f32 %v1720, %v1737
  %v1739 = vmul.f32 %v1722, %v1737
  %v1740 = vmul.f32 %v1724, %v1737
  %v1741 = vmul.f32 %v1738, %v1726
  %v1742 = vmul.f32 %v1739, %v1728
  %v1743 = vadd.f32 %v1741, %v1742
  %v1744 = vmul.f32 %v1740, %v1730
  %v1745 = vadd.f32 %v1743, %v1744
  %v1746 = vmul.f32 %v1745, %v1738
  %v1747 = vsub.f32 %v1726, %v1746
  %v1748 = vmul.f32 %v1745, %v1739
  %v1749 = vsub.f32 %v1728, %v1748
  %v1750 = vmul.f32 %v1745, %v1740
  %v1751 = vsub.f32 %v1730, %v1750
  %v1752 = vmul.f32 %v1747, %v1747
  %v1753 = vmul.f32 %v1749, %v1749
  %v1754 = vadd.f32 %v1752, %v1753
  %v1755 = vmul.f32 %v1751, %v1751
  %v1756 = vadd.f32 %v1754, %v1755
  %v1757 = vmax.f32 %v1756, 1e-24
  %v1758 = vrsqrt.pop %v1757
  %v1759 = vmul.f32 %v1747, %v1758
  %v1760 = vmul.f32 %v1749, %v1758
  %v1761 = vmul.f32 %v1751, %v1758
  %v1762 = vmul.f32 %v1739, %v1761
  %v1763 = vmul.f32 %v1740, %v1760
  %v1764 = vsub.f32 %v1762, %v1763
  %v1765 = vmul.f32 %v1740, %v1759
  %v1766 = vmul.f32 %v1738, %v1761
  %v1767 = vsub.f32 %v1765, %v1766
  %v1768 = vmul.f32 %v1738, %v1760
  %v1769 = vmul.f32 %v1739, %v1759
  %v1770 = vsub.f32 %v1768, %v1769
  %v1771 = vmul.f32 %v1535, %v1738
  %v1772 = vmul.f32 %v1536, %v1759
  %v1773 = vadd.f32 %v1771, %v1772
  %v1774 = vmul.f32 %v1537, %v1764
  %v1775 = vadd.f32 %v1773, %v1774
  %v1776 = vmul.f32 %v1535, %v1739
  %v1777 = vmul.f32 %v1536, %v1760
  %v1778 = vadd.f32 %v1776, %v1777
  %v1779 = vmul.f32 %v1537, %v1767
  %v1780 = vadd.f32 %v1778, %v1779
  %v1781 = vmul.f32 %v1535, %v1740
  %v1782 = vmul.f32 %v1536, %v1761
  %v1783 = vadd.f32 %v1781, %v1782
  %v1784 = vmul.f32 %v1537, %v1770
  %v1785 = vadd.f32 %v1783, %v1784
  %v1786 = vmul.f32 %v1538, %v1738
  %v1787 = vmul.f32 %v1539, %v1759
  %v1788 = vadd.f32 %v1786, %v1787
  %v1789 = vmul.f32 %v1540, %v1764
  %v1790 = vadd.f32 %v1788, %v1789
  %v1791 = vmul.f32 %v1538, %v1739
  %v1792 = vmul.f32 %v1539, %v1760
  %v1793 = vadd.f32 %v1791, %v1792
  %v1794 = vmul.f32 %v1540, %v1767
  %v1795 = vadd.f32 %v1793, %v1794
  %v1796 = vmul.f32 %v1538, %v1740
  %v1797 = vmul.f32 %v1539, %v1761
  %v1798 = vadd.f32 %v1796, %v1797
  %v1799 = vmul.f32 %v1540, %v1770
  %v1800 = vadd.f32 %v1798, %v1799
  %v1801 = vmul.f32 %v1541, %v1738
  %v1802 = vmul.f32 %v1542, %v1759
  %v1803 = vadd.f32 %v1801, %v1802
  %v1804 = vmul.f32 %v1543, %v1764
  %v1805 = vadd.f32 %v1803, %v1804
  %v1806 = vmul.f32 %v1541, %v1739
  %v1807 = vmul.f32 %v1542, %v1760
  %v1808 = vadd.f32 %v1806, %v1807
  %v1809 = vmul.f32 %v1543, %v1767
  %v1810 = vadd.f32 %v1808, %v1809
  %v1811 = vmul.f32 %v1541, %v1740
  %v1812 = vmul.f32 %v1542, %v1761
  %v1813 = vadd.f32 %v1811, %v1812
  %v1814 = vmul.f32 %v1543, %v1770
  %v1815 = vadd.f32 %v1813, %v1814
  %s1816 = scalar_lea.vmem [#allocation2], 792
  %1817 = vst [vmem:[%s1816] sm:$0xff] %v1775
  %s1818 = scalar_lea.vmem [#allocation2], 800
  %1819 = vst [vmem:[%s1818] sm:$0xff] %v1780
  %s1820 = scalar_lea.vmem [#allocation2], 808
  %1821 = vst [vmem:[%s1820] sm:$0xff] %v1785
  %s1822 = scalar_lea.vmem [#allocation2], 816
  %1823 = vst [vmem:[%s1822] sm:$0xff] %v1790
  %s1824 = scalar_lea.vmem [#allocation2], 824
  %1825 = vst [vmem:[%s1824] sm:$0xff] %v1795
  %s1826 = scalar_lea.vmem [#allocation2], 832
  %1827 = vst [vmem:[%s1826] sm:$0xff] %v1800
  %s1828 = scalar_lea.vmem [#allocation2], 840
  %1829 = vst [vmem:[%s1828] sm:$0xff] %v1805
  %s1830 = scalar_lea.vmem [#allocation2], 848
  %1831 = vst [vmem:[%s1830] sm:$0xff] %v1810
  %s1832 = scalar_lea.vmem [#allocation2], 856
  %1833 = vst [vmem:[%s1832] sm:$0xff] %v1815
  %s1834 = scalar_lea.vmem %s1, 336
  %v1835 = vld [vmem:[%s1834] sm:$0xff]
  %s1836 = scalar_lea.vmem %s1, 344
  %v1837 = vld [vmem:[%s1836] sm:$0xff]
  %s1838 = scalar_lea.vmem %s1, 352
  %v1839 = vld [vmem:[%s1838] sm:$0xff]
  %v1840 = vmul.f32 %v1535, %v1835
  %v1841 = vmul.f32 %v1536, %v1837
  %v1842 = vadd.f32 %v1840, %v1841
  %v1843 = vmul.f32 %v1537, %v1839
  %v1844 = vadd.f32 %v1842, %v1843
  %v1845 = vmul.f32 %v1538, %v1835
  %v1846 = vmul.f32 %v1539, %v1837
  %v1847 = vadd.f32 %v1845, %v1846
  %v1848 = vmul.f32 %v1540, %v1839
  %v1849 = vadd.f32 %v1847, %v1848
  %v1850 = vmul.f32 %v1541, %v1835
  %v1851 = vmul.f32 %v1542, %v1837
  %v1852 = vadd.f32 %v1850, %v1851
  %v1853 = vmul.f32 %v1543, %v1839
  %v1854 = vadd.f32 %v1852, %v1853
  %v1855 = vadd.f32 %v1844, %v1333
  %v1856 = vadd.f32 %v1849, %v1334
  %v1857 = vadd.f32 %v1854, %v1335
  %s1858 = scalar_lea.vmem %s2, 336
  %1859 = vst [vmem:[%s1858] sm:$0xff] %v1855
  %s1860 = scalar_lea.vmem %s2, 344
  %1861 = vst [vmem:[%s1860] sm:$0xff] %v1856
  %s1862 = scalar_lea.vmem %s2, 352
  %1863 = vst [vmem:[%s1862] sm:$0xff] %v1857
  %s1864 = scalar_lea.vmem %s0, 672
  %v1865 = vld [vmem:[%s1864] sm:$0xff]
  %s1866 = scalar_lea.vmem %s0, 680
  %v1867 = vld [vmem:[%s1866] sm:$0xff]
  %s1868 = scalar_lea.vmem %s0, 688
  %v1869 = vld [vmem:[%s1868] sm:$0xff]
  %s1870 = scalar_lea.vmem %s0, 696
  %v1871 = vld [vmem:[%s1870] sm:$0xff]
  %s1872 = scalar_lea.vmem %s0, 704
  %v1873 = vld [vmem:[%s1872] sm:$0xff]
  %s1874 = scalar_lea.vmem %s0, 712
  %v1875 = vld [vmem:[%s1874] sm:$0xff]
  %v1876 = vmul.f32 %v1865, %v1865
  %v1877 = vmul.f32 %v1867, %v1867
  %v1878 = vadd.f32 %v1876, %v1877
  %v1879 = vmul.f32 %v1869, %v1869
  %v1880 = vadd.f32 %v1878, %v1879
  %v1881 = vmax.f32 %v1880, 1e-24
  %v1882 = vrsqrt.pop %v1881
  %v1883 = vmul.f32 %v1865, %v1882
  %v1884 = vmul.f32 %v1867, %v1882
  %v1885 = vmul.f32 %v1869, %v1882
  %v1886 = vmul.f32 %v1883, %v1871
  %v1887 = vmul.f32 %v1884, %v1873
  %v1888 = vadd.f32 %v1886, %v1887
  %v1889 = vmul.f32 %v1885, %v1875
  %v1890 = vadd.f32 %v1888, %v1889
  %v1891 = vmul.f32 %v1890, %v1883
  %v1892 = vsub.f32 %v1871, %v1891
  %v1893 = vmul.f32 %v1890, %v1884
  %v1894 = vsub.f32 %v1873, %v1893
  %v1895 = vmul.f32 %v1890, %v1885
  %v1896 = vsub.f32 %v1875, %v1895
  %v1897 = vmul.f32 %v1892, %v1892
  %v1898 = vmul.f32 %v1894, %v1894
  %v1899 = vadd.f32 %v1897, %v1898
  %v1900 = vmul.f32 %v1896, %v1896
  %v1901 = vadd.f32 %v1899, %v1900
  %v1902 = vmax.f32 %v1901, 1e-24
  %v1903 = vrsqrt.pop %v1902
  %v1904 = vmul.f32 %v1892, %v1903
  %v1905 = vmul.f32 %v1894, %v1903
  %v1906 = vmul.f32 %v1896, %v1903
  %v1907 = vmul.f32 %v1884, %v1906
  %v1908 = vmul.f32 %v1885, %v1905
  %v1909 = vsub.f32 %v1907, %v1908
  %v1910 = vmul.f32 %v1885, %v1904
  %v1911 = vmul.f32 %v1883, %v1906
  %v1912 = vsub.f32 %v1910, %v1911
  %v1913 = vmul.f32 %v1883, %v1905
  %v1914 = vmul.f32 %v1884, %v1904
  %v1915 = vsub.f32 %v1913, %v1914
  %v1916 = vmul.f32 %v1535, %v1883
  %v1917 = vmul.f32 %v1536, %v1904
  %v1918 = vadd.f32 %v1916, %v1917
  %v1919 = vmul.f32 %v1537, %v1909
  %v1920 = vadd.f32 %v1918, %v1919
  %v1921 = vmul.f32 %v1535, %v1884
  %v1922 = vmul.f32 %v1536, %v1905
  %v1923 = vadd.f32 %v1921, %v1922
  %v1924 = vmul.f32 %v1537, %v1912
  %v1925 = vadd.f32 %v1923, %v1924
  %v1926 = vmul.f32 %v1535, %v1885
  %v1927 = vmul.f32 %v1536, %v1906
  %v1928 = vadd.f32 %v1926, %v1927
  %v1929 = vmul.f32 %v1537, %v1915
  %v1930 = vadd.f32 %v1928, %v1929
  %v1931 = vmul.f32 %v1538, %v1883
  %v1932 = vmul.f32 %v1539, %v1904
  %v1933 = vadd.f32 %v1931, %v1932
  %v1934 = vmul.f32 %v1540, %v1909
  %v1935 = vadd.f32 %v1933, %v1934
  %v1936 = vmul.f32 %v1538, %v1884
  %v1937 = vmul.f32 %v1539, %v1905
  %v1938 = vadd.f32 %v1936, %v1937
  %v1939 = vmul.f32 %v1540, %v1912
  %v1940 = vadd.f32 %v1938, %v1939
  %v1941 = vmul.f32 %v1538, %v1885
  %v1942 = vmul.f32 %v1539, %v1906
  %v1943 = vadd.f32 %v1941, %v1942
  %v1944 = vmul.f32 %v1540, %v1915
  %v1945 = vadd.f32 %v1943, %v1944
  %v1946 = vmul.f32 %v1541, %v1883
  %v1947 = vmul.f32 %v1542, %v1904
  %v1948 = vadd.f32 %v1946, %v1947
  %v1949 = vmul.f32 %v1543, %v1909
  %v1950 = vadd.f32 %v1948, %v1949
  %v1951 = vmul.f32 %v1541, %v1884
  %v1952 = vmul.f32 %v1542, %v1905
  %v1953 = vadd.f32 %v1951, %v1952
  %v1954 = vmul.f32 %v1543, %v1912
  %v1955 = vadd.f32 %v1953, %v1954
  %v1956 = vmul.f32 %v1541, %v1885
  %v1957 = vmul.f32 %v1542, %v1906
  %v1958 = vadd.f32 %v1956, %v1957
  %v1959 = vmul.f32 %v1543, %v1915
  %v1960 = vadd.f32 %v1958, %v1959
  %s1961 = scalar_lea.vmem [#allocation2], 864
  %1962 = vst [vmem:[%s1961] sm:$0xff] %v1920
  %s1963 = scalar_lea.vmem [#allocation2], 872
  %1964 = vst [vmem:[%s1963] sm:$0xff] %v1925
  %s1965 = scalar_lea.vmem [#allocation2], 880
  %1966 = vst [vmem:[%s1965] sm:$0xff] %v1930
  %s1967 = scalar_lea.vmem [#allocation2], 888
  %1968 = vst [vmem:[%s1967] sm:$0xff] %v1935
  %s1969 = scalar_lea.vmem [#allocation2], 896
  %1970 = vst [vmem:[%s1969] sm:$0xff] %v1940
  %s1971 = scalar_lea.vmem [#allocation2], 904
  %1972 = vst [vmem:[%s1971] sm:$0xff] %v1945
  %s1973 = scalar_lea.vmem [#allocation2], 912
  %1974 = vst [vmem:[%s1973] sm:$0xff] %v1950
  %s1975 = scalar_lea.vmem [#allocation2], 920
  %1976 = vst [vmem:[%s1975] sm:$0xff] %v1955
  %s1977 = scalar_lea.vmem [#allocation2], 928
  %1978 = vst [vmem:[%s1977] sm:$0xff] %v1960
  %v1979 = vld [vmem:[%s1671] sm:$0xff]
  %v1980 = vld [vmem:[%s1673] sm:$0xff]
  %v1981 = vld [vmem:[%s1675] sm:$0xff]
  %v1982 = vld [vmem:[%s1677] sm:$0xff]
  %v1983 = vld [vmem:[%s1679] sm:$0xff]
  %v1984 = vld [vmem:[%s1681] sm:$0xff]
  %v1985 = vld [vmem:[%s1683] sm:$0xff]
  %v1986 = vld [vmem:[%s1685] sm:$0xff]
  %v1987 = vld [vmem:[%s1687] sm:$0xff]
  %s1988 = scalar_lea.vmem %s1, 360
  %v1989 = vld [vmem:[%s1988] sm:$0xff]
  %s1990 = scalar_lea.vmem %s1, 368
  %v1991 = vld [vmem:[%s1990] sm:$0xff]
  %s1992 = scalar_lea.vmem %s1, 376
  %v1993 = vld [vmem:[%s1992] sm:$0xff]
  %v1994 = vmul.f32 %v1979, %v1989
  %v1995 = vmul.f32 %v1980, %v1991
  %v1996 = vadd.f32 %v1994, %v1995
  %v1997 = vmul.f32 %v1981, %v1993
  %v1998 = vadd.f32 %v1996, %v1997
  %v1999 = vmul.f32 %v1982, %v1989
  %v2000 = vmul.f32 %v1983, %v1991
  %v2001 = vadd.f32 %v1999, %v2000
  %v2002 = vmul.f32 %v1984, %v1993
  %v2003 = vadd.f32 %v2001, %v2002
  %v2004 = vmul.f32 %v1985, %v1989
  %v2005 = vmul.f32 %v1986, %v1991
  %v2006 = vadd.f32 %v2004, %v2005
  %v2007 = vmul.f32 %v1987, %v1993
  %v2008 = vadd.f32 %v2006, %v2007
  %v2009 = vadd.f32 %v1998, %v1565
  %v2010 = vadd.f32 %v2003, %v1566
  %v2011 = vadd.f32 %v2008, %v1567
  %s2012 = scalar_lea.vmem %s2, 360
  %2013 = vst [vmem:[%s2012] sm:$0xff] %v2009
  %s2014 = scalar_lea.vmem %s2, 368
  %2015 = vst [vmem:[%s2014] sm:$0xff] %v2010
  %s2016 = scalar_lea.vmem %s2, 376
  %2017 = vst [vmem:[%s2016] sm:$0xff] %v2011
  %v2018 = vld [vmem:[%s1816] sm:$0xff]
  %v2019 = vld [vmem:[%s1818] sm:$0xff]
  %v2020 = vld [vmem:[%s1820] sm:$0xff]
  %v2021 = vld [vmem:[%s1822] sm:$0xff]
  %v2022 = vld [vmem:[%s1824] sm:$0xff]
  %v2023 = vld [vmem:[%s1826] sm:$0xff]
  %v2024 = vld [vmem:[%s1828] sm:$0xff]
  %v2025 = vld [vmem:[%s1830] sm:$0xff]
  %v2026 = vld [vmem:[%s1832] sm:$0xff]
  %s2027 = scalar_lea.vmem %s1, 384
  %v2028 = vld [vmem:[%s2027] sm:$0xff]
  %s2029 = scalar_lea.vmem %s1, 392
  %v2030 = vld [vmem:[%s2029] sm:$0xff]
  %s2031 = scalar_lea.vmem %s1, 400
  %v2032 = vld [vmem:[%s2031] sm:$0xff]
  %v2033 = vmul.f32 %v2018, %v2028
  %v2034 = vmul.f32 %v2019, %v2030
  %v2035 = vadd.f32 %v2033, %v2034
  %v2036 = vmul.f32 %v2020, %v2032
  %v2037 = vadd.f32 %v2035, %v2036
  %v2038 = vmul.f32 %v2021, %v2028
  %v2039 = vmul.f32 %v2022, %v2030
  %v2040 = vadd.f32 %v2038, %v2039
  %v2041 = vmul.f32 %v2023, %v2032
  %v2042 = vadd.f32 %v2040, %v2041
  %v2043 = vmul.f32 %v2024, %v2028
  %v2044 = vmul.f32 %v2025, %v2030
  %v2045 = vadd.f32 %v2043, %v2044
  %v2046 = vmul.f32 %v2026, %v2032
  %v2047 = vadd.f32 %v2045, %v2046
  %v2048 = vadd.f32 %v2037, %v1710
  %v2049 = vadd.f32 %v2042, %v1711
  %v2050 = vadd.f32 %v2047, %v1712
  %s2051 = scalar_lea.vmem %s2, 384
  %2052 = vst [vmem:[%s2051] sm:$0xff] %v2048
  %s2053 = scalar_lea.vmem %s2, 392
  %2054 = vst [vmem:[%s2053] sm:$0xff] %v2049
  %s2055 = scalar_lea.vmem %s2, 400
  %2056 = vst [vmem:[%s2055] sm:$0xff] %v2050
  %s2057 = scalar_lea.vmem %s0, 768
  %v2058 = vld [vmem:[%s2057] sm:$0xff]
  %s2059 = scalar_lea.vmem %s0, 776
  %v2060 = vld [vmem:[%s2059] sm:$0xff]
  %s2061 = scalar_lea.vmem %s0, 784
  %v2062 = vld [vmem:[%s2061] sm:$0xff]
  %s2063 = scalar_lea.vmem %s0, 792
  %v2064 = vld [vmem:[%s2063] sm:$0xff]
  %s2065 = scalar_lea.vmem %s0, 800
  %v2066 = vld [vmem:[%s2065] sm:$0xff]
  %s2067 = scalar_lea.vmem %s0, 808
  %v2068 = vld [vmem:[%s2067] sm:$0xff]
  %v2069 = vmul.f32 %v2058, %v2058
  %v2070 = vmul.f32 %v2060, %v2060
  %v2071 = vadd.f32 %v2069, %v2070
  %v2072 = vmul.f32 %v2062, %v2062
  %v2073 = vadd.f32 %v2071, %v2072
  %v2074 = vmax.f32 %v2073, 1e-24
  %v2075 = vrsqrt.pop %v2074
  %v2076 = vmul.f32 %v2058, %v2075
  %v2077 = vmul.f32 %v2060, %v2075
  %v2078 = vmul.f32 %v2062, %v2075
  %v2079 = vmul.f32 %v2076, %v2064
  %v2080 = vmul.f32 %v2077, %v2066
  %v2081 = vadd.f32 %v2079, %v2080
  %v2082 = vmul.f32 %v2078, %v2068
  %v2083 = vadd.f32 %v2081, %v2082
  %v2084 = vmul.f32 %v2083, %v2076
  %v2085 = vsub.f32 %v2064, %v2084
  %v2086 = vmul.f32 %v2083, %v2077
  %v2087 = vsub.f32 %v2066, %v2086
  %v2088 = vmul.f32 %v2083, %v2078
  %v2089 = vsub.f32 %v2068, %v2088
  %v2090 = vmul.f32 %v2085, %v2085
  %v2091 = vmul.f32 %v2087, %v2087
  %v2092 = vadd.f32 %v2090, %v2091
  %v2093 = vmul.f32 %v2089, %v2089
  %v2094 = vadd.f32 %v2092, %v2093
  %v2095 = vmax.f32 %v2094, 1e-24
  %v2096 = vrsqrt.pop %v2095
  %v2097 = vmul.f32 %v2085, %v2096
  %v2098 = vmul.f32 %v2087, %v2096
  %v2099 = vmul.f32 %v2089, %v2096
  %v2100 = vmul.f32 %v2077, %v2099
  %v2101 = vmul.f32 %v2078, %v2098
  %v2102 = vsub.f32 %v2100, %v2101
  %v2103 = vmul.f32 %v2078, %v2097
  %v2104 = vmul.f32 %v2076, %v2099
  %v2105 = vsub.f32 %v2103, %v2104
  %v2106 = vmul.f32 %v2076, %v2098
  %v2107 = vmul.f32 %v2077, %v2097
  %v2108 = vsub.f32 %v2106, %v2107
  %v2109 = vmul.f32 %v2018, %v2076
  %v2110 = vmul.f32 %v2019, %v2097
  %v2111 = vadd.f32 %v2109, %v2110
  %v2112 = vmul.f32 %v2020, %v2102
  %v2113 = vadd.f32 %v2111, %v2112
  %v2114 = vmul.f32 %v2018, %v2077
  %v2115 = vmul.f32 %v2019, %v2098
  %v2116 = vadd.f32 %v2114, %v2115
  %v2117 = vmul.f32 %v2020, %v2105
  %v2118 = vadd.f32 %v2116, %v2117
  %v2119 = vmul.f32 %v2018, %v2078
  %v2120 = vmul.f32 %v2019, %v2099
  %v2121 = vadd.f32 %v2119, %v2120
  %v2122 = vmul.f32 %v2020, %v2108
  %v2123 = vadd.f32 %v2121, %v2122
  %v2124 = vmul.f32 %v2021, %v2076
  %v2125 = vmul.f32 %v2022, %v2097
  %v2126 = vadd.f32 %v2124, %v2125
  %v2127 = vmul.f32 %v2023, %v2102
  %v2128 = vadd.f32 %v2126, %v2127
  %v2129 = vmul.f32 %v2021, %v2077
  %v2130 = vmul.f32 %v2022, %v2098
  %v2131 = vadd.f32 %v2129, %v2130
  %v2132 = vmul.f32 %v2023, %v2105
  %v2133 = vadd.f32 %v2131, %v2132
  %v2134 = vmul.f32 %v2021, %v2078
  %v2135 = vmul.f32 %v2022, %v2099
  %v2136 = vadd.f32 %v2134, %v2135
  %v2137 = vmul.f32 %v2023, %v2108
  %v2138 = vadd.f32 %v2136, %v2137
  %v2139 = vmul.f32 %v2024, %v2076
  %v2140 = vmul.f32 %v2025, %v2097
  %v2141 = vadd.f32 %v2139, %v2140
  %v2142 = vmul.f32 %v2026, %v2102
  %v2143 = vadd.f32 %v2141, %v2142
  %v2144 = vmul.f32 %v2024, %v2077
  %v2145 = vmul.f32 %v2025, %v2098
  %v2146 = vadd.f32 %v2144, %v2145
  %v2147 = vmul.f32 %v2026, %v2105
  %v2148 = vadd.f32 %v2146, %v2147
  %v2149 = vmul.f32 %v2024, %v2078
  %v2150 = vmul.f32 %v2025, %v2099
  %v2151 = vadd.f32 %v2149, %v2150
  %v2152 = vmul.f32 %v2026, %v2108
  %v2153 = vadd.f32 %v2151, %v2152
  %s2154 = scalar_lea.vmem [#allocation2], 936
  %2155 = vst [vmem:[%s2154] sm:$0xff] %v2113
  %s2156 = scalar_lea.vmem [#allocation2], 944
  %2157 = vst [vmem:[%s2156] sm:$0xff] %v2118
  %s2158 = scalar_lea.vmem [#allocation2], 952
  %2159 = vst [vmem:[%s2158] sm:$0xff] %v2123
  %s2160 = scalar_lea.vmem [#allocation2], 960
  %2161 = vst [vmem:[%s2160] sm:$0xff] %v2128
  %s2162 = scalar_lea.vmem [#allocation2], 968
  %2163 = vst [vmem:[%s2162] sm:$0xff] %v2133
  %s2164 = scalar_lea.vmem [#allocation2], 976
  %2165 = vst [vmem:[%s2164] sm:$0xff] %v2138
  %s2166 = scalar_lea.vmem [#allocation2], 984
  %2167 = vst [vmem:[%s2166] sm:$0xff] %v2143
  %s2168 = scalar_lea.vmem [#allocation2], 992
  %2169 = vst [vmem:[%s2168] sm:$0xff] %v2148
  %s2170 = scalar_lea.vmem [#allocation2], 1000
  %2171 = vst [vmem:[%s2170] sm:$0xff] %v2153
  %v2172 = vld [vmem:[%s1961] sm:$0xff]
  %v2173 = vld [vmem:[%s1963] sm:$0xff]
  %v2174 = vld [vmem:[%s1965] sm:$0xff]
  %v2175 = vld [vmem:[%s1967] sm:$0xff]
  %v2176 = vld [vmem:[%s1969] sm:$0xff]
  %v2177 = vld [vmem:[%s1971] sm:$0xff]
  %v2178 = vld [vmem:[%s1973] sm:$0xff]
  %v2179 = vld [vmem:[%s1975] sm:$0xff]
  %v2180 = vld [vmem:[%s1977] sm:$0xff]
  %s2181 = scalar_lea.vmem %s1, 408
  %v2182 = vld [vmem:[%s2181] sm:$0xff]
  %s2183 = scalar_lea.vmem %s1, 416
  %v2184 = vld [vmem:[%s2183] sm:$0xff]
  %s2185 = scalar_lea.vmem %s1, 424
  %v2186 = vld [vmem:[%s2185] sm:$0xff]
  %v2187 = vmul.f32 %v2172, %v2182
  %v2188 = vmul.f32 %v2173, %v2184
  %v2189 = vadd.f32 %v2187, %v2188
  %v2190 = vmul.f32 %v2174, %v2186
  %v2191 = vadd.f32 %v2189, %v2190
  %v2192 = vmul.f32 %v2175, %v2182
  %v2193 = vmul.f32 %v2176, %v2184
  %v2194 = vadd.f32 %v2192, %v2193
  %v2195 = vmul.f32 %v2177, %v2186
  %v2196 = vadd.f32 %v2194, %v2195
  %v2197 = vmul.f32 %v2178, %v2182
  %v2198 = vmul.f32 %v2179, %v2184
  %v2199 = vadd.f32 %v2197, %v2198
  %v2200 = vmul.f32 %v2180, %v2186
  %v2201 = vadd.f32 %v2199, %v2200
  %v2202 = vadd.f32 %v2191, %v1855
  %v2203 = vadd.f32 %v2196, %v1856
  %v2204 = vadd.f32 %v2201, %v1857
  %s2205 = scalar_lea.vmem %s2, 408
  %2206 = vst [vmem:[%s2205] sm:$0xff] %v2202
  %s2207 = scalar_lea.vmem %s2, 416
  %2208 = vst [vmem:[%s2207] sm:$0xff] %v2203
  %s2209 = scalar_lea.vmem %s2, 424
  %2210 = vst [vmem:[%s2209] sm:$0xff] %v2204
  %s2211 = scalar_lea.vmem %s0, 816
  %v2212 = vld [vmem:[%s2211] sm:$0xff]
  %s2213 = scalar_lea.vmem %s0, 824
  %v2214 = vld [vmem:[%s2213] sm:$0xff]
  %s2215 = scalar_lea.vmem %s0, 832
  %v2216 = vld [vmem:[%s2215] sm:$0xff]
  %s2217 = scalar_lea.vmem %s0, 840
  %v2218 = vld [vmem:[%s2217] sm:$0xff]
  %s2219 = scalar_lea.vmem %s0, 848
  %v2220 = vld [vmem:[%s2219] sm:$0xff]
  %s2221 = scalar_lea.vmem %s0, 856
  %v2222 = vld [vmem:[%s2221] sm:$0xff]
  %v2223 = vmul.f32 %v2212, %v2212
  %v2224 = vmul.f32 %v2214, %v2214
  %v2225 = vadd.f32 %v2223, %v2224
  %v2226 = vmul.f32 %v2216, %v2216
  %v2227 = vadd.f32 %v2225, %v2226
  %v2228 = vmax.f32 %v2227, 1e-24
  %v2229 = vrsqrt.pop %v2228
  %v2230 = vmul.f32 %v2212, %v2229
  %v2231 = vmul.f32 %v2214, %v2229
  %v2232 = vmul.f32 %v2216, %v2229
  %v2233 = vmul.f32 %v2230, %v2218
  %v2234 = vmul.f32 %v2231, %v2220
  %v2235 = vadd.f32 %v2233, %v2234
  %v2236 = vmul.f32 %v2232, %v2222
  %v2237 = vadd.f32 %v2235, %v2236
  %v2238 = vmul.f32 %v2237, %v2230
  %v2239 = vsub.f32 %v2218, %v2238
  %v2240 = vmul.f32 %v2237, %v2231
  %v2241 = vsub.f32 %v2220, %v2240
  %v2242 = vmul.f32 %v2237, %v2232
  %v2243 = vsub.f32 %v2222, %v2242
  %v2244 = vmul.f32 %v2239, %v2239
  %v2245 = vmul.f32 %v2241, %v2241
  %v2246 = vadd.f32 %v2244, %v2245
  %v2247 = vmul.f32 %v2243, %v2243
  %v2248 = vadd.f32 %v2246, %v2247
  %v2249 = vmax.f32 %v2248, 1e-24
  %v2250 = vrsqrt.pop %v2249
  %v2251 = vmul.f32 %v2239, %v2250
  %v2252 = vmul.f32 %v2241, %v2250
  %v2253 = vmul.f32 %v2243, %v2250
  %v2254 = vmul.f32 %v2231, %v2253
  %v2255 = vmul.f32 %v2232, %v2252
  %v2256 = vsub.f32 %v2254, %v2255
  %v2257 = vmul.f32 %v2232, %v2251
  %v2258 = vmul.f32 %v2230, %v2253
  %v2259 = vsub.f32 %v2257, %v2258
  %v2260 = vmul.f32 %v2230, %v2252
  %v2261 = vmul.f32 %v2231, %v2251
  %v2262 = vsub.f32 %v2260, %v2261
  %v2263 = vmul.f32 %v2172, %v2230
  %v2264 = vmul.f32 %v2173, %v2251
  %v2265 = vadd.f32 %v2263, %v2264
  %v2266 = vmul.f32 %v2174, %v2256
  %v2267 = vadd.f32 %v2265, %v2266
  %v2268 = vmul.f32 %v2172, %v2231
  %v2269 = vmul.f32 %v2173, %v2252
  %v2270 = vadd.f32 %v2268, %v2269
  %v2271 = vmul.f32 %v2174, %v2259
  %v2272 = vadd.f32 %v2270, %v2271
  %v2273 = vmul.f32 %v2172, %v2232
  %v2274 = vmul.f32 %v2173, %v2253
  %v2275 = vadd.f32 %v2273, %v2274
  %v2276 = vmul.f32 %v2174, %v2262
  %v2277 = vadd.f32 %v2275, %v2276
  %v2278 = vmul.f32 %v2175, %v2230
  %v2279 = vmul.f32 %v2176, %v2251
  %v2280 = vadd.f32 %v2278, %v2279
  %v2281 = vmul.f32 %v2177, %v2256
  %v2282 = vadd.f32 %v2280, %v2281
  %v2283 = vmul.f32 %v2175, %v2231
  %v2284 = vmul.f32 %v2176, %v2252
  %v2285 = vadd.f32 %v2283, %v2284
  %v2286 = vmul.f32 %v2177, %v2259
  %v2287 = vadd.f32 %v2285, %v2286
  %v2288 = vmul.f32 %v2175, %v2232
  %v2289 = vmul.f32 %v2176, %v2253
  %v2290 = vadd.f32 %v2288, %v2289
  %v2291 = vmul.f32 %v2177, %v2262
  %v2292 = vadd.f32 %v2290, %v2291
  %v2293 = vmul.f32 %v2178, %v2230
  %v2294 = vmul.f32 %v2179, %v2251
  %v2295 = vadd.f32 %v2293, %v2294
  %v2296 = vmul.f32 %v2180, %v2256
  %v2297 = vadd.f32 %v2295, %v2296
  %v2298 = vmul.f32 %v2178, %v2231
  %v2299 = vmul.f32 %v2179, %v2252
  %v2300 = vadd.f32 %v2298, %v2299
  %v2301 = vmul.f32 %v2180, %v2259
  %v2302 = vadd.f32 %v2300, %v2301
  %v2303 = vmul.f32 %v2178, %v2232
  %v2304 = vmul.f32 %v2179, %v2253
  %v2305 = vadd.f32 %v2303, %v2304
  %v2306 = vmul.f32 %v2180, %v2262
  %v2307 = vadd.f32 %v2305, %v2306
  %s2308 = scalar_lea.vmem [#allocation2], 1008
  %2309 = vst [vmem:[%s2308] sm:$0xff] %v2267
  %s2310 = scalar_lea.vmem [#allocation2], 1016
  %2311 = vst [vmem:[%s2310] sm:$0xff] %v2272
  %s2312 = scalar_lea.vmem [#allocation2], 1024
  %2313 = vst [vmem:[%s2312] sm:$0xff] %v2277
  %s2314 = scalar_lea.vmem [#allocation2], 1032
  %2315 = vst [vmem:[%s2314] sm:$0xff] %v2282
  %s2316 = scalar_lea.vmem [#allocation2], 1040
  %2317 = vst [vmem:[%s2316] sm:$0xff] %v2287
  %s2318 = scalar_lea.vmem [#allocation2], 1048
  %2319 = vst [vmem:[%s2318] sm:$0xff] %v2292
  %s2320 = scalar_lea.vmem [#allocation2], 1056
  %2321 = vst [vmem:[%s2320] sm:$0xff] %v2297
  %s2322 = scalar_lea.vmem [#allocation2], 1064
  %2323 = vst [vmem:[%s2322] sm:$0xff] %v2302
  %s2324 = scalar_lea.vmem [#allocation2], 1072
  %2325 = vst [vmem:[%s2324] sm:$0xff] %v2307
  %v2326 = vld [vmem:[%s2154] sm:$0xff]
  %v2327 = vld [vmem:[%s2156] sm:$0xff]
  %v2328 = vld [vmem:[%s2158] sm:$0xff]
  %v2329 = vld [vmem:[%s2160] sm:$0xff]
  %v2330 = vld [vmem:[%s2162] sm:$0xff]
  %v2331 = vld [vmem:[%s2164] sm:$0xff]
  %v2332 = vld [vmem:[%s2166] sm:$0xff]
  %v2333 = vld [vmem:[%s2168] sm:$0xff]
  %v2334 = vld [vmem:[%s2170] sm:$0xff]
  %s2335 = scalar_lea.vmem %s1, 432
  %v2336 = vld [vmem:[%s2335] sm:$0xff]
  %s2337 = scalar_lea.vmem %s1, 440
  %v2338 = vld [vmem:[%s2337] sm:$0xff]
  %s2339 = scalar_lea.vmem %s1, 448
  %v2340 = vld [vmem:[%s2339] sm:$0xff]
  %v2341 = vmul.f32 %v2326, %v2336
  %v2342 = vmul.f32 %v2327, %v2338
  %v2343 = vadd.f32 %v2341, %v2342
  %v2344 = vmul.f32 %v2328, %v2340
  %v2345 = vadd.f32 %v2343, %v2344
  %v2346 = vmul.f32 %v2329, %v2336
  %v2347 = vmul.f32 %v2330, %v2338
  %v2348 = vadd.f32 %v2346, %v2347
  %v2349 = vmul.f32 %v2331, %v2340
  %v2350 = vadd.f32 %v2348, %v2349
  %v2351 = vmul.f32 %v2332, %v2336
  %v2352 = vmul.f32 %v2333, %v2338
  %v2353 = vadd.f32 %v2351, %v2352
  %v2354 = vmul.f32 %v2334, %v2340
  %v2355 = vadd.f32 %v2353, %v2354
  %v2356 = vadd.f32 %v2345, %v2048
  %v2357 = vadd.f32 %v2350, %v2049
  %v2358 = vadd.f32 %v2355, %v2050
  %s2359 = scalar_lea.vmem %s2, 432
  %2360 = vst [vmem:[%s2359] sm:$0xff] %v2356
  %s2361 = scalar_lea.vmem %s2, 440
  %2362 = vst [vmem:[%s2361] sm:$0xff] %v2357
  %s2363 = scalar_lea.vmem %s2, 448
  %2364 = vst [vmem:[%s2363] sm:$0xff] %v2358
  %s2365 = scalar_lea.vmem %s0, 864
  %v2366 = vld [vmem:[%s2365] sm:$0xff]
  %s2367 = scalar_lea.vmem %s0, 872
  %v2368 = vld [vmem:[%s2367] sm:$0xff]
  %s2369 = scalar_lea.vmem %s0, 880
  %v2370 = vld [vmem:[%s2369] sm:$0xff]
  %s2371 = scalar_lea.vmem %s0, 888
  %v2372 = vld [vmem:[%s2371] sm:$0xff]
  %s2373 = scalar_lea.vmem %s0, 896
  %v2374 = vld [vmem:[%s2373] sm:$0xff]
  %s2375 = scalar_lea.vmem %s0, 904
  %v2376 = vld [vmem:[%s2375] sm:$0xff]
  %v2377 = vmul.f32 %v2366, %v2366
  %v2378 = vmul.f32 %v2368, %v2368
  %v2379 = vadd.f32 %v2377, %v2378
  %v2380 = vmul.f32 %v2370, %v2370
  %v2381 = vadd.f32 %v2379, %v2380
  %v2382 = vmax.f32 %v2381, 1e-24
  %v2383 = vrsqrt.pop %v2382
  %v2384 = vmul.f32 %v2366, %v2383
  %v2385 = vmul.f32 %v2368, %v2383
  %v2386 = vmul.f32 %v2370, %v2383
  %v2387 = vmul.f32 %v2384, %v2372
  %v2388 = vmul.f32 %v2385, %v2374
  %v2389 = vadd.f32 %v2387, %v2388
  %v2390 = vmul.f32 %v2386, %v2376
  %v2391 = vadd.f32 %v2389, %v2390
  %v2392 = vmul.f32 %v2391, %v2384
  %v2393 = vsub.f32 %v2372, %v2392
  %v2394 = vmul.f32 %v2391, %v2385
  %v2395 = vsub.f32 %v2374, %v2394
  %v2396 = vmul.f32 %v2391, %v2386
  %v2397 = vsub.f32 %v2376, %v2396
  %v2398 = vmul.f32 %v2393, %v2393
  %v2399 = vmul.f32 %v2395, %v2395
  %v2400 = vadd.f32 %v2398, %v2399
  %v2401 = vmul.f32 %v2397, %v2397
  %v2402 = vadd.f32 %v2400, %v2401
  %v2403 = vmax.f32 %v2402, 1e-24
  %v2404 = vrsqrt.pop %v2403
  %v2405 = vmul.f32 %v2393, %v2404
  %v2406 = vmul.f32 %v2395, %v2404
  %v2407 = vmul.f32 %v2397, %v2404
  %v2408 = vmul.f32 %v2385, %v2407
  %v2409 = vmul.f32 %v2386, %v2406
  %v2410 = vsub.f32 %v2408, %v2409
  %v2411 = vmul.f32 %v2386, %v2405
  %v2412 = vmul.f32 %v2384, %v2407
  %v2413 = vsub.f32 %v2411, %v2412
  %v2414 = vmul.f32 %v2384, %v2406
  %v2415 = vmul.f32 %v2385, %v2405
  %v2416 = vsub.f32 %v2414, %v2415
  %v2417 = vmul.f32 %v2326, %v2384
  %v2418 = vmul.f32 %v2327, %v2405
  %v2419 = vadd.f32 %v2417, %v2418
  %v2420 = vmul.f32 %v2328, %v2410
  %v2421 = vadd.f32 %v2419, %v2420
  %v2422 = vmul.f32 %v2326, %v2385
  %v2423 = vmul.f32 %v2327, %v2406
  %v2424 = vadd.f32 %v2422, %v2423
  %v2425 = vmul.f32 %v2328, %v2413
  %v2426 = vadd.f32 %v2424, %v2425
  %v2427 = vmul.f32 %v2326, %v2386
  %v2428 = vmul.f32 %v2327, %v2407
  %v2429 = vadd.f32 %v2427, %v2428
  %v2430 = vmul.f32 %v2328, %v2416
  %v2431 = vadd.f32 %v2429, %v2430
  %v2432 = vmul.f32 %v2329, %v2384
  %v2433 = vmul.f32 %v2330, %v2405
  %v2434 = vadd.f32 %v2432, %v2433
  %v2435 = vmul.f32 %v2331, %v2410
  %v2436 = vadd.f32 %v2434, %v2435
  %v2437 = vmul.f32 %v2329, %v2385
  %v2438 = vmul.f32 %v2330, %v2406
  %v2439 = vadd.f32 %v2437, %v2438
  %v2440 = vmul.f32 %v2331, %v2413
  %v2441 = vadd.f32 %v2439, %v2440
  %v2442 = vmul.f32 %v2329, %v2386
  %v2443 = vmul.f32 %v2330, %v2407
  %v2444 = vadd.f32 %v2442, %v2443
  %v2445 = vmul.f32 %v2331, %v2416
  %v2446 = vadd.f32 %v2444, %v2445
  %v2447 = vmul.f32 %v2332, %v2384
  %v2448 = vmul.f32 %v2333, %v2405
  %v2449 = vadd.f32 %v2447, %v2448
  %v2450 = vmul.f32 %v2334, %v2410
  %v2451 = vadd.f32 %v2449, %v2450
  %v2452 = vmul.f32 %v2332, %v2385
  %v2453 = vmul.f32 %v2333, %v2406
  %v2454 = vadd.f32 %v2452, %v2453
  %v2455 = vmul.f32 %v2334, %v2413
  %v2456 = vadd.f32 %v2454, %v2455
  %v2457 = vmul.f32 %v2332, %v2386
  %v2458 = vmul.f32 %v2333, %v2407
  %v2459 = vadd.f32 %v2457, %v2458
  %v2460 = vmul.f32 %v2334, %v2416
  %v2461 = vadd.f32 %v2459, %v2460
  %s2462 = scalar_lea.vmem [#allocation2], 1080
  %2463 = vst [vmem:[%s2462] sm:$0xff] %v2421
  %s2464 = scalar_lea.vmem [#allocation2], 1088
  %2465 = vst [vmem:[%s2464] sm:$0xff] %v2426
  %s2466 = scalar_lea.vmem [#allocation2], 1096
  %2467 = vst [vmem:[%s2466] sm:$0xff] %v2431
  %s2468 = scalar_lea.vmem [#allocation2], 1104
  %2469 = vst [vmem:[%s2468] sm:$0xff] %v2436
  %s2470 = scalar_lea.vmem [#allocation2], 1112
  %2471 = vst [vmem:[%s2470] sm:$0xff] %v2441
  %s2472 = scalar_lea.vmem [#allocation2], 1120
  %2473 = vst [vmem:[%s2472] sm:$0xff] %v2446
  %s2474 = scalar_lea.vmem [#allocation2], 1128
  %2475 = vst [vmem:[%s2474] sm:$0xff] %v2451
  %s2476 = scalar_lea.vmem [#allocation2], 1136
  %2477 = vst [vmem:[%s2476] sm:$0xff] %v2456
  %s2478 = scalar_lea.vmem [#allocation2], 1144
  %2479 = vst [vmem:[%s2478] sm:$0xff] %v2461
  %v2480 = vld [vmem:[%s2308] sm:$0xff]
  %v2481 = vld [vmem:[%s2310] sm:$0xff]
  %v2482 = vld [vmem:[%s2312] sm:$0xff]
  %v2483 = vld [vmem:[%s2314] sm:$0xff]
  %v2484 = vld [vmem:[%s2316] sm:$0xff]
  %v2485 = vld [vmem:[%s2318] sm:$0xff]
  %v2486 = vld [vmem:[%s2320] sm:$0xff]
  %v2487 = vld [vmem:[%s2322] sm:$0xff]
  %v2488 = vld [vmem:[%s2324] sm:$0xff]
  %s2489 = scalar_lea.vmem %s1, 456
  %v2490 = vld [vmem:[%s2489] sm:$0xff]
  %s2491 = scalar_lea.vmem %s1, 464
  %v2492 = vld [vmem:[%s2491] sm:$0xff]
  %s2493 = scalar_lea.vmem %s1, 472
  %v2494 = vld [vmem:[%s2493] sm:$0xff]
  %v2495 = vmul.f32 %v2480, %v2490
  %v2496 = vmul.f32 %v2481, %v2492
  %v2497 = vadd.f32 %v2495, %v2496
  %v2498 = vmul.f32 %v2482, %v2494
  %v2499 = vadd.f32 %v2497, %v2498
  %v2500 = vmul.f32 %v2483, %v2490
  %v2501 = vmul.f32 %v2484, %v2492
  %v2502 = vadd.f32 %v2500, %v2501
  %v2503 = vmul.f32 %v2485, %v2494
  %v2504 = vadd.f32 %v2502, %v2503
  %v2505 = vmul.f32 %v2486, %v2490
  %v2506 = vmul.f32 %v2487, %v2492
  %v2507 = vadd.f32 %v2505, %v2506
  %v2508 = vmul.f32 %v2488, %v2494
  %v2509 = vadd.f32 %v2507, %v2508
  %v2510 = vadd.f32 %v2499, %v2202
  %v2511 = vadd.f32 %v2504, %v2203
  %v2512 = vadd.f32 %v2509, %v2204
  %s2513 = scalar_lea.vmem %s2, 456
  %2514 = vst [vmem:[%s2513] sm:$0xff] %v2510
  %s2515 = scalar_lea.vmem %s2, 464
  %2516 = vst [vmem:[%s2515] sm:$0xff] %v2511
  %s2517 = scalar_lea.vmem %s2, 472
  %2518 = vst [vmem:[%s2517] sm:$0xff] %v2512
  %s2519 = scalar_lea.vmem %s0, 912
  %v2520 = vld [vmem:[%s2519] sm:$0xff]
  %s2521 = scalar_lea.vmem %s0, 920
  %v2522 = vld [vmem:[%s2521] sm:$0xff]
  %s2523 = scalar_lea.vmem %s0, 928
  %v2524 = vld [vmem:[%s2523] sm:$0xff]
  %s2525 = scalar_lea.vmem %s0, 936
  %v2526 = vld [vmem:[%s2525] sm:$0xff]
  %s2527 = scalar_lea.vmem %s0, 944
  %v2528 = vld [vmem:[%s2527] sm:$0xff]
  %s2529 = scalar_lea.vmem %s0, 952
  %v2530 = vld [vmem:[%s2529] sm:$0xff]
  %v2531 = vmul.f32 %v2520, %v2520
  %v2532 = vmul.f32 %v2522, %v2522
  %v2533 = vadd.f32 %v2531, %v2532
  %v2534 = vmul.f32 %v2524, %v2524
  %v2535 = vadd.f32 %v2533, %v2534
  %v2536 = vmax.f32 %v2535, 1e-24
  %v2537 = vrsqrt.pop %v2536
  %v2538 = vmul.f32 %v2520, %v2537
  %v2539 = vmul.f32 %v2522, %v2537
  %v2540 = vmul.f32 %v2524, %v2537
  %v2541 = vmul.f32 %v2538, %v2526
  %v2542 = vmul.f32 %v2539, %v2528
  %v2543 = vadd.f32 %v2541, %v2542
  %v2544 = vmul.f32 %v2540, %v2530
  %v2545 = vadd.f32 %v2543, %v2544
  %v2546 = vmul.f32 %v2545, %v2538
  %v2547 = vsub.f32 %v2526, %v2546
  %v2548 = vmul.f32 %v2545, %v2539
  %v2549 = vsub.f32 %v2528, %v2548
  %v2550 = vmul.f32 %v2545, %v2540
  %v2551 = vsub.f32 %v2530, %v2550
  %v2552 = vmul.f32 %v2547, %v2547
  %v2553 = vmul.f32 %v2549, %v2549
  %v2554 = vadd.f32 %v2552, %v2553
  %v2555 = vmul.f32 %v2551, %v2551
  %v2556 = vadd.f32 %v2554, %v2555
  %v2557 = vmax.f32 %v2556, 1e-24
  %v2558 = vrsqrt.pop %v2557
  %v2559 = vmul.f32 %v2547, %v2558
  %v2560 = vmul.f32 %v2549, %v2558
  %v2561 = vmul.f32 %v2551, %v2558
  %v2562 = vmul.f32 %v2539, %v2561
  %v2563 = vmul.f32 %v2540, %v2560
  %v2564 = vsub.f32 %v2562, %v2563
  %v2565 = vmul.f32 %v2540, %v2559
  %v2566 = vmul.f32 %v2538, %v2561
  %v2567 = vsub.f32 %v2565, %v2566
  %v2568 = vmul.f32 %v2538, %v2560
  %v2569 = vmul.f32 %v2539, %v2559
  %v2570 = vsub.f32 %v2568, %v2569
  %v2571 = vmul.f32 %v2480, %v2538
  %v2572 = vmul.f32 %v2481, %v2559
  %v2573 = vadd.f32 %v2571, %v2572
  %v2574 = vmul.f32 %v2482, %v2564
  %v2575 = vadd.f32 %v2573, %v2574
  %v2576 = vmul.f32 %v2480, %v2539
  %v2577 = vmul.f32 %v2481, %v2560
  %v2578 = vadd.f32 %v2576, %v2577
  %v2579 = vmul.f32 %v2482, %v2567
  %v2580 = vadd.f32 %v2578, %v2579
  %v2581 = vmul.f32 %v2480, %v2540
  %v2582 = vmul.f32 %v2481, %v2561
  %v2583 = vadd.f32 %v2581, %v2582
  %v2584 = vmul.f32 %v2482, %v2570
  %v2585 = vadd.f32 %v2583, %v2584
  %v2586 = vmul.f32 %v2483, %v2538
  %v2587 = vmul.f32 %v2484, %v2559
  %v2588 = vadd.f32 %v2586, %v2587
  %v2589 = vmul.f32 %v2485, %v2564
  %v2590 = vadd.f32 %v2588, %v2589
  %v2591 = vmul.f32 %v2483, %v2539
  %v2592 = vmul.f32 %v2484, %v2560
  %v2593 = vadd.f32 %v2591, %v2592
  %v2594 = vmul.f32 %v2485, %v2567
  %v2595 = vadd.f32 %v2593, %v2594
  %v2596 = vmul.f32 %v2483, %v2540
  %v2597 = vmul.f32 %v2484, %v2561
  %v2598 = vadd.f32 %v2596, %v2597
  %v2599 = vmul.f32 %v2485, %v2570
  %v2600 = vadd.f32 %v2598, %v2599
  %v2601 = vmul.f32 %v2486, %v2538
  %v2602 = vmul.f32 %v2487, %v2559
  %v2603 = vadd.f32 %v2601, %v2602
  %v2604 = vmul.f32 %v2488, %v2564
  %v2605 = vadd.f32 %v2603, %v2604
  %v2606 = vmul.f32 %v2486, %v2539
  %v2607 = vmul.f32 %v2487, %v2560
  %v2608 = vadd.f32 %v2606, %v2607
  %v2609 = vmul.f32 %v2488, %v2567
  %v2610 = vadd.f32 %v2608, %v2609
  %v2611 = vmul.f32 %v2486, %v2540
  %v2612 = vmul.f32 %v2487, %v2561
  %v2613 = vadd.f32 %v2611, %v2612
  %v2614 = vmul.f32 %v2488, %v2570
  %v2615 = vadd.f32 %v2613, %v2614
  %s2616 = scalar_lea.vmem [#allocation2], 1152
  %2617 = vst [vmem:[%s2616] sm:$0xff] %v2575
  %s2618 = scalar_lea.vmem [#allocation2], 1160
  %2619 = vst [vmem:[%s2618] sm:$0xff] %v2580
  %s2620 = scalar_lea.vmem [#allocation2], 1168
  %2621 = vst [vmem:[%s2620] sm:$0xff] %v2585
  %s2622 = scalar_lea.vmem [#allocation2], 1176
  %2623 = vst [vmem:[%s2622] sm:$0xff] %v2590
  %s2624 = scalar_lea.vmem [#allocation2], 1184
  %2625 = vst [vmem:[%s2624] sm:$0xff] %v2595
  %s2626 = scalar_lea.vmem [#allocation2], 1192
  %2627 = vst [vmem:[%s2626] sm:$0xff] %v2600
  %s2628 = scalar_lea.vmem [#allocation2], 1200
  %2629 = vst [vmem:[%s2628] sm:$0xff] %v2605
  %s2630 = scalar_lea.vmem [#allocation2], 1208
  %2631 = vst [vmem:[%s2630] sm:$0xff] %v2610
  %s2632 = scalar_lea.vmem [#allocation2], 1216
  %2633 = vst [vmem:[%s2632] sm:$0xff] %v2615
  %v2634 = vld [vmem:[%s2462] sm:$0xff]
  %v2635 = vld [vmem:[%s2464] sm:$0xff]
  %v2636 = vld [vmem:[%s2466] sm:$0xff]
  %v2637 = vld [vmem:[%s2468] sm:$0xff]
  %v2638 = vld [vmem:[%s2470] sm:$0xff]
  %v2639 = vld [vmem:[%s2472] sm:$0xff]
  %v2640 = vld [vmem:[%s2474] sm:$0xff]
  %v2641 = vld [vmem:[%s2476] sm:$0xff]
  %v2642 = vld [vmem:[%s2478] sm:$0xff]
  %s2643 = scalar_lea.vmem %s1, 480
  %v2644 = vld [vmem:[%s2643] sm:$0xff]
  %s2645 = scalar_lea.vmem %s1, 488
  %v2646 = vld [vmem:[%s2645] sm:$0xff]
  %s2647 = scalar_lea.vmem %s1, 496
  %v2648 = vld [vmem:[%s2647] sm:$0xff]
  %v2649 = vmul.f32 %v2634, %v2644
  %v2650 = vmul.f32 %v2635, %v2646
  %v2651 = vadd.f32 %v2649, %v2650
  %v2652 = vmul.f32 %v2636, %v2648
  %v2653 = vadd.f32 %v2651, %v2652
  %v2654 = vmul.f32 %v2637, %v2644
  %v2655 = vmul.f32 %v2638, %v2646
  %v2656 = vadd.f32 %v2654, %v2655
  %v2657 = vmul.f32 %v2639, %v2648
  %v2658 = vadd.f32 %v2656, %v2657
  %v2659 = vmul.f32 %v2640, %v2644
  %v2660 = vmul.f32 %v2641, %v2646
  %v2661 = vadd.f32 %v2659, %v2660
  %v2662 = vmul.f32 %v2642, %v2648
  %v2663 = vadd.f32 %v2661, %v2662
  %v2664 = vadd.f32 %v2653, %v2356
  %v2665 = vadd.f32 %v2658, %v2357
  %v2666 = vadd.f32 %v2663, %v2358
  %s2667 = scalar_lea.vmem %s2, 480
  %2668 = vst [vmem:[%s2667] sm:$0xff] %v2664
  %s2669 = scalar_lea.vmem %s2, 488
  %2670 = vst [vmem:[%s2669] sm:$0xff] %v2665
  %s2671 = scalar_lea.vmem %s2, 496
  %2672 = vst [vmem:[%s2671] sm:$0xff] %v2666
  %s2673 = scalar_lea.vmem %s0, 960
  %v2674 = vld [vmem:[%s2673] sm:$0xff]
  %s2675 = scalar_lea.vmem %s0, 968
  %v2676 = vld [vmem:[%s2675] sm:$0xff]
  %s2677 = scalar_lea.vmem %s0, 976
  %v2678 = vld [vmem:[%s2677] sm:$0xff]
  %s2679 = scalar_lea.vmem %s0, 984
  %v2680 = vld [vmem:[%s2679] sm:$0xff]
  %s2681 = scalar_lea.vmem %s0, 992
  %v2682 = vld [vmem:[%s2681] sm:$0xff]
  %s2683 = scalar_lea.vmem %s0, 1000
  %v2684 = vld [vmem:[%s2683] sm:$0xff]
  %v2685 = vmul.f32 %v2674, %v2674
  %v2686 = vmul.f32 %v2676, %v2676
  %v2687 = vadd.f32 %v2685, %v2686
  %v2688 = vmul.f32 %v2678, %v2678
  %v2689 = vadd.f32 %v2687, %v2688
  %v2690 = vmax.f32 %v2689, 1e-24
  %v2691 = vrsqrt.pop %v2690
  %v2692 = vmul.f32 %v2674, %v2691
  %v2693 = vmul.f32 %v2676, %v2691
  %v2694 = vmul.f32 %v2678, %v2691
  %v2695 = vmul.f32 %v2692, %v2680
  %v2696 = vmul.f32 %v2693, %v2682
  %v2697 = vadd.f32 %v2695, %v2696
  %v2698 = vmul.f32 %v2694, %v2684
  %v2699 = vadd.f32 %v2697, %v2698
  %v2700 = vmul.f32 %v2699, %v2692
  %v2701 = vsub.f32 %v2680, %v2700
  %v2702 = vmul.f32 %v2699, %v2693
  %v2703 = vsub.f32 %v2682, %v2702
  %v2704 = vmul.f32 %v2699, %v2694
  %v2705 = vsub.f32 %v2684, %v2704
  %v2706 = vmul.f32 %v2701, %v2701
  %v2707 = vmul.f32 %v2703, %v2703
  %v2708 = vadd.f32 %v2706, %v2707
  %v2709 = vmul.f32 %v2705, %v2705
  %v2710 = vadd.f32 %v2708, %v2709
  %v2711 = vmax.f32 %v2710, 1e-24
  %v2712 = vrsqrt.pop %v2711
  %v2713 = vmul.f32 %v2701, %v2712
  %v2714 = vmul.f32 %v2703, %v2712
  %v2715 = vmul.f32 %v2705, %v2712
  %v2716 = vmul.f32 %v2693, %v2715
  %v2717 = vmul.f32 %v2694, %v2714
  %v2718 = vsub.f32 %v2716, %v2717
  %v2719 = vmul.f32 %v2694, %v2713
  %v2720 = vmul.f32 %v2692, %v2715
  %v2721 = vsub.f32 %v2719, %v2720
  %v2722 = vmul.f32 %v2692, %v2714
  %v2723 = vmul.f32 %v2693, %v2713
  %v2724 = vsub.f32 %v2722, %v2723
  %v2725 = vmul.f32 %v2634, %v2692
  %v2726 = vmul.f32 %v2635, %v2713
  %v2727 = vadd.f32 %v2725, %v2726
  %v2728 = vmul.f32 %v2636, %v2718
  %v2729 = vadd.f32 %v2727, %v2728
  %v2730 = vmul.f32 %v2634, %v2693
  %v2731 = vmul.f32 %v2635, %v2714
  %v2732 = vadd.f32 %v2730, %v2731
  %v2733 = vmul.f32 %v2636, %v2721
  %v2734 = vadd.f32 %v2732, %v2733
  %v2735 = vmul.f32 %v2634, %v2694
  %v2736 = vmul.f32 %v2635, %v2715
  %v2737 = vadd.f32 %v2735, %v2736
  %v2738 = vmul.f32 %v2636, %v2724
  %v2739 = vadd.f32 %v2737, %v2738
  %v2740 = vmul.f32 %v2637, %v2692
  %v2741 = vmul.f32 %v2638, %v2713
  %v2742 = vadd.f32 %v2740, %v2741
  %v2743 = vmul.f32 %v2639, %v2718
  %v2744 = vadd.f32 %v2742, %v2743
  %v2745 = vmul.f32 %v2637, %v2693
  %v2746 = vmul.f32 %v2638, %v2714
  %v2747 = vadd.f32 %v2745, %v2746
  %v2748 = vmul.f32 %v2639, %v2721
  %v2749 = vadd.f32 %v2747, %v2748
  %v2750 = vmul.f32 %v2637, %v2694
  %v2751 = vmul.f32 %v2638, %v2715
  %v2752 = vadd.f32 %v2750, %v2751
  %v2753 = vmul.f32 %v2639, %v2724
  %v2754 = vadd.f32 %v2752, %v2753
  %v2755 = vmul.f32 %v2640, %v2692
  %v2756 = vmul.f32 %v2641, %v2713
  %v2757 = vadd.f32 %v2755, %v2756
  %v2758 = vmul.f32 %v2642, %v2718
  %v2759 = vadd.f32 %v2757, %v2758
  %v2760 = vmul.f32 %v2640, %v2693
  %v2761 = vmul.f32 %v2641, %v2714
  %v2762 = vadd.f32 %v2760, %v2761
  %v2763 = vmul.f32 %v2642, %v2721
  %v2764 = vadd.f32 %v2762, %v2763
  %v2765 = vmul.f32 %v2640, %v2694
  %v2766 = vmul.f32 %v2641, %v2715
  %v2767 = vadd.f32 %v2765, %v2766
  %v2768 = vmul.f32 %v2642, %v2724
  %v2769 = vadd.f32 %v2767, %v2768
  %s2770 = scalar_lea.vmem [#allocation2], 1224
  %2771 = vst [vmem:[%s2770] sm:$0xff] %v2729
  %s2772 = scalar_lea.vmem [#allocation2], 1232
  %2773 = vst [vmem:[%s2772] sm:$0xff] %v2734
  %s2774 = scalar_lea.vmem [#allocation2], 1240
  %2775 = vst [vmem:[%s2774] sm:$0xff] %v2739
  %s2776 = scalar_lea.vmem [#allocation2], 1248
  %2777 = vst [vmem:[%s2776] sm:$0xff] %v2744
  %s2778 = scalar_lea.vmem [#allocation2], 1256
  %2779 = vst [vmem:[%s2778] sm:$0xff] %v2749
  %s2780 = scalar_lea.vmem [#allocation2], 1264
  %2781 = vst [vmem:[%s2780] sm:$0xff] %v2754
  %s2782 = scalar_lea.vmem [#allocation2], 1272
  %2783 = vst [vmem:[%s2782] sm:$0xff] %v2759
  %s2784 = scalar_lea.vmem [#allocation2], 1280
  %2785 = vst [vmem:[%s2784] sm:$0xff] %v2764
  %s2786 = scalar_lea.vmem [#allocation2], 1288
  %2787 = vst [vmem:[%s2786] sm:$0xff] %v2769
  %v2788 = vld [vmem:[%s2616] sm:$0xff]
  %v2789 = vld [vmem:[%s2618] sm:$0xff]
  %v2790 = vld [vmem:[%s2620] sm:$0xff]
  %v2791 = vld [vmem:[%s2622] sm:$0xff]
  %v2792 = vld [vmem:[%s2624] sm:$0xff]
  %v2793 = vld [vmem:[%s2626] sm:$0xff]
  %v2794 = vld [vmem:[%s2628] sm:$0xff]
  %v2795 = vld [vmem:[%s2630] sm:$0xff]
  %v2796 = vld [vmem:[%s2632] sm:$0xff]
  %s2797 = scalar_lea.vmem %s1, 504
  %v2798 = vld [vmem:[%s2797] sm:$0xff]
  %s2799 = scalar_lea.vmem %s1, 512
  %v2800 = vld [vmem:[%s2799] sm:$0xff]
  %s2801 = scalar_lea.vmem %s1, 520
  %v2802 = vld [vmem:[%s2801] sm:$0xff]
  %v2803 = vmul.f32 %v2788, %v2798
  %v2804 = vmul.f32 %v2789, %v2800
  %v2805 = vadd.f32 %v2803, %v2804
  %v2806 = vmul.f32 %v2790, %v2802
  %v2807 = vadd.f32 %v2805, %v2806
  %v2808 = vmul.f32 %v2791, %v2798
  %v2809 = vmul.f32 %v2792, %v2800
  %v2810 = vadd.f32 %v2808, %v2809
  %v2811 = vmul.f32 %v2793, %v2802
  %v2812 = vadd.f32 %v2810, %v2811
  %v2813 = vmul.f32 %v2794, %v2798
  %v2814 = vmul.f32 %v2795, %v2800
  %v2815 = vadd.f32 %v2813, %v2814
  %v2816 = vmul.f32 %v2796, %v2802
  %v2817 = vadd.f32 %v2815, %v2816
  %v2818 = vadd.f32 %v2807, %v2510
  %v2819 = vadd.f32 %v2812, %v2511
  %v2820 = vadd.f32 %v2817, %v2512
  %s2821 = scalar_lea.vmem %s2, 504
  %2822 = vst [vmem:[%s2821] sm:$0xff] %v2818
  %s2823 = scalar_lea.vmem %s2, 512
  %2824 = vst [vmem:[%s2823] sm:$0xff] %v2819
  %s2825 = scalar_lea.vmem %s2, 520
  %2826 = vst [vmem:[%s2825] sm:$0xff] %v2820
  %s2827 = scalar_lea.vmem %s0, 1008
  %v2828 = vld [vmem:[%s2827] sm:$0xff]
  %s2829 = scalar_lea.vmem %s0, 1016
  %v2830 = vld [vmem:[%s2829] sm:$0xff]
  %s2831 = scalar_lea.vmem %s0, 1024
  %v2832 = vld [vmem:[%s2831] sm:$0xff]
  %s2833 = scalar_lea.vmem %s0, 1032
  %v2834 = vld [vmem:[%s2833] sm:$0xff]
  %s2835 = scalar_lea.vmem %s0, 1040
  %v2836 = vld [vmem:[%s2835] sm:$0xff]
  %s2837 = scalar_lea.vmem %s0, 1048
  %v2838 = vld [vmem:[%s2837] sm:$0xff]
  %v2839 = vmul.f32 %v2828, %v2828
  %v2840 = vmul.f32 %v2830, %v2830
  %v2841 = vadd.f32 %v2839, %v2840
  %v2842 = vmul.f32 %v2832, %v2832
  %v2843 = vadd.f32 %v2841, %v2842
  %v2844 = vmax.f32 %v2843, 1e-24
  %v2845 = vrsqrt.pop %v2844
  %v2846 = vmul.f32 %v2828, %v2845
  %v2847 = vmul.f32 %v2830, %v2845
  %v2848 = vmul.f32 %v2832, %v2845
  %v2849 = vmul.f32 %v2846, %v2834
  %v2850 = vmul.f32 %v2847, %v2836
  %v2851 = vadd.f32 %v2849, %v2850
  %v2852 = vmul.f32 %v2848, %v2838
  %v2853 = vadd.f32 %v2851, %v2852
  %v2854 = vmul.f32 %v2853, %v2846
  %v2855 = vsub.f32 %v2834, %v2854
  %v2856 = vmul.f32 %v2853, %v2847
  %v2857 = vsub.f32 %v2836, %v2856
  %v2858 = vmul.f32 %v2853, %v2848
  %v2859 = vsub.f32 %v2838, %v2858
  %v2860 = vmul.f32 %v2855, %v2855
  %v2861 = vmul.f32 %v2857, %v2857
  %v2862 = vadd.f32 %v2860, %v2861
  %v2863 = vmul.f32 %v2859, %v2859
  %v2864 = vadd.f32 %v2862, %v2863
  %v2865 = vmax.f32 %v2864, 1e-24
  %v2866 = vrsqrt.pop %v2865
  %v2867 = vmul.f32 %v2855, %v2866
  %v2868 = vmul.f32 %v2857, %v2866
  %v2869 = vmul.f32 %v2859, %v2866
  %v2870 = vmul.f32 %v2847, %v2869
  %v2871 = vmul.f32 %v2848, %v2868
  %v2872 = vsub.f32 %v2870, %v2871
  %v2873 = vmul.f32 %v2848, %v2867
  %v2874 = vmul.f32 %v2846, %v2869
  %v2875 = vsub.f32 %v2873, %v2874
  %v2876 = vmul.f32 %v2846, %v2868
  %v2877 = vmul.f32 %v2847, %v2867
  %v2878 = vsub.f32 %v2876, %v2877
  %v2879 = vmul.f32 %v2788, %v2846
  %v2880 = vmul.f32 %v2789, %v2867
  %v2881 = vadd.f32 %v2879, %v2880
  %v2882 = vmul.f32 %v2790, %v2872
  %v2883 = vadd.f32 %v2881, %v2882
  %v2884 = vmul.f32 %v2788, %v2847
  %v2885 = vmul.f32 %v2789, %v2868
  %v2886 = vadd.f32 %v2884, %v2885
  %v2887 = vmul.f32 %v2790, %v2875
  %v2888 = vadd.f32 %v2886, %v2887
  %v2889 = vmul.f32 %v2788, %v2848
  %v2890 = vmul.f32 %v2789, %v2869
  %v2891 = vadd.f32 %v2889, %v2890
  %v2892 = vmul.f32 %v2790, %v2878
  %v2893 = vadd.f32 %v2891, %v2892
  %v2894 = vmul.f32 %v2791, %v2846
  %v2895 = vmul.f32 %v2792, %v2867
  %v2896 = vadd.f32 %v2894, %v2895
  %v2897 = vmul.f32 %v2793, %v2872
  %v2898 = vadd.f32 %v2896, %v2897
  %v2899 = vmul.f32 %v2791, %v2847
  %v2900 = vmul.f32 %v2792, %v2868
  %v2901 = vadd.f32 %v2899, %v2900
  %v2902 = vmul.f32 %v2793, %v2875
  %v2903 = vadd.f32 %v2901, %v2902
  %v2904 = vmul.f32 %v2791, %v2848
  %v2905 = vmul.f32 %v2792, %v2869
  %v2906 = vadd.f32 %v2904, %v2905
  %v2907 = vmul.f32 %v2793, %v2878
  %v2908 = vadd.f32 %v2906, %v2907
  %v2909 = vmul.f32 %v2794, %v2846
  %v2910 = vmul.f32 %v2795, %v2867
  %v2911 = vadd.f32 %v2909, %v2910
  %v2912 = vmul.f32 %v2796, %v2872
  %v2913 = vadd.f32 %v2911, %v2912
  %v2914 = vmul.f32 %v2794, %v2847
  %v2915 = vmul.f32 %v2795, %v2868
  %v2916 = vadd.f32 %v2914, %v2915
  %v2917 = vmul.f32 %v2796, %v2875
  %v2918 = vadd.f32 %v2916, %v2917
  %v2919 = vmul.f32 %v2794, %v2848
  %v2920 = vmul.f32 %v2795, %v2869
  %v2921 = vadd.f32 %v2919, %v2920
  %v2922 = vmul.f32 %v2796, %v2878
  %v2923 = vadd.f32 %v2921, %v2922
  %s2924 = scalar_lea.vmem [#allocation2], 1296
  %2925 = vst [vmem:[%s2924] sm:$0xff] %v2883
  %s2926 = scalar_lea.vmem [#allocation2], 1304
  %2927 = vst [vmem:[%s2926] sm:$0xff] %v2888
  %s2928 = scalar_lea.vmem [#allocation2], 1312
  %2929 = vst [vmem:[%s2928] sm:$0xff] %v2893
  %s2930 = scalar_lea.vmem [#allocation2], 1320
  %2931 = vst [vmem:[%s2930] sm:$0xff] %v2898
  %s2932 = scalar_lea.vmem [#allocation2], 1328
  %2933 = vst [vmem:[%s2932] sm:$0xff] %v2903
  %s2934 = scalar_lea.vmem [#allocation2], 1336
  %2935 = vst [vmem:[%s2934] sm:$0xff] %v2908
  %s2936 = scalar_lea.vmem [#allocation2], 1344
  %2937 = vst [vmem:[%s2936] sm:$0xff] %v2913
  %s2938 = scalar_lea.vmem [#allocation2], 1352
  %2939 = vst [vmem:[%s2938] sm:$0xff] %v2918
  %s2940 = scalar_lea.vmem [#allocation2], 1360
  %2941 = vst [vmem:[%s2940] sm:$0xff] %v2923
  %v2942 = vld [vmem:[%s2770] sm:$0xff]
  %v2943 = vld [vmem:[%s2772] sm:$0xff]
  %v2944 = vld [vmem:[%s2774] sm:$0xff]
  %v2945 = vld [vmem:[%s2776] sm:$0xff]
  %v2946 = vld [vmem:[%s2778] sm:$0xff]
  %v2947 = vld [vmem:[%s2780] sm:$0xff]
  %v2948 = vld [vmem:[%s2782] sm:$0xff]
  %v2949 = vld [vmem:[%s2784] sm:$0xff]
  %v2950 = vld [vmem:[%s2786] sm:$0xff]
  %s2951 = scalar_lea.vmem %s1, 528
  %v2952 = vld [vmem:[%s2951] sm:$0xff]
  %s2953 = scalar_lea.vmem %s1, 536
  %v2954 = vld [vmem:[%s2953] sm:$0xff]
  %s2955 = scalar_lea.vmem %s1, 544
  %v2956 = vld [vmem:[%s2955] sm:$0xff]
  %v2957 = vmul.f32 %v2942, %v2952
  %v2958 = vmul.f32 %v2943, %v2954
  %v2959 = vadd.f32 %v2957, %v2958
  %v2960 = vmul.f32 %v2944, %v2956
  %v2961 = vadd.f32 %v2959, %v2960
  %v2962 = vmul.f32 %v2945, %v2952
  %v2963 = vmul.f32 %v2946, %v2954
  %v2964 = vadd.f32 %v2962, %v2963
  %v2965 = vmul.f32 %v2947, %v2956
  %v2966 = vadd.f32 %v2964, %v2965
  %v2967 = vmul.f32 %v2948, %v2952
  %v2968 = vmul.f32 %v2949, %v2954
  %v2969 = vadd.f32 %v2967, %v2968
  %v2970 = vmul.f32 %v2950, %v2956
  %v2971 = vadd.f32 %v2969, %v2970
  %v2972 = vadd.f32 %v2961, %v2664
  %v2973 = vadd.f32 %v2966, %v2665
  %v2974 = vadd.f32 %v2971, %v2666
  %s2975 = scalar_lea.vmem %s2, 528
  %2976 = vst [vmem:[%s2975] sm:$0xff] %v2972
  %s2977 = scalar_lea.vmem %s2, 536
  %2978 = vst [vmem:[%s2977] sm:$0xff] %v2973
  %s2979 = scalar_lea.vmem %s2, 544
  %2980 = vst [vmem:[%s2979] sm:$0xff] %v2974
  %v2981 = vld [vmem:[%s2924] sm:$0xff]
  %v2982 = vld [vmem:[%s2926] sm:$0xff]
  %v2983 = vld [vmem:[%s2928] sm:$0xff]
  %v2984 = vld [vmem:[%s2930] sm:$0xff]
  %v2985 = vld [vmem:[%s2932] sm:$0xff]
  %v2986 = vld [vmem:[%s2934] sm:$0xff]
  %v2987 = vld [vmem:[%s2936] sm:$0xff]
  %v2988 = vld [vmem:[%s2938] sm:$0xff]
  %v2989 = vld [vmem:[%s2940] sm:$0xff]
  %s2990 = scalar_lea.vmem %s1, 552
  %v2991 = vld [vmem:[%s2990] sm:$0xff]
  %s2992 = scalar_lea.vmem %s1, 560
  %v2993 = vld [vmem:[%s2992] sm:$0xff]
  %s2994 = scalar_lea.vmem %s1, 568
  %v2995 = vld [vmem:[%s2994] sm:$0xff]
  %v2996 = vmul.f32 %v2981, %v2991
  %v2997 = vmul.f32 %v2982, %v2993
  %v2998 = vadd.f32 %v2996, %v2997
  %v2999 = vmul.f32 %v2983, %v2995
  %v3000 = vadd.f32 %v2998, %v2999
  %v3001 = vmul.f32 %v2984, %v2991
  %v3002 = vmul.f32 %v2985, %v2993
  %v3003 = vadd.f32 %v3001, %v3002
  %v3004 = vmul.f32 %v2986, %v2995
  %v3005 = vadd.f32 %v3003, %v3004
  %v3006 = vmul.f32 %v2987, %v2991
  %v3007 = vmul.f32 %v2988, %v2993
  %v3008 = vadd.f32 %v3006, %v3007
  %v3009 = vmul.f32 %v2989, %v2995
  %v3010 = vadd.f32 %v3008, %v3009
  %v3011 = vadd.f32 %v3000, %v2818
  %v3012 = vadd.f32 %v3005, %v2819
  %v3013 = vadd.f32 %v3010, %v2820
  %s3014 = scalar_lea.vmem %s2, 552
  %3015 = vst [vmem:[%s3014] sm:$0xff] %v3011
  %s3016 = scalar_lea.vmem %s2, 560
  %3017 = vst [vmem:[%s3016] sm:$0xff] %v3012
  %s3018 = scalar_lea.vmem %s2, 568
  %3019 = vst [vmem:[%s3018] sm:$0xff] %v3013
  // Predicated region
  $region10: #{fk.1} parent=0 // pred_check
    _
  $region11: #{fk.1} parent=0 // pred_check_branch
    %3021 = sbr.rel (0) target = $region13
  $region12: #{fk.1} parent=0 // pred_region
    _
  $region13: #{fk.1} parent=0 // pred_fallthru
    _
  // Predicated region
  $region14: #{fk.1} parent=0 // pred_check
    _
  $region15: #{fk.1} parent=0 // pred_check_branch
    %3023 = sbr.rel (0) target = $region17
  $region16: #{fk.1} parent=0 // pred_region
    _
  $region17: #{fk.1} parent=0 // pred_fallthru
    _

</llo_original>
